<compile_context>
chip_gen: v7x
topology: tpu7x:2x2x1
jax: 0.10.0
libtpu: 0.0.40
codegen_flags: <defaults>
</compile_context>

<pallas_src>
import math

import jax
import jax.numpy as jnp
from jax.experimental import pallas as pl
from jax.experimental.pallas import tpu as pltpu

# ViT Blocks are typically built with norm_layer=partial(nn.LayerNorm, eps=1e-6).
LN_EPS = 1e-6


# ---------------------------------------------------------------------------
# in-kernel math helpers
# ---------------------------------------------------------------------------
def _layernorm(x, w, b):
    # biased variance over the last dim, like torch.nn.LayerNorm (f32)
    mu = jnp.mean(x, axis=-1, keepdims=True)
    var = jnp.mean((x - mu) ** 2, axis=-1, keepdims=True)
    return (x - mu) * jax.lax.rsqrt(var + LN_EPS) * w + b


def _gelu_tanh(x):
    # tanh-approximate GELU; tanh runs on the EUP (free VLIW slot).
    c = math.sqrt(2.0 / math.pi)
    return 0.5 * x * (1.0 + jnp.tanh(c * (x + 0.044715 * x * x * x)))


# contracting dims for q @ k^T without materializing k.T through the XLU
_NT_DIMS = (((1,), (1,)), ((), ()))


# ---------------------------------------------------------------------------
# fused Block kernel
# ---------------------------------------------------------------------------
def _make_block_kernel(num_heads, dim):
    hd = dim // num_heads
    C = dim

    def kernel(x_ref,
               ln1w, ln1b,
               wqkv, bqkv,            # (C, 3C) bf16 (q-part pre-scaled), (1, 3C) f32
               wpr, bpr,              # (C, C) bf16, (1, C) f32
               ln2w, ln2b,
               w1, b1, w2, b2,        # (C, Hm)/(Hm, C) bf16; b1 bf16, b2 f32
               o_ref,
               attn_ref):             # VMEM scratch: (N, C) bf16 head-concat buffer
        x = x_ref[0]                                              # (N, C) f32

        # ---------------- attention branch: x + proj(softmax(qk^T)v) -------
        xn = _layernorm(x, ln1w[...], ln1b[...])
        # single full-width QKV projection + one bias add
        qkv = jnp.dot(xn.astype(jnp.bfloat16), wqkv[...],
                      preferred_element_type=jnp.float32) + bqkv[...]
        qkvb = qkv.astype(jnp.bfloat16)                           # (N, 3C)

        for h in range(num_heads):                                # small H: unroll
            lo = h * hd
            qh = qkvb[:, lo:lo + hd]                              # already scaled
            kh = qkvb[:, C + lo:C + lo + hd]
            vh = qkvb[:, 2 * C + lo:2 * C + lo + hd]

            # q @ k^T via dot_general (no XLU transpose of K)
            s = jax.lax.dot_general(qh, kh, _NT_DIMS,
                                    preferred_element_type=jnp.float32)
            s = s - jnp.max(s, axis=-1, keepdims=True)
            e = jnp.exp(s)
            p = e * pl.reciprocal(jnp.sum(e, axis=-1, keepdims=True), approx=True)

            oh = jnp.dot(p.astype(jnp.bfloat16), vh,
                         preferred_element_type=jnp.float32)      # (N, hd)
            # lane-concatenate head outputs (128-aligned static slice store)
            attn_ref[:, lo:lo + hd] = oh.astype(jnp.bfloat16)

        # single fused projection over the concatenated heads
        proj = jnp.dot(attn_ref[...], wpr[...],
                       preferred_element_type=jnp.float32)
        x = x + proj + bpr[...]

        # ---------------- MLP branch: x + fc2(GELU(fc1(LN2(x)))) -----------
        xn2 = _layernorm(x, ln2w[...], ln2b[...])
        h1 = jnp.dot(xn2.astype(jnp.bfloat16), w1[...],
                     preferred_element_type=jnp.float32)
        # bias add + GELU in bf16 (halves vreg pressure on the (N, 4C) tensor)
        h1 = _gelu_tanh(h1.astype(jnp.bfloat16) + b1[...])
        h2 = jnp.dot(h1, w2[...], preferred_element_type=jnp.float32) + b2[...]
        o_ref[0] = x + h2

    return kernel


_PARAM_ORDER = ("ln1_w", "ln1_b",
                "wqkv", "bqkv",
                "wpr", "bpr",
                "ln2_w", "ln2_b",
                "w1", "b1", "w2", "b2")


def block_forward(x, kp, num_heads):
    """x: (B, N, C) f32; kp: kernel-layout params from prepare_kernel_params."""
    B, N, C = x.shape
    kern = _make_block_kernel(num_heads, C)

    def rep(arr):
        # constant block index across the grid -> DMA'd once, not re-fetched.
        nd = arr.ndim
        return pl.BlockSpec(arr.shape, lambda b, _n=nd: (0,) * _n)

    in_specs = [pl.BlockSpec((1, N, C), lambda b: (b, 0, 0))]
    in_specs += [rep(kp[name]) for name in _PARAM_ORDER]

    # TODO(synk): at real ViT-B/L sizes on v7x, single-buffer the weight specs
    # (pipeline_mode=pl.Buffered(1)) and re-size vmem_limit_bytes accordingly.
    return pl.pallas_call(
        kern,
        out_shape=jax.ShapeDtypeStruct((B, N, C), jnp.float32),
        grid=(B,),
        in_specs=in_specs,
        out_specs=pl.BlockSpec((1, N, C), lambda b: (b, 0, 0)),
        scratch_shapes=[pltpu.VMEM((N, C), jnp.bfloat16)],
        input_output_aliases={0: 0},
        compiler_params=pltpu.CompilerParams(
            dimension_semantics=("parallel",),
            vmem_limit_bytes=32 * 1024 * 1024),
    )(x, *[kp[name] for name in _PARAM_ORDER])


# ---------------------------------------------------------------------------
# parameters: torch-layout init + conversion to kernel layout
# ---------------------------------------------------------------------------
def init_block_params(key, dim, num_heads, mlp_ratio, qkv_bias=True):
    """Synthetic parameters in torch.nn layout (Linear weight = (out, in))."""
    H = int(dim * mlp_ratio)
    ks = jax.random.split(key, 8)

    def trunc(k, shape, std=0.02):
        return std * jax.random.truncated_normal(k, -2.0, 2.0, shape, jnp.float32)

    qkv_b = trunc(ks[1], (3 * dim,)) if qkv_bias else jnp.zeros((3 * dim,), jnp.float32)
    return dict(
        norm1_w=jnp.ones((dim,), jnp.float32),
        norm1_b=jnp.zeros((dim,), jnp.float32),
        qkv_w=trunc(ks[0], (3 * dim, dim)),
        qkv_b=qkv_b,
        proj_w=trunc(ks[2], (dim, dim)),
        proj_b=trunc(ks[3], (dim,)),
        norm2_w=jnp.ones((dim,), jnp.float32),
        norm2_b=jnp.zeros((dim,), jnp.float32),
        fc1_w=trunc(ks[4], (H, dim)),
        fc1_b=trunc(ks[5], (H,)),
        fc2_w=trunc(ks[6], (dim, H)),
        fc2_b=trunc(ks[7], (dim,)),
    )


def prepare_kernel_params(p, num_heads):
    """torch layout -> kernel layout: fused qkv, transposed, bf16 weights,
    attention scale folded into the Q weights/bias."""
    C = p["norm1_w"].shape[0]
    hd = C // num_heads
    Hm = p["fc1_w"].shape[0]
    scale = hd ** (-0.5)
    bf16 = jnp.bfloat16

    qkv_w = p["qkv_w"].at[:C].multiply(scale)       # scale folded into Q rows
    qkv_b = p["qkv_b"].at[:C].multiply(scale)

    return dict(
        ln1_w=p["norm1_w"].reshape(1, C),
        ln1_b=p["norm1_b"].reshape(1, C),
        wqkv=qkv_w.T.astype(bf16),                  # (C, 3C)
        bqkv=qkv_b.reshape(1, 3 * C),               # f32
        wpr=p["proj_w"].T.astype(bf16),             # (C, C)
        bpr=p["proj_b"].reshape(1, C),
        ln2_w=p["norm2_w"].reshape(1, C),
        ln2_b=p["norm2_b"].reshape(1, C),
        w1=p["fc1_w"].T.astype(bf16),               # (C, Hm)
        b1=p["fc1_b"].reshape(1, Hm).astype(bf16),  # bf16: added to bf16 h1
        w2=p["fc2_w"].T.astype(bf16),               # (Hm, C)
        b2=p["fc2_b"].reshape(1, C),
    )


# ---------------------------------------------------------------------------
# pure-JAX f32 reference (torch semantics) for correctness checking
# ---------------------------------------------------------------------------
def block_reference(x, p, num_heads):
    B, N, C = x.shape
    hd = C // num_heads

    def ln(v, w, b):
        mu = jnp.mean(v, -1, keepdims=True)
        var = jnp.mean((v - mu) ** 2, -1, keepdims=True)
        return (v - mu) * jax.lax.rsqrt(var + LN_EPS) * w + b

    xn = ln(x, p["norm1_w"], p["norm1_b"])
    qkv = xn @ p["qkv_w"].T + p["qkv_b"]
    qkv = qkv.reshape(B, N, 3, num_heads, hd).transpose(2, 0, 3, 1, 4)
    q, k, v = qkv[0], qkv[1], qkv[2]
    a = jnp.einsum("bhqd,bhkd->bhqk", q, k) * (hd ** -0.5)
    a = jax.nn.softmax(a, axis=-1)
    o = jnp.einsum("bhqk,bhkd->bhqd", a, v)
    o = o.transpose(0, 2, 1, 3).reshape(B, N, C)
    o = o @ p["proj_w"].T + p["proj_b"]
    x = x + o
    xn2 = ln(x, p["norm2_w"], p["norm2_b"])
    h = xn2 @ p["fc1_w"].T + p["fc1_b"]
    h = jax.nn.gelu(h, approximate=False)
    h = h @ p["fc2_w"].T + p["fc2_b"]
    return x + h


# ---------------------------------------------------------------------------
if __name__ == "__main__":
    B, N, C = 2, 128, 256          # tokens / embed chosen lane-aligned
    HEADS, MLP_RATIO = 2, 4.0      # head_dim = 128 -> fully 128-lane aligned

    key = jax.random.PRNGKey(0)
    kx, kp = jax.random.split(key)
    x = jax.random.normal(kx, (B, N, C), jnp.float32)

    torch_params = init_block_params(kp, C, HEADS, MLP_RATIO, qkv_bias=True)
    kernel_params = prepare_kernel_params(torch_params, HEADS)

    # reference first (f32, torch semantics)
    y_ref = block_reference(x, torch_params, HEADS)

    y = block_forward(x, kernel_params, HEADS)
    jax.block_until_ready(y)

    assert y.shape == (B, N, C)
    assert bool(jnp.all(jnp.isfinite(y)))

    # loose tolerance: bf16 matmul operands (f32 accumulate), approx softmax
    # reciprocal, bf16 tanh-GELU.
    max_err = float(jnp.max(jnp.abs(y - y_ref)))
    assert max_err < 5e-2, f"max abs err vs f32 reference: {max_err}"

    print("KERNEL_OK")
</pallas_src>

<mosaic_0001>
module attributes {stable_mosaic.version = 11 : i64} {
  func.func @kernel(%arg0: i32, %arg1: memref<1x128x256xf32, #tpu.memory_space<vmem>>, %arg2: memref<1x256xf32, #tpu.memory_space<vmem>>, %arg3: memref<1x256xf32, #tpu.memory_space<vmem>>, %arg4: memref<256x768xbf16, #tpu.memory_space<vmem>>, %arg5: memref<1x768xf32, #tpu.memory_space<vmem>>, %arg6: memref<256x256xbf16, #tpu.memory_space<vmem>>, %arg7: memref<1x256xf32, #tpu.memory_space<vmem>>, %arg8: memref<1x256xf32, #tpu.memory_space<vmem>>, %arg9: memref<1x256xf32, #tpu.memory_space<vmem>>, %arg10: memref<256x1024xbf16, #tpu.memory_space<vmem>>, %arg11: memref<1x1024xbf16, #tpu.memory_space<vmem>>, %arg12: memref<1024x256xbf16, #tpu.memory_space<vmem>>, %arg13: memref<1x256xf32, #tpu.memory_space<vmem>>, %arg14: memref<1x128x256xf32, #tpu.memory_space<vmem>>, %arg15: memref<128x256xbf16, #tpu.memory_space<vmem>>) attributes {dimension_semantics = [#tpu.dimension_semantics<parallel>], iteration_bounds = array<i64: 2>, scalar_prefetch = 0 : i64, scratch_operands = 1 : i64, tpu.core_type = #tpu.core_type<tc>, window_params = [{transform_indices = @transform_0, window_bounds = array<i64: 1, 128, 256>}, {pipeline_mode = #tpu.pipeline_mode<synchronous>, transform_indices = @transform_1, window_bounds = array<i64: 1, 256>}, {pipeline_mode = #tpu.pipeline_mode<synchronous>, transform_indices = @transform_2, window_bounds = array<i64: 1, 256>}, {pipeline_mode = #tpu.pipeline_mode<synchronous>, transform_indices = @transform_3, window_bounds = array<i64: 256, 768>}, {pipeline_mode = #tpu.pipeline_mode<synchronous>, transform_indices = @transform_4, window_bounds = array<i64: 1, 768>}, {pipeline_mode = #tpu.pipeline_mode<synchronous>, transform_indices = @transform_5, window_bounds = array<i64: 256, 256>}, {pipeline_mode = #tpu.pipeline_mode<synchronous>, transform_indices = @transform_6, window_bounds = array<i64: 1, 256>}, {pipeline_mode = #tpu.pipeline_mode<synchronous>, transform_indices = @transform_7, window_bounds = array<i64: 1, 256>}, {pipeline_mode = #tpu.pipeline_mode<synchronous>, transform_indices = @transform_8, window_bounds = array<i64: 1, 256>}, {pipeline_mode = #tpu.pipeline_mode<synchronous>, transform_indices = @transform_9, window_bounds = array<i64: 256, 1024>}, {pipeline_mode = #tpu.pipeline_mode<synchronous>, transform_indices = @transform_10, window_bounds = array<i64: 1, 1024>}, {pipeline_mode = #tpu.pipeline_mode<synchronous>, transform_indices = @transform_11, window_bounds = array<i64: 1024, 256>}, {pipeline_mode = #tpu.pipeline_mode<synchronous>, transform_indices = @transform_12, window_bounds = array<i64: 1, 256>}, {transform_indices = @transform_13, window_bounds = array<i64: 1, 128, 256>}]} {
    %c0 = arith.constant 0 : index
    %c0_0 = arith.constant 0 : index
    %c0_1 = arith.constant 0 : index
    %0 = vector.load %arg1[%c0, %c0_0, %c0_1] : memref<1x128x256xf32, #tpu.memory_space<vmem>>, vector<1x128x256xf32>
    %1 = vector.shape_cast %0 : vector<1x128x256xf32> to vector<128x256xf32>
    %c0_2 = arith.constant 0 : index
    %c0_3 = arith.constant 0 : index
    %2 = vector.load %arg2[%c0_2, %c0_3] : memref<1x256xf32, #tpu.memory_space<vmem>>, vector<1x256xf32>
    %c0_4 = arith.constant 0 : index
    %c0_5 = arith.constant 0 : index
    %3 = vector.load %arg3[%c0_4, %c0_5] : memref<1x256xf32, #tpu.memory_space<vmem>>, vector<1x256xf32>
    %cst = arith.constant dense<0.000000e+00> : vector<128xf32>
    %4 = vector.multi_reduction <add>, %1, %cst [1] : vector<128x256xf32> to vector<128xf32>
    %5 = vector.shape_cast %4 : vector<128xf32> to vector<128x1xf32>
    %cst_6 = arith.constant 2.560000e+02 : f32
    %6 = vector.broadcast %cst_6 : f32 to vector<128x1xf32>
    %7 = arith.divf %5, %6 : vector<128x1xf32>
    %8 = vector.broadcast %7 : vector<128x1xf32> to vector<128x256xf32>
    %9 = arith.subf %1, %8 : vector<128x256xf32>
    %10 = arith.mulf %9, %9 : vector<128x256xf32>
    %cst_7 = arith.constant dense<0.000000e+00> : vector<128xf32>
    %11 = vector.multi_reduction <add>, %10, %cst_7 [1] : vector<128x256xf32> to vector<128xf32>
    %12 = vector.shape_cast %11 : vector<128xf32> to vector<128x1xf32>
    %cst_8 = arith.constant 2.560000e+02 : f32
    %13 = vector.broadcast %cst_8 : f32 to vector<128x1xf32>
    %14 = arith.divf %12, %13 : vector<128x1xf32>
    %15 = vector.broadcast %7 : vector<128x1xf32> to vector<128x256xf32>
    %16 = arith.subf %1, %15 : vector<128x256xf32>
    %cst_9 = arith.constant 9.99999997E-7 : f32
    %17 = vector.broadcast %cst_9 : f32 to vector<128x1xf32>
    %18 = arith.addf %14, %17 : vector<128x1xf32>
    %19 = math.rsqrt %18 : vector<128x1xf32>
    %20 = vector.broadcast %19 : vector<128x1xf32> to vector<128x256xf32>
    %21 = arith.mulf %16, %20 : vector<128x256xf32>
    %22 = vector.broadcast %2 : vector<1x256xf32> to vector<128x256xf32>
    %23 = arith.mulf %21, %22 : vector<128x256xf32>
    %24 = vector.broadcast %3 : vector<1x256xf32> to vector<128x256xf32>
    %25 = arith.addf %23, %24 : vector<128x256xf32>
    %26 = arith.truncf %25 : vector<128x256xf32> to vector<128x256xbf16>
    %c0_10 = arith.constant 0 : index
    %c0_11 = arith.constant 0 : index
    %27 = vector.load %arg4[%c0_10, %c0_11] : memref<256x768xbf16, #tpu.memory_space<vmem>>, vector<256x768xbf16>
    %cst_12 = arith.constant dense<0.000000e+00> : vector<128x768xf32>
    %28 = tpu.matmul %26, %27, %cst_12 {dimension_numbers = #tpu.dot_dimension_numbers<[1], [0], [0], [1], [0, 0, 1, 1], [], []>} : vector<128x256xbf16>, vector<256x768xbf16>, vector<128x768xf32> -> vector<128x768xf32>
    %c0_13 = arith.constant 0 : index
    %c0_14 = arith.constant 0 : index
    %29 = vector.load %arg5[%c0_13, %c0_14] : memref<1x768xf32, #tpu.memory_space<vmem>>, vector<1x768xf32>
    %30 = vector.broadcast %29 : vector<1x768xf32> to vector<128x768xf32>
    %31 = arith.addf %28, %30 : vector<128x768xf32>
    %32 = arith.truncf %31 : vector<128x768xf32> to vector<128x768xbf16>
    %33 = vector.extract_strided_slice %32 {offsets = [0, 0], sizes = [128, 128], strides = [1, 1]} : vector<128x768xbf16> to vector<128x128xbf16>
    %34 = vector.extract_strided_slice %32 {offsets = [0, 256], sizes = [128, 128], strides = [1, 1]} : vector<128x768xbf16> to vector<128x128xbf16>
    %35 = vector.extract_strided_slice %32 {offsets = [0, 512], sizes = [128, 128], strides = [1, 1]} : vector<128x768xbf16> to vector<128x128xbf16>
    %cst_15 = arith.constant dense<0.000000e+00> : vector<128x128xf32>
    %36 = tpu.matmul %33, %34, %cst_15 {dimension_numbers = #tpu.dot_dimension_numbers<[1], [1], [0], [0], [0, 0, 1, 0], [], []>} : vector<128x128xbf16>, vector<128x128xbf16>, vector<128x128xf32> -> vector<128x128xf32>
    %cst_16 = arith.constant dense<0xFF800000> : vector<128xf32>
    %37 = vector.multi_reduction <maximumf>, %36, %cst_16 [1] : vector<128x128xf32> to vector<128xf32>
    %38 = vector.shape_cast %37 : vector<128xf32> to vector<128x1xf32>
    %39 = vector.broadcast %38 : vector<128x1xf32> to vector<128x128xf32>
    %40 = arith.subf %36, %39 : vector<128x128xf32>
    %41 = math.exp %40 : vector<128x128xf32>
    %cst_17 = arith.constant dense<0.000000e+00> : vector<128xf32>
    %42 = vector.multi_reduction <add>, %41, %cst_17 [1] : vector<128x128xf32> to vector<128xf32>
    %43 = vector.shape_cast %42 : vector<128xf32> to vector<128x1xf32>
    %44 = tpu.reciprocal %43 {approx = true} : vector<128x1xf32> -> vector<128x1xf32>
    %45 = vector.broadcast %44 : vector<128x1xf32> to vector<128x128xf32>
    %46 = arith.mulf %41, %45 : vector<128x128xf32>
    %47 = arith.truncf %46 : vector<128x128xf32> to vector<128x128xbf16>
    %cst_18 = arith.constant dense<0.000000e+00> : vector<128x128xf32>
    %48 = tpu.matmul %47, %35, %cst_18 {dimension_numbers = #tpu.dot_dimension_numbers<[1], [0], [0], [1], [0, 0, 1, 1], [], []>} : vector<128x128xbf16>, vector<128x128xbf16>, vector<128x128xf32> -> vector<128x128xf32>
    %49 = arith.truncf %48 : vector<128x128xf32> to vector<128x128xbf16>
    %c0_19 = arith.constant 0 : index
    %c0_20 = arith.constant 0 : index
    %50 = vector.load %arg15[%c0_19, %c0_20] : memref<128x256xbf16, #tpu.memory_space<vmem>>, vector<128x128xbf16>
    tpu.vector_store %arg15[%c0_19, %c0_20], %49 {strides = array<i32>} : memref<128x256xbf16, #tpu.memory_space<vmem>>, vector<128x128xbf16>,
    %51 = vector.extract_strided_slice %32 {offsets = [0, 128], sizes = [128, 128], strides = [1, 1]} : vector<128x768xbf16> to vector<128x128xbf16>
    %52 = vector.extract_strided_slice %32 {offsets = [0, 384], sizes = [128, 128], strides = [1, 1]} : vector<128x768xbf16> to vector<128x128xbf16>
    %53 = vector.extract_strided_slice %32 {offsets = [0, 640], sizes = [128, 128], strides = [1, 1]} : vector<128x768xbf16> to vector<128x128xbf16>
    %cst_21 = arith.constant dense<0.000000e+00> : vector<128x128xf32>
    %54 = tpu.matmul %51, %52, %cst_21 {dimension_numbers = #tpu.dot_dimension_numbers<[1], [1], [0], [0], [0, 0, 1, 0], [], []>} : vector<128x128xbf16>, vector<128x128xbf16>, vector<128x128xf32> -> vector<128x128xf32>
    %cst_22 = arith.constant dense<0xFF800000> : vector<128xf32>
    %55 = vector.multi_reduction <maximumf>, %54, %cst_22 [1] : vector<128x128xf32> to vector<128xf32>
    %56 = vector.shape_cast %55 : vector<128xf32> to vector<128x1xf32>
    %57 = vector.broadcast %56 : vector<128x1xf32> to vector<128x128xf32>
    %58 = arith.subf %54, %57 : vector<128x128xf32>
    %59 = math.exp %58 : vector<128x128xf32>
    %cst_23 = arith.constant dense<0.000000e+00> : vector<128xf32>
    %60 = vector.multi_reduction <add>, %59, %cst_23 [1] : vector<128x128xf32> to vector<128xf32>
    %61 = vector.shape_cast %60 : vector<128xf32> to vector<128x1xf32>
    %62 = tpu.reciprocal %61 {approx = true} : vector<128x1xf32> -> vector<128x1xf32>
    %63 = vector.broadcast %62 : vector<128x1xf32> to vector<128x128xf32>
    %64 = arith.mulf %59, %63 : vector<128x128xf32>
    %65 = arith.truncf %64 : vector<128x128xf32> to vector<128x128xbf16>
    %cst_24 = arith.constant dense<0.000000e+00> : vector<128x128xf32>
    %66 = tpu.matmul %65, %53, %cst_24 {dimension_numbers = #tpu.dot_dimension_numbers<[1], [0], [0], [1], [0, 0, 1, 1], [], []>} : vector<128x128xbf16>, vector<128x128xbf16>, vector<128x128xf32> -> vector<128x128xf32>
    %67 = arith.truncf %66 : vector<128x128xf32> to vector<128x128xbf16>
    %c0_25 = arith.constant 0 : index
    %c128 = arith.constant 128 : index
    %68 = vector.load %arg15[%c0_25, %c128] : memref<128x256xbf16, #tpu.memory_space<vmem>>, vector<128x128xbf16>
    tpu.vector_store %arg15[%c0_25, %c128], %67 {strides = array<i32>} : memref<128x256xbf16, #tpu.memory_space<vmem>>, vector<128x128xbf16>,
    %c0_26 = arith.constant 0 : index
    %c0_27 = arith.constant 0 : index
    %69 = vector.load %arg15[%c0_26, %c0_27] : memref<128x256xbf16, #tpu.memory_space<vmem>>, vector<128x256xbf16>
    %c0_28 = arith.constant 0 : index
    %c0_29 = arith.constant 0 : index
    %70 = vector.load %arg6[%c0_28, %c0_29] : memref<256x256xbf16, #tpu.memory_space<vmem>>, vector<256x256xbf16>
    %cst_30 = arith.constant dense<0.000000e+00> : vector<128x256xf32>
    %71 = tpu.matmul %69, %70, %cst_30 {dimension_numbers = #tpu.dot_dimension_numbers<[1], [0], [0], [1], [0, 0, 1, 1], [], []>} : vector<128x256xbf16>, vector<256x256xbf16>, vector<128x256xf32> -> vector<128x256xf32>
    %72 = arith.addf %1, %71 : vector<128x256xf32>
    %c0_31 = arith.constant 0 : index
    %c0_32 = arith.constant 0 : index
    %73 = vector.load %arg7[%c0_31, %c0_32] : memref<1x256xf32, #tpu.memory_space<vmem>>, vector<1x256xf32>
    %74 = vector.broadcast %73 : vector<1x256xf32> to vector<128x256xf32>
    %75 = arith.addf %72, %74 : vector<128x256xf32>
    %c0_33 = arith.constant 0 : index
    %c0_34 = arith.constant 0 : index
    %76 = vector.load %arg8[%c0_33, %c0_34] : memref<1x256xf32, #tpu.memory_space<vmem>>, vector<1x256xf32>
    %c0_35 = arith.constant 0 : index
    %c0_36 = arith.constant 0 : index
    %77 = vector.load %arg9[%c0_35, %c0_36] : memref<1x256xf32, #tpu.memory_space<vmem>>, vector<1x256xf32>
    %cst_37 = arith.constant dense<0.000000e+00> : vector<128xf32>
    %78 = vector.multi_reduction <add>, %75, %cst_37 [1] : vector<128x256xf32> to vector<128xf32>
    %79 = vector.shape_cast %78 : vector<128xf32> to vector<128x1xf32>
    %cst_38 = arith.constant 2.560000e+02 : f32
    %80 = vector.broadcast %cst_38 : f32 to vector<128x1xf32>
    %81 = arith.divf %79, %80 : vector<128x1xf32>
    %82 = vector.broadcast %81 : vector<128x1xf32> to vector<128x256xf32>
    %83 = arith.subf %75, %82 : vector<128x256xf32>
    %84 = arith.mulf %83, %83 : vector<128x256xf32>
    %cst_39 = arith.constant dense<0.000000e+00> : vector<128xf32>
    %85 = vector.multi_reduction <add>, %84, %cst_39 [1] : vector<128x256xf32> to vector<128xf32>
    %86 = vector.shape_cast %85 : vector<128xf32> to vector<128x1xf32>
    %cst_40 = arith.constant 2.560000e+02 : f32
    %87 = vector.broadcast %cst_40 : f32 to vector<128x1xf32>
    %88 = arith.divf %86, %87 : vector<128x1xf32>
    %89 = vector.broadcast %81 : vector<128x1xf32> to vector<128x256xf32>
    %90 = arith.subf %75, %89 : vector<128x256xf32>
    %cst_41 = arith.constant 9.99999997E-7 : f32
    %91 = vector.broadcast %cst_41 : f32 to vector<128x1xf32>
    %92 = arith.addf %88, %91 : vector<128x1xf32>
    %93 = math.rsqrt %92 : vector<128x1xf32>
    %94 = vector.broadcast %93 : vector<128x1xf32> to vector<128x256xf32>
    %95 = arith.mulf %90, %94 : vector<128x256xf32>
    %96 = vector.broadcast %76 : vector<1x256xf32> to vector<128x256xf32>
    %97 = arith.mulf %95, %96 : vector<128x256xf32>
    %98 = vector.broadcast %77 : vector<1x256xf32> to vector<128x256xf32>
    %99 = arith.addf %97, %98 : vector<128x256xf32>
    %100 = arith.truncf %99 : vector<128x256xf32> to vector<128x256xbf16>
    %c0_42 = arith.constant 0 : index
    %c0_43 = arith.constant 0 : index
    %101 = vector.load %arg10[%c0_42, %c0_43] : memref<256x1024xbf16, #tpu.memory_space<vmem>>, vector<256x1024xbf16>
    %cst_44 = arith.constant dense<0.000000e+00> : vector<128x1024xf32>
    %102 = tpu.matmul %100, %101, %cst_44 {dimension_numbers = #tpu.dot_dimension_numbers<[1], [0], [0], [1], [0, 0, 1, 1], [], []>} : vector<128x256xbf16>, vector<256x1024xbf16>, vector<128x1024xf32> -> vector<128x1024xf32>
    %103 = arith.truncf %102 : vector<128x1024xf32> to vector<128x1024xbf16>
    %c0_45 = arith.constant 0 : index
    %c0_46 = arith.constant 0 : index
    %104 = vector.load %arg11[%c0_45, %c0_46] : memref<1x1024xbf16, #tpu.memory_space<vmem>>, vector<1x1024xbf16>
    %105 = vector.broadcast %104 : vector<1x1024xbf16> to vector<128x1024xbf16>
    %106 = arith.addf %103, %105 : vector<128x1024xbf16>
    %cst_47 = arith.constant 5.000000e-01 : bf16
    %107 = vector.broadcast %cst_47 : bf16 to vector<128x1024xbf16>
    %108 = arith.mulf %107, %106 : vector<128x1024xbf16>
    %cst_48 = arith.constant 4.467770e-02 : bf16
    %109 = vector.broadcast %cst_48 : bf16 to vector<128x1024xbf16>
    %110 = arith.mulf %109, %106 : vector<128x1024xbf16>
    %111 = arith.mulf %110, %106 : vector<128x1024xbf16>
    %112 = arith.mulf %111, %106 : vector<128x1024xbf16>
    %113 = arith.addf %106, %112 : vector<128x1024xbf16>
    %cst_49 = arith.constant 7.968750e-01 : bf16
    %114 = vector.broadcast %cst_49 : bf16 to vector<128x1024xbf16>
    %115 = arith.mulf %114, %113 : vector<128x1024xbf16>
    %116 = math.tanh %115 : vector<128x1024xbf16>
    %cst_50 = arith.constant 1.000000e+00 : bf16
    %117 = vector.broadcast %cst_50 : bf16 to vector<128x1024xbf16>
    %118 = arith.addf %117, %116 : vector<128x1024xbf16>
    %119 = arith.mulf %108, %118 : vector<128x1024xbf16>
    %c0_51 = arith.constant 0 : index
    %c0_52 = arith.constant 0 : index
    %120 = vector.load %arg12[%c0_51, %c0_52] : memref<1024x256xbf16, #tpu.memory_space<vmem>>, vector<1024x256xbf16>
    %cst_53 = arith.constant dense<0.000000e+00> : vector<128x256xf32>
    %121 = tpu.matmul %119, %120, %cst_53 {dimension_numbers = #tpu.dot_dimension_numbers<[1], [0], [0], [1], [0, 0, 1, 1], [], []>} : vector<128x1024xbf16>, vector<1024x256xbf16>, vector<128x256xf32> -> vector<128x256xf32>
    %c0_54 = arith.constant 0 : index
    %c0_55 = arith.constant 0 : index
    %122 = vector.load %arg13[%c0_54, %c0_55] : memref<1x256xf32, #tpu.memory_space<vmem>>, vector<1x256xf32>
    %123 = vector.broadcast %122 : vector<1x256xf32> to vector<128x256xf32>
    %124 = arith.addf %121, %123 : vector<128x256xf32>
    %125 = arith.addf %75, %124 : vector<128x256xf32>
    %c0_56 = arith.constant 0 : index
    %c0_57 = arith.constant 0 : index
    %c0_58 = arith.constant 0 : index
    %126 = vector.load %arg14[%c0_56, %c0_57, %c0_58] : memref<1x128x256xf32, #tpu.memory_space<vmem>>, vector<1x128x256xf32>
    %127 = vector.shape_cast %126 : vector<1x128x256xf32> to vector<128x256xf32>
    %128 = vector.shape_cast %125 : vector<128x256xf32> to vector<1x128x256xf32>
    tpu.vector_store %arg14[%c0_56, %c0_57, %c0_58], %128 {strides = array<i32>} : memref<1x128x256xf32, #tpu.memory_space<vmem>>, vector<1x128x256xf32>,
    return
  }
  func.func @transform_0(%arg0: i32) -> (i32, i32, i32) {
    %c0_i32 = arith.constant 0 : i32
    %c0_i32_0 = arith.constant 0 : i32
    %c0_i32_1 = arith.constant 0 : i32
    return %arg0, %c0_i32, %c0_i32_0 : i32, i32, i32
  }
  func.func @transform_1(%arg0: i32) -> (i32, i32) {
    %c0_i32 = arith.constant 0 : i32
    %c0_i32_0 = arith.constant 0 : i32
    %c0_i32_1 = arith.constant 0 : i32
    return %c0_i32, %c0_i32_0 : i32, i32
  }
  func.func @transform_2(%arg0: i32) -> (i32, i32) {
    %c0_i32 = arith.constant 0 : i32
    %c0_i32_0 = arith.constant 0 : i32
    %c0_i32_1 = arith.constant 0 : i32
    return %c0_i32, %c0_i32_0 : i32, i32
  }
  func.func @transform_3(%arg0: i32) -> (i32, i32) {
    %c0_i32 = arith.constant 0 : i32
    %c0_i32_0 = arith.constant 0 : i32
    %c0_i32_1 = arith.constant 0 : i32
    return %c0_i32, %c0_i32_0 : i32, i32
  }
  func.func @transform_4(%arg0: i32) -> (i32, i32) {
    %c0_i32 = arith.constant 0 : i32
    %c0_i32_0 = arith.constant 0 : i32
    %c0_i32_1 = arith.constant 0 : i32
    return %c0_i32, %c0_i32_0 : i32, i32
  }
  func.func @transform_5(%arg0: i32) -> (i32, i32) {
    %c0_i32 = arith.constant 0 : i32
    %c0_i32_0 = arith.constant 0 : i32
    %c0_i32_1 = arith.constant 0 : i32
    return %c0_i32, %c0_i32_0 : i32, i32
  }
  func.func @transform_6(%arg0: i32) -> (i32, i32) {
    %c0_i32 = arith.constant 0 : i32
    %c0_i32_0 = arith.constant 0 : i32
    %c0_i32_1 = arith.constant 0 : i32
    return %c0_i32, %c0_i32_0 : i32, i32
  }
  func.func @transform_7(%arg0: i32) -> (i32, i32) {
    %c0_i32 = arith.constant 0 : i32
    %c0_i32_0 = arith.constant 0 : i32
    %c0_i32_1 = arith.constant 0 : i32
    return %c0_i32, %c0_i32_0 : i32, i32
  }
  func.func @transform_8(%arg0: i32) -> (i32, i32) {
    %c0_i32 = arith.constant 0 : i32
    %c0_i32_0 = arith.constant 0 : i32
    %c0_i32_1 = arith.constant 0 : i32
    return %c0_i32, %c0_i32_0 : i32, i32
  }
  func.func @transform_9(%arg0: i32) -> (i32, i32) {
    %c0_i32 = arith.constant 0 : i32
    %c0_i32_0 = arith.constant 0 : i32
    %c0_i32_1 = arith.constant 0 : i32
    return %c0_i32, %c0_i32_0 : i32, i32
  }
  func.func @transform_10(%arg0: i32) -> (i32, i32) {
    %c0_i32 = arith.constant 0 : i32
    %c0_i32_0 = arith.constant 0 : i32
    %c0_i32_1 = arith.constant 0 : i32
    return %c0_i32, %c0_i32_0 : i32, i32
  }
  func.func @transform_11(%arg0: i32) -> (i32, i32) {
    %c0_i32 = arith.constant 0 : i32
    %c0_i32_0 = arith.constant 0 : i32
    %c0_i32_1 = arith.constant 0 : i32
    return %c0_i32, %c0_i32_0 : i32, i32
  }
  func.func @transform_12(%arg0: i32) -> (i32, i32) {
    %c0_i32 = arith.constant 0 : i32
    %c0_i32_0 = arith.constant 0 : i32
    %c0_i32_1 = arith.constant 0 : i32
    return %c0_i32, %c0_i32_0 : i32, i32
  }
  func.func @transform_13(%arg0: i32) -> (i32, i32, i32) {
    %c0_i32 = arith.constant 0 : i32
    %c0_i32_0 = arith.constant 0 : i32
    %c0_i32_1 = arith.constant 0 : i32
    return %arg0, %c0_i32, %c0_i32_0 : i32, i32, i32
  }
}

</mosaic_0001>

<llo_original>
// kernel: tpu_custom_call.1
$region0: #{tpu_custom_call.1}
  #allocation0 [shape = 'u32[]', space=smem, size = 0x4, offset = 0x4, fixed_abs, tag = 'smem constant byte address 0x4 - core index']
  #allocation1 [shape = 'u32[144,128]{1,0:T(1,128)}', space=vmem, size = 0x12000, scoped, tag = 'internal scratch']
  #allocation2 [shape = 'bf16[128,256]{1,0:T(16,128)(2,1)}', space=vmem, size = 0x10000, scoped, tag = 'scratch operand']
  %s0 = inlined_call_operand.hbm [shape: f32[2,128,256], index: 0, kind: input, shape index: {}, may-alias: {0,13}]
  %s1 = inlined_call_operand.vmem [shape: f32[1,256], index: 1, kind: input, shape index: {}]
  %s2 = inlined_call_operand.vmem [shape: f32[1,256], index: 2, kind: input, shape index: {}]
  %s3 = inlined_call_operand.hbm [shape: bf16[256,768], index: 3, kind: input, shape index: {}]
  %s4 = inlined_call_operand.vmem [shape: f32[1,768], index: 4, kind: input, shape index: {}]
  %s5 = inlined_call_operand.hbm [shape: bf16[256,256], index: 5, kind: input, shape index: {}]
  %s6 = inlined_call_operand.vmem [shape: f32[1,256], index: 6, kind: input, shape index: {}]
  %s7 = inlined_call_operand.vmem [shape: f32[1,256], index: 7, kind: input, shape index: {}]
  %s8 = inlined_call_operand.vmem [shape: f32[1,256], index: 8, kind: input, shape index: {}]
  %s9 = inlined_call_operand.vmem [shape: bf16[256,1024], index: 9, kind: input, shape index: {}]
  %s10 = inlined_call_operand.vmem [shape: bf16[1,1024], index: 10, kind: input, shape index: {}]
  %s11 = inlined_call_operand.hbm [shape: bf16[1024,256], index: 11, kind: input, shape index: {}]
  %s12 = inlined_call_operand.vmem [shape: f32[1,256], index: 12, kind: input, shape index: {}]
  %s13 = inlined_call_operand.hbm [shape: f32[2,128,256], index: 13, kind: output, shape index: {}, may-alias: {0,13}]
  %s14 = sld [smem:[#allocation0]]
  $region101: #{tpu_custom_call.1} parent=0
    _
  %s16 = ssub.s32 1, %s14
  %s17 = scalar_select 0, %s16, %s14
  $region1: #{tpu_custom_call.1} parent=0
    #allocation3 [shape = 'u8[262144]{0}', space=vmem, size = 0x40000, scoped, tag = 'input window, operand 0']
    #allocation4 [shape = 's32[2]{0}', space=sflag, size = 0x8, scoped, tag = 'scoped memory for tpu_custom_call.1']
    #allocation5 [shape = 's32[2]{0}', space=sflag, size = 0x8, scoped, tag = 'scoped memory for tpu_custom_call.1']
    #allocation6 [shape = 'u8[393216]{0}', space=vmem, size = 0x60000, scoped, tag = 'input window, operand 3, single buffered']
    #allocation7 [shape = 's32[1]{0}', space=sflag, size = 0x4, scoped, tag = 'scoped memory for tpu_custom_call.1']
    #allocation8 [shape = 'u8[131072]{0}', space=vmem, size = 0x20000, scoped, tag = 'input window, operand 5, single buffered']
    #allocation9 [shape = 'u8[524288]{0}', space=vmem, size = 0x80000, scoped, tag = 'input window, operand 11, single buffered']
    #allocation10 [shape = 's32[1]{0}', space=sflag, size = 0x4, scoped, tag = 'scoped memory for tpu_custom_call.1']
    #allocation11 [shape = 'u8[262144]{0}', space=vmem, size = 0x40000, scoped, tag = 'output window, operand 0']
    %18 = vsyncpa [#allocation4], 0
    %s19 = scalar_lea.sflag [#allocation4], 1
    %20 = vsyncpa %s19, 0
    %21 = vsyncpa [#allocation7], 0
    %22 = vsyncpa [#allocation10], 0
    %23 = vsyncpa [#allocation5], 0
    %s24 = scalar_lea.sflag [#allocation5], 1
    %25 = vsyncpa %s24, 0
    loop: start=0, step=1, limit=4
    $region2: #{tpu_custom_call.1} parent=1 // loop_pre_header
      _
    $region3: #{tpu_custom_call.1} parent=1 // loop_header
      %s27 = sphi 0, %s31
      %p28 = scmp.ge.s32.totalorder %s27, 4
      %s37 = sphi 0, %s39
      %s40 = sphi 0, %s37
      %s41 = sphi 0, %s40
      %s57 = sphi 0, %s41
      %s61 = sphi 0, %s61
      %s63 = sphi 0, %s61
      %s64 = sphi 0, %s63
      %s78 = sphi 0, %s64
      %s82 = sphi 0, %s82
      %s84 = sphi 0, %s82
      %s85 = sphi 0, %s84
      %s99 = sphi 0, %s85
      %s103 = sphi 0, %s103
      %s105 = sphi 0, %s103
      %s106 = sphi 0, %s105
      %s120 = sphi 0, %s106
      %s124 = sphi 0, %s124
      %s126 = sphi 0, %s124
      %s127 = sphi 0, %s126
      %s141 = sphi 0, %s127
      %s145 = sphi 0, %s145
      %s147 = sphi 0, %s145
      %s148 = sphi 0, %s147
      %s162 = sphi 0, %s148
      %s166 = sphi 0, %s166
      %s168 = sphi 0, %s166
      %s169 = sphi 0, %s168
      %s183 = sphi 0, %s169
      %s187 = sphi 0, %s187
      %s189 = sphi 0, %s187
      %s190 = sphi 0, %s189
      %s204 = sphi 0, %s190
      %s208 = sphi 0, %s208
      %s210 = sphi 0, %s208
      %s211 = sphi 0, %s210
      %s225 = sphi 0, %s211
      %s229 = sphi 0, %s229
      %s231 = sphi 0, %s229
      %s232 = sphi 0, %s231
      %s246 = sphi 0, %s232
      %s250 = sphi 0, %s250
      %s252 = sphi 0, %s250
      %s253 = sphi 0, %s252
      %s267 = sphi 0, %s253
      %s271 = sphi 0, %s271
      %s273 = sphi 0, %s271
      %s274 = sphi 0, %s273
      %s288 = sphi 0, %s274
      %s292 = sphi 0, %s292
      %s294 = sphi 0, %s292
      %s295 = sphi 0, %s294
      %s309 = sphi 0, %s295
      %s315 = sphi 0, %s317
      %s318 = sphi 0, %s315
      %s319 = sphi 0, %s318
      %s335 = sphi 0, %s319
    $region4: #{tpu_custom_call.1} parent=1 // loop_header_branch
      %30 = sbr.rel (%p28) target = $region8
    $region5: #{tpu_custom_call.1} parent=1 // loop_body
      %s32 = ssub.s32 %s27, 1
      %s33 = ssub.s32 %s27, 2
      %s34 = sadd.s32 %s27, 1
      %s35 = ssub.s32 %s27, %s34
      %p36 = scmp.eq.s32.totalorder %s35, 0
      %s38 = sadd.s32 %s37, 1
      %s39 = scalar_select %p36, %s37, %s38
      %p42 = pneg %p36
      %p43 = scmp.eq.s32.totalorder %s27, 1
      %p44 = por %p42, %p43
      %p45 = scmp.ne.s32.totalorder %s37, %s40
      %p46 = scmp.eq.s32.totalorder %s27, 0
      %p47 = por %p45, %p46
      %p48 = scmp.ne.s32.totalorder %s37, %s40
      %p49 = scmp.eq.s32.totalorder %s32, 1
      %p50 = por %p48, %p49
      %p51 = scmp.ne.s32.totalorder %s40, %s41
      %p52 = scmp.eq.s32.totalorder %s32, 0
      %p53 = por %p51, %p52
      %p54 = scmp.ne.s32.totalorder %s40, %s41
      %p55 = scmp.eq.s32.totalorder %s33, 1
      %p56 = por %p54, %p55
      %p58 = scmp.ne.s32.totalorder %s41, %s57
      %p59 = scmp.eq.s32.totalorder %s33, 0
      %p60 = por %p58, %p59
      %s62 = sadd.s32 %s61, 1
      %p65 = scmp.eq.s32.totalorder %s27, 1
      %p66 = scmp.ne.s32.totalorder %s61, %s63
      %p67 = scmp.eq.s32.totalorder %s27, 0
      %p68 = por %p66, %p67
      %p69 = scmp.ne.s32.totalorder %s61, %s63
      %p70 = scmp.eq.s32.totalorder %s32, 1
      %p71 = por %p69, %p70
      %p72 = scmp.ne.s32.totalorder %s63, %s64
      %p73 = scmp.eq.s32.totalorder %s32, 0
      %p74 = por %p72, %p73
      %p75 = scmp.ne.s32.totalorder %s63, %s64
      %p76 = scmp.eq.s32.totalorder %s33, 1
      %p77 = por %p75, %p76
      %p79 = scmp.ne.s32.totalorder %s64, %s78
      %p80 = scmp.eq.s32.totalorder %s33, 0
      %p81 = por %p79, %p80
      %s83 = sadd.s32 %s82, 1
      %p86 = scmp.eq.s32.totalorder %s27, 1
      %p87 = scmp.ne.s32.totalorder %s82, %s84
      %p88 = scmp.eq.s32.totalorder %s27, 0
      %p89 = por %p87, %p88
      %p90 = scmp.ne.s32.totalorder %s82, %s84
      %p91 = scmp.eq.s32.totalorder %s32, 1
      %p92 = por %p90, %p91
      %p93 = scmp.ne.s32.totalorder %s84, %s85
      %p94 = scmp.eq.s32.totalorder %s32, 0
      %p95 = por %p93, %p94
      %p96 = scmp.ne.s32.totalorder %s84, %s85
      %p97 = scmp.eq.s32.totalorder %s33, 1
      %p98 = por %p96, %p97
      %p100 = scmp.ne.s32.totalorder %s85, %s99
      %p101 = scmp.eq.s32.totalorder %s33, 0
      %p102 = por %p100, %p101
      %s104 = sadd.s32 %s103, 1
      %p107 = scmp.eq.s32.totalorder %s27, 1
      %p108 = scmp.ne.s32.totalorder %s103, %s105
      %p109 = scmp.eq.s32.totalorder %s27, 0
      %p110 = por %p108, %p109
      %p111 = scmp.ne.s32.totalorder %s103, %s105
      %p112 = scmp.eq.s32.totalorder %s32, 1
      %p113 = por %p111, %p112
      %p114 = scmp.ne.s32.totalorder %s105, %s106
      %p115 = scmp.eq.s32.totalorder %s32, 0
      %p116 = por %p114, %p115
      %p117 = scmp.ne.s32.totalorder %s105, %s106
      %p118 = scmp.eq.s32.totalorder %s33, 1
      %p119 = por %p117, %p118
      %p121 = scmp.ne.s32.totalorder %s106, %s120
      %p122 = scmp.eq.s32.totalorder %s33, 0
      %p123 = por %p121, %p122
      %s125 = sadd.s32 %s124, 1
      %p128 = scmp.eq.s32.totalorder %s27, 1
      %p129 = scmp.ne.s32.totalorder %s124, %s126
      %p130 = scmp.eq.s32.totalorder %s27, 0
      %p131 = por %p129, %p130
      %p132 = scmp.ne.s32.totalorder %s124, %s126
      %p133 = scmp.eq.s32.totalorder %s32, 1
      %p134 = por %p132, %p133
      %p135 = scmp.ne.s32.totalorder %s126, %s127
      %p136 = scmp.eq.s32.totalorder %s32, 0
      %p137 = por %p135, %p136
      %p138 = scmp.ne.s32.totalorder %s126, %s127
      %p139 = scmp.eq.s32.totalorder %s33, 1
      %p140 = por %p138, %p139
      %p142 = scmp.ne.s32.totalorder %s127, %s141
      %p143 = scmp.eq.s32.totalorder %s33, 0
      %p144 = por %p142, %p143
      %s146 = sadd.s32 %s145, 1
      %p149 = scmp.eq.s32.totalorder %s27, 1
      %p150 = scmp.ne.s32.totalorder %s145, %s147
      %p151 = scmp.eq.s32.totalorder %s27, 0
      %p152 = por %p150, %p151
      %p153 = scmp.ne.s32.totalorder %s145, %s147
      %p154 = scmp.eq.s32.totalorder %s32, 1
      %p155 = por %p153, %p154
      %p156 = scmp.ne.s32.totalorder %s147, %s148
      %p157 = scmp.eq.s32.totalorder %s32, 0
      %p158 = por %p156, %p157
      %p159 = scmp.ne.s32.totalorder %s147, %s148
      %p160 = scmp.eq.s32.totalorder %s33, 1
      %p161 = por %p159, %p160
      %p163 = scmp.ne.s32.totalorder %s148, %s162
      %p164 = scmp.eq.s32.totalorder %s33, 0
      %p165 = por %p163, %p164
      %s167 = sadd.s32 %s166, 1
      %p170 = scmp.eq.s32.totalorder %s27, 1
      %p171 = scmp.ne.s32.totalorder %s166, %s168
      %p172 = scmp.eq.s32.totalorder %s27, 0
      %p173 = por %p171, %p172
      %p174 = scmp.ne.s32.totalorder %s166, %s168
      %p175 = scmp.eq.s32.totalorder %s32, 1
      %p176 = por %p174, %p175
      %p177 = scmp.ne.s32.totalorder %s168, %s169
      %p178 = scmp.eq.s32.totalorder %s32, 0
      %p179 = por %p177, %p178
      %p180 = scmp.ne.s32.totalorder %s168, %s169
      %p181 = scmp.eq.s32.totalorder %s33, 1
      %p182 = por %p180, %p181
      %p184 = scmp.ne.s32.totalorder %s169, %s183
      %p185 = scmp.eq.s32.totalorder %s33, 0
      %p186 = por %p184, %p185
      %s188 = sadd.s32 %s187, 1
      %p191 = scmp.eq.s32.totalorder %s27, 1
      %p192 = scmp.ne.s32.totalorder %s187, %s189
      %p193 = scmp.eq.s32.totalorder %s27, 0
      %p194 = por %p192, %p193
      %p195 = scmp.ne.s32.totalorder %s187, %s189
      %p196 = scmp.eq.s32.totalorder %s32, 1
      %p197 = por %p195, %p196
      %p198 = scmp.ne.s32.totalorder %s189, %s190
      %p199 = scmp.eq.s32.totalorder %s32, 0
      %p200 = por %p198, %p199
      %p201 = scmp.ne.s32.totalorder %s189, %s190
      %p202 = scmp.eq.s32.totalorder %s33, 1
      %p203 = por %p201, %p202
      %p205 = scmp.ne.s32.totalorder %s190, %s204
      %p206 = scmp.eq.s32.totalorder %s33, 0
      %p207 = por %p205, %p206
      %s209 = sadd.s32 %s208, 1
      %p212 = scmp.eq.s32.totalorder %s27, 1
      %p213 = scmp.ne.s32.totalorder %s208, %s210
      %p214 = scmp.eq.s32.totalorder %s27, 0
      %p215 = por %p213, %p214
      %p216 = scmp.ne.s32.totalorder %s208, %s210
      %p217 = scmp.eq.s32.totalorder %s32, 1
      %p218 = por %p216, %p217
      %p219 = scmp.ne.s32.totalorder %s210, %s211
      %p220 = scmp.eq.s32.totalorder %s32, 0
      %p221 = por %p219, %p220
      %p222 = scmp.ne.s32.totalorder %s210, %s211
      %p223 = scmp.eq.s32.totalorder %s33, 1
      %p224 = por %p222, %p223
      %p226 = scmp.ne.s32.totalorder %s211, %s225
      %p227 = scmp.eq.s32.totalorder %s33, 0
      %p228 = por %p226, %p227
      %s230 = sadd.s32 %s229, 1
      %p233 = scmp.eq.s32.totalorder %s27, 1
      %p234 = scmp.ne.s32.totalorder %s229, %s231
      %p235 = scmp.eq.s32.totalorder %s27, 0
      %p236 = por %p234, %p235
      %p237 = scmp.ne.s32.totalorder %s229, %s231
      %p238 = scmp.eq.s32.totalorder %s32, 1
      %p239 = por %p237, %p238
      %p240 = scmp.ne.s32.totalorder %s231, %s232
      %p241 = scmp.eq.s32.totalorder %s32, 0
      %p242 = por %p240, %p241
      %p243 = scmp.ne.s32.totalorder %s231, %s232
      %p244 = scmp.eq.s32.totalorder %s33, 1
      %p245 = por %p243, %p244
      %p247 = scmp.ne.s32.totalorder %s232, %s246
      %p248 = scmp.eq.s32.totalorder %s33, 0
      %p249 = por %p247, %p248
      %s251 = sadd.s32 %s250, 1
      %p254 = scmp.eq.s32.totalorder %s27, 1
      %p255 = scmp.ne.s32.totalorder %s250, %s252
      %p256 = scmp.eq.s32.totalorder %s27, 0
      %p257 = por %p255, %p256
      %p258 = scmp.ne.s32.totalorder %s250, %s252
      %p259 = scmp.eq.s32.totalorder %s32, 1
      %p260 = por %p258, %p259
      %p261 = scmp.ne.s32.totalorder %s252, %s253
      %p262 = scmp.eq.s32.totalorder %s32, 0
      %p263 = por %p261, %p262
      %p264 = scmp.ne.s32.totalorder %s252, %s253
      %p265 = scmp.eq.s32.totalorder %s33, 1
      %p266 = por %p264, %p265
      %p268 = scmp.ne.s32.totalorder %s253, %s267
      %p269 = scmp.eq.s32.totalorder %s33, 0
      %p270 = por %p268, %p269
      %s272 = sadd.s32 %s271, 1
      %p275 = scmp.eq.s32.totalorder %s27, 1
      %p276 = scmp.ne.s32.totalorder %s271, %s273
      %p277 = scmp.eq.s32.totalorder %s27, 0
      %p278 = por %p276, %p277
      %p279 = scmp.ne.s32.totalorder %s271, %s273
      %p280 = scmp.eq.s32.totalorder %s32, 1
      %p281 = por %p279, %p280
      %p282 = scmp.ne.s32.totalorder %s273, %s274
      %p283 = scmp.eq.s32.totalorder %s32, 0
      %p284 = por %p282, %p283
      %p285 = scmp.ne.s32.totalorder %s273, %s274
      %p286 = scmp.eq.s32.totalorder %s33, 1
      %p287 = por %p285, %p286
      %p289 = scmp.ne.s32.totalorder %s274, %s288
      %p290 = scmp.eq.s32.totalorder %s33, 0
      %p291 = por %p289, %p290
      %s293 = sadd.s32 %s292, 1
      %p296 = scmp.eq.s32.totalorder %s27, 1
      %p297 = scmp.ne.s32.totalorder %s292, %s294
      %p298 = scmp.eq.s32.totalorder %s27, 0
      %p299 = por %p297, %p298
      %p300 = scmp.ne.s32.totalorder %s292, %s294
      %p301 = scmp.eq.s32.totalorder %s32, 1
      %p302 = por %p300, %p301
      %p303 = scmp.ne.s32.totalorder %s294, %s295
      %p304 = scmp.eq.s32.totalorder %s32, 0
      %p305 = por %p303, %p304
      %p306 = scmp.ne.s32.totalorder %s294, %s295
      %p307 = scmp.eq.s32.totalorder %s33, 1
      %p308 = por %p306, %p307
      %p310 = scmp.ne.s32.totalorder %s295, %s309
      %p311 = scmp.eq.s32.totalorder %s33, 0
      %p312 = por %p310, %p311
      %s313 = ssub.s32 %s27, %s34
      %p314 = scmp.eq.s32.totalorder %s313, 0
      %s316 = sadd.s32 %s315, 1
      %s317 = scalar_select %p314, %s315, %s316
      %p320 = pneg %p314
      %p321 = scmp.eq.s32.totalorder %s27, 1
      %p322 = por %p320, %p321
      %p323 = scmp.ne.s32.totalorder %s315, %s318
      %p324 = scmp.eq.s32.totalorder %s27, 0
      %p325 = por %p323, %p324
      %p326 = scmp.ne.s32.totalorder %s315, %s318
      %p327 = scmp.eq.s32.totalorder %s32, 1
      %p328 = por %p326, %p327
      %p329 = scmp.ne.s32.totalorder %s318, %s319
      %p330 = scmp.eq.s32.totalorder %s32, 0
      %p331 = por %p329, %p330
      %p332 = scmp.ne.s32.totalorder %s318, %s319
      %p333 = scmp.eq.s32.totalorder %s33, 1
      %p334 = por %p332, %p333
      %p336 = scmp.ne.s32.totalorder %s319, %s335
      %p337 = scmp.eq.s32.totalorder %s33, 0
      %p338 = por %p336, %p337
      %p339 = scmp.le.s32.totalorder 1, %s27
      %p340 = scmp.lt.s32.totalorder %s27, 3
      %p341 = pnand %p339, %p340
      %p342 = pneg %p341
      // Predicated region
      $region9: #{tpu_custom_call.1} parent=5 // pred_check
        _
      $region10: #{tpu_custom_call.1} parent=5 // pred_check_branch
        %344 = sbr.rel (%p341) target = $region12
      $region11: #{tpu_custom_call.1} parent=5 // pred_region
        %s345 = ssub.s32 %s27, 1
        // Predicated region
        $region13: #{tpu_custom_call.1} parent=11 // pred_check
          %p346 = pneg %p74
        $region14: #{tpu_custom_call.1} parent=11 // pred_check_branch
          %348 = sbr.rel (%p346) target = $region16
        $region15: #{tpu_custom_call.1} parent=11 // pred_region
          _
        $region16: #{tpu_custom_call.1} parent=11 // pred_fallthru
          _
        // Predicated region
        $region17: #{tpu_custom_call.1} parent=11 // pred_check
          %p349 = pneg %p95
        $region18: #{tpu_custom_call.1} parent=11 // pred_check_branch
          %351 = sbr.rel (%p349) target = $region20
        $region19: #{tpu_custom_call.1} parent=11 // pred_region
          _
        $region20: #{tpu_custom_call.1} parent=11 // pred_fallthru
          _
        // Predicated region
        $region21: #{tpu_custom_call.1} parent=11 // pred_check
          %p352 = pneg %p116
        $region22: #{tpu_custom_call.1} parent=11 // pred_check_branch
          %354 = sbr.rel (%p352) target = $region24
        $region23: #{tpu_custom_call.1} parent=11 // pred_region
          %s356 = ssub.s32 12288, 12288
          %357 = vsyncadd [#allocation7], %s356
          %s358 = sshll.u32 [#allocation6], 4
          %s359 = int_to_ptr.vmem [resolvable:$true] %s358
          %364 = dma.hbm_to_vmem [thread:$0]  %s3, 12288, %s359, [#allocation7], 384, 384, 24
        $region24: #{tpu_custom_call.1} parent=11 // pred_fallthru
          _
        // Predicated region
        $region25: #{tpu_custom_call.1} parent=11 // pred_check
          %p365 = pneg %p137
        $region26: #{tpu_custom_call.1} parent=11 // pred_check_branch
          %367 = sbr.rel (%p365) target = $region28
        $region27: #{tpu_custom_call.1} parent=11 // pred_region
          _
        $region28: #{tpu_custom_call.1} parent=11 // pred_fallthru
          _
        // Predicated region
        $region29: #{tpu_custom_call.1} parent=11 // pred_check
          %p368 = pneg %p158
        $region30: #{tpu_custom_call.1} parent=11 // pred_check_branch
          %370 = sbr.rel (%p368) target = $region32
        $region31: #{tpu_custom_call.1} parent=11 // pred_region
          %s372 = ssub.s32 4096, 4096
          %373 = vsyncadd [#allocation7], %s372
          %s374 = sshll.u32 [#allocation8], 4
          %s375 = int_to_ptr.vmem [resolvable:$true] %s374
          %380 = dma.hbm_to_vmem [thread:$0]  %s5, 4096, %s375, [#allocation7], 128, 128, 8
        $region32: #{tpu_custom_call.1} parent=11 // pred_fallthru
          _
        // Predicated region
        $region33: #{tpu_custom_call.1} parent=11 // pred_check
          %p381 = pneg %p179
        $region34: #{tpu_custom_call.1} parent=11 // pred_check_branch
          %383 = sbr.rel (%p381) target = $region36
        $region35: #{tpu_custom_call.1} parent=11 // pred_region
          _
        $region36: #{tpu_custom_call.1} parent=11 // pred_fallthru
          _
        // Predicated region
        $region37: #{tpu_custom_call.1} parent=11 // pred_check
          %p384 = pneg %p200
        $region38: #{tpu_custom_call.1} parent=11 // pred_check_branch
          %386 = sbr.rel (%p384) target = $region40
        $region39: #{tpu_custom_call.1} parent=11 // pred_region
          _
        $region40: #{tpu_custom_call.1} parent=11 // pred_fallthru
          _
        // Predicated region
        $region41: #{tpu_custom_call.1} parent=11 // pred_check
          %p387 = pneg %p221
        $region42: #{tpu_custom_call.1} parent=11 // pred_check_branch
          %389 = sbr.rel (%p387) target = $region44
        $region43: #{tpu_custom_call.1} parent=11 // pred_region
          _
        $region44: #{tpu_custom_call.1} parent=11 // pred_fallthru
          _
        // Predicated region
        $region45: #{tpu_custom_call.1} parent=11 // pred_check
          %p390 = pneg %p242
        $region46: #{tpu_custom_call.1} parent=11 // pred_check_branch
          %392 = sbr.rel (%p390) target = $region48
        $region47: #{tpu_custom_call.1} parent=11 // pred_region
          _
        $region48: #{tpu_custom_call.1} parent=11 // pred_fallthru
          _
        // Predicated region
        $region49: #{tpu_custom_call.1} parent=11 // pred_check
          %p393 = pneg %p263
        $region50: #{tpu_custom_call.1} parent=11 // pred_check_branch
          %395 = sbr.rel (%p393) target = $region52
        $region51: #{tpu_custom_call.1} parent=11 // pred_region
          _
        $region52: #{tpu_custom_call.1} parent=11 // pred_fallthru
          _
        // Predicated region
        $region53: #{tpu_custom_call.1} parent=11 // pred_check
          %p396 = pneg %p284
        $region54: #{tpu_custom_call.1} parent=11 // pred_check_branch
          %398 = sbr.rel (%p396) target = $region56
        $region55: #{tpu_custom_call.1} parent=11 // pred_region
          %s400 = ssub.s32 16384, 16384
          %401 = vsyncadd [#allocation10], %s400
          %s402 = sshll.u32 [#allocation9], 4
          %s403 = int_to_ptr.vmem [resolvable:$true] %s402
          %408 = dma.hbm_to_vmem [thread:$0]  %s11, 16384, %s403, [#allocation10], 128, 128, 8
        $region56: #{tpu_custom_call.1} parent=11 // pred_fallthru
          _
        // Predicated region
        $region57: #{tpu_custom_call.1} parent=11 // pred_check
          %p409 = pneg %p305
        $region58: #{tpu_custom_call.1} parent=11 // pred_check_branch
          %411 = sbr.rel (%p409) target = $region60
        $region59: #{tpu_custom_call.1} parent=11 // pred_region
          _
        $region60: #{tpu_custom_call.1} parent=11 // pred_fallthru
          _
      $region12: #{tpu_custom_call.1} parent=5 // pred_fallthru
        _
      %p412 = scmp.lt.s32.totalorder %s27, 2
      // Predicated region
      $region61: #{tpu_custom_call.1} parent=5 // pred_check
        %p413 = pneg %p412
      $region62: #{tpu_custom_call.1} parent=5 // pred_check_branch
        %415 = sbr.rel (%p413) target = $region64
      $region63: #{tpu_custom_call.1} parent=5 // pred_region
        // Predicated region
        $region65: #{tpu_custom_call.1} parent=63 // pred_check
          %p416 = pneg %p47
        $region66: #{tpu_custom_call.1} parent=63 // pred_check_branch
          %418 = sbr.rel (%p416) target = $region68
        $region67: #{tpu_custom_call.1} parent=63 // pred_region
          %s419 = sand.u32 %s37, 1
          %s420 = scalar_lea.sflag [#allocation4], %s419
          %s421 = sand.u32 %s37, 1
          %s422 = smul.addr %s421, 256
          %s423 = scalar_lea.vmem [#allocation3], %s422
          %s425 = ssub.s32 4096, 4096
          %426 = vsyncadd %s420, %s425
          %s427 = smul.addr %s27, 32
          %s428 = smul.addr %s427, 128
          %s429 = scalar_lea.hbm %s0, %s428
          %s430 = sshll.u32 %s423, 4
          %s431 = int_to_ptr.vmem [resolvable:$true] %s430
          %436 = dma.hbm_to_vmem [thread:$0]  %s429, 4096, %s431, %s420, 256, 256, 16
        $region68: #{tpu_custom_call.1} parent=63 // pred_fallthru
          _
      $region64: #{tpu_custom_call.1} parent=5 // pred_fallthru
        _
      %p437 = scmp.le.s32.totalorder 1, %s27
      %p438 = scmp.lt.s32.totalorder %s27, 3
      %p439 = pnand %p437, %p438
      %p440 = pneg %p439
      // Predicated region
      $region69: #{tpu_custom_call.1} parent=5 // pred_check
        _
      $region70: #{tpu_custom_call.1} parent=5 // pred_check_branch
        %442 = sbr.rel (%p439) target = $region72
      $region71: #{tpu_custom_call.1} parent=5 // pred_region
        %s443 = ssub.s32 %s27, 1
        %s444 = sand.u32 %s40, 1
        %s445 = scalar_lea.sflag [#allocation4], %s444
        %s446 = sand.u32 %s40, 1
        %s447 = smul.addr %s446, 256
        %s448 = scalar_lea.vmem [#allocation3], %s447
        // Predicated region
        $region73: #{tpu_custom_call.1} parent=71 // pred_check
          %p449 = pneg %p53
        $region74: #{tpu_custom_call.1} parent=71 // pred_check_branch
          %451 = sbr.rel (%p449) target = $region76
        $region75: #{tpu_custom_call.1} parent=71 // pred_region
          %452 = dma.done %s445, 4096
        $region76: #{tpu_custom_call.1} parent=71 // pred_fallthru
          _
        // Predicated region
        $region77: #{tpu_custom_call.1} parent=71 // pred_check
          %p453 = pneg %p116
        $region78: #{tpu_custom_call.1} parent=71 // pred_check_branch
          %455 = sbr.rel (%p453) target = $region80
        $region79: #{tpu_custom_call.1} parent=71 // pred_region
          %456 = dma.done [#allocation7], 12288
        $region80: #{tpu_custom_call.1} parent=71 // pred_fallthru
          _
        // Predicated region
        $region81: #{tpu_custom_call.1} parent=71 // pred_check
          %p457 = pneg %p158
        $region82: #{tpu_custom_call.1} parent=71 // pred_check_branch
          %459 = sbr.rel (%p457) target = $region84
        $region83: #{tpu_custom_call.1} parent=71 // pred_region
          %460 = dma.done [#allocation7], 4096
        $region84: #{tpu_custom_call.1} parent=71 // pred_fallthru
          _
        // Predicated region
        $region85: #{tpu_custom_call.1} parent=71 // pred_check
          %p461 = pneg %p284
        $region86: #{tpu_custom_call.1} parent=71 // pred_check_branch
          %463 = sbr.rel (%p461) target = $region88
        $region87: #{tpu_custom_call.1} parent=71 // pred_region
          %464 = dma.done [#allocation10], 16384
        $region88: #{tpu_custom_call.1} parent=71 // pred_fallthru
          _
        %s465 = sand.u32 %s40, 1
        %s466 = scalar_lea.sflag [#allocation4], %s465
        %s467 = sand.u32 %s40, 1
        %s468 = smul.addr %s467, 256
        %s469 = scalar_lea.vmem [#allocation3], %s468
        %p470 = pneg %p53
        %p471 = pneg %p50
        %p472 = pneg %p74
        %p473 = pneg %p71
        %p474 = pneg %p95
        %p475 = pneg %p92
        %p476 = pneg %p116
        %p477 = pneg %p113
        %p478 = pneg %p137
        %p479 = pneg %p134
        %p480 = pneg %p158
        %p481 = pneg %p155
        %p482 = pneg %p179
        %p483 = pneg %p176
        %p484 = pneg %p200
        %p485 = pneg %p197
        %p486 = pneg %p221
        %p487 = pneg %p218
        %p488 = pneg %p242
        %p489 = pneg %p239
        %p490 = pneg %p263
        %p491 = pneg %p260
        %p492 = pneg %p284
        %p493 = pneg %p281
        %p494 = pneg %p305
        %p495 = pneg %p302
        %p496 = pneg %p331
        %p497 = pneg %p328
        %s498 = sand.u32 %s318, 1
        %s499 = scalar_lea.sflag [#allocation5], %s498
        %s500 = sand.u32 %s318, 1
        %s501 = smul.addr %s500, 256
        %s502 = scalar_lea.vmem [#allocation11], %s501
        %v508 = vld [vmem:[%s448] sm:$0xff]
        %v509 = vld [vmem:[%s448 + $0x8] sm:$0xff]
        %v510 = vld [vmem:[%s448 + $0x10] sm:$0xff]
        %v511 = vld [vmem:[%s448 + $0x18] sm:$0xff]
        %v512 = vld [vmem:[%s448 + $0x20] sm:$0xff]
        %v513 = vld [vmem:[%s448 + $0x28] sm:$0xff]
        %v514 = vld [vmem:[%s448 + $0x30] sm:$0xff]
        %v515 = vld [vmem:[%s448 + $0x38] sm:$0xff]
        %v516 = vld [vmem:[%s448 + $0x40] sm:$0xff]
        %v517 = vld [vmem:[%s448 + $0x48] sm:$0xff]
        %v518 = vld [vmem:[%s448 + $0x50] sm:$0xff]
        %v519 = vld [vmem:[%s448 + $0x58] sm:$0xff]
        %v520 = vld [vmem:[%s448 + $0x60] sm:$0xff]
        %v521 = vld [vmem:[%s448 + $0x68] sm:$0xff]
        %v522 = vld [vmem:[%s448 + $0x70] sm:$0xff]
        %v523 = vld [vmem:[%s448 + $0x78] sm:$0xff]
        %v524 = vld [vmem:[%s448 + $0x80] sm:$0xff]
        %v525 = vld [vmem:[%s448 + $0x88] sm:$0xff]
        %v526 = vld [vmem:[%s448 + $0x90] sm:$0xff]
        %v527 = vld [vmem:[%s448 + $0x98] sm:$0xff]
        %v528 = vld [vmem:[%s448 + $0xa0] sm:$0xff]
        %v529 = vld [vmem:[%s448 + $0xa8] sm:$0xff]
        %v530 = vld [vmem:[%s448 + $0xb0] sm:$0xff]
        %v531 = vld [vmem:[%s448 + $0xb8] sm:$0xff]
        %v532 = vld [vmem:[%s448 + $0xc0] sm:$0xff]
        %v533 = vld [vmem:[%s448 + $0xc8] sm:$0xff]
        %v534 = vld [vmem:[%s448 + $0xd0] sm:$0xff]
        %v535 = vld [vmem:[%s448 + $0xd8] sm:$0xff]
        %v536 = vld [vmem:[%s448 + $0xe0] sm:$0xff]
        %v537 = vld [vmem:[%s448 + $0xe8] sm:$0xff]
        %v538 = vld [vmem:[%s448 + $0xf0] sm:$0xff]
        %v539 = vld [vmem:[%s448 + $0xf8] sm:$0xff]
        %v540 = vld [vmem:[%s1] sm:$0x3]
        %v541 = vld [vmem:[%s2] sm:$0x3]
        %v542 = vadd.f32 %v508, %v509
        %543 = vadd.xlane.f32.xlu0 %v542
        %v544 = vpop.xlane.xlu0 %543
        %v545 = vadd.f32 %v510, %v511
        %546 = vadd.xlane.f32.xlu0 %v545
        %v547 = vpop.xlane.xlu0 %546
        %v548 = vadd.f32 %v512, %v513
        %549 = vadd.xlane.f32.xlu0 %v548
        %v550 = vpop.xlane.xlu0 %549
        %v551 = vadd.f32 %v514, %v515
        %552 = vadd.xlane.f32.xlu0 %v551
        %v553 = vpop.xlane.xlu0 %552
        %v554 = vadd.f32 %v516, %v517
        %555 = vadd.xlane.f32.xlu0 %v554
        %v556 = vpop.xlane.xlu0 %555
        %v557 = vadd.f32 %v518, %v519
        %558 = vadd.xlane.f32.xlu0 %v557
        %v559 = vpop.xlane.xlu0 %558
        %v560 = vadd.f32 %v520, %v521
        %561 = vadd.xlane.f32.xlu0 %v560
        %v562 = vpop.xlane.xlu0 %561
        %v563 = vadd.f32 %v522, %v523
        %564 = vadd.xlane.f32.xlu0 %v563
        %v565 = vpop.xlane.xlu0 %564
        %v566 = vadd.f32 %v524, %v525
        %567 = vadd.xlane.f32.xlu0 %v566
        %v568 = vpop.xlane.xlu0 %567
        %v569 = vadd.f32 %v526, %v527
        %570 = vadd.xlane.f32.xlu0 %v569
        %v571 = vpop.xlane.xlu0 %570
        %v572 = vadd.f32 %v528, %v529
        %573 = vadd.xlane.f32.xlu0 %v572
        %v574 = vpop.xlane.xlu0 %573
        %v575 = vadd.f32 %v530, %v531
        %576 = vadd.xlane.f32.xlu0 %v575
        %v577 = vpop.xlane.xlu0 %576
        %v578 = vadd.f32 %v532, %v533
        %579 = vadd.xlane.f32.xlu0 %v578
        %v580 = vpop.xlane.xlu0 %579
        %v581 = vadd.f32 %v534, %v535
        %582 = vadd.xlane.f32.xlu0 %v581
        %v583 = vpop.xlane.xlu0 %582
        %v584 = vadd.f32 %v536, %v537
        %585 = vadd.xlane.f32.xlu0 %v584
        %v586 = vpop.xlane.xlu0 %585
        %v587 = vadd.f32 %v538, %v539
        %588 = vadd.xlane.f32.xlu0 %v587
        %v589 = vpop.xlane.xlu0 %588
        %v590 = vrcp.pop 256.0
        %v591 = vmul.f32 %v544, %v590
        %v592 = vmul.f32 %v547, %v590
        %v593 = vmul.f32 %v550, %v590
        %v594 = vmul.f32 %v553, %v590
        %v595 = vmul.f32 %v556, %v590
        %v596 = vmul.f32 %v559, %v590
        %v597 = vmul.f32 %v562, %v590
        %v598 = vmul.f32 %v565, %v590
        %v599 = vmul.f32 %v568, %v590
        %v600 = vmul.f32 %v571, %v590
        %v601 = vmul.f32 %v574, %v590
        %v602 = vmul.f32 %v577, %v590
        %v603 = vmul.f32 %v580, %v590
        %v604 = vmul.f32 %v583, %v590
        %v605 = vmul.f32 %v586, %v590
        %v606 = vmul.f32 %v589, %v590
        %v607 = vsub.f32 %v508, %v591
        %v608 = vsub.f32 %v509, %v591
        %v609 = vsub.f32 %v510, %v592
        %v610 = vsub.f32 %v511, %v592
        %v611 = vsub.f32 %v512, %v593
        %v612 = vsub.f32 %v513, %v593
        %v613 = vsub.f32 %v514, %v594
        %v614 = vsub.f32 %v515, %v594
        %v615 = vsub.f32 %v516, %v595
        %v616 = vsub.f32 %v517, %v595
        %v617 = vsub.f32 %v518, %v596
        %v618 = vsub.f32 %v519, %v596
        %v619 = vsub.f32 %v520, %v597
        %v620 = vsub.f32 %v521, %v597
        %v621 = vsub.f32 %v522, %v598
        %v622 = vsub.f32 %v523, %v598
        %v623 = vsub.f32 %v524, %v599
        %v624 = vsub.f32 %v525, %v599
        %v625 = vsub.f32 %v526, %v600
        %v626 = vsub.f32 %v527, %v600
        %v627 = vsub.f32 %v528, %v601
        %v628 = vsub.f32 %v529, %v601
        %v629 = vsub.f32 %v530, %v602
        %v630 = vsub.f32 %v531, %v602
        %v631 = vsub.f32 %v532, %v603
        %v632 = vsub.f32 %v533, %v603
        %v633 = vsub.f32 %v534, %v604
        %v634 = vsub.f32 %v535, %v604
        %v635 = vsub.f32 %v536, %v605
        %v636 = vsub.f32 %v537, %v605
        %v637 = vsub.f32 %v538, %v606
        %v638 = vsub.f32 %v539, %v606
        %v639 = vmul.f32 %v607, %v607
        %v640 = vmul.f32 %v608, %v608
        %v641 = vmul.f32 %v609, %v609
        %v642 = vmul.f32 %v610, %v610
        %v643 = vmul.f32 %v611, %v611
        %v644 = vmul.f32 %v612, %v612
        %v645 = vmul.f32 %v613, %v613
        %v646 = vmul.f32 %v614, %v614
        %v647 = vmul.f32 %v615, %v615
        %v648 = vmul.f32 %v616, %v616
        %v649 = vmul.f32 %v617, %v617
        %v650 = vmul.f32 %v618, %v618
        %v651 = vmul.f32 %v619, %v619
        %v652 = vmul.f32 %v620, %v620
        %v653 = vmul.f32 %v621, %v621
        %v654 = vmul.f32 %v622, %v622
        %v655 = vmul.f32 %v623, %v623
        %v656 = vmul.f32 %v624, %v624
        %v657 = vmul.f32 %v625, %v625
        %v658 = vmul.f32 %v626, %v626
        %v659 = vmul.f32 %v627, %v627
        %v660 = vmul.f32 %v628, %v628
        %v661 = vmul.f32 %v629, %v629
        %v662 = vmul.f32 %v630, %v630
        %v663 = vmul.f32 %v631, %v631
        %v664 = vmul.f32 %v632, %v632
        %v665 = vmul.f32 %v633, %v633
        %v666 = vmul.f32 %v634, %v634
        %v667 = vmul.f32 %v635, %v635
        %v668 = vmul.f32 %v636, %v636
        %v669 = vmul.f32 %v637, %v637
        %v670 = vmul.f32 %v638, %v638
        %v671 = vadd.f32 %v639, %v640
        %672 = vadd.xlane.f32.xlu0 %v671
        %v673 = vpop.xlane.xlu0 %672
        %v674 = vadd.f32 %v641, %v642
        %675 = vadd.xlane.f32.xlu0 %v674
        %v676 = vpop.xlane.xlu0 %675
        %v677 = vadd.f32 %v643, %v644
        %678 = vadd.xlane.f32.xlu0 %v677
        %v679 = vpop.xlane.xlu0 %678
        %v680 = vadd.f32 %v645, %v646
        %681 = vadd.xlane.f32.xlu0 %v680
        %v682 = vpop.xlane.xlu0 %681
        %v683 = vadd.f32 %v647, %v648
        %684 = vadd.xlane.f32.xlu0 %v683
        %v685 = vpop.xlane.xlu0 %684
        %v686 = vadd.f32 %v649, %v650
        %687 = vadd.xlane.f32.xlu0 %v686
        %v688 = vpop.xlane.xlu0 %687
        %v689 = vadd.f32 %v651, %v652
        %690 = vadd.xlane.f32.xlu0 %v689
        %v691 = vpop.xlane.xlu0 %690
        %v692 = vadd.f32 %v653, %v654
        %693 = vadd.xlane.f32.xlu0 %v692
        %v694 = vpop.xlane.xlu0 %693
        %v695 = vadd.f32 %v655, %v656
        %696 = vadd.xlane.f32.xlu0 %v695
        %v697 = vpop.xlane.xlu0 %696
        %v698 = vadd.f32 %v657, %v658
        %699 = vadd.xlane.f32.xlu0 %v698
        %v700 = vpop.xlane.xlu0 %699
        %v701 = vadd.f32 %v659, %v660
        %702 = vadd.xlane.f32.xlu0 %v701
        %v703 = vpop.xlane.xlu0 %702
        %v704 = vadd.f32 %v661, %v662
        %705 = vadd.xlane.f32.xlu0 %v704
        %v706 = vpop.xlane.xlu0 %705
        %v707 = vadd.f32 %v663, %v664
        %708 = vadd.xlane.f32.xlu0 %v707
        %v709 = vpop.xlane.xlu0 %708
        %v710 = vadd.f32 %v665, %v666
        %711 = vadd.xlane.f32.xlu0 %v710
        %v712 = vpop.xlane.xlu0 %711
        %v713 = vadd.f32 %v667, %v668
        %714 = vadd.xlane.f32.xlu0 %v713
        %v715 = vpop.xlane.xlu0 %714
        %v716 = vadd.f32 %v669, %v670
        %717 = vadd.xlane.f32.xlu0 %v716
        %v718 = vpop.xlane.xlu0 %717
        %v719 = vmul.f32 %v673, %v590
        %v720 = vmul.f32 %v676, %v590
        %v721 = vmul.f32 %v679, %v590
        %v722 = vmul.f32 %v682, %v590
        %v723 = vmul.f32 %v685, %v590
        %v724 = vmul.f32 %v688, %v590
        %v725 = vmul.f32 %v691, %v590
        %v726 = vmul.f32 %v694, %v590
        %v727 = vmul.f32 %v697, %v590
        %v728 = vmul.f32 %v700, %v590
        %v729 = vmul.f32 %v703, %v590
        %v730 = vmul.f32 %v706, %v590
        %v731 = vmul.f32 %v709, %v590
        %v732 = vmul.f32 %v712, %v590
        %v733 = vmul.f32 %v715, %v590
        %v734 = vmul.f32 %v718, %v590
        %v735 = vadd.f32 %v719, 1e-06
        %v736 = vadd.f32 %v720, 1e-06
        %v737 = vadd.f32 %v721, 1e-06
        %v738 = vadd.f32 %v722, 1e-06
        %v739 = vadd.f32 %v723, 1e-06
        %v740 = vadd.f32 %v724, 1e-06
        %v741 = vadd.f32 %v725, 1e-06
        %v742 = vadd.f32 %v726, 1e-06
        %v743 = vadd.f32 %v727, 1e-06
        %v744 = vadd.f32 %v728, 1e-06
        %v745 = vadd.f32 %v729, 1e-06
        %v746 = vadd.f32 %v730, 1e-06
        %v747 = vadd.f32 %v731, 1e-06
        %v748 = vadd.f32 %v732, 1e-06
        %v749 = vadd.f32 %v733, 1e-06
        %v750 = vadd.f32 %v734, 1e-06
        %v751 = vrsqrt.pop %v735
        %v752 = vrsqrt.pop %v736
        %v753 = vrsqrt.pop %v737
        %v754 = vrsqrt.pop %v738
        %v755 = vrsqrt.pop %v739
        %v756 = vrsqrt.pop %v740
        %v757 = vrsqrt.pop %v741
        %v758 = vrsqrt.pop %v742
        %v759 = vrsqrt.pop %v743
        %v760 = vrsqrt.pop %v744
        %v761 = vrsqrt.pop %v745
        %v762 = vrsqrt.pop %v746
        %v763 = vrsqrt.pop %v747
        %v764 = vrsqrt.pop %v748
        %v765 = vrsqrt.pop %v749
        %v766 = vrsqrt.pop %v750
        %v767 = vmul.f32 %v607, %v751
        %v768 = vmul.f32 %v608, %v751
        %v769 = vmul.f32 %v609, %v752
        %v770 = vmul.f32 %v610, %v752
        %v771 = vmul.f32 %v611, %v753
        %v772 = vmul.f32 %v612, %v753
        %v773 = vmul.f32 %v613, %v754
        %v774 = vmul.f32 %v614, %v754
        %v775 = vmul.f32 %v615, %v755
        %v776 = vmul.f32 %v616, %v755
        %v777 = vmul.f32 %v617, %v756
        %v778 = vmul.f32 %v618, %v756
        %v779 = vmul.f32 %v619, %v757
        %v780 = vmul.f32 %v620, %v757
        %v781 = vmul.f32 %v621, %v758
        %v782 = vmul.f32 %v622, %v758
        %v783 = vmul.f32 %v623, %v759
        %v784 = vmul.f32 %v624, %v759
        %v785 = vmul.f32 %v625, %v760
        %v786 = vmul.f32 %v626, %v760
        %v787 = vmul.f32 %v627, %v761
        %v788 = vmul.f32 %v628, %v761
        %v789 = vmul.f32 %v629, %v762
        %v790 = vmul.f32 %v630, %v762
        %v791 = vmul.f32 %v631, %v763
        %v792 = vmul.f32 %v632, %v763
        %v793 = vmul.f32 %v633, %v764
        %v794 = vmul.f32 %v634, %v764
        %v795 = vmul.f32 %v635, %v765
        %v796 = vmul.f32 %v636, %v765
        %v797 = vmul.f32 %v637, %v766
        %v798 = vmul.f32 %v638, %v766
        %v800 = vlaneseq
        %v801 = vshrl.u32 %v800, 7
        %v802 = vsub.s32 0, %v801
        %v803 = vrot.slane %v540, %v802
        %v804 = vlaneseq
        %v805 = vshrl.u32 %v804, 7
        %v806 = vsub.s32 1, %v805
        %v807 = vrot.slane %v540, %v806
        %v810 = vmul.f32 %v767, %v803
        %v811 = vmul.f32 %v768, %v807
        %v812 = vmul.f32 %v769, %v803
        %v813 = vmul.f32 %v770, %v807
        %v814 = vmul.f32 %v771, %v803
        %v815 = vmul.f32 %v772, %v807
        %v816 = vmul.f32 %v773, %v803
        %v817 = vmul.f32 %v774, %v807
        %v818 = vmul.f32 %v775, %v803
        %v819 = vmul.f32 %v776, %v807
        %v820 = vmul.f32 %v777, %v803
        %v821 = vmul.f32 %v778, %v807
        %v822 = vmul.f32 %v779, %v803
        %v823 = vmul.f32 %v780, %v807
        %v824 = vmul.f32 %v781, %v803
        %v825 = vmul.f32 %v782, %v807
        %v826 = vmul.f32 %v783, %v803
        %v827 = vmul.f32 %v784, %v807
        %v828 = vmul.f32 %v785, %v803
        %v829 = vmul.f32 %v786, %v807
        %v830 = vmul.f32 %v787, %v803
        %v831 = vmul.f32 %v788, %v807
        %v832 = vmul.f32 %v789, %v803
        %v833 = vmul.f32 %v790, %v807
        %v834 = vmul.f32 %v791, %v803
        %v835 = vmul.f32 %v792, %v807
        %v836 = vmul.f32 %v793, %v803
        %v837 = vmul.f32 %v794, %v807
        %v838 = vmul.f32 %v795, %v803
        %v839 = vmul.f32 %v796, %v807
        %v840 = vmul.f32 %v797, %v803
        %v841 = vmul.f32 %v798, %v807
        %v843 = vlaneseq
        %v844 = vshrl.u32 %v843, 7
        %v845 = vsub.s32 0, %v844
        %v846 = vrot.slane %v541, %v845
        %v847 = vlaneseq
        %v848 = vshrl.u32 %v847, 7
        %v849 = vsub.s32 1, %v848
        %v850 = vrot.slane %v541, %v849
        %v853 = vadd.f32 %v810, %v846
        %v854 = vadd.f32 %v811, %v850
        %v855 = vadd.f32 %v812, %v846
        %v856 = vadd.f32 %v813, %v850
        %v857 = vadd.f32 %v814, %v846
        %v858 = vadd.f32 %v815, %v850
        %v859 = vadd.f32 %v816, %v846
        %v860 = vadd.f32 %v817, %v850
        %v861 = vadd.f32 %v818, %v846
        %v862 = vadd.f32 %v819, %v850
        %v863 = vadd.f32 %v820, %v846
        %v864 = vadd.f32 %v821, %v850
        %v865 = vadd.f32 %v822, %v846
        %v866 = vadd.f32 %v823, %v850
        %v867 = vadd.f32 %v824, %v846
        %v868 = vadd.f32 %v825, %v850
        %v869 = vadd.f32 %v826, %v846
        %v870 = vadd.f32 %v827, %v850
        %v871 = vadd.f32 %v828, %v846
        %v872 = vadd.f32 %v829, %v850
        %v873 = vadd.f32 %v830, %v846
        %v874 = vadd.f32 %v831, %v850
        %v875 = vadd.f32 %v832, %v846
        %v876 = vadd.f32 %v833, %v850
        %v877 = vadd.f32 %v834, %v846
        %v878 = vadd.f32 %v835, %v850
        %v879 = vadd.f32 %v836, %v846
        %v880 = vadd.f32 %v837, %v850
        %v881 = vadd.f32 %v838, %v846
        %v882 = vadd.f32 %v839, %v850
        %v883 = vadd.f32 %v840, %v846
        %v884 = vadd.f32 %v841, %v850
        %v885 = vpack.c.bf16 %v855, %v853
        %v886 = vpack.c.bf16 %v856, %v854
        %v887 = vpack.c.bf16 %v859, %v857
        %v888 = vpack.c.bf16 %v860, %v858
        %v889 = vpack.c.bf16 %v863, %v861
        %v890 = vpack.c.bf16 %v864, %v862
        %v891 = vpack.c.bf16 %v867, %v865
        %v892 = vpack.c.bf16 %v868, %v866
        %v893 = vpack.c.bf16 %v871, %v869
        %v894 = vpack.c.bf16 %v872, %v870
        %v895 = vpack.c.bf16 %v875, %v873
        %v896 = vpack.c.bf16 %v876, %v874
        %v897 = vpack.c.bf16 %v879, %v877
        %v898 = vpack.c.bf16 %v880, %v878
        %v899 = vpack.c.bf16 %v883, %v881
        %v900 = vpack.c.bf16 %v884, %v882
        %v901 = vld [vmem:[#allocation6] sm:$0xff]
        %v902 = vld [vmem:[#allocation6 + $0x8] sm:$0xff]
        %v903 = vld [vmem:[#allocation6 + $0x10] sm:$0xff]
        %v904 = vld [vmem:[#allocation6 + $0x18] sm:$0xff]
        %v905 = vld [vmem:[#allocation6 + $0x20] sm:$0xff]
        %v906 = vld [vmem:[#allocation6 + $0x28] sm:$0xff]
        %v907 = vld [vmem:[#allocation6 + $0x30] sm:$0xff]
        %v908 = vld [vmem:[#allocation6 + $0x38] sm:$0xff]
        %v909 = vld [vmem:[#allocation6 + $0x40] sm:$0xff]
        %v910 = vld [vmem:[#allocation6 + $0x48] sm:$0xff]
        %v911 = vld [vmem:[#allocation6 + $0x50] sm:$0xff]
        %v912 = vld [vmem:[#allocation6 + $0x58] sm:$0xff]
        %v913 = vld [vmem:[#allocation6 + $0x60] sm:$0xff]
        %v914 = vld [vmem:[#allocation6 + $0x68] sm:$0xff]
        %v915 = vld [vmem:[#allocation6 + $0x70] sm:$0xff]
        %v916 = vld [vmem:[#allocation6 + $0x78] sm:$0xff]
        %v917 = vld [vmem:[#allocation6 + $0x80] sm:$0xff]
        %v918 = vld [vmem:[#allocation6 + $0x88] sm:$0xff]
        %v919 = vld [vmem:[#allocation6 + $0x90] sm:$0xff]
        %v920 = vld [vmem:[#allocation6 + $0x98] sm:$0xff]
        %v921 = vld [vmem:[#allocation6 + $0xa0] sm:$0xff]
        %v922 = vld [vmem:[#allocation6 + $0xa8] sm:$0xff]
        %v923 = vld [vmem:[#allocation6 + $0xb0] sm:$0xff]
        %v924 = vld [vmem:[#allocation6 + $0xb8] sm:$0xff]
        %v925 = vld [vmem:[#allocation6 + $0xc0] sm:$0xff]
        %v926 = vld [vmem:[#allocation6 + $0xc8] sm:$0xff]
        %v927 = vld [vmem:[#allocation6 + $0xd0] sm:$0xff]
        %v928 = vld [vmem:[#allocation6 + $0xd8] sm:$0xff]
        %v929 = vld [vmem:[#allocation6 + $0xe0] sm:$0xff]
        %v930 = vld [vmem:[#allocation6 + $0xe8] sm:$0xff]
        %v931 = vld [vmem:[#allocation6 + $0xf0] sm:$0xff]
        %v932 = vld [vmem:[#allocation6 + $0xf8] sm:$0xff]
        %v933 = vld [vmem:[#allocation6 + $0x100] sm:$0xff]
        %v934 = vld [vmem:[#allocation6 + $0x108] sm:$0xff]
        %v935 = vld [vmem:[#allocation6 + $0x110] sm:$0xff]
        %v936 = vld [vmem:[#allocation6 + $0x118] sm:$0xff]
        %v937 = vld [vmem:[#allocation6 + $0x120] sm:$0xff]
        %v938 = vld [vmem:[#allocation6 + $0x128] sm:$0xff]
        %v939 = vld [vmem:[#allocation6 + $0x130] sm:$0xff]
        %v940 = vld [vmem:[#allocation6 + $0x138] sm:$0xff]
        %v941 = vld [vmem:[#allocation6 + $0x140] sm:$0xff]
        %v942 = vld [vmem:[#allocation6 + $0x148] sm:$0xff]
        %v943 = vld [vmem:[#allocation6 + $0x150] sm:$0xff]
        %v944 = vld [vmem:[#allocation6 + $0x158] sm:$0xff]
        %v945 = vld [vmem:[#allocation6 + $0x160] sm:$0xff]
        %v946 = vld [vmem:[#allocation6 + $0x168] sm:$0xff]
        %v947 = vld [vmem:[#allocation6 + $0x170] sm:$0xff]
        %v948 = vld [vmem:[#allocation6 + $0x178] sm:$0xff]
        %v949 = vld [vmem:[#allocation6 + $0x180] sm:$0xff]
        %v950 = vld [vmem:[#allocation6 + $0x188] sm:$0xff]
        %v951 = vld [vmem:[#allocation6 + $0x190] sm:$0xff]
        %v952 = vld [vmem:[#allocation6 + $0x198] sm:$0xff]
        %v953 = vld [vmem:[#allocation6 + $0x1a0] sm:$0xff]
        %v954 = vld [vmem:[#allocation6 + $0x1a8] sm:$0xff]
        %v955 = vld [vmem:[#allocation6 + $0x1b0] sm:$0xff]
        %v956 = vld [vmem:[#allocation6 + $0x1b8] sm:$0xff]
        %v957 = vld [vmem:[#allocation6 + $0x1c0] sm:$0xff]
        %v958 = vld [vmem:[#allocation6 + $0x1c8] sm:$0xff]
        %v959 = vld [vmem:[#allocation6 + $0x1d0] sm:$0xff]
        %v960 = vld [vmem:[#allocation6 + $0x1d8] sm:$0xff]
        %v961 = vld [vmem:[#allocation6 + $0x1e0] sm:$0xff]
        %v962 = vld [vmem:[#allocation6 + $0x1e8] sm:$0xff]
        %v963 = vld [vmem:[#allocation6 + $0x1f0] sm:$0xff]
        %v964 = vld [vmem:[#allocation6 + $0x1f8] sm:$0xff]
        %v965 = vld [vmem:[#allocation6 + $0x200] sm:$0xff]
        %v966 = vld [vmem:[#allocation6 + $0x208] sm:$0xff]
        %v967 = vld [vmem:[#allocation6 + $0x210] sm:$0xff]
        %v968 = vld [vmem:[#allocation6 + $0x218] sm:$0xff]
        %v969 = vld [vmem:[#allocation6 + $0x220] sm:$0xff]
        %v970 = vld [vmem:[#allocation6 + $0x228] sm:$0xff]
        %v971 = vld [vmem:[#allocation6 + $0x230] sm:$0xff]
        %v972 = vld [vmem:[#allocation6 + $0x238] sm:$0xff]
        %v973 = vld [vmem:[#allocation6 + $0x240] sm:$0xff]
        %v974 = vld [vmem:[#allocation6 + $0x248] sm:$0xff]
        %v975 = vld [vmem:[#allocation6 + $0x250] sm:$0xff]
        %v976 = vld [vmem:[#allocation6 + $0x258] sm:$0xff]
        %v977 = vld [vmem:[#allocation6 + $0x260] sm:$0xff]
        %v978 = vld [vmem:[#allocation6 + $0x268] sm:$0xff]
        %v979 = vld [vmem:[#allocation6 + $0x270] sm:$0xff]
        %v980 = vld [vmem:[#allocation6 + $0x278] sm:$0xff]
        %v981 = vld [vmem:[#allocation6 + $0x280] sm:$0xff]
        %v982 = vld [vmem:[#allocation6 + $0x288] sm:$0xff]
        %v983 = vld [vmem:[#allocation6 + $0x290] sm:$0xff]
        %v984 = vld [vmem:[#allocation6 + $0x298] sm:$0xff]
        %v985 = vld [vmem:[#allocation6 + $0x2a0] sm:$0xff]
        %v986 = vld [vmem:[#allocation6 + $0x2a8] sm:$0xff]
        %v987 = vld [vmem:[#allocation6 + $0x2b0] sm:$0xff]
        %v988 = vld [vmem:[#allocation6 + $0x2b8] sm:$0xff]
        %v989 = vld [vmem:[#allocation6 + $0x2c0] sm:$0xff]
        %v990 = vld [vmem:[#allocation6 + $0x2c8] sm:$0xff]
        %v991 = vld [vmem:[#allocation6 + $0x2d0] sm:$0xff]
        %v992 = vld [vmem:[#allocation6 + $0x2d8] sm:$0xff]
        %v993 = vld [vmem:[#allocation6 + $0x2e0] sm:$0xff]
        %v994 = vld [vmem:[#allocation6 + $0x2e8] sm:$0xff]
        %v995 = vld [vmem:[#allocation6 + $0x2f0] sm:$0xff]
        %v996 = vld [vmem:[#allocation6 + $0x2f8] sm:$0xff]
        %v997 = vld [vmem:[%s4] sm:$0x3f]
        %v999 = vlaneseq
        %v1000 = vshrl.u32 %v999, 7
        %v1001 = vsub.s32 0, %v1000
        %v1002 = vrot.slane %v997, %v1001
        %v1003 = vlaneseq
        %v1004 = vshrl.u32 %v1003, 7
        %v1005 = vsub.s32 1, %v1004
        %v1006 = vrot.slane %v997, %v1005
        %v1007 = vlaneseq
        %v1008 = vshrl.u32 %v1007, 7
        %v1009 = vsub.s32 2, %v1008
        %v1010 = vrot.slane %v997, %v1009
        %v1011 = vlaneseq
        %v1012 = vshrl.u32 %v1011, 7
        %v1013 = vsub.s32 3, %v1012
        %v1014 = vrot.slane %v997, %v1013
        %v1015 = vlaneseq
        %v1016 = vshrl.u32 %v1015, 7
        %v1017 = vsub.s32 4, %v1016
        %v1018 = vrot.slane %v997, %v1017
        %v1019 = vlaneseq
        %v1020 = vshrl.u32 %v1019, 7
        %v1021 = vsub.s32 5, %v1020
        %v1022 = vrot.slane %v997, %v1021
        %v1125 = vunpack.c.l.b16 %v901
        %v1126 = vunpack.c.h.b16 %v901
        %v1127 = vunpack.c.l.b16 %v902
        %v1128 = vunpack.c.h.b16 %v902
        %v1129 = vunpack.c.l.b16 %v903
        %v1130 = vunpack.c.h.b16 %v903
        %v1131 = vunpack.c.l.b16 %v904
        %v1132 = vunpack.c.h.b16 %v904
        %v1133 = vunpack.c.l.b16 %v905
        %v1134 = vunpack.c.h.b16 %v905
        %v1135 = vunpack.c.l.b16 %v906
        %v1136 = vunpack.c.h.b16 %v906
        %v1137 = vunpack.c.l.b16 %v907
        %v1138 = vunpack.c.h.b16 %v907
        %v1139 = vunpack.c.l.b16 %v908
        %v1140 = vunpack.c.h.b16 %v908
        %v1141 = vunpack.c.l.b16 %v909
        %v1142 = vunpack.c.h.b16 %v909
        %v1143 = vunpack.c.l.b16 %v910
        %v1144 = vunpack.c.h.b16 %v910
        %v1145 = vunpack.c.l.b16 %v911
        %v1146 = vunpack.c.h.b16 %v911
        %v1147 = vunpack.c.l.b16 %v912
        %v1148 = vunpack.c.h.b16 %v912
        %v1149 = vunpack.c.l.b16 %v913
        %v1150 = vunpack.c.h.b16 %v913
        %v1151 = vunpack.c.l.b16 %v914
        %v1152 = vunpack.c.h.b16 %v914
        %v1153 = vunpack.c.l.b16 %v915
        %v1154 = vunpack.c.h.b16 %v915
        %v1155 = vunpack.c.l.b16 %v916
        %v1156 = vunpack.c.h.b16 %v916
        %v1157 = vunpack.c.l.b16 %v917
        %v1158 = vunpack.c.h.b16 %v917
        %v1159 = vunpack.c.l.b16 %v918
        %v1160 = vunpack.c.h.b16 %v918
        %v1161 = vunpack.c.l.b16 %v919
        %v1162 = vunpack.c.h.b16 %v919
        %v1163 = vunpack.c.l.b16 %v920
        %v1164 = vunpack.c.h.b16 %v920
        %v1165 = vunpack.c.l.b16 %v921
        %v1166 = vunpack.c.h.b16 %v921
        %v1167 = vunpack.c.l.b16 %v922
        %v1168 = vunpack.c.h.b16 %v922
        %v1169 = vunpack.c.l.b16 %v923
        %v1170 = vunpack.c.h.b16 %v923
        %v1171 = vunpack.c.l.b16 %v924
        %v1172 = vunpack.c.h.b16 %v924
        %v1173 = vunpack.c.l.b16 %v925
        %v1174 = vunpack.c.h.b16 %v925
        %v1175 = vunpack.c.l.b16 %v926
        %v1176 = vunpack.c.h.b16 %v926
        %v1177 = vunpack.c.l.b16 %v927
        %v1178 = vunpack.c.h.b16 %v927
        %v1179 = vunpack.c.l.b16 %v928
        %v1180 = vunpack.c.h.b16 %v928
        %v1181 = vunpack.c.l.b16 %v929
        %v1182 = vunpack.c.h.b16 %v929
        %v1183 = vunpack.c.l.b16 %v930
        %v1184 = vunpack.c.h.b16 %v930
        %v1185 = vunpack.c.l.b16 %v931
        %v1186 = vunpack.c.h.b16 %v931
        %v1187 = vunpack.c.l.b16 %v932
        %v1188 = vunpack.c.h.b16 %v932
        %v1189 = vunpack.c.l.b16 %v933
        %v1190 = vunpack.c.h.b16 %v933
        %v1191 = vunpack.c.l.b16 %v934
        %v1192 = vunpack.c.h.b16 %v934
        %v1193 = vunpack.c.l.b16 %v935
        %v1194 = vunpack.c.h.b16 %v935
        %v1195 = vunpack.c.l.b16 %v936
        %v1196 = vunpack.c.h.b16 %v936
        %v1197 = vunpack.c.l.b16 %v937
        %v1198 = vunpack.c.h.b16 %v937
        %v1199 = vunpack.c.l.b16 %v938
        %v1200 = vunpack.c.h.b16 %v938
        %v1201 = vunpack.c.l.b16 %v939
        %v1202 = vunpack.c.h.b16 %v939
        %v1203 = vunpack.c.l.b16 %v940
        %v1204 = vunpack.c.h.b16 %v940
        %v1205 = vunpack.c.l.b16 %v941
        %v1206 = vunpack.c.h.b16 %v941
        %v1207 = vunpack.c.l.b16 %v942
        %v1208 = vunpack.c.h.b16 %v942
        %v1209 = vunpack.c.l.b16 %v943
        %v1210 = vunpack.c.h.b16 %v943
        %v1211 = vunpack.c.l.b16 %v944
        %v1212 = vunpack.c.h.b16 %v944
        %v1213 = vunpack.c.l.b16 %v945
        %v1214 = vunpack.c.h.b16 %v945
        %v1215 = vunpack.c.l.b16 %v946
        %v1216 = vunpack.c.h.b16 %v946
        %v1217 = vunpack.c.l.b16 %v947
        %v1218 = vunpack.c.h.b16 %v947
        %v1219 = vunpack.c.l.b16 %v948
        %v1220 = vunpack.c.h.b16 %v948
        %v1221 = vunpack.c.l.b16 %v949
        %v1222 = vunpack.c.h.b16 %v949
        %v1223 = vunpack.c.l.b16 %v950
        %v1224 = vunpack.c.h.b16 %v950
        %v1225 = vunpack.c.l.b16 %v951
        %v1226 = vunpack.c.h.b16 %v951
        %v1227 = vunpack.c.l.b16 %v952
        %v1228 = vunpack.c.h.b16 %v952
        %v1229 = vunpack.c.l.b16 %v953
        %v1230 = vunpack.c.h.b16 %v953
        %v1231 = vunpack.c.l.b16 %v954
        %v1232 = vunpack.c.h.b16 %v954
        %v1233 = vunpack.c.l.b16 %v955
        %v1234 = vunpack.c.h.b16 %v955
        %v1235 = vunpack.c.l.b16 %v956
        %v1236 = vunpack.c.h.b16 %v956
        %v1237 = vunpack.c.l.b16 %v957
        %v1238 = vunpack.c.h.b16 %v957
        %v1239 = vunpack.c.l.b16 %v958
        %v1240 = vunpack.c.h.b16 %v958
        %v1241 = vunpack.c.l.b16 %v959
        %v1242 = vunpack.c.h.b16 %v959
        %v1243 = vunpack.c.l.b16 %v960
        %v1244 = vunpack.c.h.b16 %v960
        %v1245 = vunpack.c.l.b16 %v961
        %v1246 = vunpack.c.h.b16 %v961
        %v1247 = vunpack.c.l.b16 %v962
        %v1248 = vunpack.c.h.b16 %v962
        %v1249 = vunpack.c.l.b16 %v963
        %v1250 = vunpack.c.h.b16 %v963
        %v1251 = vunpack.c.l.b16 %v964
        %v1252 = vunpack.c.h.b16 %v964
        %v1253 = vunpack.c.l.b16 %v965
        %v1254 = vunpack.c.h.b16 %v965
        %v1255 = vunpack.c.l.b16 %v966
        %v1256 = vunpack.c.h.b16 %v966
        %v1257 = vunpack.c.l.b16 %v967
        %v1258 = vunpack.c.h.b16 %v967
        %v1259 = vunpack.c.l.b16 %v968
        %v1260 = vunpack.c.h.b16 %v968
        %v1261 = vunpack.c.l.b16 %v969
        %v1262 = vunpack.c.h.b16 %v969
        %v1263 = vunpack.c.l.b16 %v970
        %v1264 = vunpack.c.h.b16 %v970
        %v1265 = vunpack.c.l.b16 %v971
        %v1266 = vunpack.c.h.b16 %v971
        %v1267 = vunpack.c.l.b16 %v972
        %v1268 = vunpack.c.h.b16 %v972
        %v1269 = vunpack.c.l.b16 %v973
        %v1270 = vunpack.c.h.b16 %v973
        %v1271 = vunpack.c.l.b16 %v974
        %v1272 = vunpack.c.h.b16 %v974
        %v1273 = vunpack.c.l.b16 %v975
        %v1274 = vunpack.c.h.b16 %v975
        %v1275 = vunpack.c.l.b16 %v976
        %v1276 = vunpack.c.h.b16 %v976
        %v1277 = vunpack.c.l.b16 %v977
        %v1278 = vunpack.c.h.b16 %v977
        %v1279 = vunpack.c.l.b16 %v978
        %v1280 = vunpack.c.h.b16 %v978
        %v1281 = vunpack.c.l.b16 %v979
        %v1282 = vunpack.c.h.b16 %v979
        %v1283 = vunpack.c.l.b16 %v980
        %v1284 = vunpack.c.h.b16 %v980
        %v1285 = vunpack.c.l.b16 %v981
        %v1286 = vunpack.c.h.b16 %v981
        %v1287 = vunpack.c.l.b16 %v982
        %v1288 = vunpack.c.h.b16 %v982
        %v1289 = vunpack.c.l.b16 %v983
        %v1290 = vunpack.c.h.b16 %v983
        %v1291 = vunpack.c.l.b16 %v984
        %v1292 = vunpack.c.h.b16 %v984
        %v1293 = vunpack.c.l.b16 %v985
        %v1294 = vunpack.c.h.b16 %v985
        %v1295 = vunpack.c.l.b16 %v986
        %v1296 = vunpack.c.h.b16 %v986
        %v1297 = vunpack.c.l.b16 %v987
        %v1298 = vunpack.c.h.b16 %v987
        %v1299 = vunpack.c.l.b16 %v988
        %v1300 = vunpack.c.h.b16 %v988
        %v1301 = vunpack.c.l.b16 %v989
        %v1302 = vunpack.c.h.b16 %v989
        %v1303 = vunpack.c.l.b16 %v990
        %v1304 = vunpack.c.h.b16 %v990
        %v1305 = vunpack.c.l.b16 %v991
        %v1306 = vunpack.c.h.b16 %v991
        %v1307 = vunpack.c.l.b16 %v992
        %v1308 = vunpack.c.h.b16 %v992
        %v1309 = vunpack.c.l.b16 %v993
        %v1310 = vunpack.c.h.b16 %v993
        %v1311 = vunpack.c.l.b16 %v994
        %v1312 = vunpack.c.h.b16 %v994
        %v1313 = vunpack.c.l.b16 %v995
        %v1314 = vunpack.c.h.b16 %v995
        %v1315 = vunpack.c.l.b16 %v996
        %v1316 = vunpack.c.h.b16 %v996
        %v1317 = vpack.c.b16 %v1131, %v1125
        %v1318 = vpack.c.b16 %v1132, %v1126
        %v1319 = vpack.c.b16 %v1133, %v1127
        %v1320 = vpack.c.b16 %v1134, %v1128
        %v1321 = vpack.c.b16 %v1135, %v1129
        %v1322 = vpack.c.b16 %v1136, %v1130
        %v1323 = vpack.c.b16 %v1143, %v1137
        %v1324 = vpack.c.b16 %v1144, %v1138
        %v1325 = vpack.c.b16 %v1145, %v1139
        %v1326 = vpack.c.b16 %v1146, %v1140
        %v1327 = vpack.c.b16 %v1147, %v1141
        %v1328 = vpack.c.b16 %v1148, %v1142
        %v1329 = vpack.c.b16 %v1155, %v1149
        %v1330 = vpack.c.b16 %v1156, %v1150
        %v1331 = vpack.c.b16 %v1157, %v1151
        %v1332 = vpack.c.b16 %v1158, %v1152
        %v1333 = vpack.c.b16 %v1159, %v1153
        %v1334 = vpack.c.b16 %v1160, %v1154
        %v1335 = vpack.c.b16 %v1167, %v1161
        %v1336 = vpack.c.b16 %v1168, %v1162
        %v1337 = vpack.c.b16 %v1169, %v1163
        %v1338 = vpack.c.b16 %v1170, %v1164
        %v1339 = vpack.c.b16 %v1171, %v1165
        %v1340 = vpack.c.b16 %v1172, %v1166
        %v1341 = vpack.c.b16 %v1179, %v1173
        %v1342 = vpack.c.b16 %v1180, %v1174
        %v1343 = vpack.c.b16 %v1181, %v1175
        %v1344 = vpack.c.b16 %v1182, %v1176
        %v1345 = vpack.c.b16 %v1183, %v1177
        %v1346 = vpack.c.b16 %v1184, %v1178
        %v1347 = vpack.c.b16 %v1191, %v1185
        %v1348 = vpack.c.b16 %v1192, %v1186
        %v1349 = vpack.c.b16 %v1193, %v1187
        %v1350 = vpack.c.b16 %v1194, %v1188
        %v1351 = vpack.c.b16 %v1195, %v1189
        %v1352 = vpack.c.b16 %v1196, %v1190
        %v1353 = vpack.c.b16 %v1203, %v1197
        %v1354 = vpack.c.b16 %v1204, %v1198
        %v1355 = vpack.c.b16 %v1205, %v1199
        %v1356 = vpack.c.b16 %v1206, %v1200
        %v1357 = vpack.c.b16 %v1207, %v1201
        %v1358 = vpack.c.b16 %v1208, %v1202
        %v1359 = vpack.c.b16 %v1215, %v1209
        %v1360 = vpack.c.b16 %v1216, %v1210
        %v1361 = vpack.c.b16 %v1217, %v1211
        %v1362 = vpack.c.b16 %v1218, %v1212
        %v1363 = vpack.c.b16 %v1219, %v1213
        %v1364 = vpack.c.b16 %v1220, %v1214
        %v1365 = vpack.c.b16 %v1227, %v1221
        %v1366 = vpack.c.b16 %v1228, %v1222
        %v1367 = vpack.c.b16 %v1229, %v1223
        %v1368 = vpack.c.b16 %v1230, %v1224
        %v1369 = vpack.c.b16 %v1231, %v1225
        %v1370 = vpack.c.b16 %v1232, %v1226
        %v1371 = vpack.c.b16 %v1239, %v1233
        %v1372 = vpack.c.b16 %v1240, %v1234
        %v1373 = vpack.c.b16 %v1241, %v1235
        %v1374 = vpack.c.b16 %v1242, %v1236
        %v1375 = vpack.c.b16 %v1243, %v1237
        %v1376 = vpack.c.b16 %v1244, %v1238
        %v1377 = vpack.c.b16 %v1251, %v1245
        %v1378 = vpack.c.b16 %v1252, %v1246
        %v1379 = vpack.c.b16 %v1253, %v1247
        %v1380 = vpack.c.b16 %v1254, %v1248
        %v1381 = vpack.c.b16 %v1255, %v1249
        %v1382 = vpack.c.b16 %v1256, %v1250
        %v1383 = vpack.c.b16 %v1263, %v1257
        %v1384 = vpack.c.b16 %v1264, %v1258
        %v1385 = vpack.c.b16 %v1265, %v1259
        %v1386 = vpack.c.b16 %v1266, %v1260
        %v1387 = vpack.c.b16 %v1267, %v1261
        %v1388 = vpack.c.b16 %v1268, %v1262
        %v1389 = vpack.c.b16 %v1275, %v1269
        %v1390 = vpack.c.b16 %v1276, %v1270
        %v1391 = vpack.c.b16 %v1277, %v1271
        %v1392 = vpack.c.b16 %v1278, %v1272
        %v1393 = vpack.c.b16 %v1279, %v1273
        %v1394 = vpack.c.b16 %v1280, %v1274
        %v1395 = vpack.c.b16 %v1287, %v1281
        %v1396 = vpack.c.b16 %v1288, %v1282
        %v1397 = vpack.c.b16 %v1289, %v1283
        %v1398 = vpack.c.b16 %v1290, %v1284
        %v1399 = vpack.c.b16 %v1291, %v1285
        %v1400 = vpack.c.b16 %v1292, %v1286
        %v1401 = vpack.c.b16 %v1299, %v1293
        %v1402 = vpack.c.b16 %v1300, %v1294
        %v1403 = vpack.c.b16 %v1301, %v1295
        %v1404 = vpack.c.b16 %v1302, %v1296
        %v1405 = vpack.c.b16 %v1303, %v1297
        %v1406 = vpack.c.b16 %v1304, %v1298
        %v1407 = vpack.c.b16 %v1311, %v1305
        %v1408 = vpack.c.b16 %v1312, %v1306
        %v1409 = vpack.c.b16 %v1313, %v1307
        %v1410 = vpack.c.b16 %v1314, %v1308
        %v1411 = vpack.c.b16 %v1315, %v1309
        %v1412 = vpack.c.b16 %v1316, %v1310
        %1509 = vmatprep.subr.bf16.mxu0 %v1318
        %1510 = vmatpush1.bf16.msra.mxu0 %v1317
        %1511 = vmatprep.subr.bf16.mxu0 %v1324
        %1512 = vmatpush1.bf16.msra.mxu0 %v1323
        %1513 = vmatprep.subr.bf16.mxu0 %v1330
        %1514 = vmatpush1.bf16.msra.mxu0 %v1329
        %1515 = vmatprep.subr.bf16.mxu0 %v1336
        %1516 = vmatpush1.bf16.msra.mxu0 %v1335
        %1517 = vmatprep.subr.bf16.mxu0 %v1342
        %1518 = vmatpush1.bf16.msra.mxu0 %v1341
        %1519 = vmatprep.subr.bf16.mxu0 %v1348
        %1520 = vmatpush1.bf16.msra.mxu0 %v1347
        %1521 = vmatprep.subr.bf16.mxu0 %v1354
        %1522 = vmatpush1.bf16.msra.mxu0 %v1353
        %1523 = vmatprep.subr.bf16.mxu0 %v1360
        %1524 = vmatpush1.bf16.msra.mxu0 %v1359
        %1525 = vmatprep.subr.bf16.mxu0 %v1366
        %1526 = vmatpush1.bf16.msra.mxu0 %v1365
        %1527 = vmatprep.subr.bf16.mxu0 %v1372
        %1528 = vmatpush1.bf16.msra.mxu0 %v1371
        %1529 = vmatprep.subr.bf16.mxu0 %v1378
        %1530 = vmatpush1.bf16.msra.mxu0 %v1377
        %1531 = vmatprep.subr.bf16.mxu0 %v1384
        %1532 = vmatpush1.bf16.msra.mxu0 %v1383
        %1533 = vmatprep.subr.bf16.mxu0 %v1390
        %1534 = vmatpush1.bf16.msra.mxu0 %v1389
        %1535 = vmatprep.subr.bf16.mxu0 %v1396
        %1536 = vmatpush1.bf16.msra.mxu0 %v1395
        %1537 = vmatprep.subr.bf16.mxu0 %v1402
        %1538 = vmatpush1.bf16.msra.mxu0 %v1401
        %1539 = vmatprep.subr.bf16.mxu0 %v1408
        %1540 = vmatpush1.bf16.msra.mxu0 %v1407
        %1541 = vmatprep.mubr.bf16.mxu0 %v886
        %1542 = vmatmul.mubr.bf16.gmra.mrb[0].mxu0 %v885
        %v1543 = vpop.f32.mrb[0].mxu0
        %v1544 = vadd.f32 %v1002, %v1543
        %v1545 = vpop.f32.mrb[0].mxu0
        %v1546 = vadd.f32 %v1006, %v1545
        %v1547 = vpop.f32.mrb[0].mxu0
        %v1548 = vadd.f32 %v1002, %v1547
        %v1549 = vpop.f32.mrb[0].mxu0
        %v1550 = vadd.f32 %v1006, %v1549
        %1551 = vmatprep.mubr.bf16.mxu0 %v888
        %1552 = vmatmul.mubr.bf16.gmra.mrb[0].mxu0 %v887
        %v1553 = vpop.f32.mrb[0].mxu0
        %v1554 = vadd.f32 %v1002, %v1553
        %v1555 = vpop.f32.mrb[0].mxu0
        %v1556 = vadd.f32 %v1006, %v1555
        %v1557 = vpop.f32.mrb[0].mxu0
        %v1558 = vadd.f32 %v1002, %v1557
        %v1559 = vpop.f32.mrb[0].mxu0
        %v1560 = vadd.f32 %v1006, %v1559
        %1561 = vmatprep.mubr.bf16.mxu0 %v890
        %1562 = vmatmul.mubr.bf16.gmra.mrb[0].mxu0 %v889
        %v1563 = vpop.f32.mrb[0].mxu0
        %v1564 = vadd.f32 %v1002, %v1563
        %v1565 = vpop.f32.mrb[0].mxu0
        %v1566 = vadd.f32 %v1006, %v1565
        %v1567 = vpop.f32.mrb[0].mxu0
        %v1568 = vadd.f32 %v1002, %v1567
        %v1569 = vpop.f32.mrb[0].mxu0
        %v1570 = vadd.f32 %v1006, %v1569
        %1571 = vmatprep.mubr.bf16.mxu0 %v892
        %1572 = vmatmul.mubr.bf16.gmra.mrb[0].mxu0 %v891
        %v1573 = vpop.f32.mrb[0].mxu0
        %v1574 = vadd.f32 %v1002, %v1573
        %v1575 = vpop.f32.mrb[0].mxu0
        %v1576 = vadd.f32 %v1006, %v1575
        %v1577 = vpop.f32.mrb[0].mxu0
        %v1578 = vadd.f32 %v1002, %v1577
        %v1579 = vpop.f32.mrb[0].mxu0
        %v1580 = vadd.f32 %v1006, %v1579
        %1581 = vmatprep.mubr.bf16.mxu0 %v894
        %1582 = vmatmul.mubr.bf16.gmra.mrb[0].mxu0 %v893
        %v1583 = vpop.f32.mrb[0].mxu0
        %v1584 = vadd.f32 %v1002, %v1583
        %v1585 = vpop.f32.mrb[0].mxu0
        %v1586 = vadd.f32 %v1006, %v1585
        %v1587 = vpop.f32.mrb[0].mxu0
        %v1588 = vadd.f32 %v1002, %v1587
        %v1589 = vpop.f32.mrb[0].mxu0
        %v1590 = vadd.f32 %v1006, %v1589
        %1591 = vmatprep.mubr.bf16.mxu0 %v896
        %1592 = vmatmul.mubr.bf16.gmra.mrb[0].mxu0 %v895
        %v1593 = vpop.f32.mrb[0].mxu0
        %v1594 = vadd.f32 %v1002, %v1593
        %v1595 = vpop.f32.mrb[0].mxu0
        %v1596 = vadd.f32 %v1006, %v1595
        %v1597 = vpop.f32.mrb[0].mxu0
        %v1598 = vadd.f32 %v1002, %v1597
        %v1599 = vpop.f32.mrb[0].mxu0
        %v1600 = vadd.f32 %v1006, %v1599
        %1601 = vmatprep.mubr.bf16.mxu0 %v898
        %1602 = vmatmul.mubr.bf16.gmra.mrb[0].mxu0 %v897
        %v1603 = vpop.f32.mrb[0].mxu0
        %v1604 = vadd.f32 %v1002, %v1603
        %v1605 = vpop.f32.mrb[0].mxu0
        %v1606 = vadd.f32 %v1006, %v1605
        %v1607 = vpop.f32.mrb[0].mxu0
        %v1608 = vadd.f32 %v1002, %v1607
        %v1609 = vpop.f32.mrb[0].mxu0
        %v1610 = vadd.f32 %v1006, %v1609
        %1611 = vmatprep.mubr.bf16.mxu0 %v900
        %1612 = vmatmul.mubr.bf16.gmra.mrb[0].mxu0 %v899
        %v1613 = vpop.f32.mrb[0].mxu0
        %v1614 = vadd.f32 %v1002, %v1613
        %v1615 = vpop.f32.mrb[0].mxu0
        %v1616 = vadd.f32 %v1006, %v1615
        %v1617 = vpop.f32.mrb[0].mxu0
        %v1618 = vadd.f32 %v1002, %v1617
        %v1619 = vpop.f32.mrb[0].mxu0
        %v1620 = vadd.f32 %v1006, %v1619
        %1621 = vdwg.mxu0
        %1622 = vmatprep.subr.bf16.mxu0 %v1320
        %1623 = vmatpush1.bf16.msra.mxu0 %v1319
        %1624 = vmatprep.subr.bf16.mxu0 %v1326
        %1625 = vmatpush1.bf16.msra.mxu0 %v1325
        %1626 = vmatprep.subr.bf16.mxu0 %v1332
        %1627 = vmatpush1.bf16.msra.mxu0 %v1331
        %1628 = vmatprep.subr.bf16.mxu0 %v1338
        %1629 = vmatpush1.bf16.msra.mxu0 %v1337
        %1630 = vmatprep.subr.bf16.mxu0 %v1344
        %1631 = vmatpush1.bf16.msra.mxu0 %v1343
        %1632 = vmatprep.subr.bf16.mxu0 %v1350
        %1633 = vmatpush1.bf16.msra.mxu0 %v1349
        %1634 = vmatprep.subr.bf16.mxu0 %v1356
        %1635 = vmatpush1.bf16.msra.mxu0 %v1355
        %1636 = vmatprep.subr.bf16.mxu0 %v1362
        %1637 = vmatpush1.bf16.msra.mxu0 %v1361
        %1638 = vmatprep.subr.bf16.mxu0 %v1368
        %1639 = vmatpush1.bf16.msra.mxu0 %v1367
        %1640 = vmatprep.subr.bf16.mxu0 %v1374
        %1641 = vmatpush1.bf16.msra.mxu0 %v1373
        %1642 = vmatprep.subr.bf16.mxu0 %v1380
        %1643 = vmatpush1.bf16.msra.mxu0 %v1379
        %1644 = vmatprep.subr.bf16.mxu0 %v1386
        %1645 = vmatpush1.bf16.msra.mxu0 %v1385
        %1646 = vmatprep.subr.bf16.mxu0 %v1392
        %1647 = vmatpush1.bf16.msra.mxu0 %v1391
        %1648 = vmatprep.subr.bf16.mxu0 %v1398
        %1649 = vmatpush1.bf16.msra.mxu0 %v1397
        %1650 = vmatprep.subr.bf16.mxu0 %v1404
        %1651 = vmatpush1.bf16.msra.mxu0 %v1403
        %1652 = vmatprep.subr.bf16.mxu0 %v1410
        %1653 = vmatpush1.bf16.msra.mxu0 %v1409
        %1654 = vmatprep.mubr.bf16.mxu0 %v886
        %1655 = vmatmul.mubr.bf16.gmra.mrb[0].mxu0 %v885
        %v1656 = vpop.f32.mrb[0].mxu0
        %v1657 = vadd.f32 %v1010, %v1656
        %v1658 = vpop.f32.mrb[0].mxu0
        %v1659 = vadd.f32 %v1014, %v1658
        %v1660 = vpop.f32.mrb[0].mxu0
        %v1661 = vadd.f32 %v1010, %v1660
        %v1662 = vpop.f32.mrb[0].mxu0
        %v1663 = vadd.f32 %v1014, %v1662
        %1664 = vmatprep.mubr.bf16.mxu0 %v888
        %1665 = vmatmul.mubr.bf16.gmra.mrb[0].mxu0 %v887
        %v1666 = vpop.f32.mrb[0].mxu0
        %v1667 = vadd.f32 %v1010, %v1666
        %v1668 = vpop.f32.mrb[0].mxu0
        %v1669 = vadd.f32 %v1014, %v1668
        %v1670 = vpop.f32.mrb[0].mxu0
        %v1671 = vadd.f32 %v1010, %v1670
        %v1672 = vpop.f32.mrb[0].mxu0
        %v1673 = vadd.f32 %v1014, %v1672
        %1674 = vmatprep.mubr.bf16.mxu0 %v890
        %1675 = vmatmul.mubr.bf16.gmra.mrb[0].mxu0 %v889
        %v1676 = vpop.f32.mrb[0].mxu0
        %v1677 = vadd.f32 %v1010, %v1676
        %v1678 = vpop.f32.mrb[0].mxu0
        %v1679 = vadd.f32 %v1014, %v1678
        %v1680 = vpop.f32.mrb[0].mxu0
        %v1681 = vadd.f32 %v1010, %v1680
        %v1682 = vpop.f32.mrb[0].mxu0
        %v1683 = vadd.f32 %v1014, %v1682
        %1684 = vmatprep.mubr.bf16.mxu0 %v892
        %1685 = vmatmul.mubr.bf16.gmra.mrb[0].mxu0 %v891
        %v1686 = vpop.f32.mrb[0].mxu0
        %v1687 = vadd.f32 %v1010, %v1686
        %v1688 = vpop.f32.mrb[0].mxu0
        %v1689 = vadd.f32 %v1014, %v1688
        %v1690 = vpop.f32.mrb[0].mxu0
        %v1691 = vadd.f32 %v1010, %v1690
        %v1692 = vpop.f32.mrb[0].mxu0
        %v1693 = vadd.f32 %v1014, %v1692
        %1694 = vmatprep.mubr.bf16.mxu0 %v894
        %1695 = vmatmul.mubr.bf16.gmra.mrb[0].mxu0 %v893
        %v1696 = vpop.f32.mrb[0].mxu0
        %v1697 = vadd.f32 %v1010, %v1696
        %v1698 = vpop.f32.mrb[0].mxu0
        %v1699 = vadd.f32 %v1014, %v1698
        %v1700 = vpop.f32.mrb[0].mxu0
        %v1701 = vadd.f32 %v1010, %v1700
        %v1702 = vpop.f32.mrb[0].mxu0
        %v1703 = vadd.f32 %v1014, %v1702
        %1704 = vmatprep.mubr.bf16.mxu0 %v896
        %1705 = vmatmul.mubr.bf16.gmra.mrb[0].mxu0 %v895
        %v1706 = vpop.f32.mrb[0].mxu0
        %v1707 = vadd.f32 %v1010, %v1706
        %v1708 = vpop.f32.mrb[0].mxu0
        %v1709 = vadd.f32 %v1014, %v1708
        %v1710 = vpop.f32.mrb[0].mxu0
        %v1711 = vadd.f32 %v1010, %v1710
        %v1712 = vpop.f32.mrb[0].mxu0
        %v1713 = vadd.f32 %v1014, %v1712
        %1714 = vmatprep.mubr.bf16.mxu0 %v898
        %1715 = vmatmul.mubr.bf16.gmra.mrb[0].mxu0 %v897
        %v1716 = vpop.f32.mrb[0].mxu0
        %v1717 = vadd.f32 %v1010, %v1716
        %v1718 = vpop.f32.mrb[0].mxu0
        %v1719 = vadd.f32 %v1014, %v1718
        %v1720 = vpop.f32.mrb[0].mxu0
        %v1721 = vadd.f32 %v1010, %v1720
        %v1722 = vpop.f32.mrb[0].mxu0
        %v1723 = vadd.f32 %v1014, %v1722
        %1724 = vmatprep.mubr.bf16.mxu0 %v900
        %1725 = vmatmul.mubr.bf16.gmra.mrb[0].mxu0 %v899
        %v1726 = vpop.f32.mrb[0].mxu0
        %v1727 = vadd.f32 %v1010, %v1726
        %v1728 = vpop.f32.mrb[0].mxu0
        %v1729 = vadd.f32 %v1014, %v1728
        %v1730 = vpop.f32.mrb[0].mxu0
        %v1731 = vadd.f32 %v1010, %v1730
        %v1732 = vpop.f32.mrb[0].mxu0
        %v1733 = vadd.f32 %v1014, %v1732
        %1734 = vdwg.mxu0
        %1735 = vmatprep.subr.bf16.mxu0 %v1322
        %1736 = vmatpush1.bf16.msra.mxu0 %v1321
        %1737 = vmatprep.subr.bf16.mxu0 %v1328
        %1738 = vmatpush1.bf16.msra.mxu0 %v1327
        %1739 = vmatprep.subr.bf16.mxu0 %v1334
        %1740 = vmatpush1.bf16.msra.mxu0 %v1333
        %1741 = vmatprep.subr.bf16.mxu0 %v1340
        %1742 = vmatpush1.bf16.msra.mxu0 %v1339
        %1743 = vmatprep.subr.bf16.mxu0 %v1346
        %1744 = vmatpush1.bf16.msra.mxu0 %v1345
        %1745 = vmatprep.subr.bf16.mxu0 %v1352
        %1746 = vmatpush1.bf16.msra.mxu0 %v1351
        %1747 = vmatprep.subr.bf16.mxu0 %v1358
        %1748 = vmatpush1.bf16.msra.mxu0 %v1357
        %1749 = vmatprep.subr.bf16.mxu0 %v1364
        %1750 = vmatpush1.bf16.msra.mxu0 %v1363
        %1751 = vmatprep.subr.bf16.mxu0 %v1370
        %1752 = vmatpush1.bf16.msra.mxu0 %v1369
        %1753 = vmatprep.subr.bf16.mxu0 %v1376
        %1754 = vmatpush1.bf16.msra.mxu0 %v1375
        %1755 = vmatprep.subr.bf16.mxu0 %v1382
        %1756 = vmatpush1.bf16.msra.mxu0 %v1381
        %1757 = vmatprep.subr.bf16.mxu0 %v1388
        %1758 = vmatpush1.bf16.msra.mxu0 %v1387
        %1759 = vmatprep.subr.bf16.mxu0 %v1394
        %1760 = vmatpush1.bf16.msra.mxu0 %v1393
        %1761 = vmatprep.subr.bf16.mxu0 %v1400
        %1762 = vmatpush1.bf16.msra.mxu0 %v1399
        %1763 = vmatprep.subr.bf16.mxu0 %v1406
        %1764 = vmatpush1.bf16.msra.mxu0 %v1405
        %1765 = vmatprep.subr.bf16.mxu0 %v1412
        %1766 = vmatpush1.bf16.msra.mxu0 %v1411
        %1767 = vmatprep.mubr.bf16.mxu0 %v886
        %1768 = vmatmul.mubr.bf16.gmra.mrb[0].mxu0 %v885
        %v1769 = vpop.f32.mrb[0].mxu0
        %v1770 = vadd.f32 %v1018, %v1769
        %v1771 = vpop.f32.mrb[0].mxu0
        %v1772 = vadd.f32 %v1022, %v1771
        %v1773 = vpop.f32.mrb[0].mxu0
        %v1774 = vadd.f32 %v1018, %v1773
        %v1775 = vpop.f32.mrb[0].mxu0
        %v1776 = vadd.f32 %v1022, %v1775
        %1777 = vmatprep.mubr.bf16.mxu0 %v888
        %1778 = vmatmul.mubr.bf16.gmra.mrb[0].mxu0 %v887
        %v1779 = vpop.f32.mrb[0].mxu0
        %v1780 = vadd.f32 %v1018, %v1779
        %v1781 = vpop.f32.mrb[0].mxu0
        %v1782 = vadd.f32 %v1022, %v1781
        %v1783 = vpop.f32.mrb[0].mxu0
        %v1784 = vadd.f32 %v1018, %v1783
        %v1785 = vpop.f32.mrb[0].mxu0
        %v1786 = vadd.f32 %v1022, %v1785
        %1787 = vmatprep.mubr.bf16.mxu0 %v890
        %1788 = vmatmul.mubr.bf16.gmra.mrb[0].mxu0 %v889
        %v1789 = vpop.f32.mrb[0].mxu0
        %v1790 = vadd.f32 %v1018, %v1789
        %v1791 = vpop.f32.mrb[0].mxu0
        %v1792 = vadd.f32 %v1022, %v1791
        %v1793 = vpop.f32.mrb[0].mxu0
        %v1794 = vadd.f32 %v1018, %v1793
        %v1795 = vpop.f32.mrb[0].mxu0
        %v1796 = vadd.f32 %v1022, %v1795
        %1797 = vmatprep.mubr.bf16.mxu0 %v892
        %1798 = vmatmul.mubr.bf16.gmra.mrb[0].mxu0 %v891
        %v1799 = vpop.f32.mrb[0].mxu0
        %v1800 = vadd.f32 %v1018, %v1799
        %v1801 = vpop.f32.mrb[0].mxu0
        %v1802 = vadd.f32 %v1022, %v1801
        %v1803 = vpop.f32.mrb[0].mxu0
        %v1804 = vadd.f32 %v1018, %v1803
        %v1805 = vpop.f32.mrb[0].mxu0
        %v1806 = vadd.f32 %v1022, %v1805
        %1807 = vmatprep.mubr.bf16.mxu0 %v894
        %1808 = vmatmul.mubr.bf16.gmra.mrb[0].mxu0 %v893
        %v1809 = vpop.f32.mrb[0].mxu0
        %v1810 = vadd.f32 %v1018, %v1809
        %v1811 = vpop.f32.mrb[0].mxu0
        %v1812 = vadd.f32 %v1022, %v1811
        %v1813 = vpop.f32.mrb[0].mxu0
        %v1814 = vadd.f32 %v1018, %v1813
        %v1815 = vpop.f32.mrb[0].mxu0
        %v1816 = vadd.f32 %v1022, %v1815
        %1817 = vmatprep.mubr.bf16.mxu0 %v896
        %1818 = vmatmul.mubr.bf16.gmra.mrb[0].mxu0 %v895
        %v1819 = vpop.f32.mrb[0].mxu0
        %v1820 = vadd.f32 %v1018, %v1819
        %v1821 = vpop.f32.mrb[0].mxu0
        %v1822 = vadd.f32 %v1022, %v1821
        %v1823 = vpop.f32.mrb[0].mxu0
        %v1824 = vadd.f32 %v1018, %v1823
        %v1825 = vpop.f32.mrb[0].mxu0
        %v1826 = vadd.f32 %v1022, %v1825
        %1827 = vmatprep.mubr.bf16.mxu0 %v898
        %1828 = vmatmul.mubr.bf16.gmra.mrb[0].mxu0 %v897
        %v1829 = vpop.f32.mrb[0].mxu0
        %v1830 = vadd.f32 %v1018, %v1829
        %v1831 = vpop.f32.mrb[0].mxu0
        %v1832 = vadd.f32 %v1022, %v1831
        %v1833 = vpop.f32.mrb[0].mxu0
        %v1834 = vadd.f32 %v1018, %v1833
        %v1835 = vpop.f32.mrb[0].mxu0
        %v1836 = vadd.f32 %v1022, %v1835
        %1837 = vmatprep.mubr.bf16.mxu0 %v900
        %1838 = vmatmul.mubr.bf16.gmra.mrb[0].mxu0 %v899
        %v1839 = vpop.f32.mrb[0].mxu0
        %v1840 = vadd.f32 %v1018, %v1839
        %v1841 = vpop.f32.mrb[0].mxu0
        %v1842 = vadd.f32 %v1022, %v1841
        %v1843 = vpop.f32.mrb[0].mxu0
        %v1844 = vadd.f32 %v1018, %v1843
        %v1845 = vpop.f32.mrb[0].mxu0
        %v1846 = vadd.f32 %v1022, %v1845
        %1847 = vdwg.mxu0
        %v1848 = vpack.c.bf16 %v1548, %v1544
        %v1849 = vpack.c.bf16 %v1550, %v1546
        %v1850 = vpack.c.bf16 %v1661, %v1657
        %v1851 = vpack.c.bf16 %v1663, %v1659
        %v1852 = vpack.c.bf16 %v1774, %v1770
        %v1853 = vpack.c.bf16 %v1776, %v1772
        %v1854 = vpack.c.bf16 %v1558, %v1554
        %v1855 = vpack.c.bf16 %v1560, %v1556
        %v1856 = vpack.c.bf16 %v1671, %v1667
        %v1857 = vpack.c.bf16 %v1673, %v1669
        %v1858 = vpack.c.bf16 %v1784, %v1780
        %v1859 = vpack.c.bf16 %v1786, %v1782
        %v1860 = vpack.c.bf16 %v1568, %v1564
        %v1861 = vpack.c.bf16 %v1570, %v1566
        %v1862 = vpack.c.bf16 %v1681, %v1677
        %v1863 = vpack.c.bf16 %v1683, %v1679
        %v1864 = vpack.c.bf16 %v1794, %v1790
        %v1865 = vpack.c.bf16 %v1796, %v1792
        %v1866 = vpack.c.bf16 %v1578, %v1574
        %v1867 = vpack.c.bf16 %v1580, %v1576
        %v1868 = vpack.c.bf16 %v1691, %v1687
        %v1869 = vpack.c.bf16 %v1693, %v1689
        %v1870 = vpack.c.bf16 %v1804, %v1800
        %v1871 = vpack.c.bf16 %v1806, %v1802
        %v1872 = vpack.c.bf16 %v1588, %v1584
        %v1873 = vpack.c.bf16 %v1590, %v1586
        %v1874 = vpack.c.bf16 %v1701, %v1697
        %v1875 = vpack.c.bf16 %v1703, %v1699
        %v1876 = vpack.c.bf16 %v1814, %v1810
        %v1877 = vpack.c.bf16 %v1816, %v1812
        %v1878 = vpack.c.bf16 %v1598, %v1594
        %v1879 = vpack.c.bf16 %v1600, %v1596
        %v1880 = vpack.c.bf16 %v1711, %v1707
        %v1881 = vpack.c.bf16 %v1713, %v1709
        %v1882 = vpack.c.bf16 %v1824, %v1820
        %v1883 = vpack.c.bf16 %v1826, %v1822
        %v1884 = vpack.c.bf16 %v1608, %v1604
        %v1885 = vpack.c.bf16 %v1610, %v1606
        %v1886 = vpack.c.bf16 %v1721, %v1717
        %v1887 = vpack.c.bf16 %v1723, %v1719
        %v1888 = vpack.c.bf16 %v1834, %v1830
        %v1889 = vpack.c.bf16 %v1836, %v1832
        %v1890 = vpack.c.bf16 %v1618, %v1614
        %v1891 = vpack.c.bf16 %v1620, %v1616
        %v1892 = vpack.c.bf16 %v1731, %v1727
        %v1893 = vpack.c.bf16 %v1733, %v1729
        %v1894 = vpack.c.bf16 %v1844, %v1840
        %v1895 = vpack.c.bf16 %v1846, %v1842
        %1896 = vmatprep.subr.bf16.mxu0 0
        %1897 = vmatpush1.bf16.xpose.msra.mxu0 %v1850
        %1898 = vmatprep.subr.bf16.mxu0 0
        %1899 = vmatpush1.bf16.xpose.msra.mxu0 %v1856
        %1900 = vmatprep.subr.bf16.mxu0 0
        %1901 = vmatpush1.bf16.xpose.msra.mxu0 %v1862
        %1902 = vmatprep.subr.bf16.mxu0 0
        %1903 = vmatpush1.bf16.xpose.msra.mxu0 %v1868
        %1904 = vmatprep.subr.bf16.mxu0 0
        %1905 = vmatpush1.bf16.xpose.msra.mxu0 %v1874
        %1906 = vmatprep.subr.bf16.mxu0 0
        %1907 = vmatpush1.bf16.xpose.msra.mxu0 %v1880
        %1908 = vmatprep.subr.bf16.mxu0 0
        %1909 = vmatpush1.bf16.xpose.msra.mxu0 %v1886
        %1910 = vmatprep.subr.bf16.mxu0 0
        %1911 = vmatpush1.bf16.xpose.msra.mxu0 %v1892
        %1912 = vmatprep.subr.bf16.mxu0 0
        %1913 = vmatpush1.bf16.xpose.msra.mxu0 0
        %1914 = vmatprep.subr.bf16.mxu0 0
        %1915 = vmatpush1.bf16.xpose.msra.mxu0 0
        %1916 = vmatprep.subr.bf16.mxu0 0
        %1917 = vmatpush1.bf16.xpose.msra.mxu0 0
        %1918 = vmatprep.subr.bf16.mxu0 0
        %1919 = vmatpush1.bf16.xpose.msra.mxu0 0
        %1920 = vmatprep.subr.bf16.mxu0 0
        %1921 = vmatpush1.bf16.xpose.msra.mxu0 0
        %1922 = vmatprep.subr.bf16.mxu0 0
        %1923 = vmatpush1.bf16.xpose.msra.mxu0 0
        %1924 = vmatprep.subr.bf16.mxu0 0
        %1925 = vmatpush1.bf16.xpose.msra.mxu0 0
        %1926 = vmatprep.subr.bf16.mxu0 0
        %1927 = vmatpush1.bf16.xpose.msra.mxu0 0
        %1928 = vmatprep.mubr.bf16.mxu0 0
        %1929 = vmatmul.mubr.bf16.gmra.mrb[0].mxu0 %v1848
        %v1930 = vpop.f32.mrb[0].mxu0
        %v1931 = vadd.f32 0.0, %v1930
        %v1932 = vpop.f32.mrb[0].mxu0
        %v1933 = vpop.f32.mrb[0].mxu0
        %v1934 = vadd.f32 0.0, %v1933
        %v1935 = vpop.f32.mrb[0].mxu0
        %1936 = vmatprep.mubr.bf16.mxu0 0
        %1937 = vmatmul.mubr.bf16.gmra.mrb[0].mxu0 %v1854
        %v1938 = vpop.f32.mrb[0].mxu0
        %v1939 = vadd.f32 0.0, %v1938
        %v1940 = vpop.f32.mrb[0].mxu0
        %v1941 = vpop.f32.mrb[0].mxu0
        %v1942 = vadd.f32 0.0, %v1941
        %v1943 = vpop.f32.mrb[0].mxu0
        %1944 = vmatprep.mubr.bf16.mxu0 0
        %1945 = vmatmul.mubr.bf16.gmra.mrb[0].mxu0 %v1860
        %v1946 = vpop.f32.mrb[0].mxu0
        %v1947 = vadd.f32 0.0, %v1946
        %v1948 = vpop.f32.mrb[0].mxu0
        %v1949 = vpop.f32.mrb[0].mxu0
        %v1950 = vadd.f32 0.0, %v1949
        %v1951 = vpop.f32.mrb[0].mxu0
        %1952 = vmatprep.mubr.bf16.mxu0 0
        %1953 = vmatmul.mubr.bf16.gmra.mrb[0].mxu0 %v1866
        %v1954 = vpop.f32.mrb[0].mxu0
        %v1955 = vadd.f32 0.0, %v1954
        %v1956 = vpop.f32.mrb[0].mxu0
        %v1957 = vpop.f32.mrb[0].mxu0
        %v1958 = vadd.f32 0.0, %v1957
        %v1959 = vpop.f32.mrb[0].mxu0
        %1960 = vmatprep.mubr.bf16.mxu0 0
        %1961 = vmatmul.mubr.bf16.gmra.mrb[0].mxu0 %v1872
        %v1962 = vpop.f32.mrb[0].mxu0
        %v1963 = vadd.f32 0.0, %v1962
        %v1964 = vpop.f32.mrb[0].mxu0
        %v1965 = vpop.f32.mrb[0].mxu0
        %v1966 = vadd.f32 0.0, %v1965
        %v1967 = vpop.f32.mrb[0].mxu0
        %1968 = vmatprep.mubr.bf16.mxu0 0
        %1969 = vmatmul.mubr.bf16.gmra.mrb[0].mxu0 %v1878
        %v1970 = vpop.f32.mrb[0].mxu0
        %v1971 = vadd.f32 0.0, %v1970
        %v1972 = vpop.f32.mrb[0].mxu0
        %v1973 = vpop.f32.mrb[0].mxu0
        %v1974 = vadd.f32 0.0, %v1973
        %v1975 = vpop.f32.mrb[0].mxu0
        %1976 = vmatprep.mubr.bf16.mxu0 0
        %1977 = vmatmul.mubr.bf16.gmra.mrb[0].mxu0 %v1884
        %v1978 = vpop.f32.mrb[0].mxu0
        %v1979 = vadd.f32 0.0, %v1978
        %v1980 = vpop.f32.mrb[0].mxu0
        %v1981 = vpop.f32.mrb[0].mxu0
        %v1982 = vadd.f32 0.0, %v1981
        %v1983 = vpop.f32.mrb[0].mxu0
        %1984 = vmatprep.mubr.bf16.mxu0 0
        %1985 = vmatmul.mubr.bf16.gmra.mrb[0].mxu0 %v1890
        %v1986 = vpop.f32.mrb[0].mxu0
        %v1987 = vadd.f32 0.0, %v1986
        %v1988 = vpop.f32.mrb[0].mxu0
        %v1989 = vpop.f32.mrb[0].mxu0
        %v1990 = vadd.f32 0.0, %v1989
        %v1991 = vpop.f32.mrb[0].mxu0
        %1992 = vdwg.mxu0
        %1993 = vmax.xlane.f32.xlu0 %v1931
        %v1994 = vpop.xlane.xlu0 %1993
        %1995 = vmax.xlane.f32.xlu0 %v1934
        %v1996 = vpop.xlane.xlu0 %1995
        %1997 = vmax.xlane.f32.xlu0 %v1939
        %v1998 = vpop.xlane.xlu0 %1997
        %1999 = vmax.xlane.f32.xlu0 %v1942
        %v2000 = vpop.xlane.xlu0 %1999
        %2001 = vmax.xlane.f32.xlu0 %v1947
        %v2002 = vpop.xlane.xlu0 %2001
        %2003 = vmax.xlane.f32.xlu0 %v1950
        %v2004 = vpop.xlane.xlu0 %2003
        %2005 = vmax.xlane.f32.xlu0 %v1955
        %v2006 = vpop.xlane.xlu0 %2005
        %2007 = vmax.xlane.f32.xlu0 %v1958
        %v2008 = vpop.xlane.xlu0 %2007
        %2009 = vmax.xlane.f32.xlu0 %v1963
        %v2010 = vpop.xlane.xlu0 %2009
        %2011 = vmax.xlane.f32.xlu0 %v1966
        %v2012 = vpop.xlane.xlu0 %2011
        %2013 = vmax.xlane.f32.xlu0 %v1971
        %v2014 = vpop.xlane.xlu0 %2013
        %2015 = vmax.xlane.f32.xlu0 %v1974
        %v2016 = vpop.xlane.xlu0 %2015
        %2017 = vmax.xlane.f32.xlu0 %v1979
        %v2018 = vpop.xlane.xlu0 %2017
        %2019 = vmax.xlane.f32.xlu0 %v1982
        %v2020 = vpop.xlane.xlu0 %2019
        %2021 = vmax.xlane.f32.xlu0 %v1987
        %v2022 = vpop.xlane.xlu0 %2021
        %2023 = vmax.xlane.f32.xlu0 %v1990
        %v2024 = vpop.xlane.xlu0 %2023
        %v2025 = vsub.f32 %v1931, %v1994
        %v2026 = vsub.f32 %v1934, %v1996
        %v2027 = vsub.f32 %v1939, %v1998
        %v2028 = vsub.f32 %v1942, %v2000
        %v2029 = vsub.f32 %v1947, %v2002
        %v2030 = vsub.f32 %v1950, %v2004
        %v2031 = vsub.f32 %v1955, %v2006
        %v2032 = vsub.f32 %v1958, %v2008
        %v2033 = vsub.f32 %v1963, %v2010
        %v2034 = vsub.f32 %v1966, %v2012
        %v2035 = vsub.f32 %v1971, %v2014
        %v2036 = vsub.f32 %v1974, %v2016
        %v2037 = vsub.f32 %v1979, %v2018
        %v2038 = vsub.f32 %v1982, %v2020
        %v2039 = vsub.f32 %v1987, %v2022
        %v2040 = vsub.f32 %v1990, %v2024
        %v2041 = vmul.f32 %v2025, 1.442695
        %v2042 = vpow.pop %v2041
        %v2043 = vmul.f32 %v2026, 1.442695
        %v2044 = vpow.pop %v2043
        %v2045 = vmul.f32 %v2027, 1.442695
        %v2046 = vpow.pop %v2045
        %v2047 = vmul.f32 %v2028, 1.442695
        %v2048 = vpow.pop %v2047
        %v2049 = vmul.f32 %v2029, 1.442695
        %v2050 = vpow.pop %v2049
        %v2051 = vmul.f32 %v2030, 1.442695
        %v2052 = vpow.pop %v2051
        %v2053 = vmul.f32 %v2031, 1.442695
        %v2054 = vpow.pop %v2053
        %v2055 = vmul.f32 %v2032, 1.442695
        %v2056 = vpow.pop %v2055
        %v2057 = vmul.f32 %v2033, 1.442695
        %v2058 = vpow.pop %v2057
        %v2059 = vmul.f32 %v2034, 1.442695
        %v2060 = vpow.pop %v2059
        %v2061 = vmul.f32 %v2035, 1.442695
        %v2062 = vpow.pop %v2061
        %v2063 = vmul.f32 %v2036, 1.442695
        %v2064 = vpow.pop %v2063
        %v2065 = vmul.f32 %v2037, 1.442695
        %v2066 = vpow.pop %v2065
        %v2067 = vmul.f32 %v2038, 1.442695
        %v2068 = vpow.pop %v2067
        %v2069 = vmul.f32 %v2039, 1.442695
        %v2070 = vpow.pop %v2069
        %v2071 = vmul.f32 %v2040, 1.442695
        %v2072 = vpow.pop %v2071
        %2073 = vadd.xlane.f32.xlu0 %v2042
        %v2074 = vpop.xlane.xlu0 %2073
        %2075 = vadd.xlane.f32.xlu0 %v2044
        %v2076 = vpop.xlane.xlu0 %2075
        %2077 = vadd.xlane.f32.xlu0 %v2046
        %v2078 = vpop.xlane.xlu0 %2077
        %2079 = vadd.xlane.f32.xlu0 %v2048
        %v2080 = vpop.xlane.xlu0 %2079
        %2081 = vadd.xlane.f32.xlu0 %v2050
        %v2082 = vpop.xlane.xlu0 %2081
        %2083 = vadd.xlane.f32.xlu0 %v2052
        %v2084 = vpop.xlane.xlu0 %2083
        %2085 = vadd.xlane.f32.xlu0 %v2054
        %v2086 = vpop.xlane.xlu0 %2085
        %2087 = vadd.xlane.f32.xlu0 %v2056
        %v2088 = vpop.xlane.xlu0 %2087
        %2089 = vadd.xlane.f32.xlu0 %v2058
        %v2090 = vpop.xlane.xlu0 %2089
        %2091 = vadd.xlane.f32.xlu0 %v2060
        %v2092 = vpop.xlane.xlu0 %2091
        %2093 = vadd.xlane.f32.xlu0 %v2062
        %v2094 = vpop.xlane.xlu0 %2093
        %2095 = vadd.xlane.f32.xlu0 %v2064
        %v2096 = vpop.xlane.xlu0 %2095
        %2097 = vadd.xlane.f32.xlu0 %v2066
        %v2098 = vpop.xlane.xlu0 %2097
        %2099 = vadd.xlane.f32.xlu0 %v2068
        %v2100 = vpop.xlane.xlu0 %2099
        %2101 = vadd.xlane.f32.xlu0 %v2070
        %v2102 = vpop.xlane.xlu0 %2101
        %2103 = vadd.xlane.f32.xlu0 %v2072
        %v2104 = vpop.xlane.xlu0 %2103
        %v2105 = vrcp.pop %v2074
        %v2106 = vrcp.pop %v2076
        %v2107 = vrcp.pop %v2078
        %v2108 = vrcp.pop %v2080
        %v2109 = vrcp.pop %v2082
        %v2110 = vrcp.pop %v2084
        %v2111 = vrcp.pop %v2086
        %v2112 = vrcp.pop %v2088
        %v2113 = vrcp.pop %v2090
        %v2114 = vrcp.pop %v2092
        %v2115 = vrcp.pop %v2094
        %v2116 = vrcp.pop %v2096
        %v2117 = vrcp.pop %v2098
        %v2118 = vrcp.pop %v2100
        %v2119 = vrcp.pop %v2102
        %v2120 = vrcp.pop %v2104
        %v2121 = vmul.f32 %v2042, %v2105
        %v2122 = vmul.f32 %v2044, %v2106
        %v2123 = vmul.f32 %v2046, %v2107
        %v2124 = vmul.f32 %v2048, %v2108
        %v2125 = vmul.f32 %v2050, %v2109
        %v2126 = vmul.f32 %v2052, %v2110
        %v2127 = vmul.f32 %v2054, %v2111
        %v2128 = vmul.f32 %v2056, %v2112
        %v2129 = vmul.f32 %v2058, %v2113
        %v2130 = vmul.f32 %v2060, %v2114
        %v2131 = vmul.f32 %v2062, %v2115
        %v2132 = vmul.f32 %v2064, %v2116
        %v2133 = vmul.f32 %v2066, %v2117
        %v2134 = vmul.f32 %v2068, %v2118
        %v2135 = vmul.f32 %v2070, %v2119
        %v2136 = vmul.f32 %v2072, %v2120
        %v2137 = vpack.c.bf16 %v2122, %v2121
        %v2138 = vpack.c.bf16 %v2124, %v2123
        %v2139 = vpack.c.bf16 %v2126, %v2125
        %v2140 = vpack.c.bf16 %v2128, %v2127
        %v2141 = vpack.c.bf16 %v2130, %v2129
        %v2142 = vpack.c.bf16 %v2132, %v2131
        %v2143 = vpack.c.bf16 %v2134, %v2133
        %v2144 = vpack.c.bf16 %v2136, %v2135
        %2145 = vmatprep.subr.bf16.mxu0 0
        %2146 = vmatpush1.bf16.msra.mxu0 %v1852
        %2147 = vmatprep.subr.bf16.mxu0 0
        %2148 = vmatpush1.bf16.msra.mxu0 %v1858
        %2149 = vmatprep.subr.bf16.mxu0 0
        %2150 = vmatpush1.bf16.msra.mxu0 %v1864
        %2151 = vmatprep.subr.bf16.mxu0 0
        %2152 = vmatpush1.bf16.msra.mxu0 %v1870
        %2153 = vmatprep.subr.bf16.mxu0 0
        %2154 = vmatpush1.bf16.msra.mxu0 %v1876
        %2155 = vmatprep.subr.bf16.mxu0 0
        %2156 = vmatpush1.bf16.msra.mxu0 %v1882
        %2157 = vmatprep.subr.bf16.mxu0 0
        %2158 = vmatpush1.bf16.msra.mxu0 %v1888
        %2159 = vmatprep.subr.bf16.mxu0 0
        %2160 = vmatpush1.bf16.msra.mxu0 %v1894
        %2161 = vmatprep.subr.bf16.mxu0 0
        %2162 = vmatpush1.bf16.msra.mxu0 0
        %2163 = vmatprep.subr.bf16.mxu0 0
        %2164 = vmatpush1.bf16.msra.mxu0 0
        %2165 = vmatprep.subr.bf16.mxu0 0
        %2166 = vmatpush1.bf16.msra.mxu0 0
        %2167 = vmatprep.subr.bf16.mxu0 0
        %2168 = vmatpush1.bf16.msra.mxu0 0
        %2169 = vmatprep.subr.bf16.mxu0 0
        %2170 = vmatpush1.bf16.msra.mxu0 0
        %2171 = vmatprep.subr.bf16.mxu0 0
        %2172 = vmatpush1.bf16.msra.mxu0 0
        %2173 = vmatprep.subr.bf16.mxu0 0
        %2174 = vmatpush1.bf16.msra.mxu0 0
        %2175 = vmatprep.subr.bf16.mxu0 0
        %2176 = vmatpush1.bf16.msra.mxu0 0
        %2177 = vmatprep.mubr.bf16.mxu0 0
        %2178 = vmatmul.mubr.bf16.gmra.mrb[0].mxu0 %v2137
        %v2179 = vpop.f32.mrb[0].mxu0
        %v2180 = vadd.f32 0.0, %v2179
        %v2181 = vpop.f32.mrb[0].mxu0
        %v2182 = vpop.f32.mrb[0].mxu0
        %v2183 = vadd.f32 0.0, %v2182
        %v2184 = vpop.f32.mrb[0].mxu0
        %2185 = vmatprep.mubr.bf16.mxu0 0
        %2186 = vmatmul.mubr.bf16.gmra.mrb[0].mxu0 %v2138
        %v2187 = vpop.f32.mrb[0].mxu0
        %v2188 = vadd.f32 0.0, %v2187
        %v2189 = vpop.f32.mrb[0].mxu0
        %v2190 = vpop.f32.mrb[0].mxu0
        %v2191 = vadd.f32 0.0, %v2190
        %v2192 = vpop.f32.mrb[0].mxu0
        %2193 = vmatprep.mubr.bf16.mxu0 0
        %2194 = vmatmul.mubr.bf16.gmra.mrb[0].mxu0 %v2139
        %v2195 = vpop.f32.mrb[0].mxu0
        %v2196 = vadd.f32 0.0, %v2195
        %v2197 = vpop.f32.mrb[0].mxu0
        %v2198 = vpop.f32.mrb[0].mxu0
        %v2199 = vadd.f32 0.0, %v2198
        %v2200 = vpop.f32.mrb[0].mxu0
        %2201 = vmatprep.mubr.bf16.mxu0 0
        %2202 = vmatmul.mubr.bf16.gmra.mrb[0].mxu0 %v2140
        %v2203 = vpop.f32.mrb[0].mxu0
        %v2204 = vadd.f32 0.0, %v2203
        %v2205 = vpop.f32.mrb[0].mxu0
        %v2206 = vpop.f32.mrb[0].mxu0
        %v2207 = vadd.f32 0.0, %v2206
        %v2208 = vpop.f32.mrb[0].mxu0
        %2209 = vmatprep.mubr.bf16.mxu0 0
        %2210 = vmatmul.mubr.bf16.gmra.mrb[0].mxu0 %v2141
        %v2211 = vpop.f32.mrb[0].mxu0
        %v2212 = vadd.f32 0.0, %v2211
        %v2213 = vpop.f32.mrb[0].mxu0
        %v2214 = vpop.f32.mrb[0].mxu0
        %v2215 = vadd.f32 0.0, %v2214
        %v2216 = vpop.f32.mrb[0].mxu0
        %2217 = vmatprep.mubr.bf16.mxu0 0
        %2218 = vmatmul.mubr.bf16.gmra.mrb[0].mxu0 %v2142
        %v2219 = vpop.f32.mrb[0].mxu0
        %v2220 = vadd.f32 0.0, %v2219
        %v2221 = vpop.f32.mrb[0].mxu0
        %v2222 = vpop.f32.mrb[0].mxu0
        %v2223 = vadd.f32 0.0, %v2222
        %v2224 = vpop.f32.mrb[0].mxu0
        %2225 = vmatprep.mubr.bf16.mxu0 0
        %2226 = vmatmul.mubr.bf16.gmra.mrb[0].mxu0 %v2143
        %v2227 = vpop.f32.mrb[0].mxu0
        %v2228 = vadd.f32 0.0, %v2227
        %v2229 = vpop.f32.mrb[0].mxu0
        %v2230 = vpop.f32.mrb[0].mxu0
        %v2231 = vadd.f32 0.0, %v2230
        %v2232 = vpop.f32.mrb[0].mxu0
        %2233 = vmatprep.mubr.bf16.mxu0 0
        %2234 = vmatmul.mubr.bf16.gmra.mrb[0].mxu0 %v2144
        %v2235 = vpop.f32.mrb[0].mxu0
        %v2236 = vadd.f32 0.0, %v2235
        %v2237 = vpop.f32.mrb[0].mxu0
        %v2238 = vpop.f32.mrb[0].mxu0
        %v2239 = vadd.f32 0.0, %v2238
        %v2240 = vpop.f32.mrb[0].mxu0
        %2241 = vdwg.mxu0
        %v2242 = vpack.c.bf16 %v2183, %v2180
        %v2243 = vpack.c.bf16 %v2191, %v2188
        %v2244 = vpack.c.bf16 %v2199, %v2196
        %v2245 = vpack.c.bf16 %v2207, %v2204
        %v2246 = vpack.c.bf16 %v2215, %v2212
        %v2247 = vpack.c.bf16 %v2223, %v2220
        %v2248 = vpack.c.bf16 %v2231, %v2228
        %v2249 = vpack.c.bf16 %v2239, %v2236
        %2250 = vst [vmem:[#allocation2] sm:$0xff] %v2242
        %2251 = vst [vmem:[#allocation2 + $0x10] sm:$0xff] %v2243
        %2252 = vst [vmem:[#allocation2 + $0x20] sm:$0xff] %v2244
        %2253 = vst [vmem:[#allocation2 + $0x30] sm:$0xff] %v2245
        %2254 = vst [vmem:[#allocation2 + $0x40] sm:$0xff] %v2246
        %2255 = vst [vmem:[#allocation2 + $0x50] sm:$0xff] %v2247
        %2256 = vst [vmem:[#allocation2 + $0x60] sm:$0xff] %v2248
        %2257 = vst [vmem:[#allocation2 + $0x70] sm:$0xff] %v2249
        %2258 = vmatprep.subr.bf16.mxu0 0
        %2259 = vmatpush1.bf16.xpose.msra.mxu0 %v1851
        %2260 = vmatprep.subr.bf16.mxu0 0
        %2261 = vmatpush1.bf16.xpose.msra.mxu0 %v1857
        %2262 = vmatprep.subr.bf16.mxu0 0
        %2263 = vmatpush1.bf16.xpose.msra.mxu0 %v1863
        %2264 = vmatprep.subr.bf16.mxu0 0
        %2265 = vmatpush1.bf16.xpose.msra.mxu0 %v1869
        %2266 = vmatprep.subr.bf16.mxu0 0
        %2267 = vmatpush1.bf16.xpose.msra.mxu0 %v1875
        %2268 = vmatprep.subr.bf16.mxu0 0
        %2269 = vmatpush1.bf16.xpose.msra.mxu0 %v1881
        %2270 = vmatprep.subr.bf16.mxu0 0
        %2271 = vmatpush1.bf16.xpose.msra.mxu0 %v1887
        %2272 = vmatprep.subr.bf16.mxu0 0
        %2273 = vmatpush1.bf16.xpose.msra.mxu0 %v1893
        %2274 = vmatprep.subr.bf16.mxu0 0
        %2275 = vmatpush1.bf16.xpose.msra.mxu0 0
        %2276 = vmatprep.subr.bf16.mxu0 0
        %2277 = vmatpush1.bf16.xpose.msra.mxu0 0
        %2278 = vmatprep.subr.bf16.mxu0 0
        %2279 = vmatpush1.bf16.xpose.msra.mxu0 0
        %2280 = vmatprep.subr.bf16.mxu0 0
        %2281 = vmatpush1.bf16.xpose.msra.mxu0 0
        %2282 = vmatprep.subr.bf16.mxu0 0
        %2283 = vmatpush1.bf16.xpose.msra.mxu0 0
        %2284 = vmatprep.subr.bf16.mxu0 0
        %2285 = vmatpush1.bf16.xpose.msra.mxu0 0
        %2286 = vmatprep.subr.bf16.mxu0 0
        %2287 = vmatpush1.bf16.xpose.msra.mxu0 0
        %2288 = vmatprep.subr.bf16.mxu0 0
        %2289 = vmatpush1.bf16.xpose.msra.mxu0 0
        %2290 = vmatprep.mubr.bf16.mxu0 0
        %2291 = vmatmul.mubr.bf16.gmra.mrb[0].mxu0 %v1849
        %v2292 = vpop.f32.mrb[0].mxu0
        %v2293 = vadd.f32 0.0, %v2292
        %v2294 = vpop.f32.mrb[0].mxu0
        %v2295 = vpop.f32.mrb[0].mxu0
        %v2296 = vadd.f32 0.0, %v2295
        %v2297 = vpop.f32.mrb[0].mxu0
        %2298 = vmatprep.mubr.bf16.mxu0 0
        %2299 = vmatmul.mubr.bf16.gmra.mrb[0].mxu0 %v1855
        %v2300 = vpop.f32.mrb[0].mxu0
        %v2301 = vadd.f32 0.0, %v2300
        %v2302 = vpop.f32.mrb[0].mxu0
        %v2303 = vpop.f32.mrb[0].mxu0
        %v2304 = vadd.f32 0.0, %v2303
        %v2305 = vpop.f32.mrb[0].mxu0
        %2306 = vmatprep.mubr.bf16.mxu0 0
        %2307 = vmatmul.mubr.bf16.gmra.mrb[0].mxu0 %v1861
        %v2308 = vpop.f32.mrb[0].mxu0
        %v2309 = vadd.f32 0.0, %v2308
        %v2310 = vpop.f32.mrb[0].mxu0
        %v2311 = vpop.f32.mrb[0].mxu0
        %v2312 = vadd.f32 0.0, %v2311
        %v2313 = vpop.f32.mrb[0].mxu0
        %2314 = vmatprep.mubr.bf16.mxu0 0
        %2315 = vmatmul.mubr.bf16.gmra.mrb[0].mxu0 %v1867
        %v2316 = vpop.f32.mrb[0].mxu0
        %v2317 = vadd.f32 0.0, %v2316
        %v2318 = vpop.f32.mrb[0].mxu0
        %v2319 = vpop.f32.mrb[0].mxu0
        %v2320 = vadd.f32 0.0, %v2319
        %v2321 = vpop.f32.mrb[0].mxu0
        %2322 = vmatprep.mubr.bf16.mxu0 0
        %2323 = vmatmul.mubr.bf16.gmra.mrb[0].mxu0 %v1873
        %v2324 = vpop.f32.mrb[0].mxu0
        %v2325 = vadd.f32 0.0, %v2324
        %v2326 = vpop.f32.mrb[0].mxu0
        %v2327 = vpop.f32.mrb[0].mxu0
        %v2328 = vadd.f32 0.0, %v2327
        %v2329 = vpop.f32.mrb[0].mxu0
        %2330 = vmatprep.mubr.bf16.mxu0 0
        %2331 = vmatmul.mubr.bf16.gmra.mrb[0].mxu0 %v1879
        %v2332 = vpop.f32.mrb[0].mxu0
        %v2333 = vadd.f32 0.0, %v2332
        %v2334 = vpop.f32.mrb[0].mxu0
        %v2335 = vpop.f32.mrb[0].mxu0
        %v2336 = vadd.f32 0.0, %v2335
        %v2337 = vpop.f32.mrb[0].mxu0
        %2338 = vmatprep.mubr.bf16.mxu0 0
        %2339 = vmatmul.mubr.bf16.gmra.mrb[0].mxu0 %v1885
        %v2340 = vpop.f32.mrb[0].mxu0
        %v2341 = vadd.f32 0.0, %v2340
        %v2342 = vpop.f32.mrb[0].mxu0
        %v2343 = vpop.f32.mrb[0].mxu0
        %v2344 = vadd.f32 0.0, %v2343
        %v2345 = vpop.f32.mrb[0].mxu0
        %2346 = vmatprep.mubr.bf16.mxu0 0
        %2347 = vmatmul.mubr.bf16.gmra.mrb[0].mxu0 %v1891
        %v2348 = vpop.f32.mrb[0].mxu0
        %v2349 = vadd.f32 0.0, %v2348
        %v2350 = vpop.f32.mrb[0].mxu0
        %v2351 = vpop.f32.mrb[0].mxu0
        %v2352 = vadd.f32 0.0, %v2351
        %v2353 = vpop.f32.mrb[0].mxu0
        %2354 = vdwg.mxu0
        %2355 = vmax.xlane.f32.xlu0 %v2293
        %v2356 = vpop.xlane.xlu0 %2355
        %2357 = vmax.xlane.f32.xlu0 %v2296
        %v2358 = vpop.xlane.xlu0 %2357
        %2359 = vmax.xlane.f32.xlu0 %v2301
        %v2360 = vpop.xlane.xlu0 %2359
        %2361 = vmax.xlane.f32.xlu0 %v2304
        %v2362 = vpop.xlane.xlu0 %2361
        %2363 = vmax.xlane.f32.xlu0 %v2309
        %v2364 = vpop.xlane.xlu0 %2363
        %2365 = vmax.xlane.f32.xlu0 %v2312
        %v2366 = vpop.xlane.xlu0 %2365
        %2367 = vmax.xlane.f32.xlu0 %v2317
        %v2368 = vpop.xlane.xlu0 %2367
        %2369 = vmax.xlane.f32.xlu0 %v2320
        %v2370 = vpop.xlane.xlu0 %2369
        %2371 = vmax.xlane.f32.xlu0 %v2325
        %v2372 = vpop.xlane.xlu0 %2371
        %2373 = vmax.xlane.f32.xlu0 %v2328
        %v2374 = vpop.xlane.xlu0 %2373
        %2375 = vmax.xlane.f32.xlu0 %v2333
        %v2376 = vpop.xlane.xlu0 %2375
        %2377 = vmax.xlane.f32.xlu0 %v2336
        %v2378 = vpop.xlane.xlu0 %2377
        %2379 = vmax.xlane.f32.xlu0 %v2341
        %v2380 = vpop.xlane.xlu0 %2379
        %2381 = vmax.xlane.f32.xlu0 %v2344
        %v2382 = vpop.xlane.xlu0 %2381
        %2383 = vmax.xlane.f32.xlu0 %v2349
        %v2384 = vpop.xlane.xlu0 %2383
        %2385 = vmax.xlane.f32.xlu0 %v2352
        %v2386 = vpop.xlane.xlu0 %2385
        %v2387 = vsub.f32 %v2293, %v2356
        %v2388 = vsub.f32 %v2296, %v2358
        %v2389 = vsub.f32 %v2301, %v2360
        %v2390 = vsub.f32 %v2304, %v2362
        %v2391 = vsub.f32 %v2309, %v2364
        %v2392 = vsub.f32 %v2312, %v2366
        %v2393 = vsub.f32 %v2317, %v2368
        %v2394 = vsub.f32 %v2320, %v2370
        %v2395 = vsub.f32 %v2325, %v2372
        %v2396 = vsub.f32 %v2328, %v2374
        %v2397 = vsub.f32 %v2333, %v2376
        %v2398 = vsub.f32 %v2336, %v2378
        %v2399 = vsub.f32 %v2341, %v2380
        %v2400 = vsub.f32 %v2344, %v2382
        %v2401 = vsub.f32 %v2349, %v2384
        %v2402 = vsub.f32 %v2352, %v2386
        %v2403 = vmul.f32 %v2387, 1.442695
        %v2404 = vpow.pop %v2403
        %v2405 = vmul.f32 %v2388, 1.442695
        %v2406 = vpow.pop %v2405
        %v2407 = vmul.f32 %v2389, 1.442695
        %v2408 = vpow.pop %v2407
        %v2409 = vmul.f32 %v2390, 1.442695
        %v2410 = vpow.pop %v2409
        %v2411 = vmul.f32 %v2391, 1.442695
        %v2412 = vpow.pop %v2411
        %v2413 = vmul.f32 %v2392, 1.442695
        %v2414 = vpow.pop %v2413
        %v2415 = vmul.f32 %v2393, 1.442695
        %v2416 = vpow.pop %v2415
        %v2417 = vmul.f32 %v2394, 1.442695
        %v2418 = vpow.pop %v2417
        %v2419 = vmul.f32 %v2395, 1.442695
        %v2420 = vpow.pop %v2419
        %v2421 = vmul.f32 %v2396, 1.442695
        %v2422 = vpow.pop %v2421
        %v2423 = vmul.f32 %v2397, 1.442695
        %v2424 = vpow.pop %v2423
        %v2425 = vmul.f32 %v2398, 1.442695
        %v2426 = vpow.pop %v2425
        %v2427 = vmul.f32 %v2399, 1.442695
        %v2428 = vpow.pop %v2427
        %v2429 = vmul.f32 %v2400, 1.442695
        %v2430 = vpow.pop %v2429
        %v2431 = vmul.f32 %v2401, 1.442695
        %v2432 = vpow.pop %v2431
        %v2433 = vmul.f32 %v2402, 1.442695
        %v2434 = vpow.pop %v2433
        %2435 = vadd.xlane.f32.xlu0 %v2404
        %v2436 = vpop.xlane.xlu0 %2435
        %2437 = vadd.xlane.f32.xlu0 %v2406
        %v2438 = vpop.xlane.xlu0 %2437
        %2439 = vadd.xlane.f32.xlu0 %v2408
        %v2440 = vpop.xlane.xlu0 %2439
        %2441 = vadd.xlane.f32.xlu0 %v2410
        %v2442 = vpop.xlane.xlu0 %2441
        %2443 = vadd.xlane.f32.xlu0 %v2412
        %v2444 = vpop.xlane.xlu0 %2443
        %2445 = vadd.xlane.f32.xlu0 %v2414
        %v2446 = vpop.xlane.xlu0 %2445
        %2447 = vadd.xlane.f32.xlu0 %v2416
        %v2448 = vpop.xlane.xlu0 %2447
        %2449 = vadd.xlane.f32.xlu0 %v2418
        %v2450 = vpop.xlane.xlu0 %2449
        %2451 = vadd.xlane.f32.xlu0 %v2420
        %v2452 = vpop.xlane.xlu0 %2451
        %2453 = vadd.xlane.f32.xlu0 %v2422
        %v2454 = vpop.xlane.xlu0 %2453
        %2455 = vadd.xlane.f32.xlu0 %v2424
        %v2456 = vpop.xlane.xlu0 %2455
        %2457 = vadd.xlane.f32.xlu0 %v2426
        %v2458 = vpop.xlane.xlu0 %2457
        %2459 = vadd.xlane.f32.xlu0 %v2428
        %v2460 = vpop.xlane.xlu0 %2459
        %2461 = vadd.xlane.f32.xlu0 %v2430
        %v2462 = vpop.xlane.xlu0 %2461
        %2463 = vadd.xlane.f32.xlu0 %v2432
        %v2464 = vpop.xlane.xlu0 %2463
        %2465 = vadd.xlane.f32.xlu0 %v2434
        %v2466 = vpop.xlane.xlu0 %2465
        %v2467 = vrcp.pop %v2436
        %v2468 = vrcp.pop %v2438
        %v2469 = vrcp.pop %v2440
        %v2470 = vrcp.pop %v2442
        %v2471 = vrcp.pop %v2444
        %v2472 = vrcp.pop %v2446
        %v2473 = vrcp.pop %v2448
        %v2474 = vrcp.pop %v2450
        %v2475 = vrcp.pop %v2452
        %v2476 = vrcp.pop %v2454
        %v2477 = vrcp.pop %v2456
        %v2478 = vrcp.pop %v2458
        %v2479 = vrcp.pop %v2460
        %v2480 = vrcp.pop %v2462
        %v2481 = vrcp.pop %v2464
        %v2482 = vrcp.pop %v2466
        %v2483 = vmul.f32 %v2404, %v2467
        %v2484 = vmul.f32 %v2406, %v2468
        %v2485 = vmul.f32 %v2408, %v2469
        %v2486 = vmul.f32 %v2410, %v2470
        %v2487 = vmul.f32 %v2412, %v2471
        %v2488 = vmul.f32 %v2414, %v2472
        %v2489 = vmul.f32 %v2416, %v2473
        %v2490 = vmul.f32 %v2418, %v2474
        %v2491 = vmul.f32 %v2420, %v2475
        %v2492 = vmul.f32 %v2422, %v2476
        %v2493 = vmul.f32 %v2424, %v2477
        %v2494 = vmul.f32 %v2426, %v2478
        %v2495 = vmul.f32 %v2428, %v2479
        %v2496 = vmul.f32 %v2430, %v2480
        %v2497 = vmul.f32 %v2432, %v2481
        %v2498 = vmul.f32 %v2434, %v2482
        %v2499 = vpack.c.bf16 %v2484, %v2483
        %v2500 = vpack.c.bf16 %v2486, %v2485
        %v2501 = vpack.c.bf16 %v2488, %v2487
        %v2502 = vpack.c.bf16 %v2490, %v2489
        %v2503 = vpack.c.bf16 %v2492, %v2491
        %v2504 = vpack.c.bf16 %v2494, %v2493
        %v2505 = vpack.c.bf16 %v2496, %v2495
        %v2506 = vpack.c.bf16 %v2498, %v2497
        %2507 = vmatprep.subr.bf16.mxu0 0
        %2508 = vmatpush1.bf16.msra.mxu0 %v1853
        %2509 = vmatprep.subr.bf16.mxu0 0
        %2510 = vmatpush1.bf16.msra.mxu0 %v1859
        %2511 = vmatprep.subr.bf16.mxu0 0
        %2512 = vmatpush1.bf16.msra.mxu0 %v1865
        %2513 = vmatprep.subr.bf16.mxu0 0
        %2514 = vmatpush1.bf16.msra.mxu0 %v1871
        %2515 = vmatprep.subr.bf16.mxu0 0
        %2516 = vmatpush1.bf16.msra.mxu0 %v1877
        %2517 = vmatprep.subr.bf16.mxu0 0
        %2518 = vmatpush1.bf16.msra.mxu0 %v1883
        %2519 = vmatprep.subr.bf16.mxu0 0
        %2520 = vmatpush1.bf16.msra.mxu0 %v1889
        %2521 = vmatprep.subr.bf16.mxu0 0
        %2522 = vmatpush1.bf16.msra.mxu0 %v1895
        %2523 = vmatprep.subr.bf16.mxu0 0
        %2524 = vmatpush1.bf16.msra.mxu0 0
        %2525 = vmatprep.subr.bf16.mxu0 0
        %2526 = vmatpush1.bf16.msra.mxu0 0
        %2527 = vmatprep.subr.bf16.mxu0 0
        %2528 = vmatpush1.bf16.msra.mxu0 0
        %2529 = vmatprep.subr.bf16.mxu0 0
        %2530 = vmatpush1.bf16.msra.mxu0 0
        %2531 = vmatprep.subr.bf16.mxu0 0
        %2532 = vmatpush1.bf16.msra.mxu0 0
        %2533 = vmatprep.subr.bf16.mxu0 0
        %2534 = vmatpush1.bf16.msra.mxu0 0
        %2535 = vmatprep.subr.bf16.mxu0 0
        %2536 = vmatpush1.bf16.msra.mxu0 0
        %2537 = vmatprep.subr.bf16.mxu0 0
        %2538 = vmatpush1.bf16.msra.mxu0 0
        %2539 = vmatprep.mubr.bf16.mxu0 0
        %2540 = vmatmul.mubr.bf16.gmra.mrb[0].mxu0 %v2499
        %v2541 = vpop.f32.mrb[0].mxu0
        %v2542 = vadd.f32 0.0, %v2541
        %v2543 = vpop.f32.mrb[0].mxu0
        %v2544 = vpop.f32.mrb[0].mxu0
        %v2545 = vadd.f32 0.0, %v2544
        %v2546 = vpop.f32.mrb[0].mxu0
        %2547 = vmatprep.mubr.bf16.mxu0 0
        %2548 = vmatmul.mubr.bf16.gmra.mrb[0].mxu0 %v2500
        %v2549 = vpop.f32.mrb[0].mxu0
        %v2550 = vadd.f32 0.0, %v2549
        %v2551 = vpop.f32.mrb[0].mxu0
        %v2552 = vpop.f32.mrb[0].mxu0
        %v2553 = vadd.f32 0.0, %v2552
        %v2554 = vpop.f32.mrb[0].mxu0
        %2555 = vmatprep.mubr.bf16.mxu0 0
        %2556 = vmatmul.mubr.bf16.gmra.mrb[0].mxu0 %v2501
        %v2557 = vpop.f32.mrb[0].mxu0
        %v2558 = vadd.f32 0.0, %v2557
        %v2559 = vpop.f32.mrb[0].mxu0
        %v2560 = vpop.f32.mrb[0].mxu0
        %v2561 = vadd.f32 0.0, %v2560
        %v2562 = vpop.f32.mrb[0].mxu0
        %2563 = vmatprep.mubr.bf16.mxu0 0
        %2564 = vmatmul.mubr.bf16.gmra.mrb[0].mxu0 %v2502
        %v2565 = vpop.f32.mrb[0].mxu0
        %v2566 = vadd.f32 0.0, %v2565
        %v2567 = vpop.f32.mrb[0].mxu0
        %v2568 = vpop.f32.mrb[0].mxu0
        %v2569 = vadd.f32 0.0, %v2568
        %v2570 = vpop.f32.mrb[0].mxu0
        %2571 = vmatprep.mubr.bf16.mxu0 0
        %2572 = vmatmul.mubr.bf16.gmra.mrb[0].mxu0 %v2503
        %v2573 = vpop.f32.mrb[0].mxu0
        %v2574 = vadd.f32 0.0, %v2573
        %v2575 = vpop.f32.mrb[0].mxu0
        %v2576 = vpop.f32.mrb[0].mxu0
        %v2577 = vadd.f32 0.0, %v2576
        %v2578 = vpop.f32.mrb[0].mxu0
        %2579 = vmatprep.mubr.bf16.mxu0 0
        %2580 = vmatmul.mubr.bf16.gmra.mrb[0].mxu0 %v2504
        %v2581 = vpop.f32.mrb[0].mxu0
        %v2582 = vadd.f32 0.0, %v2581
        %v2583 = vpop.f32.mrb[0].mxu0
        %v2584 = vpop.f32.mrb[0].mxu0
        %v2585 = vadd.f32 0.0, %v2584
        %v2586 = vpop.f32.mrb[0].mxu0
        %2587 = vmatprep.mubr.bf16.mxu0 0
        %2588 = vmatmul.mubr.bf16.gmra.mrb[0].mxu0 %v2505
        %v2589 = vpop.f32.mrb[0].mxu0
        %v2590 = vadd.f32 0.0, %v2589
        %v2591 = vpop.f32.mrb[0].mxu0
        %v2592 = vpop.f32.mrb[0].mxu0
        %v2593 = vadd.f32 0.0, %v2592
        %v2594 = vpop.f32.mrb[0].mxu0
        %2595 = vmatprep.mubr.bf16.mxu0 0
        %2596 = vmatmul.mubr.bf16.gmra.mrb[0].mxu0 %v2506
        %v2597 = vpop.f32.mrb[0].mxu0
        %v2598 = vadd.f32 0.0, %v2597
        %v2599 = vpop.f32.mrb[0].mxu0
        %v2600 = vpop.f32.mrb[0].mxu0
        %v2601 = vadd.f32 0.0, %v2600
        %v2602 = vpop.f32.mrb[0].mxu0
        %2603 = vdwg.mxu0
        %v2604 = vpack.c.bf16 %v2545, %v2542
        %v2605 = vpack.c.bf16 %v2553, %v2550
        %v2606 = vpack.c.bf16 %v2561, %v2558
        %v2607 = vpack.c.bf16 %v2569, %v2566
        %v2608 = vpack.c.bf16 %v2577, %v2574
        %v2609 = vpack.c.bf16 %v2585, %v2582
        %v2610 = vpack.c.bf16 %v2593, %v2590
        %v2611 = vpack.c.bf16 %v2601, %v2598
        %2612 = vst [vmem:[#allocation2 + $0x8] sm:$0xff] %v2604
        %2613 = vst [vmem:[#allocation2 + $0x18] sm:$0xff] %v2605
        %2614 = vst [vmem:[#allocation2 + $0x28] sm:$0xff] %v2606
        %2615 = vst [vmem:[#allocation2 + $0x38] sm:$0xff] %v2607
        %2616 = vst [vmem:[#allocation2 + $0x48] sm:$0xff] %v2608
        %2617 = vst [vmem:[#allocation2 + $0x58] sm:$0xff] %v2609
        %2618 = vst [vmem:[#allocation2 + $0x68] sm:$0xff] %v2610
        %2619 = vst [vmem:[#allocation2 + $0x78] sm:$0xff] %v2611
        %v2620 = vld [vmem:[#allocation2] sm:$0xff]
        %v2621 = vld [vmem:[#allocation2 + $0x8] sm:$0xff]
        %v2622 = vld [vmem:[#allocation2 + $0x10] sm:$0xff]
        %v2623 = vld [vmem:[#allocation2 + $0x18] sm:$0xff]
        %v2624 = vld [vmem:[#allocation2 + $0x20] sm:$0xff]
        %v2625 = vld [vmem:[#allocation2 + $0x28] sm:$0xff]
        %v2626 = vld [vmem:[#allocation2 + $0x30] sm:$0xff]
        %v2627 = vld [vmem:[#allocation2 + $0x38] sm:$0xff]
        %v2628 = vld [vmem:[#allocation2 + $0x40] sm:$0xff]
        %v2629 = vld [vmem:[#allocation2 + $0x48] sm:$0xff]
        %v2630 = vld [vmem:[#allocation2 + $0x50] sm:$0xff]
        %v2631 = vld [vmem:[#allocation2 + $0x58] sm:$0xff]
        %v2632 = vld [vmem:[#allocation2 + $0x60] sm:$0xff]
        %v2633 = vld [vmem:[#allocation2 + $0x68] sm:$0xff]
        %v2634 = vld [vmem:[#allocation2 + $0x70] sm:$0xff]
        %v2635 = vld [vmem:[#allocation2 + $0x78] sm:$0xff]
        %v2636 = vld [vmem:[#allocation8] sm:$0xff]
        %v2637 = vld [vmem:[#allocation8 + $0x8] sm:$0xff]
        %v2638 = vld [vmem:[#allocation8 + $0x10] sm:$0xff]
        %v2639 = vld [vmem:[#allocation8 + $0x18] sm:$0xff]
        %v2640 = vld [vmem:[#allocation8 + $0x20] sm:$0xff]
        %v2641 = vld [vmem:[#allocation8 + $0x28] sm:$0xff]
        %v2642 = vld [vmem:[#allocation8 + $0x30] sm:$0xff]
        %v2643 = vld [vmem:[#allocation8 + $0x38] sm:$0xff]
        %v2644 = vld [vmem:[#allocation8 + $0x40] sm:$0xff]
        %v2645 = vld [vmem:[#allocation8 + $0x48] sm:$0xff]
        %v2646 = vld [vmem:[#allocation8 + $0x50] sm:$0xff]
        %v2647 = vld [vmem:[#allocation8 + $0x58] sm:$0xff]
        %v2648 = vld [vmem:[#allocation8 + $0x60] sm:$0xff]
        %v2649 = vld [vmem:[#allocation8 + $0x68] sm:$0xff]
        %v2650 = vld [vmem:[#allocation8 + $0x70] sm:$0xff]
        %v2651 = vld [vmem:[#allocation8 + $0x78] sm:$0xff]
        %v2652 = vld [vmem:[#allocation8 + $0x80] sm:$0xff]
        %v2653 = vld [vmem:[#allocation8 + $0x88] sm:$0xff]
        %v2654 = vld [vmem:[#allocation8 + $0x90] sm:$0xff]
        %v2655 = vld [vmem:[#allocation8 + $0x98] sm:$0xff]
        %v2656 = vld [vmem:[#allocation8 + $0xa0] sm:$0xff]
        %v2657 = vld [vmem:[#allocation8 + $0xa8] sm:$0xff]
        %v2658 = vld [vmem:[#allocation8 + $0xb0] sm:$0xff]
        %v2659 = vld [vmem:[#allocation8 + $0xb8] sm:$0xff]
        %v2660 = vld [vmem:[#allocation8 + $0xc0] sm:$0xff]
        %v2661 = vld [vmem:[#allocation8 + $0xc8] sm:$0xff]
        %v2662 = vld [vmem:[#allocation8 + $0xd0] sm:$0xff]
        %v2663 = vld [vmem:[#allocation8 + $0xd8] sm:$0xff]
        %v2664 = vld [vmem:[#allocation8 + $0xe0] sm:$0xff]
        %v2665 = vld [vmem:[#allocation8 + $0xe8] sm:$0xff]
        %v2666 = vld [vmem:[#allocation8 + $0xf0] sm:$0xff]
        %v2667 = vld [vmem:[#allocation8 + $0xf8] sm:$0xff]
        %v2700 = vunpack.c.l.b16 %v2636
        %v2701 = vunpack.c.h.b16 %v2636
        %v2702 = vunpack.c.l.b16 %v2637
        %v2703 = vunpack.c.h.b16 %v2637
        %v2704 = vunpack.c.l.b16 %v2638
        %v2705 = vunpack.c.h.b16 %v2638
        %v2706 = vunpack.c.l.b16 %v2639
        %v2707 = vunpack.c.h.b16 %v2639
        %v2708 = vunpack.c.l.b16 %v2640
        %v2709 = vunpack.c.h.b16 %v2640
        %v2710 = vunpack.c.l.b16 %v2641
        %v2711 = vunpack.c.h.b16 %v2641
        %v2712 = vunpack.c.l.b16 %v2642
        %v2713 = vunpack.c.h.b16 %v2642
        %v2714 = vunpack.c.l.b16 %v2643
        %v2715 = vunpack.c.h.b16 %v2643
        %v2716 = vunpack.c.l.b16 %v2644
        %v2717 = vunpack.c.h.b16 %v2644
        %v2718 = vunpack.c.l.b16 %v2645
        %v2719 = vunpack.c.h.b16 %v2645
        %v2720 = vunpack.c.l.b16 %v2646
        %v2721 = vunpack.c.h.b16 %v2646
        %v2722 = vunpack.c.l.b16 %v2647
        %v2723 = vunpack.c.h.b16 %v2647
        %v2724 = vunpack.c.l.b16 %v2648
        %v2725 = vunpack.c.h.b16 %v2648
        %v2726 = vunpack.c.l.b16 %v2649
        %v2727 = vunpack.c.h.b16 %v2649
        %v2728 = vunpack.c.l.b16 %v2650
        %v2729 = vunpack.c.h.b16 %v2650
        %v2730 = vunpack.c.l.b16 %v2651
        %v2731 = vunpack.c.h.b16 %v2651
        %v2732 = vunpack.c.l.b16 %v2652
        %v2733 = vunpack.c.h.b16 %v2652
        %v2734 = vunpack.c.l.b16 %v2653
        %v2735 = vunpack.c.h.b16 %v2653
        %v2736 = vunpack.c.l.b16 %v2654
        %v2737 = vunpack.c.h.b16 %v2654
        %v2738 = vunpack.c.l.b16 %v2655
        %v2739 = vunpack.c.h.b16 %v2655
        %v2740 = vunpack.c.l.b16 %v2656
        %v2741 = vunpack.c.h.b16 %v2656
        %v2742 = vunpack.c.l.b16 %v2657
        %v2743 = vunpack.c.h.b16 %v2657
        %v2744 = vunpack.c.l.b16 %v2658
        %v2745 = vunpack.c.h.b16 %v2658
        %v2746 = vunpack.c.l.b16 %v2659
        %v2747 = vunpack.c.h.b16 %v2659
        %v2748 = vunpack.c.l.b16 %v2660
        %v2749 = vunpack.c.h.b16 %v2660
        %v2750 = vunpack.c.l.b16 %v2661
        %v2751 = vunpack.c.h.b16 %v2661
        %v2752 = vunpack.c.l.b16 %v2662
        %v2753 = vunpack.c.h.b16 %v2662
        %v2754 = vunpack.c.l.b16 %v2663
        %v2755 = vunpack.c.h.b16 %v2663
        %v2756 = vunpack.c.l.b16 %v2664
        %v2757 = vunpack.c.h.b16 %v2664
        %v2758 = vunpack.c.l.b16 %v2665
        %v2759 = vunpack.c.h.b16 %v2665
        %v2760 = vunpack.c.l.b16 %v2666
        %v2761 = vunpack.c.h.b16 %v2666
        %v2762 = vunpack.c.l.b16 %v2667
        %v2763 = vunpack.c.h.b16 %v2667
        %v2764 = vpack.c.b16 %v2702, %v2700
        %v2765 = vpack.c.b16 %v2703, %v2701
        %v2766 = vpack.c.b16 %v2706, %v2704
        %v2767 = vpack.c.b16 %v2707, %v2705
        %v2768 = vpack.c.b16 %v2710, %v2708
        %v2769 = vpack.c.b16 %v2711, %v2709
        %v2770 = vpack.c.b16 %v2714, %v2712
        %v2771 = vpack.c.b16 %v2715, %v2713
        %v2772 = vpack.c.b16 %v2718, %v2716
        %v2773 = vpack.c.b16 %v2719, %v2717
        %v2774 = vpack.c.b16 %v2722, %v2720
        %v2775 = vpack.c.b16 %v2723, %v2721
        %v2776 = vpack.c.b16 %v2726, %v2724
        %v2777 = vpack.c.b16 %v2727, %v2725
        %v2778 = vpack.c.b16 %v2730, %v2728
        %v2779 = vpack.c.b16 %v2731, %v2729
        %v2780 = vpack.c.b16 %v2734, %v2732
        %v2781 = vpack.c.b16 %v2735, %v2733
        %v2782 = vpack.c.b16 %v2738, %v2736
        %v2783 = vpack.c.b16 %v2739, %v2737
        %v2784 = vpack.c.b16 %v2742, %v2740
        %v2785 = vpack.c.b16 %v2743, %v2741
        %v2786 = vpack.c.b16 %v2746, %v2744
        %v2787 = vpack.c.b16 %v2747, %v2745
        %v2788 = vpack.c.b16 %v2750, %v2748
        %v2789 = vpack.c.b16 %v2751, %v2749
        %v2790 = vpack.c.b16 %v2754, %v2752
        %v2791 = vpack.c.b16 %v2755, %v2753
        %v2792 = vpack.c.b16 %v2758, %v2756
        %v2793 = vpack.c.b16 %v2759, %v2757
        %v2794 = vpack.c.b16 %v2762, %v2760
        %v2795 = vpack.c.b16 %v2763, %v2761
        %2828 = vmatprep.subr.bf16.mxu0 %v2765
        %2829 = vmatpush1.bf16.msra.mxu0 %v2764
        %2830 = vmatprep.subr.bf16.mxu0 %v2767
        %2831 = vmatpush1.bf16.msra.mxu0 %v2766
        %2832 = vmatprep.subr.bf16.mxu0 %v2769
        %2833 = vmatpush1.bf16.msra.mxu0 %v2768
        %2834 = vmatprep.subr.bf16.mxu0 %v2771
        %2835 = vmatpush1.bf16.msra.mxu0 %v2770
        %2836 = vmatprep.subr.bf16.mxu0 %v2773
        %2837 = vmatpush1.bf16.msra.mxu0 %v2772
        %2838 = vmatprep.subr.bf16.mxu0 %v2775
        %2839 = vmatpush1.bf16.msra.mxu0 %v2774
        %2840 = vmatprep.subr.bf16.mxu0 %v2777
        %2841 = vmatpush1.bf16.msra.mxu0 %v2776
        %2842 = vmatprep.subr.bf16.mxu0 %v2779
        %2843 = vmatpush1.bf16.msra.mxu0 %v2778
        %2844 = vmatprep.subr.bf16.mxu0 %v2781
        %2845 = vmatpush1.bf16.msra.mxu0 %v2780
        %2846 = vmatprep.subr.bf16.mxu0 %v2783
        %2847 = vmatpush1.bf16.msra.mxu0 %v2782
        %2848 = vmatprep.subr.bf16.mxu0 %v2785
        %2849 = vmatpush1.bf16.msra.mxu0 %v2784
        %2850 = vmatprep.subr.bf16.mxu0 %v2787
        %2851 = vmatpush1.bf16.msra.mxu0 %v2786
        %2852 = vmatprep.subr.bf16.mxu0 %v2789
        %2853 = vmatpush1.bf16.msra.mxu0 %v2788
        %2854 = vmatprep.subr.bf16.mxu0 %v2791
        %2855 = vmatpush1.bf16.msra.mxu0 %v2790
        %2856 = vmatprep.subr.bf16.mxu0 %v2793
        %2857 = vmatpush1.bf16.msra.mxu0 %v2792
        %2858 = vmatprep.subr.bf16.mxu0 %v2795
        %2859 = vmatpush1.bf16.msra.mxu0 %v2794
        %2860 = vmatprep.mubr.bf16.mxu0 %v2621
        %2861 = vmatmul.mubr.bf16.gmra.mrb[0].mxu0 %v2620
        %v2862 = vpop.f32.mrb[0].mxu0
        %v2863 = vadd.f32 0.0, %v2862
        %v2864 = vpop.f32.mrb[0].mxu0
        %v2865 = vadd.f32 0.0, %v2864
        %v2866 = vpop.f32.mrb[0].mxu0
        %v2867 = vadd.f32 0.0, %v2866
        %v2868 = vpop.f32.mrb[0].mxu0
        %v2869 = vadd.f32 0.0, %v2868
        %2870 = vmatprep.mubr.bf16.mxu0 %v2623
        %2871 = vmatmul.mubr.bf16.gmra.mrb[0].mxu0 %v2622
        %v2872 = vpop.f32.mrb[0].mxu0
        %v2873 = vadd.f32 0.0, %v2872
        %v2874 = vpop.f32.mrb[0].mxu0
        %v2875 = vadd.f32 0.0, %v2874
        %v2876 = vpop.f32.mrb[0].mxu0
        %v2877 = vadd.f32 0.0, %v2876
        %v2878 = vpop.f32.mrb[0].mxu0
        %v2879 = vadd.f32 0.0, %v2878
        %2880 = vmatprep.mubr.bf16.mxu0 %v2625
        %2881 = vmatmul.mubr.bf16.gmra.mrb[0].mxu0 %v2624
        %v2882 = vpop.f32.mrb[0].mxu0
        %v2883 = vadd.f32 0.0, %v2882
        %v2884 = vpop.f32.mrb[0].mxu0
        %v2885 = vadd.f32 0.0, %v2884
        %v2886 = vpop.f32.mrb[0].mxu0
        %v2887 = vadd.f32 0.0, %v2886
        %v2888 = vpop.f32.mrb[0].mxu0
        %v2889 = vadd.f32 0.0, %v2888
        %2890 = vmatprep.mubr.bf16.mxu0 %v2627
        %2891 = vmatmul.mubr.bf16.gmra.mrb[0].mxu0 %v2626
        %v2892 = vpop.f32.mrb[0].mxu0
        %v2893 = vadd.f32 0.0, %v2892
        %v2894 = vpop.f32.mrb[0].mxu0
        %v2895 = vadd.f32 0.0, %v2894
        %v2896 = vpop.f32.mrb[0].mxu0
        %v2897 = vadd.f32 0.0, %v2896
        %v2898 = vpop.f32.mrb[0].mxu0
        %v2899 = vadd.f32 0.0, %v2898
        %2900 = vmatprep.mubr.bf16.mxu0 %v2629
        %2901 = vmatmul.mubr.bf16.gmra.mrb[0].mxu0 %v2628
        %v2902 = vpop.f32.mrb[0].mxu0
        %v2903 = vadd.f32 0.0, %v2902
        %v2904 = vpop.f32.mrb[0].mxu0
        %v2905 = vadd.f32 0.0, %v2904
        %v2906 = vpop.f32.mrb[0].mxu0
        %v2907 = vadd.f32 0.0, %v2906
        %v2908 = vpop.f32.mrb[0].mxu0
        %v2909 = vadd.f32 0.0, %v2908
        %2910 = vmatprep.mubr.bf16.mxu0 %v2631
        %2911 = vmatmul.mubr.bf16.gmra.mrb[0].mxu0 %v2630
        %v2912 = vpop.f32.mrb[0].mxu0
        %v2913 = vadd.f32 0.0, %v2912
        %v2914 = vpop.f32.mrb[0].mxu0
        %v2915 = vadd.f32 0.0, %v2914
        %v2916 = vpop.f32.mrb[0].mxu0
        %v2917 = vadd.f32 0.0, %v2916
        %v2918 = vpop.f32.mrb[0].mxu0
        %v2919 = vadd.f32 0.0, %v2918
        %2920 = vmatprep.mubr.bf16.mxu0 %v2633
        %2921 = vmatmul.mubr.bf16.gmra.mrb[0].mxu0 %v2632
        %v2922 = vpop.f32.mrb[0].mxu0
        %v2923 = vadd.f32 0.0, %v2922
        %v2924 = vpop.f32.mrb[0].mxu0
        %v2925 = vadd.f32 0.0, %v2924
        %v2926 = vpop.f32.mrb[0].mxu0
        %v2927 = vadd.f32 0.0, %v2926
        %v2928 = vpop.f32.mrb[0].mxu0
        %v2929 = vadd.f32 0.0, %v2928
        %2930 = vmatprep.mubr.bf16.mxu0 %v2635
        %2931 = vmatmul.mubr.bf16.gmra.mrb[0].mxu0 %v2634
        %v2932 = vpop.f32.mrb[0].mxu0
        %v2933 = vadd.f32 0.0, %v2932
        %v2934 = vpop.f32.mrb[0].mxu0
        %v2935 = vadd.f32 0.0, %v2934
        %v2936 = vpop.f32.mrb[0].mxu0
        %v2937 = vadd.f32 0.0, %v2936
        %v2938 = vpop.f32.mrb[0].mxu0
        %v2939 = vadd.f32 0.0, %v2938
        %2940 = vdwg.mxu0
        %v2941 = vadd.f32 %v508, %v2863
        %v2942 = vadd.f32 %v509, %v2865
        %v2943 = vadd.f32 %v510, %v2867
        %v2944 = vadd.f32 %v511, %v2869
        %v2945 = vadd.f32 %v512, %v2873
        %v2946 = vadd.f32 %v513, %v2875
        %v2947 = vadd.f32 %v514, %v2877
        %v2948 = vadd.f32 %v515, %v2879
        %v2949 = vadd.f32 %v516, %v2883
        %v2950 = vadd.f32 %v517, %v2885
        %v2951 = vadd.f32 %v518, %v2887
        %v2952 = vadd.f32 %v519, %v2889
        %v2953 = vadd.f32 %v520, %v2893
        %v2954 = vadd.f32 %v521, %v2895
        %v2955 = vadd.f32 %v522, %v2897
        %v2956 = vadd.f32 %v523, %v2899
        %v2957 = vadd.f32 %v524, %v2903
        %v2958 = vadd.f32 %v525, %v2905
        %v2959 = vadd.f32 %v526, %v2907
        %v2960 = vadd.f32 %v527, %v2909
        %v2961 = vadd.f32 %v528, %v2913
        %v2962 = vadd.f32 %v529, %v2915
        %v2963 = vadd.f32 %v530, %v2917
        %v2964 = vadd.f32 %v531, %v2919
        %v2965 = vadd.f32 %v532, %v2923
        %v2966 = vadd.f32 %v533, %v2925
        %v2967 = vadd.f32 %v534, %v2927
        %v2968 = vadd.f32 %v535, %v2929
        %v2969 = vadd.f32 %v536, %v2933
        %v2970 = vadd.f32 %v537, %v2935
        %v2971 = vadd.f32 %v538, %v2937
        %v2972 = vadd.f32 %v539, %v2939
        %v2973 = vld [vmem:[%s6] sm:$0x3]
        %v2975 = vlaneseq
        %v2976 = vshrl.u32 %v2975, 7
        %v2977 = vsub.s32 0, %v2976
        %v2978 = vrot.slane %v2973, %v2977
        %v2979 = vlaneseq
        %v2980 = vshrl.u32 %v2979, 7
        %v2981 = vsub.s32 1, %v2980
        %v2982 = vrot.slane %v2973, %v2981
        %v2985 = vadd.f32 %v2941, %v2978
        %v2986 = vadd.f32 %v2942, %v2982
        %v2987 = vadd.f32 %v2943, %v2978
        %v2988 = vadd.f32 %v2944, %v2982
        %v2989 = vadd.f32 %v2945, %v2978
        %v2990 = vadd.f32 %v2946, %v2982
        %v2991 = vadd.f32 %v2947, %v2978
        %v2992 = vadd.f32 %v2948, %v2982
        %v2993 = vadd.f32 %v2949, %v2978
        %v2994 = vadd.f32 %v2950, %v2982
        %v2995 = vadd.f32 %v2951, %v2978
        %v2996 = vadd.f32 %v2952, %v2982
        %v2997 = vadd.f32 %v2953, %v2978
        %v2998 = vadd.f32 %v2954, %v2982
        %v2999 = vadd.f32 %v2955, %v2978
        %v3000 = vadd.f32 %v2956, %v2982
        %v3001 = vadd.f32 %v2957, %v2978
        %v3002 = vadd.f32 %v2958, %v2982
        %v3003 = vadd.f32 %v2959, %v2978
        %v3004 = vadd.f32 %v2960, %v2982
        %v3005 = vadd.f32 %v2961, %v2978
        %v3006 = vadd.f32 %v2962, %v2982
        %v3007 = vadd.f32 %v2963, %v2978
        %v3008 = vadd.f32 %v2964, %v2982
        %v3009 = vadd.f32 %v2965, %v2978
        %v3010 = vadd.f32 %v2966, %v2982
        %v3011 = vadd.f32 %v2967, %v2978
        %v3012 = vadd.f32 %v2968, %v2982
        %v3013 = vadd.f32 %v2969, %v2978
        %v3014 = vadd.f32 %v2970, %v2982
        %v3015 = vadd.f32 %v2971, %v2978
        %v3016 = vadd.f32 %v2972, %v2982
        %v3017 = vld [vmem:[%s7] sm:$0x3]
        %v3018 = vld [vmem:[%s8] sm:$0x3]
        %v3019 = vadd.f32 %v2985, %v2986
        %3020 = vadd.xlane.f32.xlu0 %v3019
        %v3021 = vpop.xlane.xlu0 %3020
        %v3022 = vadd.f32 %v2987, %v2988
        %3023 = vadd.xlane.f32.xlu0 %v3022
        %v3024 = vpop.xlane.xlu0 %3023
        %v3025 = vadd.f32 %v2989, %v2990
        %3026 = vadd.xlane.f32.xlu0 %v3025
        %v3027 = vpop.xlane.xlu0 %3026
        %v3028 = vadd.f32 %v2991, %v2992
        %3029 = vadd.xlane.f32.xlu0 %v3028
        %v3030 = vpop.xlane.xlu0 %3029
        %v3031 = vadd.f32 %v2993, %v2994
        %3032 = vadd.xlane.f32.xlu0 %v3031
        %v3033 = vpop.xlane.xlu0 %3032
        %v3034 = vadd.f32 %v2995, %v2996
        %3035 = vadd.xlane.f32.xlu0 %v3034
        %v3036 = vpop.xlane.xlu0 %3035
        %v3037 = vadd.f32 %v2997, %v2998
        %3038 = vadd.xlane.f32.xlu0 %v3037
        %v3039 = vpop.xlane.xlu0 %3038
        %v3040 = vadd.f32 %v2999, %v3000
        %3041 = vadd.xlane.f32.xlu0 %v3040
        %v3042 = vpop.xlane.xlu0 %3041
        %v3043 = vadd.f32 %v3001, %v3002
        %3044 = vadd.xlane.f32.xlu0 %v3043
        %v3045 = vpop.xlane.xlu0 %3044
        %v3046 = vadd.f32 %v3003, %v3004
        %3047 = vadd.xlane.f32.xlu0 %v3046
        %v3048 = vpop.xlane.xlu0 %3047
        %v3049 = vadd.f32 %v3005, %v3006
        %3050 = vadd.xlane.f32.xlu0 %v3049
        %v3051 = vpop.xlane.xlu0 %3050
        %v3052 = vadd.f32 %v3007, %v3008
        %3053 = vadd.xlane.f32.xlu0 %v3052
        %v3054 = vpop.xlane.xlu0 %3053
        %v3055 = vadd.f32 %v3009, %v3010
        %3056 = vadd.xlane.f32.xlu0 %v3055
        %v3057 = vpop.xlane.xlu0 %3056
        %v3058 = vadd.f32 %v3011, %v3012
        %3059 = vadd.xlane.f32.xlu0 %v3058
        %v3060 = vpop.xlane.xlu0 %3059
        %v3061 = vadd.f32 %v3013, %v3014
        %3062 = vadd.xlane.f32.xlu0 %v3061
        %v3063 = vpop.xlane.xlu0 %3062
        %v3064 = vadd.f32 %v3015, %v3016
        %3065 = vadd.xlane.f32.xlu0 %v3064
        %v3066 = vpop.xlane.xlu0 %3065
        %v3067 = vmul.f32 %v3021, %v590
        %v3068 = vmul.f32 %v3024, %v590
        %v3069 = vmul.f32 %v3027, %v590
        %v3070 = vmul.f32 %v3030, %v590
        %v3071 = vmul.f32 %v3033, %v590
        %v3072 = vmul.f32 %v3036, %v590
        %v3073 = vmul.f32 %v3039, %v590
        %v3074 = vmul.f32 %v3042, %v590
        %v3075 = vmul.f32 %v3045, %v590
        %v3076 = vmul.f32 %v3048, %v590
        %v3077 = vmul.f32 %v3051, %v590
        %v3078 = vmul.f32 %v3054, %v590
        %v3079 = vmul.f32 %v3057, %v590
        %v3080 = vmul.f32 %v3060, %v590
        %v3081 = vmul.f32 %v3063, %v590
        %v3082 = vmul.f32 %v3066, %v590
        %v3083 = vsub.f32 %v2985, %v3067
        %v3084 = vsub.f32 %v2986, %v3067
        %v3085 = vsub.f32 %v2987, %v3068
        %v3086 = vsub.f32 %v2988, %v3068
        %v3087 = vsub.f32 %v2989, %v3069
        %v3088 = vsub.f32 %v2990, %v3069
        %v3089 = vsub.f32 %v2991, %v3070
        %v3090 = vsub.f32 %v2992, %v3070
        %v3091 = vsub.f32 %v2993, %v3071
        %v3092 = vsub.f32 %v2994, %v3071
        %v3093 = vsub.f32 %v2995, %v3072
        %v3094 = vsub.f32 %v2996, %v3072
        %v3095 = vsub.f32 %v2997, %v3073
        %v3096 = vsub.f32 %v2998, %v3073
        %v3097 = vsub.f32 %v2999, %v3074
        %v3098 = vsub.f32 %v3000, %v3074
        %v3099 = vsub.f32 %v3001, %v3075
        %v3100 = vsub.f32 %v3002, %v3075
        %v3101 = vsub.f32 %v3003, %v3076
        %v3102 = vsub.f32 %v3004, %v3076
        %v3103 = vsub.f32 %v3005, %v3077
        %v3104 = vsub.f32 %v3006, %v3077
        %v3105 = vsub.f32 %v3007, %v3078
        %v3106 = vsub.f32 %v3008, %v3078
        %v3107 = vsub.f32 %v3009, %v3079
        %v3108 = vsub.f32 %v3010, %v3079
        %v3109 = vsub.f32 %v3011, %v3080
        %v3110 = vsub.f32 %v3012, %v3080
        %v3111 = vsub.f32 %v3013, %v3081
        %v3112 = vsub.f32 %v3014, %v3081
        %v3113 = vsub.f32 %v3015, %v3082
        %v3114 = vsub.f32 %v3016, %v3082
        %v3115 = vmul.f32 %v3083, %v3083
        %v3116 = vmul.f32 %v3084, %v3084
        %v3117 = vmul.f32 %v3085, %v3085
        %v3118 = vmul.f32 %v3086, %v3086
        %v3119 = vmul.f32 %v3087, %v3087
        %v3120 = vmul.f32 %v3088, %v3088
        %v3121 = vmul.f32 %v3089, %v3089
        %v3122 = vmul.f32 %v3090, %v3090
        %v3123 = vmul.f32 %v3091, %v3091
        %v3124 = vmul.f32 %v3092, %v3092
        %v3125 = vmul.f32 %v3093, %v3093
        %v3126 = vmul.f32 %v3094, %v3094
        %v3127 = vmul.f32 %v3095, %v3095
        %v3128 = vmul.f32 %v3096, %v3096
        %v3129 = vmul.f32 %v3097, %v3097
        %v3130 = vmul.f32 %v3098, %v3098
        %v3131 = vmul.f32 %v3099, %v3099
        %v3132 = vmul.f32 %v3100, %v3100
        %v3133 = vmul.f32 %v3101, %v3101
        %v3134 = vmul.f32 %v3102, %v3102
        %v3135 = vmul.f32 %v3103, %v3103
        %v3136 = vmul.f32 %v3104, %v3104
        %v3137 = vmul.f32 %v3105, %v3105
        %v3138 = vmul.f32 %v3106, %v3106
        %v3139 = vmul.f32 %v3107, %v3107
        %v3140 = vmul.f32 %v3108, %v3108
        %v3141 = vmul.f32 %v3109, %v3109
        %v3142 = vmul.f32 %v3110, %v3110
        %v3143 = vmul.f32 %v3111, %v3111
        %v3144 = vmul.f32 %v3112, %v3112
        %v3145 = vmul.f32 %v3113, %v3113
        %v3146 = vmul.f32 %v3114, %v3114
        %v3147 = vadd.f32 %v3115, %v3116
        %3148 = vadd.xlane.f32.xlu0 %v3147
        %v3149 = vpop.xlane.xlu0 %3148
        %v3150 = vadd.f32 %v3117, %v3118
        %3151 = vadd.xlane.f32.xlu0 %v3150
        %v3152 = vpop.xlane.xlu0 %3151
        %v3153 = vadd.f32 %v3119, %v3120
        %3154 = vadd.xlane.f32.xlu0 %v3153
        %v3155 = vpop.xlane.xlu0 %3154
        %v3156 = vadd.f32 %v3121, %v3122
        %3157 = vadd.xlane.f32.xlu0 %v3156
        %v3158 = vpop.xlane.xlu0 %3157
        %v3159 = vadd.f32 %v3123, %v3124
        %3160 = vadd.xlane.f32.xlu0 %v3159
        %v3161 = vpop.xlane.xlu0 %3160
        %v3162 = vadd.f32 %v3125, %v3126
        %3163 = vadd.xlane.f32.xlu0 %v3162
        %v3164 = vpop.xlane.xlu0 %3163
        %v3165 = vadd.f32 %v3127, %v3128
        %3166 = vadd.xlane.f32.xlu0 %v3165
        %v3167 = vpop.xlane.xlu0 %3166
        %v3168 = vadd.f32 %v3129, %v3130
        %3169 = vadd.xlane.f32.xlu0 %v3168
        %v3170 = vpop.xlane.xlu0 %3169
        %v3171 = vadd.f32 %v3131, %v3132
        %3172 = vadd.xlane.f32.xlu0 %v3171
        %v3173 = vpop.xlane.xlu0 %3172
        %v3174 = vadd.f32 %v3133, %v3134
        %3175 = vadd.xlane.f32.xlu0 %v3174
        %v3176 = vpop.xlane.xlu0 %3175
        %v3177 = vadd.f32 %v3135, %v3136
        %3178 = vadd.xlane.f32.xlu0 %v3177
        %v3179 = vpop.xlane.xlu0 %3178
        %v3180 = vadd.f32 %v3137, %v3138
        %3181 = vadd.xlane.f32.xlu0 %v3180
        %v3182 = vpop.xlane.xlu0 %3181
        %v3183 = vadd.f32 %v3139, %v3140
        %3184 = vadd.xlane.f32.xlu0 %v3183
        %v3185 = vpop.xlane.xlu0 %3184
        %v3186 = vadd.f32 %v3141, %v3142
        %3187 = vadd.xlane.f32.xlu0 %v3186
        %v3188 = vpop.xlane.xlu0 %3187
        %v3189 = vadd.f32 %v3143, %v3144
        %3190 = vadd.xlane.f32.xlu0 %v3189
        %v3191 = vpop.xlane.xlu0 %3190
        %v3192 = vadd.f32 %v3145, %v3146
        %3193 = vadd.xlane.f32.xlu0 %v3192
        %v3194 = vpop.xlane.xlu0 %3193
        %v3195 = vmul.f32 %v3149, %v590
        %v3196 = vmul.f32 %v3152, %v590
        %v3197 = vmul.f32 %v3155, %v590
        %v3198 = vmul.f32 %v3158, %v590
        %v3199 = vmul.f32 %v3161, %v590
        %v3200 = vmul.f32 %v3164, %v590
        %v3201 = vmul.f32 %v3167, %v590
        %v3202 = vmul.f32 %v3170, %v590
        %v3203 = vmul.f32 %v3173, %v590
        %v3204 = vmul.f32 %v3176, %v590
        %v3205 = vmul.f32 %v3179, %v590
        %v3206 = vmul.f32 %v3182, %v590
        %v3207 = vmul.f32 %v3185, %v590
        %v3208 = vmul.f32 %v3188, %v590
        %v3209 = vmul.f32 %v3191, %v590
        %v3210 = vmul.f32 %v3194, %v590
        %v3211 = vadd.f32 %v3195, 1e-06
        %v3212 = vadd.f32 %v3196, 1e-06
        %v3213 = vadd.f32 %v3197, 1e-06
        %v3214 = vadd.f32 %v3198, 1e-06
        %v3215 = vadd.f32 %v3199, 1e-06
        %v3216 = vadd.f32 %v3200, 1e-06
        %v3217 = vadd.f32 %v3201, 1e-06
        %v3218 = vadd.f32 %v3202, 1e-06
        %v3219 = vadd.f32 %v3203, 1e-06
        %v3220 = vadd.f32 %v3204, 1e-06
        %v3221 = vadd.f32 %v3205, 1e-06
        %v3222 = vadd.f32 %v3206, 1e-06
        %v3223 = vadd.f32 %v3207, 1e-06
        %v3224 = vadd.f32 %v3208, 1e-06
        %v3225 = vadd.f32 %v3209, 1e-06
        %v3226 = vadd.f32 %v3210, 1e-06
        %v3227 = vrsqrt.pop %v3211
        %v3228 = vrsqrt.pop %v3212
        %v3229 = vrsqrt.pop %v3213
        %v3230 = vrsqrt.pop %v3214
        %v3231 = vrsqrt.pop %v3215
        %v3232 = vrsqrt.pop %v3216
        %v3233 = vrsqrt.pop %v3217
        %v3234 = vrsqrt.pop %v3218
        %v3235 = vrsqrt.pop %v3219
        %v3236 = vrsqrt.pop %v3220
        %v3237 = vrsqrt.pop %v3221
        %v3238 = vrsqrt.pop %v3222
        %v3239 = vrsqrt.pop %v3223
        %v3240 = vrsqrt.pop %v3224
        %v3241 = vrsqrt.pop %v3225
        %v3242 = vrsqrt.pop %v3226
        %v3243 = vmul.f32 %v3083, %v3227
        %v3244 = vmul.f32 %v3084, %v3227
        %v3245 = vmul.f32 %v3085, %v3228
        %v3246 = vmul.f32 %v3086, %v3228
        %v3247 = vmul.f32 %v3087, %v3229
        %v3248 = vmul.f32 %v3088, %v3229
        %v3249 = vmul.f32 %v3089, %v3230
        %v3250 = vmul.f32 %v3090, %v3230
        %v3251 = vmul.f32 %v3091, %v3231
        %v3252 = vmul.f32 %v3092, %v3231
        %v3253 = vmul.f32 %v3093, %v3232
        %v3254 = vmul.f32 %v3094, %v3232
        %v3255 = vmul.f32 %v3095, %v3233
        %v3256 = vmul.f32 %v3096, %v3233
        %v3257 = vmul.f32 %v3097, %v3234
        %v3258 = vmul.f32 %v3098, %v3234
        %v3259 = vmul.f32 %v3099, %v3235
        %v3260 = vmul.f32 %v3100, %v3235
        %v3261 = vmul.f32 %v3101, %v3236
        %v3262 = vmul.f32 %v3102, %v3236
        %v3263 = vmul.f32 %v3103, %v3237
        %v3264 = vmul.f32 %v3104, %v3237
        %v3265 = vmul.f32 %v3105, %v3238
        %v3266 = vmul.f32 %v3106, %v3238
        %v3267 = vmul.f32 %v3107, %v3239
        %v3268 = vmul.f32 %v3108, %v3239
        %v3269 = vmul.f32 %v3109, %v3240
        %v3270 = vmul.f32 %v3110, %v3240
        %v3271 = vmul.f32 %v3111, %v3241
        %v3272 = vmul.f32 %v3112, %v3241
        %v3273 = vmul.f32 %v3113, %v3242
        %v3274 = vmul.f32 %v3114, %v3242
        %v3276 = vlaneseq
        %v3277 = vshrl.u32 %v3276, 7
        %v3278 = vsub.s32 0, %v3277
        %v3279 = vrot.slane %v3017, %v3278
        %v3280 = vlaneseq
        %v3281 = vshrl.u32 %v3280, 7
        %v3282 = vsub.s32 1, %v3281
        %v3283 = vrot.slane %v3017, %v3282
        %v3286 = vmul.f32 %v3243, %v3279
        %v3287 = vmul.f32 %v3244, %v3283
        %v3288 = vmul.f32 %v3245, %v3279
        %v3289 = vmul.f32 %v3246, %v3283
        %v3290 = vmul.f32 %v3247, %v3279
        %v3291 = vmul.f32 %v3248, %v3283
        %v3292 = vmul.f32 %v3249, %v3279
        %v3293 = vmul.f32 %v3250, %v3283
        %v3294 = vmul.f32 %v3251, %v3279
        %v3295 = vmul.f32 %v3252, %v3283
        %v3296 = vmul.f32 %v3253, %v3279
        %v3297 = vmul.f32 %v3254, %v3283
        %v3298 = vmul.f32 %v3255, %v3279
        %v3299 = vmul.f32 %v3256, %v3283
        %v3300 = vmul.f32 %v3257, %v3279
        %v3301 = vmul.f32 %v3258, %v3283
        %v3302 = vmul.f32 %v3259, %v3279
        %v3303 = vmul.f32 %v3260, %v3283
        %v3304 = vmul.f32 %v3261, %v3279
        %v3305 = vmul.f32 %v3262, %v3283
        %v3306 = vmul.f32 %v3263, %v3279
        %v3307 = vmul.f32 %v3264, %v3283
        %v3308 = vmul.f32 %v3265, %v3279
        %v3309 = vmul.f32 %v3266, %v3283
        %v3310 = vmul.f32 %v3267, %v3279
        %v3311 = vmul.f32 %v3268, %v3283
        %v3312 = vmul.f32 %v3269, %v3279
        %v3313 = vmul.f32 %v3270, %v3283
        %v3314 = vmul.f32 %v3271, %v3279
        %v3315 = vmul.f32 %v3272, %v3283
        %v3316 = vmul.f32 %v3273, %v3279
        %v3317 = vmul.f32 %v3274, %v3283
        %v3319 = vlaneseq
        %v3320 = vshrl.u32 %v3319, 7
        %v3321 = vsub.s32 0, %v3320
        %v3322 = vrot.slane %v3018, %v3321
        %v3323 = vlaneseq
        %v3324 = vshrl.u32 %v3323, 7
        %v3325 = vsub.s32 1, %v3324
        %v3326 = vrot.slane %v3018, %v3325
        %v3329 = vadd.f32 %v3286, %v3322
        %v3330 = vadd.f32 %v3287, %v3326
        %v3331 = vadd.f32 %v3288, %v3322
        %v3332 = vadd.f32 %v3289, %v3326
        %v3333 = vadd.f32 %v3290, %v3322
        %v3334 = vadd.f32 %v3291, %v3326
        %v3335 = vadd.f32 %v3292, %v3322
        %v3336 = vadd.f32 %v3293, %v3326
        %v3337 = vadd.f32 %v3294, %v3322
        %v3338 = vadd.f32 %v3295, %v3326
        %v3339 = vadd.f32 %v3296, %v3322
        %v3340 = vadd.f32 %v3297, %v3326
        %v3341 = vadd.f32 %v3298, %v3322
        %v3342 = vadd.f32 %v3299, %v3326
        %v3343 = vadd.f32 %v3300, %v3322
        %v3344 = vadd.f32 %v3301, %v3326
        %v3345 = vadd.f32 %v3302, %v3322
        %v3346 = vadd.f32 %v3303, %v3326
        %v3347 = vadd.f32 %v3304, %v3322
        %v3348 = vadd.f32 %v3305, %v3326
        %v3349 = vadd.f32 %v3306, %v3322
        %v3350 = vadd.f32 %v3307, %v3326
        %v3351 = vadd.f32 %v3308, %v3322
        %v3352 = vadd.f32 %v3309, %v3326
        %v3353 = vadd.f32 %v3310, %v3322
        %v3354 = vadd.f32 %v3311, %v3326
        %v3355 = vadd.f32 %v3312, %v3322
        %v3356 = vadd.f32 %v3313, %v3326
        %v3357 = vadd.f32 %v3314, %v3322
        %v3358 = vadd.f32 %v3315, %v3326
        %v3359 = vadd.f32 %v3316, %v3322
        %v3360 = vadd.f32 %v3317, %v3326
        %v3361 = vpack.c.bf16 %v3331, %v3329
        %v3362 = vpack.c.bf16 %v3332, %v3330
        %v3363 = vpack.c.bf16 %v3335, %v3333
        %v3364 = vpack.c.bf16 %v3336, %v3334
        %v3365 = vpack.c.bf16 %v3339, %v3337
        %v3366 = vpack.c.bf16 %v3340, %v3338
        %v3367 = vpack.c.bf16 %v3343, %v3341
        %v3368 = vpack.c.bf16 %v3344, %v3342
        %v3369 = vpack.c.bf16 %v3347, %v3345
        %v3370 = vpack.c.bf16 %v3348, %v3346
        %v3371 = vpack.c.bf16 %v3351, %v3349
        %v3372 = vpack.c.bf16 %v3352, %v3350
        %v3373 = vpack.c.bf16 %v3355, %v3353
        %v3374 = vpack.c.bf16 %v3356, %v3354
        %v3375 = vpack.c.bf16 %v3359, %v3357
        %v3376 = vpack.c.bf16 %v3360, %v3358
        %v3377 = vld [vmem:[%s9] sm:$0xff]
        %v3378 = vld [vmem:[%s9 + $0x8] sm:$0xff]
        %v3379 = vld [vmem:[%s9 + $0x10] sm:$0xff]
        %v3380 = vld [vmem:[%s9 + $0x18] sm:$0xff]
        %v3381 = vld [vmem:[%s9 + $0x20] sm:$0xff]
        %v3382 = vld [vmem:[%s9 + $0x28] sm:$0xff]
        %v3383 = vld [vmem:[%s9 + $0x30] sm:$0xff]
        %v3384 = vld [vmem:[%s9 + $0x38] sm:$0xff]
        %v3385 = vld [vmem:[%s9 + $0x40] sm:$0xff]
        %v3386 = vld [vmem:[%s9 + $0x48] sm:$0xff]
        %v3387 = vld [vmem:[%s9 + $0x50] sm:$0xff]
        %v3388 = vld [vmem:[%s9 + $0x58] sm:$0xff]
        %v3389 = vld [vmem:[%s9 + $0x60] sm:$0xff]
        %v3390 = vld [vmem:[%s9 + $0x68] sm:$0xff]
        %v3391 = vld [vmem:[%s9 + $0x70] sm:$0xff]
        %v3392 = vld [vmem:[%s9 + $0x78] sm:$0xff]
        %v3393 = vld [vmem:[%s9 + $0x80] sm:$0xff]
        %v3394 = vld [vmem:[%s9 + $0x88] sm:$0xff]
        %v3395 = vld [vmem:[%s9 + $0x90] sm:$0xff]
        %v3396 = vld [vmem:[%s9 + $0x98] sm:$0xff]
        %v3397 = vld [vmem:[%s9 + $0xa0] sm:$0xff]
        %v3398 = vld [vmem:[%s9 + $0xa8] sm:$0xff]
        %v3399 = vld [vmem:[%s9 + $0xb0] sm:$0xff]
        %v3400 = vld [vmem:[%s9 + $0xb8] sm:$0xff]
        %v3401 = vld [vmem:[%s9 + $0xc0] sm:$0xff]
        %v3402 = vld [vmem:[%s9 + $0xc8] sm:$0xff]
        %v3403 = vld [vmem:[%s9 + $0xd0] sm:$0xff]
        %v3404 = vld [vmem:[%s9 + $0xd8] sm:$0xff]
        %v3405 = vld [vmem:[%s9 + $0xe0] sm:$0xff]
        %v3406 = vld [vmem:[%s9 + $0xe8] sm:$0xff]
        %v3407 = vld [vmem:[%s9 + $0xf0] sm:$0xff]
        %v3408 = vld [vmem:[%s9 + $0xf8] sm:$0xff]
        %v3409 = vld [vmem:[%s9 + $0x100] sm:$0xff]
        %v3410 = vld [vmem:[%s9 + $0x108] sm:$0xff]
        %v3411 = vld [vmem:[%s9 + $0x110] sm:$0xff]
        %v3412 = vld [vmem:[%s9 + $0x118] sm:$0xff]
        %v3413 = vld [vmem:[%s9 + $0x120] sm:$0xff]
        %v3414 = vld [vmem:[%s9 + $0x128] sm:$0xff]
        %v3415 = vld [vmem:[%s9 + $0x130] sm:$0xff]
        %v3416 = vld [vmem:[%s9 + $0x138] sm:$0xff]
        %v3417 = vld [vmem:[%s9 + $0x140] sm:$0xff]
        %v3418 = vld [vmem:[%s9 + $0x148] sm:$0xff]
        %v3419 = vld [vmem:[%s9 + $0x150] sm:$0xff]
        %v3420 = vld [vmem:[%s9 + $0x158] sm:$0xff]
        %v3421 = vld [vmem:[%s9 + $0x160] sm:$0xff]
        %v3422 = vld [vmem:[%s9 + $0x168] sm:$0xff]
        %v3423 = vld [vmem:[%s9 + $0x170] sm:$0xff]
        %v3424 = vld [vmem:[%s9 + $0x178] sm:$0xff]
        %v3425 = vld [vmem:[%s9 + $0x180] sm:$0xff]
        %v3426 = vld [vmem:[%s9 + $0x188] sm:$0xff]
        %v3427 = vld [vmem:[%s9 + $0x190] sm:$0xff]
        %v3428 = vld [vmem:[%s9 + $0x198] sm:$0xff]
        %v3429 = vld [vmem:[%s9 + $0x1a0] sm:$0xff]
        %v3430 = vld [vmem:[%s9 + $0x1a8] sm:$0xff]
        %v3431 = vld [vmem:[%s9 + $0x1b0] sm:$0xff]
        %v3432 = vld [vmem:[%s9 + $0x1b8] sm:$0xff]
        %v3433 = vld [vmem:[%s9 + $0x1c0] sm:$0xff]
        %v3434 = vld [vmem:[%s9 + $0x1c8] sm:$0xff]
        %v3435 = vld [vmem:[%s9 + $0x1d0] sm:$0xff]
        %v3436 = vld [vmem:[%s9 + $0x1d8] sm:$0xff]
        %v3437 = vld [vmem:[%s9 + $0x1e0] sm:$0xff]
        %v3438 = vld [vmem:[%s9 + $0x1e8] sm:$0xff]
        %v3439 = vld [vmem:[%s9 + $0x1f0] sm:$0xff]
        %v3440 = vld [vmem:[%s9 + $0x1f8] sm:$0xff]
        %v3441 = vld [vmem:[%s9 + $0x200] sm:$0xff]
        %v3442 = vld [vmem:[%s9 + $0x208] sm:$0xff]
        %v3443 = vld [vmem:[%s9 + $0x210] sm:$0xff]
        %v3444 = vld [vmem:[%s9 + $0x218] sm:$0xff]
        %v3445 = vld [vmem:[%s9 + $0x220] sm:$0xff]
        %v3446 = vld [vmem:[%s9 + $0x228] sm:$0xff]
        %v3447 = vld [vmem:[%s9 + $0x230] sm:$0xff]
        %v3448 = vld [vmem:[%s9 + $0x238] sm:$0xff]
        %v3449 = vld [vmem:[%s9 + $0x240] sm:$0xff]
        %v3450 = vld [vmem:[%s9 + $0x248] sm:$0xff]
        %v3451 = vld [vmem:[%s9 + $0x250] sm:$0xff]
        %v3452 = vld [vmem:[%s9 + $0x258] sm:$0xff]
        %v3453 = vld [vmem:[%s9 + $0x260] sm:$0xff]
        %v3454 = vld [vmem:[%s9 + $0x268] sm:$0xff]
        %v3455 = vld [vmem:[%s9 + $0x270] sm:$0xff]
        %v3456 = vld [vmem:[%s9 + $0x278] sm:$0xff]
        %v3457 = vld [vmem:[%s9 + $0x280] sm:$0xff]
        %v3458 = vld [vmem:[%s9 + $0x288] sm:$0xff]
        %v3459 = vld [vmem:[%s9 + $0x290] sm:$0xff]
        %v3460 = vld [vmem:[%s9 + $0x298] sm:$0xff]
        %v3461 = vld [vmem:[%s9 + $0x2a0] sm:$0xff]
        %v3462 = vld [vmem:[%s9 + $0x2a8] sm:$0xff]
        %v3463 = vld [vmem:[%s9 + $0x2b0] sm:$0xff]
        %v3464 = vld [vmem:[%s9 + $0x2b8] sm:$0xff]
        %v3465 = vld [vmem:[%s9 + $0x2c0] sm:$0xff]
        %v3466 = vld [vmem:[%s9 + $0x2c8] sm:$0xff]
        %v3467 = vld [vmem:[%s9 + $0x2d0] sm:$0xff]
        %v3468 = vld [vmem:[%s9 + $0x2d8] sm:$0xff]
        %v3469 = vld [vmem:[%s9 + $0x2e0] sm:$0xff]
        %v3470 = vld [vmem:[%s9 + $0x2e8] sm:$0xff]
        %v3471 = vld [vmem:[%s9 + $0x2f0] sm:$0xff]
        %v3472 = vld [vmem:[%s9 + $0x2f8] sm:$0xff]
        %v3473 = vld [vmem:[%s9 + $0x300] sm:$0xff]
        %v3474 = vld [vmem:[%s9 + $0x308] sm:$0xff]
        %v3475 = vld [vmem:[%s9 + $0x310] sm:$0xff]
        %v3476 = vld [vmem:[%s9 + $0x318] sm:$0xff]
        %v3477 = vld [vmem:[%s9 + $0x320] sm:$0xff]
        %v3478 = vld [vmem:[%s9 + $0x328] sm:$0xff]
        %v3479 = vld [vmem:[%s9 + $0x330] sm:$0xff]
        %v3480 = vld [vmem:[%s9 + $0x338] sm:$0xff]
        %v3481 = vld [vmem:[%s9 + $0x340] sm:$0xff]
        %v3482 = vld [vmem:[%s9 + $0x348] sm:$0xff]
        %v3483 = vld [vmem:[%s9 + $0x350] sm:$0xff]
        %v3484 = vld [vmem:[%s9 + $0x358] sm:$0xff]
        %v3485 = vld [vmem:[%s9 + $0x360] sm:$0xff]
        %v3486 = vld [vmem:[%s9 + $0x368] sm:$0xff]
        %v3487 = vld [vmem:[%s9 + $0x370] sm:$0xff]
        %v3488 = vld [vmem:[%s9 + $0x378] sm:$0xff]
        %v3489 = vld [vmem:[%s9 + $0x380] sm:$0xff]
        %v3490 = vld [vmem:[%s9 + $0x388] sm:$0xff]
        %v3491 = vld [vmem:[%s9 + $0x390] sm:$0xff]
        %v3492 = vld [vmem:[%s9 + $0x398] sm:$0xff]
        %v3493 = vld [vmem:[%s9 + $0x3a0] sm:$0xff]
        %v3494 = vld [vmem:[%s9 + $0x3a8] sm:$0xff]
        %v3495 = vld [vmem:[%s9 + $0x3b0] sm:$0xff]
        %v3496 = vld [vmem:[%s9 + $0x3b8] sm:$0xff]
        %v3497 = vld [vmem:[%s9 + $0x3c0] sm:$0xff]
        %v3498 = vld [vmem:[%s9 + $0x3c8] sm:$0xff]
        %v3499 = vld [vmem:[%s9 + $0x3d0] sm:$0xff]
        %v3500 = vld [vmem:[%s9 + $0x3d8] sm:$0xff]
        %v3501 = vld [vmem:[%s9 + $0x3e0] sm:$0xff]
        %v3502 = vld [vmem:[%s9 + $0x3e8] sm:$0xff]
        %v3503 = vld [vmem:[%s9 + $0x3f0] sm:$0xff]
        %v3504 = vld [vmem:[%s9 + $0x3f8] sm:$0xff]
        %v3633 = vunpack.c.l.b16 %v3377
        %v3634 = vunpack.c.h.b16 %v3377
        %v3635 = vunpack.c.l.b16 %v3378
        %v3636 = vunpack.c.h.b16 %v3378
        %v3637 = vunpack.c.l.b16 %v3379
        %v3638 = vunpack.c.h.b16 %v3379
        %v3639 = vunpack.c.l.b16 %v3380
        %v3640 = vunpack.c.h.b16 %v3380
        %v3641 = vunpack.c.l.b16 %v3381
        %v3642 = vunpack.c.h.b16 %v3381
        %v3643 = vunpack.c.l.b16 %v3382
        %v3644 = vunpack.c.h.b16 %v3382
        %v3645 = vunpack.c.l.b16 %v3383
        %v3646 = vunpack.c.h.b16 %v3383
        %v3647 = vunpack.c.l.b16 %v3384
        %v3648 = vunpack.c.h.b16 %v3384
        %v3649 = vunpack.c.l.b16 %v3385
        %v3650 = vunpack.c.h.b16 %v3385
        %v3651 = vunpack.c.l.b16 %v3386
        %v3652 = vunpack.c.h.b16 %v3386
        %v3653 = vunpack.c.l.b16 %v3387
        %v3654 = vunpack.c.h.b16 %v3387
        %v3655 = vunpack.c.l.b16 %v3388
        %v3656 = vunpack.c.h.b16 %v3388
        %v3657 = vunpack.c.l.b16 %v3389
        %v3658 = vunpack.c.h.b16 %v3389
        %v3659 = vunpack.c.l.b16 %v3390
        %v3660 = vunpack.c.h.b16 %v3390
        %v3661 = vunpack.c.l.b16 %v3391
        %v3662 = vunpack.c.h.b16 %v3391
        %v3663 = vunpack.c.l.b16 %v3392
        %v3664 = vunpack.c.h.b16 %v3392
        %v3665 = vunpack.c.l.b16 %v3393
        %v3666 = vunpack.c.h.b16 %v3393
        %v3667 = vunpack.c.l.b16 %v3394
        %v3668 = vunpack.c.h.b16 %v3394
        %v3669 = vunpack.c.l.b16 %v3395
        %v3670 = vunpack.c.h.b16 %v3395
        %v3671 = vunpack.c.l.b16 %v3396
        %v3672 = vunpack.c.h.b16 %v3396
        %v3673 = vunpack.c.l.b16 %v3397
        %v3674 = vunpack.c.h.b16 %v3397
        %v3675 = vunpack.c.l.b16 %v3398
        %v3676 = vunpack.c.h.b16 %v3398
        %v3677 = vunpack.c.l.b16 %v3399
        %v3678 = vunpack.c.h.b16 %v3399
        %v3679 = vunpack.c.l.b16 %v3400
        %v3680 = vunpack.c.h.b16 %v3400
        %v3681 = vunpack.c.l.b16 %v3401
        %v3682 = vunpack.c.h.b16 %v3401
        %v3683 = vunpack.c.l.b16 %v3402
        %v3684 = vunpack.c.h.b16 %v3402
        %v3685 = vunpack.c.l.b16 %v3403
        %v3686 = vunpack.c.h.b16 %v3403
        %v3687 = vunpack.c.l.b16 %v3404
        %v3688 = vunpack.c.h.b16 %v3404
        %v3689 = vunpack.c.l.b16 %v3405
        %v3690 = vunpack.c.h.b16 %v3405
        %v3691 = vunpack.c.l.b16 %v3406
        %v3692 = vunpack.c.h.b16 %v3406
        %v3693 = vunpack.c.l.b16 %v3407
        %v3694 = vunpack.c.h.b16 %v3407
        %v3695 = vunpack.c.l.b16 %v3408
        %v3696 = vunpack.c.h.b16 %v3408
        %v3697 = vunpack.c.l.b16 %v3409
        %v3698 = vunpack.c.h.b16 %v3409
        %v3699 = vunpack.c.l.b16 %v3410
        %v3700 = vunpack.c.h.b16 %v3410
        %v3701 = vunpack.c.l.b16 %v3411
        %v3702 = vunpack.c.h.b16 %v3411
        %v3703 = vunpack.c.l.b16 %v3412
        %v3704 = vunpack.c.h.b16 %v3412
        %v3705 = vunpack.c.l.b16 %v3413
        %v3706 = vunpack.c.h.b16 %v3413
        %v3707 = vunpack.c.l.b16 %v3414
        %v3708 = vunpack.c.h.b16 %v3414
        %v3709 = vunpack.c.l.b16 %v3415
        %v3710 = vunpack.c.h.b16 %v3415
        %v3711 = vunpack.c.l.b16 %v3416
        %v3712 = vunpack.c.h.b16 %v3416
        %v3713 = vunpack.c.l.b16 %v3417
        %v3714 = vunpack.c.h.b16 %v3417
        %v3715 = vunpack.c.l.b16 %v3418
        %v3716 = vunpack.c.h.b16 %v3418
        %v3717 = vunpack.c.l.b16 %v3419
        %v3718 = vunpack.c.h.b16 %v3419
        %v3719 = vunpack.c.l.b16 %v3420
        %v3720 = vunpack.c.h.b16 %v3420
        %v3721 = vunpack.c.l.b16 %v3421
        %v3722 = vunpack.c.h.b16 %v3421
        %v3723 = vunpack.c.l.b16 %v3422
        %v3724 = vunpack.c.h.b16 %v3422
        %v3725 = vunpack.c.l.b16 %v3423
        %v3726 = vunpack.c.h.b16 %v3423
        %v3727 = vunpack.c.l.b16 %v3424
        %v3728 = vunpack.c.h.b16 %v3424
        %v3729 = vunpack.c.l.b16 %v3425
        %v3730 = vunpack.c.h.b16 %v3425
        %v3731 = vunpack.c.l.b16 %v3426
        %v3732 = vunpack.c.h.b16 %v3426
        %v3733 = vunpack.c.l.b16 %v3427
        %v3734 = vunpack.c.h.b16 %v3427
        %v3735 = vunpack.c.l.b16 %v3428
        %v3736 = vunpack.c.h.b16 %v3428
        %v3737 = vunpack.c.l.b16 %v3429
        %v3738 = vunpack.c.h.b16 %v3429
        %v3739 = vunpack.c.l.b16 %v3430
        %v3740 = vunpack.c.h.b16 %v3430
        %v3741 = vunpack.c.l.b16 %v3431
        %v3742 = vunpack.c.h.b16 %v3431
        %v3743 = vunpack.c.l.b16 %v3432
        %v3744 = vunpack.c.h.b16 %v3432
        %v3745 = vunpack.c.l.b16 %v3433
        %v3746 = vunpack.c.h.b16 %v3433
        %v3747 = vunpack.c.l.b16 %v3434
        %v3748 = vunpack.c.h.b16 %v3434
        %v3749 = vunpack.c.l.b16 %v3435
        %v3750 = vunpack.c.h.b16 %v3435
        %v3751 = vunpack.c.l.b16 %v3436
        %v3752 = vunpack.c.h.b16 %v3436
        %v3753 = vunpack.c.l.b16 %v3437
        %v3754 = vunpack.c.h.b16 %v3437
        %v3755 = vunpack.c.l.b16 %v3438
        %v3756 = vunpack.c.h.b16 %v3438
        %v3757 = vunpack.c.l.b16 %v3439
        %v3758 = vunpack.c.h.b16 %v3439
        %v3759 = vunpack.c.l.b16 %v3440
        %v3760 = vunpack.c.h.b16 %v3440
        %v3761 = vunpack.c.l.b16 %v3441
        %v3762 = vunpack.c.h.b16 %v3441
        %v3763 = vunpack.c.l.b16 %v3442
        %v3764 = vunpack.c.h.b16 %v3442
        %v3765 = vunpack.c.l.b16 %v3443
        %v3766 = vunpack.c.h.b16 %v3443
        %v3767 = vunpack.c.l.b16 %v3444
        %v3768 = vunpack.c.h.b16 %v3444
        %v3769 = vunpack.c.l.b16 %v3445
        %v3770 = vunpack.c.h.b16 %v3445
        %v3771 = vunpack.c.l.b16 %v3446
        %v3772 = vunpack.c.h.b16 %v3446
        %v3773 = vunpack.c.l.b16 %v3447
        %v3774 = vunpack.c.h.b16 %v3447
        %v3775 = vunpack.c.l.b16 %v3448
        %v3776 = vunpack.c.h.b16 %v3448
        %v3777 = vunpack.c.l.b16 %v3449
        %v3778 = vunpack.c.h.b16 %v3449
        %v3779 = vunpack.c.l.b16 %v3450
        %v3780 = vunpack.c.h.b16 %v3450
        %v3781 = vunpack.c.l.b16 %v3451
        %v3782 = vunpack.c.h.b16 %v3451
        %v3783 = vunpack.c.l.b16 %v3452
        %v3784 = vunpack.c.h.b16 %v3452
        %v3785 = vunpack.c.l.b16 %v3453
        %v3786 = vunpack.c.h.b16 %v3453
        %v3787 = vunpack.c.l.b16 %v3454
        %v3788 = vunpack.c.h.b16 %v3454
        %v3789 = vunpack.c.l.b16 %v3455
        %v3790 = vunpack.c.h.b16 %v3455
        %v3791 = vunpack.c.l.b16 %v3456
        %v3792 = vunpack.c.h.b16 %v3456
        %v3793 = vunpack.c.l.b16 %v3457
        %v3794 = vunpack.c.h.b16 %v3457
        %v3795 = vunpack.c.l.b16 %v3458
        %v3796 = vunpack.c.h.b16 %v3458
        %v3797 = vunpack.c.l.b16 %v3459
        %v3798 = vunpack.c.h.b16 %v3459
        %v3799 = vunpack.c.l.b16 %v3460
        %v3800 = vunpack.c.h.b16 %v3460
        %v3801 = vunpack.c.l.b16 %v3461
        %v3802 = vunpack.c.h.b16 %v3461
        %v3803 = vunpack.c.l.b16 %v3462
        %v3804 = vunpack.c.h.b16 %v3462
        %v3805 = vunpack.c.l.b16 %v3463
        %v3806 = vunpack.c.h.b16 %v3463
        %v3807 = vunpack.c.l.b16 %v3464
        %v3808 = vunpack.c.h.b16 %v3464
        %v3809 = vunpack.c.l.b16 %v3465
        %v3810 = vunpack.c.h.b16 %v3465
        %v3811 = vunpack.c.l.b16 %v3466
        %v3812 = vunpack.c.h.b16 %v3466
        %v3813 = vunpack.c.l.b16 %v3467
        %v3814 = vunpack.c.h.b16 %v3467
        %v3815 = vunpack.c.l.b16 %v3468
        %v3816 = vunpack.c.h.b16 %v3468
        %v3817 = vunpack.c.l.b16 %v3469
        %v3818 = vunpack.c.h.b16 %v3469
        %v3819 = vunpack.c.l.b16 %v3470
        %v3820 = vunpack.c.h.b16 %v3470
        %v3821 = vunpack.c.l.b16 %v3471
        %v3822 = vunpack.c.h.b16 %v3471
        %v3823 = vunpack.c.l.b16 %v3472
        %v3824 = vunpack.c.h.b16 %v3472
        %v3825 = vunpack.c.l.b16 %v3473
        %v3826 = vunpack.c.h.b16 %v3473
        %v3827 = vunpack.c.l.b16 %v3474
        %v3828 = vunpack.c.h.b16 %v3474
        %v3829 = vunpack.c.l.b16 %v3475
        %v3830 = vunpack.c.h.b16 %v3475
        %v3831 = vunpack.c.l.b16 %v3476
        %v3832 = vunpack.c.h.b16 %v3476
        %v3833 = vunpack.c.l.b16 %v3477
        %v3834 = vunpack.c.h.b16 %v3477
        %v3835 = vunpack.c.l.b16 %v3478
        %v3836 = vunpack.c.h.b16 %v3478
        %v3837 = vunpack.c.l.b16 %v3479
        %v3838 = vunpack.c.h.b16 %v3479
        %v3839 = vunpack.c.l.b16 %v3480
        %v3840 = vunpack.c.h.b16 %v3480
        %v3841 = vunpack.c.l.b16 %v3481
        %v3842 = vunpack.c.h.b16 %v3481
        %v3843 = vunpack.c.l.b16 %v3482
        %v3844 = vunpack.c.h.b16 %v3482
        %v3845 = vunpack.c.l.b16 %v3483
        %v3846 = vunpack.c.h.b16 %v3483
        %v3847 = vunpack.c.l.b16 %v3484
        %v3848 = vunpack.c.h.b16 %v3484
        %v3849 = vunpack.c.l.b16 %v3485
        %v3850 = vunpack.c.h.b16 %v3485
        %v3851 = vunpack.c.l.b16 %v3486
        %v3852 = vunpack.c.h.b16 %v3486
        %v3853 = vunpack.c.l.b16 %v3487
        %v3854 = vunpack.c.h.b16 %v3487
        %v3855 = vunpack.c.l.b16 %v3488
        %v3856 = vunpack.c.h.b16 %v3488
        %v3857 = vunpack.c.l.b16 %v3489
        %v3858 = vunpack.c.h.b16 %v3489
        %v3859 = vunpack.c.l.b16 %v3490
        %v3860 = vunpack.c.h.b16 %v3490
        %v3861 = vunpack.c.l.b16 %v3491
        %v3862 = vunpack.c.h.b16 %v3491
        %v3863 = vunpack.c.l.b16 %v3492
        %v3864 = vunpack.c.h.b16 %v3492
        %v3865 = vunpack.c.l.b16 %v3493
        %v3866 = vunpack.c.h.b16 %v3493
        %v3867 = vunpack.c.l.b16 %v3494
        %v3868 = vunpack.c.h.b16 %v3494
        %v3869 = vunpack.c.l.b16 %v3495
        %v3870 = vunpack.c.h.b16 %v3495
        %v3871 = vunpack.c.l.b16 %v3496
        %v3872 = vunpack.c.h.b16 %v3496
        %v3873 = vunpack.c.l.b16 %v3497
        %v3874 = vunpack.c.h.b16 %v3497
        %v3875 = vunpack.c.l.b16 %v3498
        %v3876 = vunpack.c.h.b16 %v3498
        %v3877 = vunpack.c.l.b16 %v3499
        %v3878 = vunpack.c.h.b16 %v3499
        %v3879 = vunpack.c.l.b16 %v3500
        %v3880 = vunpack.c.h.b16 %v3500
        %v3881 = vunpack.c.l.b16 %v3501
        %v3882 = vunpack.c.h.b16 %v3501
        %v3883 = vunpack.c.l.b16 %v3502
        %v3884 = vunpack.c.h.b16 %v3502
        %v3885 = vunpack.c.l.b16 %v3503
        %v3886 = vunpack.c.h.b16 %v3503
        %v3887 = vunpack.c.l.b16 %v3504
        %v3888 = vunpack.c.h.b16 %v3504
        %v3889 = vpack.c.b16 %v3641, %v3633
        %v3890 = vpack.c.b16 %v3642, %v3634
        %v3891 = vpack.c.b16 %v3643, %v3635
        %v3892 = vpack.c.b16 %v3644, %v3636
        %v3893 = vpack.c.b16 %v3645, %v3637
        %v3894 = vpack.c.b16 %v3646, %v3638
        %v3895 = vpack.c.b16 %v3647, %v3639
        %v3896 = vpack.c.b16 %v3648, %v3640
        %v3897 = vpack.c.b16 %v3657, %v3649
        %v3898 = vpack.c.b16 %v3658, %v3650
        %v3899 = vpack.c.b16 %v3659, %v3651
        %v3900 = vpack.c.b16 %v3660, %v3652
        %v3901 = vpack.c.b16 %v3661, %v3653
        %v3902 = vpack.c.b16 %v3662, %v3654
        %v3903 = vpack.c.b16 %v3663, %v3655
        %v3904 = vpack.c.b16 %v3664, %v3656
        %v3905 = vpack.c.b16 %v3673, %v3665
        %v3906 = vpack.c.b16 %v3674, %v3666
        %v3907 = vpack.c.b16 %v3675, %v3667
        %v3908 = vpack.c.b16 %v3676, %v3668
        %v3909 = vpack.c.b16 %v3677, %v3669
        %v3910 = vpack.c.b16 %v3678, %v3670
        %v3911 = vpack.c.b16 %v3679, %v3671
        %v3912 = vpack.c.b16 %v3680, %v3672
        %v3913 = vpack.c.b16 %v3689, %v3681
        %v3914 = vpack.c.b16 %v3690, %v3682
        %v3915 = vpack.c.b16 %v3691, %v3683
        %v3916 = vpack.c.b16 %v3692, %v3684
        %v3917 = vpack.c.b16 %v3693, %v3685
        %v3918 = vpack.c.b16 %v3694, %v3686
        %v3919 = vpack.c.b16 %v3695, %v3687
        %v3920 = vpack.c.b16 %v3696, %v3688
        %v3921 = vpack.c.b16 %v3705, %v3697
        %v3922 = vpack.c.b16 %v3706, %v3698
        %v3923 = vpack.c.b16 %v3707, %v3699
        %v3924 = vpack.c.b16 %v3708, %v3700
        %v3925 = vpack.c.b16 %v3709, %v3701
        %v3926 = vpack.c.b16 %v3710, %v3702
        %v3927 = vpack.c.b16 %v3711, %v3703
        %v3928 = vpack.c.b16 %v3712, %v3704
        %v3929 = vpack.c.b16 %v3721, %v3713
        %v3930 = vpack.c.b16 %v3722, %v3714
        %v3931 = vpack.c.b16 %v3723, %v3715
        %v3932 = vpack.c.b16 %v3724, %v3716
        %v3933 = vpack.c.b16 %v3725, %v3717
        %v3934 = vpack.c.b16 %v3726, %v3718
        %v3935 = vpack.c.b16 %v3727, %v3719
        %v3936 = vpack.c.b16 %v3728, %v3720
        %v3937 = vpack.c.b16 %v3737, %v3729
        %v3938 = vpack.c.b16 %v3738, %v3730
        %v3939 = vpack.c.b16 %v3739, %v3731
        %v3940 = vpack.c.b16 %v3740, %v3732
        %v3941 = vpack.c.b16 %v3741, %v3733
        %v3942 = vpack.c.b16 %v3742, %v3734
        %v3943 = vpack.c.b16 %v3743, %v3735
        %v3944 = vpack.c.b16 %v3744, %v3736
        %v3945 = vpack.c.b16 %v3753, %v3745
        %v3946 = vpack.c.b16 %v3754, %v3746
        %v3947 = vpack.c.b16 %v3755, %v3747
        %v3948 = vpack.c.b16 %v3756, %v3748
        %v3949 = vpack.c.b16 %v3757, %v3749
        %v3950 = vpack.c.b16 %v3758, %v3750
        %v3951 = vpack.c.b16 %v3759, %v3751
        %v3952 = vpack.c.b16 %v3760, %v3752
        %v3953 = vpack.c.b16 %v3769, %v3761
        %v3954 = vpack.c.b16 %v3770, %v3762
        %v3955 = vpack.c.b16 %v3771, %v3763
        %v3956 = vpack.c.b16 %v3772, %v3764
        %v3957 = vpack.c.b16 %v3773, %v3765
        %v3958 = vpack.c.b16 %v3774, %v3766
        %v3959 = vpack.c.b16 %v3775, %v3767
        %v3960 = vpack.c.b16 %v3776, %v3768
        %v3961 = vpack.c.b16 %v3785, %v3777
        %v3962 = vpack.c.b16 %v3786, %v3778
        %v3963 = vpack.c.b16 %v3787, %v3779
        %v3964 = vpack.c.b16 %v3788, %v3780
        %v3965 = vpack.c.b16 %v3789, %v3781
        %v3966 = vpack.c.b16 %v3790, %v3782
        %v3967 = vpack.c.b16 %v3791, %v3783
        %v3968 = vpack.c.b16 %v3792, %v3784
        %v3969 = vpack.c.b16 %v3801, %v3793
        %v3970 = vpack.c.b16 %v3802, %v3794
        %v3971 = vpack.c.b16 %v3803, %v3795
        %v3972 = vpack.c.b16 %v3804, %v3796
        %v3973 = vpack.c.b16 %v3805, %v3797
        %v3974 = vpack.c.b16 %v3806, %v3798
        %v3975 = vpack.c.b16 %v3807, %v3799
        %v3976 = vpack.c.b16 %v3808, %v3800
        %v3977 = vpack.c.b16 %v3817, %v3809
        %v3978 = vpack.c.b16 %v3818, %v3810
        %v3979 = vpack.c.b16 %v3819, %v3811
        %v3980 = vpack.c.b16 %v3820, %v3812
        %v3981 = vpack.c.b16 %v3821, %v3813
        %v3982 = vpack.c.b16 %v3822, %v3814
        %v3983 = vpack.c.b16 %v3823, %v3815
        %v3984 = vpack.c.b16 %v3824, %v3816
        %v3985 = vpack.c.b16 %v3833, %v3825
        %v3986 = vpack.c.b16 %v3834, %v3826
        %v3987 = vpack.c.b16 %v3835, %v3827
        %v3988 = vpack.c.b16 %v3836, %v3828
        %v3989 = vpack.c.b16 %v3837, %v3829
        %v3990 = vpack.c.b16 %v3838, %v3830
        %v3991 = vpack.c.b16 %v3839, %v3831
        %v3992 = vpack.c.b16 %v3840, %v3832
        %v3993 = vpack.c.b16 %v3849, %v3841
        %v3994 = vpack.c.b16 %v3850, %v3842
        %v3995 = vpack.c.b16 %v3851, %v3843
        %v3996 = vpack.c.b16 %v3852, %v3844
        %v3997 = vpack.c.b16 %v3853, %v3845
        %v3998 = vpack.c.b16 %v3854, %v3846
        %v3999 = vpack.c.b16 %v3855, %v3847
        %v4000 = vpack.c.b16 %v3856, %v3848
        %v4001 = vpack.c.b16 %v3865, %v3857
        %v4002 = vpack.c.b16 %v3866, %v3858
        %v4003 = vpack.c.b16 %v3867, %v3859
        %v4004 = vpack.c.b16 %v3868, %v3860
        %v4005 = vpack.c.b16 %v3869, %v3861
        %v4006 = vpack.c.b16 %v3870, %v3862
        %v4007 = vpack.c.b16 %v3871, %v3863
        %v4008 = vpack.c.b16 %v3872, %v3864
        %v4009 = vpack.c.b16 %v3881, %v3873
        %v4010 = vpack.c.b16 %v3882, %v3874
        %v4011 = vpack.c.b16 %v3883, %v3875
        %v4012 = vpack.c.b16 %v3884, %v3876
        %v4013 = vpack.c.b16 %v3885, %v3877
        %v4014 = vpack.c.b16 %v3886, %v3878
        %v4015 = vpack.c.b16 %v3887, %v3879
        %v4016 = vpack.c.b16 %v3888, %v3880
        %4145 = vmatprep.subr.bf16.mxu0 %v3890
        %4146 = vmatpush1.bf16.msra.mxu0 %v3889
        %4147 = vmatprep.subr.bf16.mxu0 %v3898
        %4148 = vmatpush1.bf16.msra.mxu0 %v3897
        %4149 = vmatprep.subr.bf16.mxu0 %v3906
        %4150 = vmatpush1.bf16.msra.mxu0 %v3905
        %4151 = vmatprep.subr.bf16.mxu0 %v3914
        %4152 = vmatpush1.bf16.msra.mxu0 %v3913
        %4153 = vmatprep.subr.bf16.mxu0 %v3922
        %4154 = vmatpush1.bf16.msra.mxu0 %v3921
        %4155 = vmatprep.subr.bf16.mxu0 %v3930
        %4156 = vmatpush1.bf16.msra.mxu0 %v3929
        %4157 = vmatprep.subr.bf16.mxu0 %v3938
        %4158 = vmatpush1.bf16.msra.mxu0 %v3937
        %4159 = vmatprep.subr.bf16.mxu0 %v3946
        %4160 = vmatpush1.bf16.msra.mxu0 %v3945
        %4161 = vmatprep.subr.bf16.mxu0 %v3954
        %4162 = vmatpush1.bf16.msra.mxu0 %v3953
        %4163 = vmatprep.subr.bf16.mxu0 %v3962
        %4164 = vmatpush1.bf16.msra.mxu0 %v3961
        %4165 = vmatprep.subr.bf16.mxu0 %v3970
        %4166 = vmatpush1.bf16.msra.mxu0 %v3969
        %4167 = vmatprep.subr.bf16.mxu0 %v3978
        %4168 = vmatpush1.bf16.msra.mxu0 %v3977
        %4169 = vmatprep.subr.bf16.mxu0 %v3986
        %4170 = vmatpush1.bf16.msra.mxu0 %v3985
        %4171 = vmatprep.subr.bf16.mxu0 %v3994
        %4172 = vmatpush1.bf16.msra.mxu0 %v3993
        %4173 = vmatprep.subr.bf16.mxu0 %v4002
        %4174 = vmatpush1.bf16.msra.mxu0 %v4001
        %4175 = vmatprep.subr.bf16.mxu0 %v4010
        %4176 = vmatpush1.bf16.msra.mxu0 %v4009
        %4177 = vmatprep.mubr.bf16.mxu0 %v3362
        %4178 = vmatmul.mubr.bf16.gmra.mrb[0].mxu0 %v3361
        %v4179 = vpop.f32.mrb[0].mxu0
        %v4180 = vadd.f32 0.0, %v4179
        %v4181 = vpop.f32.mrb[0].mxu0
        %v4182 = vadd.f32 0.0, %v4181
        %v4183 = vpop.f32.mrb[0].mxu0
        %v4184 = vadd.f32 0.0, %v4183
        %v4185 = vpop.f32.mrb[0].mxu0
        %v4186 = vadd.f32 0.0, %v4185
        %4187 = vmatprep.mubr.bf16.mxu0 %v3364
        %4188 = vmatmul.mubr.bf16.gmra.mrb[0].mxu0 %v3363
        %v4189 = vpop.f32.mrb[0].mxu0
        %v4190 = vadd.f32 0.0, %v4189
        %v4191 = vpop.f32.mrb[0].mxu0
        %v4192 = vadd.f32 0.0, %v4191
        %v4193 = vpop.f32.mrb[0].mxu0
        %v4194 = vadd.f32 0.0, %v4193
        %v4195 = vpop.f32.mrb[0].mxu0
        %v4196 = vadd.f32 0.0, %v4195
        %4197 = vmatprep.mubr.bf16.mxu0 %v3366
        %4198 = vmatmul.mubr.bf16.gmra.mrb[0].mxu0 %v3365
        %v4199 = vpop.f32.mrb[0].mxu0
        %v4200 = vadd.f32 0.0, %v4199
        %v4201 = vpop.f32.mrb[0].mxu0
        %v4202 = vadd.f32 0.0, %v4201
        %v4203 = vpop.f32.mrb[0].mxu0
        %v4204 = vadd.f32 0.0, %v4203
        %v4205 = vpop.f32.mrb[0].mxu0
        %v4206 = vadd.f32 0.0, %v4205
        %4207 = vmatprep.mubr.bf16.mxu0 %v3368
        %4208 = vmatmul.mubr.bf16.gmra.mrb[0].mxu0 %v3367
        %v4209 = vpop.f32.mrb[0].mxu0
        %v4210 = vadd.f32 0.0, %v4209
        %v4211 = vpop.f32.mrb[0].mxu0
        %v4212 = vadd.f32 0.0, %v4211
        %v4213 = vpop.f32.mrb[0].mxu0
        %v4214 = vadd.f32 0.0, %v4213
        %v4215 = vpop.f32.mrb[0].mxu0
        %v4216 = vadd.f32 0.0, %v4215
        %4217 = vmatprep.mubr.bf16.mxu0 %v3370
        %4218 = vmatmul.mubr.bf16.gmra.mrb[0].mxu0 %v3369
        %v4219 = vpop.f32.mrb[0].mxu0
        %v4220 = vadd.f32 0.0, %v4219
        %v4221 = vpop.f32.mrb[0].mxu0
        %v4222 = vadd.f32 0.0, %v4221
        %v4223 = vpop.f32.mrb[0].mxu0
        %v4224 = vadd.f32 0.0, %v4223
        %v4225 = vpop.f32.mrb[0].mxu0
        %v4226 = vadd.f32 0.0, %v4225
        %4227 = vmatprep.mubr.bf16.mxu0 %v3372
        %4228 = vmatmul.mubr.bf16.gmra.mrb[0].mxu0 %v3371
        %v4229 = vpop.f32.mrb[0].mxu0
        %v4230 = vadd.f32 0.0, %v4229
        %v4231 = vpop.f32.mrb[0].mxu0
        %v4232 = vadd.f32 0.0, %v4231
        %v4233 = vpop.f32.mrb[0].mxu0
        %v4234 = vadd.f32 0.0, %v4233
        %v4235 = vpop.f32.mrb[0].mxu0
        %v4236 = vadd.f32 0.0, %v4235
        %4237 = vmatprep.mubr.bf16.mxu0 %v3374
        %4238 = vmatmul.mubr.bf16.gmra.mrb[0].mxu0 %v3373
        %v4239 = vpop.f32.mrb[0].mxu0
        %v4240 = vadd.f32 0.0, %v4239
        %v4241 = vpop.f32.mrb[0].mxu0
        %v4242 = vadd.f32 0.0, %v4241
        %v4243 = vpop.f32.mrb[0].mxu0
        %v4244 = vadd.f32 0.0, %v4243
        %v4245 = vpop.f32.mrb[0].mxu0
        %v4246 = vadd.f32 0.0, %v4245
        %4247 = vmatprep.mubr.bf16.mxu0 %v3376
        %4248 = vmatmul.mubr.bf16.gmra.mrb[0].mxu0 %v3375
        %v4249 = vpop.f32.mrb[0].mxu0
        %v4250 = vadd.f32 0.0, %v4249
        %v4251 = vpop.f32.mrb[0].mxu0
        %v4252 = vadd.f32 0.0, %v4251
        %v4253 = vpop.f32.mrb[0].mxu0
        %v4254 = vadd.f32 0.0, %v4253
        %v4255 = vpop.f32.mrb[0].mxu0
        %v4256 = vadd.f32 0.0, %v4255
        %4257 = vdwg.mxu0
        %4258 = vmatprep.subr.bf16.mxu0 %v3892
        %4259 = vmatpush1.bf16.msra.mxu0 %v3891
        %4260 = vmatprep.subr.bf16.mxu0 %v3900
        %4261 = vmatpush1.bf16.msra.mxu0 %v3899
        %4262 = vmatprep.subr.bf16.mxu0 %v3908
        %4263 = vmatpush1.bf16.msra.mxu0 %v3907
        %4264 = vmatprep.subr.bf16.mxu0 %v3916
        %4265 = vmatpush1.bf16.msra.mxu0 %v3915
        %4266 = vmatprep.subr.bf16.mxu0 %v3924
        %4267 = vmatpush1.bf16.msra.mxu0 %v3923
        %4268 = vmatprep.subr.bf16.mxu0 %v3932
        %4269 = vmatpush1.bf16.msra.mxu0 %v3931
        %4270 = vmatprep.subr.bf16.mxu0 %v3940
        %4271 = vmatpush1.bf16.msra.mxu0 %v3939
        %4272 = vmatprep.subr.bf16.mxu0 %v3948
        %4273 = vmatpush1.bf16.msra.mxu0 %v3947
        %4274 = vmatprep.subr.bf16.mxu0 %v3956
        %4275 = vmatpush1.bf16.msra.mxu0 %v3955
        %4276 = vmatprep.subr.bf16.mxu0 %v3964
        %4277 = vmatpush1.bf16.msra.mxu0 %v3963
        %4278 = vmatprep.subr.bf16.mxu0 %v3972
        %4279 = vmatpush1.bf16.msra.mxu0 %v3971
        %4280 = vmatprep.subr.bf16.mxu0 %v3980
        %4281 = vmatpush1.bf16.msra.mxu0 %v3979
        %4282 = vmatprep.subr.bf16.mxu0 %v3988
        %4283 = vmatpush1.bf16.msra.mxu0 %v3987
        %4284 = vmatprep.subr.bf16.mxu0 %v3996
        %4285 = vmatpush1.bf16.msra.mxu0 %v3995
        %4286 = vmatprep.subr.bf16.mxu0 %v4004
        %4287 = vmatpush1.bf16.msra.mxu0 %v4003
        %4288 = vmatprep.subr.bf16.mxu0 %v4012
        %4289 = vmatpush1.bf16.msra.mxu0 %v4011
        %4290 = vmatprep.mubr.bf16.mxu0 %v3362
        %4291 = vmatmul.mubr.bf16.gmra.mrb[0].mxu0 %v3361
        %v4292 = vpop.f32.mrb[0].mxu0
        %v4293 = vadd.f32 0.0, %v4292
        %v4294 = vpop.f32.mrb[0].mxu0
        %v4295 = vadd.f32 0.0, %v4294
        %v4296 = vpop.f32.mrb[0].mxu0
        %v4297 = vadd.f32 0.0, %v4296
        %v4298 = vpop.f32.mrb[0].mxu0
        %v4299 = vadd.f32 0.0, %v4298
        %4300 = vmatprep.mubr.bf16.mxu0 %v3364
        %4301 = vmatmul.mubr.bf16.gmra.mrb[0].mxu0 %v3363
        %v4302 = vpop.f32.mrb[0].mxu0
        %v4303 = vadd.f32 0.0, %v4302
        %v4304 = vpop.f32.mrb[0].mxu0
        %v4305 = vadd.f32 0.0, %v4304
        %v4306 = vpop.f32.mrb[0].mxu0
        %v4307 = vadd.f32 0.0, %v4306
        %v4308 = vpop.f32.mrb[0].mxu0
        %v4309 = vadd.f32 0.0, %v4308
        %4310 = vmatprep.mubr.bf16.mxu0 %v3366
        %4311 = vmatmul.mubr.bf16.gmra.mrb[0].mxu0 %v3365
        %v4312 = vpop.f32.mrb[0].mxu0
        %v4313 = vadd.f32 0.0, %v4312
        %v4314 = vpop.f32.mrb[0].mxu0
        %v4315 = vadd.f32 0.0, %v4314
        %v4316 = vpop.f32.mrb[0].mxu0
        %v4317 = vadd.f32 0.0, %v4316
        %v4318 = vpop.f32.mrb[0].mxu0
        %v4319 = vadd.f32 0.0, %v4318
        %4320 = vmatprep.mubr.bf16.mxu0 %v3368
        %4321 = vmatmul.mubr.bf16.gmra.mrb[0].mxu0 %v3367
        %v4322 = vpop.f32.mrb[0].mxu0
        %v4323 = vadd.f32 0.0, %v4322
        %v4324 = vpop.f32.mrb[0].mxu0
        %v4325 = vadd.f32 0.0, %v4324
        %v4326 = vpop.f32.mrb[0].mxu0
        %v4327 = vadd.f32 0.0, %v4326
        %v4328 = vpop.f32.mrb[0].mxu0
        %v4329 = vadd.f32 0.0, %v4328
        %4330 = vmatprep.mubr.bf16.mxu0 %v3370
        %4331 = vmatmul.mubr.bf16.gmra.mrb[0].mxu0 %v3369
        %v4332 = vpop.f32.mrb[0].mxu0
        %v4333 = vadd.f32 0.0, %v4332
        %v4334 = vpop.f32.mrb[0].mxu0
        %v4335 = vadd.f32 0.0, %v4334
        %v4336 = vpop.f32.mrb[0].mxu0
        %v4337 = vadd.f32 0.0, %v4336
        %v4338 = vpop.f32.mrb[0].mxu0
        %v4339 = vadd.f32 0.0, %v4338
        %4340 = vmatprep.mubr.bf16.mxu0 %v3372
        %4341 = vmatmul.mubr.bf16.gmra.mrb[0].mxu0 %v3371
        %v4342 = vpop.f32.mrb[0].mxu0
        %v4343 = vadd.f32 0.0, %v4342
        %v4344 = vpop.f32.mrb[0].mxu0
        %v4345 = vadd.f32 0.0, %v4344
        %v4346 = vpop.f32.mrb[0].mxu0
        %v4347 = vadd.f32 0.0, %v4346
        %v4348 = vpop.f32.mrb[0].mxu0
        %v4349 = vadd.f32 0.0, %v4348
        %4350 = vmatprep.mubr.bf16.mxu0 %v3374
        %4351 = vmatmul.mubr.bf16.gmra.mrb[0].mxu0 %v3373
        %v4352 = vpop.f32.mrb[0].mxu0
        %v4353 = vadd.f32 0.0, %v4352
        %v4354 = vpop.f32.mrb[0].mxu0
        %v4355 = vadd.f32 0.0, %v4354
        %v4356 = vpop.f32.mrb[0].mxu0
        %v4357 = vadd.f32 0.0, %v4356
        %v4358 = vpop.f32.mrb[0].mxu0
        %v4359 = vadd.f32 0.0, %v4358
        %4360 = vmatprep.mubr.bf16.mxu0 %v3376
        %4361 = vmatmul.mubr.bf16.gmra.mrb[0].mxu0 %v3375
        %v4362 = vpop.f32.mrb[0].mxu0
        %v4363 = vadd.f32 0.0, %v4362
        %v4364 = vpop.f32.mrb[0].mxu0
        %v4365 = vadd.f32 0.0, %v4364
        %v4366 = vpop.f32.mrb[0].mxu0
        %v4367 = vadd.f32 0.0, %v4366
        %v4368 = vpop.f32.mrb[0].mxu0
        %v4369 = vadd.f32 0.0, %v4368
        %4370 = vdwg.mxu0
        %4371 = vmatprep.subr.bf16.mxu0 %v3894
        %4372 = vmatpush1.bf16.msra.mxu0 %v3893
        %4373 = vmatprep.subr.bf16.mxu0 %v3902
        %4374 = vmatpush1.bf16.msra.mxu0 %v3901
        %4375 = vmatprep.subr.bf16.mxu0 %v3910
        %4376 = vmatpush1.bf16.msra.mxu0 %v3909
        %4377 = vmatprep.subr.bf16.mxu0 %v3918
        %4378 = vmatpush1.bf16.msra.mxu0 %v3917
        %4379 = vmatprep.subr.bf16.mxu0 %v3926
        %4380 = vmatpush1.bf16.msra.mxu0 %v3925
        %4381 = vmatprep.subr.bf16.mxu0 %v3934
        %4382 = vmatpush1.bf16.msra.mxu0 %v3933
        %4383 = vmatprep.subr.bf16.mxu0 %v3942
        %4384 = vmatpush1.bf16.msra.mxu0 %v3941
        %4385 = vmatprep.subr.bf16.mxu0 %v3950
        %4386 = vmatpush1.bf16.msra.mxu0 %v3949
        %4387 = vmatprep.subr.bf16.mxu0 %v3958
        %4388 = vmatpush1.bf16.msra.mxu0 %v3957
        %4389 = vmatprep.subr.bf16.mxu0 %v3966
        %4390 = vmatpush1.bf16.msra.mxu0 %v3965
        %4391 = vmatprep.subr.bf16.mxu0 %v3974
        %4392 = vmatpush1.bf16.msra.mxu0 %v3973
        %4393 = vmatprep.subr.bf16.mxu0 %v3982
        %4394 = vmatpush1.bf16.msra.mxu0 %v3981
        %4395 = vmatprep.subr.bf16.mxu0 %v3990
        %4396 = vmatpush1.bf16.msra.mxu0 %v3989
        %4397 = vmatprep.subr.bf16.mxu0 %v3998
        %4398 = vmatpush1.bf16.msra.mxu0 %v3997
        %4399 = vmatprep.subr.bf16.mxu0 %v4006
        %4400 = vmatpush1.bf16.msra.mxu0 %v4005
        %4401 = vmatprep.subr.bf16.mxu0 %v4014
        %4402 = vmatpush1.bf16.msra.mxu0 %v4013
        %4403 = vmatprep.mubr.bf16.mxu0 %v3362
        %4404 = vmatmul.mubr.bf16.gmra.mrb[0].mxu0 %v3361
        %v4405 = vpop.f32.mrb[0].mxu0
        %v4406 = vadd.f32 0.0, %v4405
        %v4407 = vpop.f32.mrb[0].mxu0
        %v4408 = vadd.f32 0.0, %v4407
        %v4409 = vpop.f32.mrb[0].mxu0
        %v4410 = vadd.f32 0.0, %v4409
        %v4411 = vpop.f32.mrb[0].mxu0
        %v4412 = vadd.f32 0.0, %v4411
        %4413 = vmatprep.mubr.bf16.mxu0 %v3364
        %4414 = vmatmul.mubr.bf16.gmra.mrb[0].mxu0 %v3363
        %v4415 = vpop.f32.mrb[0].mxu0
        %v4416 = vadd.f32 0.0, %v4415
        %v4417 = vpop.f32.mrb[0].mxu0
        %v4418 = vadd.f32 0.0, %v4417
        %v4419 = vpop.f32.mrb[0].mxu0
        %v4420 = vadd.f32 0.0, %v4419
        %v4421 = vpop.f32.mrb[0].mxu0
        %v4422 = vadd.f32 0.0, %v4421
        %4423 = vmatprep.mubr.bf16.mxu0 %v3366
        %4424 = vmatmul.mubr.bf16.gmra.mrb[0].mxu0 %v3365
        %v4425 = vpop.f32.mrb[0].mxu0
        %v4426 = vadd.f32 0.0, %v4425
        %v4427 = vpop.f32.mrb[0].mxu0
        %v4428 = vadd.f32 0.0, %v4427
        %v4429 = vpop.f32.mrb[0].mxu0
        %v4430 = vadd.f32 0.0, %v4429
        %v4431 = vpop.f32.mrb[0].mxu0
        %v4432 = vadd.f32 0.0, %v4431
        %4433 = vmatprep.mubr.bf16.mxu0 %v3368
        %4434 = vmatmul.mubr.bf16.gmra.mrb[0].mxu0 %v3367
        %v4435 = vpop.f32.mrb[0].mxu0
        %v4436 = vadd.f32 0.0, %v4435
        %v4437 = vpop.f32.mrb[0].mxu0
        %v4438 = vadd.f32 0.0, %v4437
        %v4439 = vpop.f32.mrb[0].mxu0
        %v4440 = vadd.f32 0.0, %v4439
        %v4441 = vpop.f32.mrb[0].mxu0
        %v4442 = vadd.f32 0.0, %v4441
        %4443 = vmatprep.mubr.bf16.mxu0 %v3370
        %4444 = vmatmul.mubr.bf16.gmra.mrb[0].mxu0 %v3369
        %v4445 = vpop.f32.mrb[0].mxu0
        %v4446 = vadd.f32 0.0, %v4445
        %v4447 = vpop.f32.mrb[0].mxu0
        %v4448 = vadd.f32 0.0, %v4447
        %v4449 = vpop.f32.mrb[0].mxu0
        %v4450 = vadd.f32 0.0, %v4449
        %v4451 = vpop.f32.mrb[0].mxu0
        %v4452 = vadd.f32 0.0, %v4451
        %4453 = vmatprep.mubr.bf16.mxu0 %v3372
        %4454 = vmatmul.mubr.bf16.gmra.mrb[0].mxu0 %v3371
        %v4455 = vpop.f32.mrb[0].mxu0
        %v4456 = vadd.f32 0.0, %v4455
        %v4457 = vpop.f32.mrb[0].mxu0
        %v4458 = vadd.f32 0.0, %v4457
        %v4459 = vpop.f32.mrb[0].mxu0
        %v4460 = vadd.f32 0.0, %v4459
        %v4461 = vpop.f32.mrb[0].mxu0
        %v4462 = vadd.f32 0.0, %v4461
        %4463 = vmatprep.mubr.bf16.mxu0 %v3374
        %4464 = vmatmul.mubr.bf16.gmra.mrb[0].mxu0 %v3373
        %v4465 = vpop.f32.mrb[0].mxu0
        %v4466 = vadd.f32 0.0, %v4465
        %v4467 = vpop.f32.mrb[0].mxu0
        %v4468 = vadd.f32 0.0, %v4467
        %v4469 = vpop.f32.mrb[0].mxu0
        %v4470 = vadd.f32 0.0, %v4469
        %v4471 = vpop.f32.mrb[0].mxu0
        %v4472 = vadd.f32 0.0, %v4471
        %4473 = vmatprep.mubr.bf16.mxu0 %v3376
        %4474 = vmatmul.mubr.bf16.gmra.mrb[0].mxu0 %v3375
        %v4475 = vpop.f32.mrb[0].mxu0
        %v4476 = vadd.f32 0.0, %v4475
        %v4477 = vpop.f32.mrb[0].mxu0
        %v4478 = vadd.f32 0.0, %v4477
        %v4479 = vpop.f32.mrb[0].mxu0
        %v4480 = vadd.f32 0.0, %v4479
        %v4481 = vpop.f32.mrb[0].mxu0
        %v4482 = vadd.f32 0.0, %v4481
        %4483 = vdwg.mxu0
        %4484 = vmatprep.subr.bf16.mxu0 %v3896
        %4485 = vmatpush1.bf16.msra.mxu0 %v3895
        %4486 = vmatprep.subr.bf16.mxu0 %v3904
        %4487 = vmatpush1.bf16.msra.mxu0 %v3903
        %4488 = vmatprep.subr.bf16.mxu0 %v3912
        %4489 = vmatpush1.bf16.msra.mxu0 %v3911
        %4490 = vmatprep.subr.bf16.mxu0 %v3920
        %4491 = vmatpush1.bf16.msra.mxu0 %v3919
        %4492 = vmatprep.subr.bf16.mxu0 %v3928
        %4493 = vmatpush1.bf16.msra.mxu0 %v3927
        %4494 = vmatprep.subr.bf16.mxu0 %v3936
        %4495 = vmatpush1.bf16.msra.mxu0 %v3935
        %4496 = vmatprep.subr.bf16.mxu0 %v3944
        %4497 = vmatpush1.bf16.msra.mxu0 %v3943
        %4498 = vmatprep.subr.bf16.mxu0 %v3952
        %4499 = vmatpush1.bf16.msra.mxu0 %v3951
        %4500 = vmatprep.subr.bf16.mxu0 %v3960
        %4501 = vmatpush1.bf16.msra.mxu0 %v3959
        %4502 = vmatprep.subr.bf16.mxu0 %v3968
        %4503 = vmatpush1.bf16.msra.mxu0 %v3967
        %4504 = vmatprep.subr.bf16.mxu0 %v3976
        %4505 = vmatpush1.bf16.msra.mxu0 %v3975
        %4506 = vmatprep.subr.bf16.mxu0 %v3984
        %4507 = vmatpush1.bf16.msra.mxu0 %v3983
        %4508 = vmatprep.subr.bf16.mxu0 %v3992
        %4509 = vmatpush1.bf16.msra.mxu0 %v3991
        %4510 = vmatprep.subr.bf16.mxu0 %v4000
        %4511 = vmatpush1.bf16.msra.mxu0 %v3999
        %4512 = vmatprep.subr.bf16.mxu0 %v4008
        %4513 = vmatpush1.bf16.msra.mxu0 %v4007
        %4514 = vmatprep.subr.bf16.mxu0 %v4016
        %4515 = vmatpush1.bf16.msra.mxu0 %v4015
        %4516 = vmatprep.mubr.bf16.mxu0 %v3362
        %4517 = vmatmul.mubr.bf16.gmra.mrb[0].mxu0 %v3361
        %v4518 = vpop.f32.mrb[0].mxu0
        %v4519 = vadd.f32 0.0, %v4518
        %v4520 = vpop.f32.mrb[0].mxu0
        %v4521 = vadd.f32 0.0, %v4520
        %v4522 = vpop.f32.mrb[0].mxu0
        %v4523 = vadd.f32 0.0, %v4522
        %v4524 = vpop.f32.mrb[0].mxu0
        %v4525 = vadd.f32 0.0, %v4524
        %4526 = vmatprep.mubr.bf16.mxu0 %v3364
        %4527 = vmatmul.mubr.bf16.gmra.mrb[0].mxu0 %v3363
        %v4528 = vpop.f32.mrb[0].mxu0
        %v4529 = vadd.f32 0.0, %v4528
        %v4530 = vpop.f32.mrb[0].mxu0
        %v4531 = vadd.f32 0.0, %v4530
        %v4532 = vpop.f32.mrb[0].mxu0
        %v4533 = vadd.f32 0.0, %v4532
        %v4534 = vpop.f32.mrb[0].mxu0
        %v4535 = vadd.f32 0.0, %v4534
        %4536 = vmatprep.mubr.bf16.mxu0 %v3366
        %4537 = vmatmul.mubr.bf16.gmra.mrb[0].mxu0 %v3365
        %v4538 = vpop.f32.mrb[0].mxu0
        %v4539 = vadd.f32 0.0, %v4538
        %v4540 = vpop.f32.mrb[0].mxu0
        %v4541 = vadd.f32 0.0, %v4540
        %v4542 = vpop.f32.mrb[0].mxu0
        %v4543 = vadd.f32 0.0, %v4542
        %v4544 = vpop.f32.mrb[0].mxu0
        %v4545 = vadd.f32 0.0, %v4544
        %4546 = vmatprep.mubr.bf16.mxu0 %v3368
        %4547 = vmatmul.mubr.bf16.gmra.mrb[0].mxu0 %v3367
        %v4548 = vpop.f32.mrb[0].mxu0
        %v4549 = vadd.f32 0.0, %v4548
        %v4550 = vpop.f32.mrb[0].mxu0
        %v4551 = vadd.f32 0.0, %v4550
        %v4552 = vpop.f32.mrb[0].mxu0
        %v4553 = vadd.f32 0.0, %v4552
        %v4554 = vpop.f32.mrb[0].mxu0
        %v4555 = vadd.f32 0.0, %v4554
        %4556 = vmatprep.mubr.bf16.mxu0 %v3370
        %4557 = vmatmul.mubr.bf16.gmra.mrb[0].mxu0 %v3369
        %v4558 = vpop.f32.mrb[0].mxu0
        %v4559 = vadd.f32 0.0, %v4558
        %v4560 = vpop.f32.mrb[0].mxu0
        %v4561 = vadd.f32 0.0, %v4560
        %v4562 = vpop.f32.mrb[0].mxu0
        %v4563 = vadd.f32 0.0, %v4562
        %v4564 = vpop.f32.mrb[0].mxu0
        %v4565 = vadd.f32 0.0, %v4564
        %4566 = vmatprep.mubr.bf16.mxu0 %v3372
        %4567 = vmatmul.mubr.bf16.gmra.mrb[0].mxu0 %v3371
        %v4568 = vpop.f32.mrb[0].mxu0
        %v4569 = vadd.f32 0.0, %v4568
        %v4570 = vpop.f32.mrb[0].mxu0
        %v4571 = vadd.f32 0.0, %v4570
        %v4572 = vpop.f32.mrb[0].mxu0
        %v4573 = vadd.f32 0.0, %v4572
        %v4574 = vpop.f32.mrb[0].mxu0
        %v4575 = vadd.f32 0.0, %v4574
        %4576 = vmatprep.mubr.bf16.mxu0 %v3374
        %4577 = vmatmul.mubr.bf16.gmra.mrb[0].mxu0 %v3373
        %v4578 = vpop.f32.mrb[0].mxu0
        %v4579 = vadd.f32 0.0, %v4578
        %v4580 = vpop.f32.mrb[0].mxu0
        %v4581 = vadd.f32 0.0, %v4580
        %v4582 = vpop.f32.mrb[0].mxu0
        %v4583 = vadd.f32 0.0, %v4582
        %v4584 = vpop.f32.mrb[0].mxu0
        %v4585 = vadd.f32 0.0, %v4584
        %4586 = vmatprep.mubr.bf16.mxu0 %v3376
        %4587 = vmatmul.mubr.bf16.gmra.mrb[0].mxu0 %v3375
        %v4588 = vpop.f32.mrb[0].mxu0
        %v4589 = vadd.f32 0.0, %v4588
        %v4590 = vpop.f32.mrb[0].mxu0
        %v4591 = vadd.f32 0.0, %v4590
        %v4592 = vpop.f32.mrb[0].mxu0
        %v4593 = vadd.f32 0.0, %v4592
        %v4594 = vpop.f32.mrb[0].mxu0
        %v4595 = vadd.f32 0.0, %v4594
        %4596 = vdwg.mxu0
        %v4597 = vpack.c.bf16 %v4184, %v4180
        %v4598 = vpack.c.bf16 %v4186, %v4182
        %v4599 = vpack.c.bf16 %v4297, %v4293
        %v4600 = vpack.c.bf16 %v4299, %v4295
        %v4601 = vpack.c.bf16 %v4410, %v4406
        %v4602 = vpack.c.bf16 %v4412, %v4408
        %v4603 = vpack.c.bf16 %v4523, %v4519
        %v4604 = vpack.c.bf16 %v4525, %v4521
        %v4605 = vpack.c.bf16 %v4194, %v4190
        %v4606 = vpack.c.bf16 %v4196, %v4192
        %v4607 = vpack.c.bf16 %v4307, %v4303
        %v4608 = vpack.c.bf16 %v4309, %v4305
        %v4609 = vpack.c.bf16 %v4420, %v4416
        %v4610 = vpack.c.bf16 %v4422, %v4418
        %v4611 = vpack.c.bf16 %v4533, %v4529
        %v4612 = vpack.c.bf16 %v4535, %v4531
        %v4613 = vpack.c.bf16 %v4204, %v4200
        %v4614 = vpack.c.bf16 %v4206, %v4202
        %v4615 = vpack.c.bf16 %v4317, %v4313
        %v4616 = vpack.c.bf16 %v4319, %v4315
        %v4617 = vpack.c.bf16 %v4430, %v4426
        %v4618 = vpack.c.bf16 %v4432, %v4428
        %v4619 = vpack.c.bf16 %v4543, %v4539
        %v4620 = vpack.c.bf16 %v4545, %v4541
        %v4621 = vpack.c.bf16 %v4214, %v4210
        %v4622 = vpack.c.bf16 %v4216, %v4212
        %v4623 = vpack.c.bf16 %v4327, %v4323
        %v4624 = vpack.c.bf16 %v4329, %v4325
        %v4625 = vpack.c.bf16 %v4440, %v4436
        %v4626 = vpack.c.bf16 %v4442, %v4438
        %v4627 = vpack.c.bf16 %v4553, %v4549
        %v4628 = vpack.c.bf16 %v4555, %v4551
        %v4629 = vpack.c.bf16 %v4224, %v4220
        %v4630 = vpack.c.bf16 %v4226, %v4222
        %v4631 = vpack.c.bf16 %v4337, %v4333
        %v4632 = vpack.c.bf16 %v4339, %v4335
        %v4633 = vpack.c.bf16 %v4450, %v4446
        %v4634 = vpack.c.bf16 %v4452, %v4448
        %v4635 = vpack.c.bf16 %v4563, %v4559
        %v4636 = vpack.c.bf16 %v4565, %v4561
        %v4637 = vpack.c.bf16 %v4234, %v4230
        %v4638 = vpack.c.bf16 %v4236, %v4232
        %v4639 = vpack.c.bf16 %v4347, %v4343
        %v4640 = vpack.c.bf16 %v4349, %v4345
        %v4641 = vpack.c.bf16 %v4460, %v4456
        %v4642 = vpack.c.bf16 %v4462, %v4458
        %v4643 = vpack.c.bf16 %v4573, %v4569
        %v4644 = vpack.c.bf16 %v4575, %v4571
        %v4645 = vpack.c.bf16 %v4244, %v4240
        %v4646 = vpack.c.bf16 %v4246, %v4242
        %v4647 = vpack.c.bf16 %v4357, %v4353
        %v4648 = vpack.c.bf16 %v4359, %v4355
        %v4649 = vpack.c.bf16 %v4470, %v4466
        %v4650 = vpack.c.bf16 %v4472, %v4468
        %v4651 = vpack.c.bf16 %v4583, %v4579
        %v4652 = vpack.c.bf16 %v4585, %v4581
        %v4653 = vpack.c.bf16 %v4254, %v4250
        %v4654 = vpack.c.bf16 %v4256, %v4252
        %v4655 = vpack.c.bf16 %v4367, %v4363
        %v4656 = vpack.c.bf16 %v4369, %v4365
        %v4657 = vpack.c.bf16 %v4480, %v4476
        %v4658 = vpack.c.bf16 %v4482, %v4478
        %v4659 = vpack.c.bf16 %v4593, %v4589
        %v4660 = vpack.c.bf16 %v4595, %v4591
        %v4661 = vld [vmem:[%s10] sm:$0xff]
        %v4663 = vcombine.high %v4661, %v4661
        %v4665 = vunpack.c.l.s4 1966171168
        %v4666 = vunpack.c.0.s8 %v4665
        %v4667 = vlaneseq
        %v4668 = vshrl.u32 %v4667, 7
        %v4669 = vsub.s32 %v4666, %v4668
        %v4670 = vrot.slane %v4661, %v4669
        %v4672 = vunpack.c.l.s4 1966171168
        %v4673 = vunpack.c.0.s8 %v4672
        %v4674 = vlaneseq
        %v4675 = vshrl.u32 %v4674, 7
        %v4676 = vsub.s32 %v4673, %v4675
        %v4677 = vrot.slane %v4663, %v4676
        %v4678 = vcombine.high %v4670, %v4670
        %v4679 = vcombine.high %v4677, %v4677
        %v4681 = vunpack.c.l.s4 1966171168
        %v4682 = vunpack.c.0.s8 %v4681
        %v4683 = vlaneseq
        %v4684 = vshrl.u32 %v4683, 7
        %v4685 = vsub.s32 %v4682, %v4684
        %v4686 = vrot.slane %v4670, %v4685
        %v4688 = vunpack.c.l.s4 1966171168
        %v4689 = vunpack.c.0.s8 %v4688
        %v4690 = vlaneseq
        %v4691 = vshrl.u32 %v4690, 7
        %v4692 = vsub.s32 %v4689, %v4691
        %v4693 = vrot.slane %v4677, %v4692
        %v4695 = vunpack.c.l.s4 1966171168
        %v4696 = vunpack.c.0.s8 %v4695
        %v4697 = vlaneseq
        %v4698 = vshrl.u32 %v4697, 7
        %v4699 = vsub.s32 %v4696, %v4698
        %v4700 = vrot.slane %v4678, %v4699
        %v4702 = vunpack.c.l.s4 1966171168
        %v4703 = vunpack.c.0.s8 %v4702
        %v4704 = vlaneseq
        %v4705 = vshrl.u32 %v4704, 7
        %v4706 = vsub.s32 %v4703, %v4705
        %v4707 = vrot.slane %v4679, %v4706
        %v4708 = vcombine.high %v4686, %v4686
        %v4709 = vcombine.high %v4693, %v4693
        %v4710 = vcombine.high %v4700, %v4700
        %v4711 = vcombine.high %v4707, %v4707
        %v4713 = vpack.i.b16 %v4686, %v4686
        %v4715 = vlaneseq
        %v4716 = vshrl.u32 %v4715, 7
        %v4717 = vsub.s32 0, %v4716
        %v4718 = vrot.slane %v4713, %v4717
        %v4720 = vpack.i.b16 %v4700, %v4700
        %v4722 = vlaneseq
        %v4723 = vshrl.u32 %v4722, 7
        %v4724 = vsub.s32 0, %v4723
        %v4725 = vrot.slane %v4720, %v4724
        %v4727 = vpack.i.b16 %v4708, %v4708
        %v4729 = vlaneseq
        %v4730 = vshrl.u32 %v4729, 7
        %v4731 = vsub.s32 0, %v4730
        %v4732 = vrot.slane %v4727, %v4731
        %v4734 = vpack.i.b16 %v4710, %v4710
        %v4736 = vlaneseq
        %v4737 = vshrl.u32 %v4736, 7
        %v4738 = vsub.s32 0, %v4737
        %v4739 = vrot.slane %v4734, %v4738
        %v4741 = vpack.i.b16 %v4693, %v4693
        %v4743 = vlaneseq
        %v4744 = vshrl.u32 %v4743, 7
        %v4745 = vsub.s32 0, %v4744
        %v4746 = vrot.slane %v4741, %v4745
        %v4748 = vpack.i.b16 %v4707, %v4707
        %v4750 = vlaneseq
        %v4751 = vshrl.u32 %v4750, 7
        %v4752 = vsub.s32 0, %v4751
        %v4753 = vrot.slane %v4748, %v4752
        %v4755 = vpack.i.b16 %v4709, %v4709
        %v4757 = vlaneseq
        %v4758 = vshrl.u32 %v4757, 7
        %v4759 = vsub.s32 0, %v4758
        %v4760 = vrot.slane %v4755, %v4759
        %v4762 = vpack.i.b16 %v4711, %v4711
        %v4764 = vlaneseq
        %v4765 = vshrl.u32 %v4764, 7
        %v4766 = vsub.s32 0, %v4765
        %v4767 = vrot.slane %v4762, %v4766
        %v4768 = vadd.bf16 %v4597, %v4718
        %v4769 = vadd.bf16 %v4598, %v4725
        %v4770 = vadd.bf16 %v4599, %v4732
        %v4771 = vadd.bf16 %v4600, %v4739
        %v4772 = vadd.bf16 %v4601, %v4746
        %v4773 = vadd.bf16 %v4602, %v4753
        %v4774 = vadd.bf16 %v4603, %v4760
        %v4775 = vadd.bf16 %v4604, %v4767
        %v4776 = vadd.bf16 %v4605, %v4718
        %v4777 = vadd.bf16 %v4606, %v4725
        %v4778 = vadd.bf16 %v4607, %v4732
        %v4779 = vadd.bf16 %v4608, %v4739
        %v4780 = vadd.bf16 %v4609, %v4746
        %v4781 = vadd.bf16 %v4610, %v4753
        %v4782 = vadd.bf16 %v4611, %v4760
        %v4783 = vadd.bf16 %v4612, %v4767
        %v4784 = vadd.bf16 %v4613, %v4718
        %v4785 = vadd.bf16 %v4614, %v4725
        %v4786 = vadd.bf16 %v4615, %v4732
        %v4787 = vadd.bf16 %v4616, %v4739
        %v4788 = vadd.bf16 %v4617, %v4746
        %v4789 = vadd.bf16 %v4618, %v4753
        %v4790 = vadd.bf16 %v4619, %v4760
        %v4791 = vadd.bf16 %v4620, %v4767
        %v4792 = vadd.bf16 %v4621, %v4718
        %v4793 = vadd.bf16 %v4622, %v4725
        %v4794 = vadd.bf16 %v4623, %v4732
        %v4795 = vadd.bf16 %v4624, %v4739
        %v4796 = vadd.bf16 %v4625, %v4746
        %v4797 = vadd.bf16 %v4626, %v4753
        %v4798 = vadd.bf16 %v4627, %v4760
        %v4799 = vadd.bf16 %v4628, %v4767
        %v4800 = vadd.bf16 %v4629, %v4718
        %v4801 = vadd.bf16 %v4630, %v4725
        %v4802 = vadd.bf16 %v4631, %v4732
        %v4803 = vadd.bf16 %v4632, %v4739
        %v4804 = vadd.bf16 %v4633, %v4746
        %v4805 = vadd.bf16 %v4634, %v4753
        %v4806 = vadd.bf16 %v4635, %v4760
        %v4807 = vadd.bf16 %v4636, %v4767
        %v4808 = vadd.bf16 %v4637, %v4718
        %v4809 = vadd.bf16 %v4638, %v4725
        %v4810 = vadd.bf16 %v4639, %v4732
        %v4811 = vadd.bf16 %v4640, %v4739
        %v4812 = vadd.bf16 %v4641, %v4746
        %v4813 = vadd.bf16 %v4642, %v4753
        %v4814 = vadd.bf16 %v4643, %v4760
        %v4815 = vadd.bf16 %v4644, %v4767
        %v4816 = vadd.bf16 %v4645, %v4718
        %v4817 = vadd.bf16 %v4646, %v4725
        %v4818 = vadd.bf16 %v4647, %v4732
        %v4819 = vadd.bf16 %v4648, %v4739
        %v4820 = vadd.bf16 %v4649, %v4746
        %v4821 = vadd.bf16 %v4650, %v4753
        %v4822 = vadd.bf16 %v4651, %v4760
        %v4823 = vadd.bf16 %v4652, %v4767
        %v4824 = vadd.bf16 %v4653, %v4718
        %v4825 = vadd.bf16 %v4654, %v4725
        %v4826 = vadd.bf16 %v4655, %v4732
        %v4827 = vadd.bf16 %v4656, %v4739
        %v4828 = vadd.bf16 %v4657, %v4746
        %v4829 = vadd.bf16 %v4658, %v4753
        %v4830 = vadd.bf16 %v4659, %v4760
        %v4831 = vadd.bf16 %v4660, %v4767
        %v4832 = vmul.bf16 %v4768, 1056980736
        %v4833 = vmul.bf16 %v4769, 1056980736
        %v4834 = vmul.bf16 %v4770, 1056980736
        %v4835 = vmul.bf16 %v4771, 1056980736
        %v4836 = vmul.bf16 %v4772, 1056980736
        %v4837 = vmul.bf16 %v4773, 1056980736
        %v4838 = vmul.bf16 %v4774, 1056980736
        %v4839 = vmul.bf16 %v4775, 1056980736
        %v4840 = vmul.bf16 %v4776, 1056980736
        %v4841 = vmul.bf16 %v4777, 1056980736
        %v4842 = vmul.bf16 %v4778, 1056980736
        %v4843 = vmul.bf16 %v4779, 1056980736
        %v4844 = vmul.bf16 %v4780, 1056980736
        %v4845 = vmul.bf16 %v4781, 1056980736
        %v4846 = vmul.bf16 %v4782, 1056980736
        %v4847 = vmul.bf16 %v4783, 1056980736
        %v4848 = vmul.bf16 %v4784, 1056980736
        %v4849 = vmul.bf16 %v4785, 1056980736
        %v4850 = vmul.bf16 %v4786, 1056980736
        %v4851 = vmul.bf16 %v4787, 1056980736
        %v4852 = vmul.bf16 %v4788, 1056980736
        %v4853 = vmul.bf16 %v4789, 1056980736
        %v4854 = vmul.bf16 %v4790, 1056980736
        %v4855 = vmul.bf16 %v4791, 1056980736
        %v4856 = vmul.bf16 %v4792, 1056980736
        %v4857 = vmul.bf16 %v4793, 1056980736
        %v4858 = vmul.bf16 %v4794, 1056980736
        %v4859 = vmul.bf16 %v4795, 1056980736
        %v4860 = vmul.bf16 %v4796, 1056980736
        %v4861 = vmul.bf16 %v4797, 1056980736
        %v4862 = vmul.bf16 %v4798, 1056980736
        %v4863 = vmul.bf16 %v4799, 1056980736
        %v4864 = vmul.bf16 %v4800, 1056980736
        %v4865 = vmul.bf16 %v4801, 1056980736
        %v4866 = vmul.bf16 %v4802, 1056980736
        %v4867 = vmul.bf16 %v4803, 1056980736
        %v4868 = vmul.bf16 %v4804, 1056980736
        %v4869 = vmul.bf16 %v4805, 1056980736
        %v4870 = vmul.bf16 %v4806, 1056980736
        %v4871 = vmul.bf16 %v4807, 1056980736
        %v4872 = vmul.bf16 %v4808, 1056980736
        %v4873 = vmul.bf16 %v4809, 1056980736
        %v4874 = vmul.bf16 %v4810, 1056980736
        %v4875 = vmul.bf16 %v4811, 1056980736
        %v4876 = vmul.bf16 %v4812, 1056980736
        %v4877 = vmul.bf16 %v4813, 1056980736
        %v4878 = vmul.bf16 %v4814, 1056980736
        %v4879 = vmul.bf16 %v4815, 1056980736
        %v4880 = vmul.bf16 %v4816, 1056980736
        %v4881 = vmul.bf16 %v4817, 1056980736
        %v4882 = vmul.bf16 %v4818, 1056980736
        %v4883 = vmul.bf16 %v4819, 1056980736
        %v4884 = vmul.bf16 %v4820, 1056980736
        %v4885 = vmul.bf16 %v4821, 1056980736
        %v4886 = vmul.bf16 %v4822, 1056980736
        %v4887 = vmul.bf16 %v4823, 1056980736
        %v4888 = vmul.bf16 %v4824, 1056980736
        %v4889 = vmul.bf16 %v4825, 1056980736
        %v4890 = vmul.bf16 %v4826, 1056980736
        %v4891 = vmul.bf16 %v4827, 1056980736
        %v4892 = vmul.bf16 %v4828, 1056980736
        %v4893 = vmul.bf16 %v4829, 1056980736
        %v4894 = vmul.bf16 %v4830, 1056980736
        %v4895 = vmul.bf16 %v4831, 1056980736
        %v4896 = vmul.bf16 %v4768, 1027030327
        %v4897 = vmul.bf16 %v4769, 1027030327
        %v4898 = vmul.bf16 %v4770, 1027030327
        %v4899 = vmul.bf16 %v4771, 1027030327
        %v4900 = vmul.bf16 %v4772, 1027030327
        %v4901 = vmul.bf16 %v4773, 1027030327
        %v4902 = vmul.bf16 %v4774, 1027030327
        %v4903 = vmul.bf16 %v4775, 1027030327
        %v4904 = vmul.bf16 %v4776, 1027030327
        %v4905 = vmul.bf16 %v4777, 1027030327
        %v4906 = vmul.bf16 %v4778, 1027030327
        %v4907 = vmul.bf16 %v4779, 1027030327
        %v4908 = vmul.bf16 %v4780, 1027030327
        %v4909 = vmul.bf16 %v4781, 1027030327
        %v4910 = vmul.bf16 %v4782, 1027030327
        %v4911 = vmul.bf16 %v4783, 1027030327
        %v4912 = vmul.bf16 %v4784, 1027030327
        %v4913 = vmul.bf16 %v4785, 1027030327
        %v4914 = vmul.bf16 %v4786, 1027030327
        %v4915 = vmul.bf16 %v4787, 1027030327
        %v4916 = vmul.bf16 %v4788, 1027030327
        %v4917 = vmul.bf16 %v4789, 1027030327
        %v4918 = vmul.bf16 %v4790, 1027030327
        %v4919 = vmul.bf16 %v4791, 1027030327
        %v4920 = vmul.bf16 %v4792, 1027030327
        %v4921 = vmul.bf16 %v4793, 1027030327
        %v4922 = vmul.bf16 %v4794, 1027030327
        %v4923 = vmul.bf16 %v4795, 1027030327
        %v4924 = vmul.bf16 %v4796, 1027030327
        %v4925 = vmul.bf16 %v4797, 1027030327
        %v4926 = vmul.bf16 %v4798, 1027030327
        %v4927 = vmul.bf16 %v4799, 1027030327
        %v4928 = vmul.bf16 %v4800, 1027030327
        %v4929 = vmul.bf16 %v4801, 1027030327
        %v4930 = vmul.bf16 %v4802, 1027030327
        %v4931 = vmul.bf16 %v4803, 1027030327
        %v4932 = vmul.bf16 %v4804, 1027030327
        %v4933 = vmul.bf16 %v4805, 1027030327
        %v4934 = vmul.bf16 %v4806, 1027030327
        %v4935 = vmul.bf16 %v4807, 1027030327
        %v4936 = vmul.bf16 %v4808, 1027030327
        %v4937 = vmul.bf16 %v4809, 1027030327
        %v4938 = vmul.bf16 %v4810, 1027030327
        %v4939 = vmul.bf16 %v4811, 1027030327
        %v4940 = vmul.bf16 %v4812, 1027030327
        %v4941 = vmul.bf16 %v4813, 1027030327
        %v4942 = vmul.bf16 %v4814, 1027030327
        %v4943 = vmul.bf16 %v4815, 1027030327
        %v4944 = vmul.bf16 %v4816, 1027030327
        %v4945 = vmul.bf16 %v4817, 1027030327
        %v4946 = vmul.bf16 %v4818, 1027030327
        %v4947 = vmul.bf16 %v4819, 1027030327
        %v4948 = vmul.bf16 %v4820, 1027030327
        %v4949 = vmul.bf16 %v4821, 1027030327
        %v4950 = vmul.bf16 %v4822, 1027030327
        %v4951 = vmul.bf16 %v4823, 1027030327
        %v4952 = vmul.bf16 %v4824, 1027030327
        %v4953 = vmul.bf16 %v4825, 1027030327
        %v4954 = vmul.bf16 %v4826, 1027030327
        %v4955 = vmul.bf16 %v4827, 1027030327
        %v4956 = vmul.bf16 %v4828, 1027030327
        %v4957 = vmul.bf16 %v4829, 1027030327
        %v4958 = vmul.bf16 %v4830, 1027030327
        %v4959 = vmul.bf16 %v4831, 1027030327
        %v4960 = vmul.bf16 %v4896, %v4768
        %v4961 = vmul.bf16 %v4897, %v4769
        %v4962 = vmul.bf16 %v4898, %v4770
        %v4963 = vmul.bf16 %v4899, %v4771
        %v4964 = vmul.bf16 %v4900, %v4772
        %v4965 = vmul.bf16 %v4901, %v4773
        %v4966 = vmul.bf16 %v4902, %v4774
        %v4967 = vmul.bf16 %v4903, %v4775
        %v4968 = vmul.bf16 %v4904, %v4776
        %v4969 = vmul.bf16 %v4905, %v4777
        %v4970 = vmul.bf16 %v4906, %v4778
        %v4971 = vmul.bf16 %v4907, %v4779
        %v4972 = vmul.bf16 %v4908, %v4780
        %v4973 = vmul.bf16 %v4909, %v4781
        %v4974 = vmul.bf16 %v4910, %v4782
        %v4975 = vmul.bf16 %v4911, %v4783
        %v4976 = vmul.bf16 %v4912, %v4784
        %v4977 = vmul.bf16 %v4913, %v4785
        %v4978 = vmul.bf16 %v4914, %v4786
        %v4979 = vmul.bf16 %v4915, %v4787
        %v4980 = vmul.bf16 %v4916, %v4788
        %v4981 = vmul.bf16 %v4917, %v4789
        %v4982 = vmul.bf16 %v4918, %v4790
        %v4983 = vmul.bf16 %v4919, %v4791
        %v4984 = vmul.bf16 %v4920, %v4792
        %v4985 = vmul.bf16 %v4921, %v4793
        %v4986 = vmul.bf16 %v4922, %v4794
        %v4987 = vmul.bf16 %v4923, %v4795
        %v4988 = vmul.bf16 %v4924, %v4796
        %v4989 = vmul.bf16 %v4925, %v4797
        %v4990 = vmul.bf16 %v4926, %v4798
        %v4991 = vmul.bf16 %v4927, %v4799
        %v4992 = vmul.bf16 %v4928, %v4800
        %v4993 = vmul.bf16 %v4929, %v4801
        %v4994 = vmul.bf16 %v4930, %v4802
        %v4995 = vmul.bf16 %v4931, %v4803
        %v4996 = vmul.bf16 %v4932, %v4804
        %v4997 = vmul.bf16 %v4933, %v4805
        %v4998 = vmul.bf16 %v4934, %v4806
        %v4999 = vmul.bf16 %v4935, %v4807
        %v5000 = vmul.bf16 %v4936, %v4808
        %v5001 = vmul.bf16 %v4937, %v4809
        %v5002 = vmul.bf16 %v4938, %v4810
        %v5003 = vmul.bf16 %v4939, %v4811
        %v5004 = vmul.bf16 %v4940, %v4812
        %v5005 = vmul.bf16 %v4941, %v4813
        %v5006 = vmul.bf16 %v4942, %v4814
        %v5007 = vmul.bf16 %v4943, %v4815
        %v5008 = vmul.bf16 %v4944, %v4816
        %v5009 = vmul.bf16 %v4945, %v4817
        %v5010 = vmul.bf16 %v4946, %v4818
        %v5011 = vmul.bf16 %v4947, %v4819
        %v5012 = vmul.bf16 %v4948, %v4820
        %v5013 = vmul.bf16 %v4949, %v4821
        %v5014 = vmul.bf16 %v4950, %v4822
        %v5015 = vmul.bf16 %v4951, %v4823
        %v5016 = vmul.bf16 %v4952, %v4824
        %v5017 = vmul.bf16 %v4953, %v4825
        %v5018 = vmul.bf16 %v4954, %v4826
        %v5019 = vmul.bf16 %v4955, %v4827
        %v5020 = vmul.bf16 %v4956, %v4828
        %v5021 = vmul.bf16 %v4957, %v4829
        %v5022 = vmul.bf16 %v4958, %v4830
        %v5023 = vmul.bf16 %v4959, %v4831
        %v5024 = vmul.bf16 %v4960, %v4768
        %v5025 = vmul.bf16 %v4961, %v4769
        %v5026 = vmul.bf16 %v4962, %v4770
        %v5027 = vmul.bf16 %v4963, %v4771
        %v5028 = vmul.bf16 %v4964, %v4772
        %v5029 = vmul.bf16 %v4965, %v4773
        %v5030 = vmul.bf16 %v4966, %v4774
        %v5031 = vmul.bf16 %v4967, %v4775
        %v5032 = vmul.bf16 %v4968, %v4776
        %v5033 = vmul.bf16 %v4969, %v4777
        %v5034 = vmul.bf16 %v4970, %v4778
        %v5035 = vmul.bf16 %v4971, %v4779
        %v5036 = vmul.bf16 %v4972, %v4780
        %v5037 = vmul.bf16 %v4973, %v4781
        %v5038 = vmul.bf16 %v4974, %v4782
        %v5039 = vmul.bf16 %v4975, %v4783
        %v5040 = vmul.bf16 %v4976, %v4784
        %v5041 = vmul.bf16 %v4977, %v4785
        %v5042 = vmul.bf16 %v4978, %v4786
        %v5043 = vmul.bf16 %v4979, %v4787
        %v5044 = vmul.bf16 %v4980, %v4788
        %v5045 = vmul.bf16 %v4981, %v4789
        %v5046 = vmul.bf16 %v4982, %v4790
        %v5047 = vmul.bf16 %v4983, %v4791
        %v5048 = vmul.bf16 %v4984, %v4792
        %v5049 = vmul.bf16 %v4985, %v4793
        %v5050 = vmul.bf16 %v4986, %v4794
        %v5051 = vmul.bf16 %v4987, %v4795
        %v5052 = vmul.bf16 %v4988, %v4796
        %v5053 = vmul.bf16 %v4989, %v4797
        %v5054 = vmul.bf16 %v4990, %v4798
        %v5055 = vmul.bf16 %v4991, %v4799
        %v5056 = vmul.bf16 %v4992, %v4800
        %v5057 = vmul.bf16 %v4993, %v4801
        %v5058 = vmul.bf16 %v4994, %v4802
        %v5059 = vmul.bf16 %v4995, %v4803
        %v5060 = vmul.bf16 %v4996, %v4804
        %v5061 = vmul.bf16 %v4997, %v4805
        %v5062 = vmul.bf16 %v4998, %v4806
        %v5063 = vmul.bf16 %v4999, %v4807
        %v5064 = vmul.bf16 %v5000, %v4808
        %v5065 = vmul.bf16 %v5001, %v4809
        %v5066 = vmul.bf16 %v5002, %v4810
        %v5067 = vmul.bf16 %v5003, %v4811
        %v5068 = vmul.bf16 %v5004, %v4812
        %v5069 = vmul.bf16 %v5005, %v4813
        %v5070 = vmul.bf16 %v5006, %v4814
        %v5071 = vmul.bf16 %v5007, %v4815
        %v5072 = vmul.bf16 %v5008, %v4816
        %v5073 = vmul.bf16 %v5009, %v4817
        %v5074 = vmul.bf16 %v5010, %v4818
        %v5075 = vmul.bf16 %v5011, %v4819
        %v5076 = vmul.bf16 %v5012, %v4820
        %v5077 = vmul.bf16 %v5013, %v4821
        %v5078 = vmul.bf16 %v5014, %v4822
        %v5079 = vmul.bf16 %v5015, %v4823
        %v5080 = vmul.bf16 %v5016, %v4824
        %v5081 = vmul.bf16 %v5017, %v4825
        %v5082 = vmul.bf16 %v5018, %v4826
        %v5083 = vmul.bf16 %v5019, %v4827
        %v5084 = vmul.bf16 %v5020, %v4828
        %v5085 = vmul.bf16 %v5021, %v4829
        %v5086 = vmul.bf16 %v5022, %v4830
        %v5087 = vmul.bf16 %v5023, %v4831
        %v5088 = vadd.bf16 %v4768, %v5024
        %v5089 = vadd.bf16 %v4769, %v5025
        %v5090 = vadd.bf16 %v4770, %v5026
        %v5091 = vadd.bf16 %v4771, %v5027
        %v5092 = vadd.bf16 %v4772, %v5028
        %v5093 = vadd.bf16 %v4773, %v5029
        %v5094 = vadd.bf16 %v4774, %v5030
        %v5095 = vadd.bf16 %v4775, %v5031
        %v5096 = vadd.bf16 %v4776, %v5032
        %v5097 = vadd.bf16 %v4777, %v5033
        %v5098 = vadd.bf16 %v4778, %v5034
        %v5099 = vadd.bf16 %v4779, %v5035
        %v5100 = vadd.bf16 %v4780, %v5036
        %v5101 = vadd.bf16 %v4781, %v5037
        %v5102 = vadd.bf16 %v4782, %v5038
        %v5103 = vadd.bf16 %v4783, %v5039
        %v5104 = vadd.bf16 %v4784, %v5040
        %v5105 = vadd.bf16 %v4785, %v5041
        %v5106 = vadd.bf16 %v4786, %v5042
        %v5107 = vadd.bf16 %v4787, %v5043
        %v5108 = vadd.bf16 %v4788, %v5044
        %v5109 = vadd.bf16 %v4789, %v5045
        %v5110 = vadd.bf16 %v4790, %v5046
        %v5111 = vadd.bf16 %v4791, %v5047
        %v5112 = vadd.bf16 %v4792, %v5048
        %v5113 = vadd.bf16 %v4793, %v5049
        %v5114 = vadd.bf16 %v4794, %v5050
        %v5115 = vadd.bf16 %v4795, %v5051
        %v5116 = vadd.bf16 %v4796, %v5052
        %v5117 = vadd.bf16 %v4797, %v5053
        %v5118 = vadd.bf16 %v4798, %v5054
        %v5119 = vadd.bf16 %v4799, %v5055
        %v5120 = vadd.bf16 %v4800, %v5056
        %v5121 = vadd.bf16 %v4801, %v5057
        %v5122 = vadd.bf16 %v4802, %v5058
        %v5123 = vadd.bf16 %v4803, %v5059
        %v5124 = vadd.bf16 %v4804, %v5060
        %v5125 = vadd.bf16 %v4805, %v5061
        %v5126 = vadd.bf16 %v4806, %v5062
        %v5127 = vadd.bf16 %v4807, %v5063
        %v5128 = vadd.bf16 %v4808, %v5064
        %v5129 = vadd.bf16 %v4809, %v5065
        %v5130 = vadd.bf16 %v4810, %v5066
        %v5131 = vadd.bf16 %v4811, %v5067
        %v5132 = vadd.bf16 %v4812, %v5068
        %v5133 = vadd.bf16 %v4813, %v5069
        %v5134 = vadd.bf16 %v4814, %v5070
        %v5135 = vadd.bf16 %v4815, %v5071
        %v5136 = vadd.bf16 %v4816, %v5072
        %v5137 = vadd.bf16 %v4817, %v5073
        %v5138 = vadd.bf16 %v4818, %v5074
        %v5139 = vadd.bf16 %v4819, %v5075
        %v5140 = vadd.bf16 %v4820, %v5076
        %v5141 = vadd.bf16 %v4821, %v5077
        %v5142 = vadd.bf16 %v4822, %v5078
        %v5143 = vadd.bf16 %v4823, %v5079
        %v5144 = vadd.bf16 %v4824, %v5080
        %v5145 = vadd.bf16 %v4825, %v5081
        %v5146 = vadd.bf16 %v4826, %v5082
        %v5147 = vadd.bf16 %v4827, %v5083
        %v5148 = vadd.bf16 %v4828, %v5084
        %v5149 = vadd.bf16 %v4829, %v5085
        %v5150 = vadd.bf16 %v4830, %v5086
        %v5151 = vadd.bf16 %v4831, %v5087
        %v5152 = vmul.bf16 %v5088, 1061961548
        %v5153 = vmul.bf16 %v5089, 1061961548
        %v5154 = vmul.bf16 %v5090, 1061961548
        %v5155 = vmul.bf16 %v5091, 1061961548
        %v5156 = vmul.bf16 %v5092, 1061961548
        %v5157 = vmul.bf16 %v5093, 1061961548
        %v5158 = vmul.bf16 %v5094, 1061961548
        %v5159 = vmul.bf16 %v5095, 1061961548
        %v5160 = vmul.bf16 %v5096, 1061961548
        %v5161 = vmul.bf16 %v5097, 1061961548
        %v5162 = vmul.bf16 %v5098, 1061961548
        %v5163 = vmul.bf16 %v5099, 1061961548
        %v5164 = vmul.bf16 %v5100, 1061961548
        %v5165 = vmul.bf16 %v5101, 1061961548
        %v5166 = vmul.bf16 %v5102, 1061961548
        %v5167 = vmul.bf16 %v5103, 1061961548
        %v5168 = vmul.bf16 %v5104, 1061961548
        %v5169 = vmul.bf16 %v5105, 1061961548
        %v5170 = vmul.bf16 %v5106, 1061961548
        %v5171 = vmul.bf16 %v5107, 1061961548
        %v5172 = vmul.bf16 %v5108, 1061961548
        %v5173 = vmul.bf16 %v5109, 1061961548
        %v5174 = vmul.bf16 %v5110, 1061961548
        %v5175 = vmul.bf16 %v5111, 1061961548
        %v5176 = vmul.bf16 %v5112, 1061961548
        %v5177 = vmul.bf16 %v5113, 1061961548
        %v5178 = vmul.bf16 %v5114, 1061961548
        %v5179 = vmul.bf16 %v5115, 1061961548
        %v5180 = vmul.bf16 %v5116, 1061961548
        %v5181 = vmul.bf16 %v5117, 1061961548
        %v5182 = vmul.bf16 %v5118, 1061961548
        %v5183 = vmul.bf16 %v5119, 1061961548
        %v5184 = vmul.bf16 %v5120, 1061961548
        %v5185 = vmul.bf16 %v5121, 1061961548
        %v5186 = vmul.bf16 %v5122, 1061961548
        %v5187 = vmul.bf16 %v5123, 1061961548
        %v5188 = vmul.bf16 %v5124, 1061961548
        %v5189 = vmul.bf16 %v5125, 1061961548
        %v5190 = vmul.bf16 %v5126, 1061961548
        %v5191 = vmul.bf16 %v5127, 1061961548
        %v5192 = vmul.bf16 %v5128, 1061961548
        %v5193 = vmul.bf16 %v5129, 1061961548
        %v5194 = vmul.bf16 %v5130, 1061961548
        %v5195 = vmul.bf16 %v5131, 1061961548
        %v5196 = vmul.bf16 %v5132, 1061961548
        %v5197 = vmul.bf16 %v5133, 1061961548
        %v5198 = vmul.bf16 %v5134, 1061961548
        %v5199 = vmul.bf16 %v5135, 1061961548
        %v5200 = vmul.bf16 %v5136, 1061961548
        %v5201 = vmul.bf16 %v5137, 1061961548
        %v5202 = vmul.bf16 %v5138, 1061961548
        %v5203 = vmul.bf16 %v5139, 1061961548
        %v5204 = vmul.bf16 %v5140, 1061961548
        %v5205 = vmul.bf16 %v5141, 1061961548
        %v5206 = vmul.bf16 %v5142, 1061961548
        %v5207 = vmul.bf16 %v5143, 1061961548
        %v5208 = vmul.bf16 %v5144, 1061961548
        %v5209 = vmul.bf16 %v5145, 1061961548
        %v5210 = vmul.bf16 %v5146, 1061961548
        %v5211 = vmul.bf16 %v5147, 1061961548
        %v5212 = vmul.bf16 %v5148, 1061961548
        %v5213 = vmul.bf16 %v5149, 1061961548
        %v5214 = vmul.bf16 %v5150, 1061961548
        %v5215 = vmul.bf16 %v5151, 1061961548
        %v5216 = vtanh.bf16.pop %v5152
        %v5217 = vtanh.bf16.pop %v5153
        %v5218 = vtanh.bf16.pop %v5154
        %v5219 = vtanh.bf16.pop %v5155
        %v5220 = vtanh.bf16.pop %v5156
        %v5221 = vtanh.bf16.pop %v5157
        %v5222 = vtanh.bf16.pop %v5158
        %v5223 = vtanh.bf16.pop %v5159
        %v5224 = vtanh.bf16.pop %v5160
        %v5225 = vtanh.bf16.pop %v5161
        %v5226 = vtanh.bf16.pop %v5162
        %v5227 = vtanh.bf16.pop %v5163
        %v5228 = vtanh.bf16.pop %v5164
        %v5229 = vtanh.bf16.pop %v5165
        %v5230 = vtanh.bf16.pop %v5166
        %v5231 = vtanh.bf16.pop %v5167
        %v5232 = vtanh.bf16.pop %v5168
        %v5233 = vtanh.bf16.pop %v5169
        %v5234 = vtanh.bf16.pop %v5170
        %v5235 = vtanh.bf16.pop %v5171
        %v5236 = vtanh.bf16.pop %v5172
        %v5237 = vtanh.bf16.pop %v5173
        %v5238 = vtanh.bf16.pop %v5174
        %v5239 = vtanh.bf16.pop %v5175
        %v5240 = vtanh.bf16.pop %v5176
        %v5241 = vtanh.bf16.pop %v5177
        %v5242 = vtanh.bf16.pop %v5178
        %v5243 = vtanh.bf16.pop %v5179
        %v5244 = vtanh.bf16.pop %v5180
        %v5245 = vtanh.bf16.pop %v5181
        %v5246 = vtanh.bf16.pop %v5182
        %v5247 = vtanh.bf16.pop %v5183
        %v5248 = vtanh.bf16.pop %v5184
        %v5249 = vtanh.bf16.pop %v5185
        %v5250 = vtanh.bf16.pop %v5186
        %v5251 = vtanh.bf16.pop %v5187
        %v5252 = vtanh.bf16.pop %v5188
        %v5253 = vtanh.bf16.pop %v5189
        %v5254 = vtanh.bf16.pop %v5190
        %v5255 = vtanh.bf16.pop %v5191
        %v5256 = vtanh.bf16.pop %v5192
        %v5257 = vtanh.bf16.pop %v5193
        %v5258 = vtanh.bf16.pop %v5194
        %v5259 = vtanh.bf16.pop %v5195
        %v5260 = vtanh.bf16.pop %v5196
        %v5261 = vtanh.bf16.pop %v5197
        %v5262 = vtanh.bf16.pop %v5198
        %v5263 = vtanh.bf16.pop %v5199
        %v5264 = vtanh.bf16.pop %v5200
        %v5265 = vtanh.bf16.pop %v5201
        %v5266 = vtanh.bf16.pop %v5202
        %v5267 = vtanh.bf16.pop %v5203
        %v5268 = vtanh.bf16.pop %v5204
        %v5269 = vtanh.bf16.pop %v5205
        %v5270 = vtanh.bf16.pop %v5206
        %v5271 = vtanh.bf16.pop %v5207
        %v5272 = vtanh.bf16.pop %v5208
        %v5273 = vtanh.bf16.pop %v5209
        %v5274 = vtanh.bf16.pop %v5210
        %v5275 = vtanh.bf16.pop %v5211
        %v5276 = vtanh.bf16.pop %v5212
        %v5277 = vtanh.bf16.pop %v5213
        %v5278 = vtanh.bf16.pop %v5214
        %v5279 = vtanh.bf16.pop %v5215
        %v5280 = vadd.bf16 %v5216, 1065369472
        %v5281 = vadd.bf16 %v5217, 1065369472
        %v5282 = vadd.bf16 %v5218, 1065369472
        %v5283 = vadd.bf16 %v5219, 1065369472
        %v5284 = vadd.bf16 %v5220, 1065369472
        %v5285 = vadd.bf16 %v5221, 1065369472
        %v5286 = vadd.bf16 %v5222, 1065369472
        %v5287 = vadd.bf16 %v5223, 1065369472
        %v5288 = vadd.bf16 %v5224, 1065369472
        %v5289 = vadd.bf16 %v5225, 1065369472
        %v5290 = vadd.bf16 %v5226, 1065369472
        %v5291 = vadd.bf16 %v5227, 1065369472
        %v5292 = vadd.bf16 %v5228, 1065369472
        %v5293 = vadd.bf16 %v5229, 1065369472
        %v5294 = vadd.bf16 %v5230, 1065369472
        %v5295 = vadd.bf16 %v5231, 1065369472
        %v5296 = vadd.bf16 %v5232, 1065369472
        %v5297 = vadd.bf16 %v5233, 1065369472
        %v5298 = vadd.bf16 %v5234, 1065369472
        %v5299 = vadd.bf16 %v5235, 1065369472
        %v5300 = vadd.bf16 %v5236, 1065369472
        %v5301 = vadd.bf16 %v5237, 1065369472
        %v5302 = vadd.bf16 %v5238, 1065369472
        %v5303 = vadd.bf16 %v5239, 1065369472
        %v5304 = vadd.bf16 %v5240, 1065369472
        %v5305 = vadd.bf16 %v5241, 1065369472
        %v5306 = vadd.bf16 %v5242, 1065369472
        %v5307 = vadd.bf16 %v5243, 1065369472
        %v5308 = vadd.bf16 %v5244, 1065369472
        %v5309 = vadd.bf16 %v5245, 1065369472
        %v5310 = vadd.bf16 %v5246, 1065369472
        %v5311 = vadd.bf16 %v5247, 1065369472
        %v5312 = vadd.bf16 %v5248, 1065369472
        %v5313 = vadd.bf16 %v5249, 1065369472
        %v5314 = vadd.bf16 %v5250, 1065369472
        %v5315 = vadd.bf16 %v5251, 1065369472
        %v5316 = vadd.bf16 %v5252, 1065369472
        %v5317 = vadd.bf16 %v5253, 1065369472
        %v5318 = vadd.bf16 %v5254, 1065369472
        %v5319 = vadd.bf16 %v5255, 1065369472
        %v5320 = vadd.bf16 %v5256, 1065369472
        %v5321 = vadd.bf16 %v5257, 1065369472
        %v5322 = vadd.bf16 %v5258, 1065369472
        %v5323 = vadd.bf16 %v5259, 1065369472
        %v5324 = vadd.bf16 %v5260, 1065369472
        %v5325 = vadd.bf16 %v5261, 1065369472
        %v5326 = vadd.bf16 %v5262, 1065369472
        %v5327 = vadd.bf16 %v5263, 1065369472
        %v5328 = vadd.bf16 %v5264, 1065369472
        %v5329 = vadd.bf16 %v5265, 1065369472
        %v5330 = vadd.bf16 %v5266, 1065369472
        %v5331 = vadd.bf16 %v5267, 1065369472
        %v5332 = vadd.bf16 %v5268, 1065369472
        %v5333 = vadd.bf16 %v5269, 1065369472
        %v5334 = vadd.bf16 %v5270, 1065369472
        %v5335 = vadd.bf16 %v5271, 1065369472
        %v5336 = vadd.bf16 %v5272, 1065369472
        %v5337 = vadd.bf16 %v5273, 1065369472
        %v5338 = vadd.bf16 %v5274, 1065369472
        %v5339 = vadd.bf16 %v5275, 1065369472
        %v5340 = vadd.bf16 %v5276, 1065369472
        %v5341 = vadd.bf16 %v5277, 1065369472
        %v5342 = vadd.bf16 %v5278, 1065369472
        %v5343 = vadd.bf16 %v5279, 1065369472
        %v5344 = vmul.bf16 %v4832, %v5280
        %v5345 = vmul.bf16 %v4833, %v5281
        %v5346 = vmul.bf16 %v4834, %v5282
        %v5347 = vmul.bf16 %v4835, %v5283
        %v5348 = vmul.bf16 %v4836, %v5284
        %v5349 = vmul.bf16 %v4837, %v5285
        %v5350 = vmul.bf16 %v4838, %v5286
        %v5351 = vmul.bf16 %v4839, %v5287
        %v5352 = vmul.bf16 %v4840, %v5288
        %v5353 = vmul.bf16 %v4841, %v5289
        %v5354 = vmul.bf16 %v4842, %v5290
        %v5355 = vmul.bf16 %v4843, %v5291
        %v5356 = vmul.bf16 %v4844, %v5292
        %v5357 = vmul.bf16 %v4845, %v5293
        %v5358 = vmul.bf16 %v4846, %v5294
        %v5359 = vmul.bf16 %v4847, %v5295
        %v5360 = vmul.bf16 %v4848, %v5296
        %v5361 = vmul.bf16 %v4849, %v5297
        %v5362 = vmul.bf16 %v4850, %v5298
        %v5363 = vmul.bf16 %v4851, %v5299
        %v5364 = vmul.bf16 %v4852, %v5300
        %v5365 = vmul.bf16 %v4853, %v5301
        %v5366 = vmul.bf16 %v4854, %v5302
        %v5367 = vmul.bf16 %v4855, %v5303
        %v5368 = vmul.bf16 %v4856, %v5304
        %v5369 = vmul.bf16 %v4857, %v5305
        %v5370 = vmul.bf16 %v4858, %v5306
        %v5371 = vmul.bf16 %v4859, %v5307
        %v5372 = vmul.bf16 %v4860, %v5308
        %v5373 = vmul.bf16 %v4861, %v5309
        %v5374 = vmul.bf16 %v4862, %v5310
        %v5375 = vmul.bf16 %v4863, %v5311
        %v5376 = vmul.bf16 %v4864, %v5312
        %v5377 = vmul.bf16 %v4865, %v5313
        %v5378 = vmul.bf16 %v4866, %v5314
        %v5379 = vmul.bf16 %v4867, %v5315
        %v5380 = vmul.bf16 %v4868, %v5316
        %v5381 = vmul.bf16 %v4869, %v5317
        %v5382 = vmul.bf16 %v4870, %v5318
        %v5383 = vmul.bf16 %v4871, %v5319
        %v5384 = vmul.bf16 %v4872, %v5320
        %v5385 = vmul.bf16 %v4873, %v5321
        %v5386 = vmul.bf16 %v4874, %v5322
        %v5387 = vmul.bf16 %v4875, %v5323
        %v5388 = vmul.bf16 %v4876, %v5324
        %v5389 = vmul.bf16 %v4877, %v5325
        %v5390 = vmul.bf16 %v4878, %v5326
        %v5391 = vmul.bf16 %v4879, %v5327
        %v5392 = vmul.bf16 %v4880, %v5328
        %v5393 = vmul.bf16 %v4881, %v5329
        %v5394 = vmul.bf16 %v4882, %v5330
        %v5395 = vmul.bf16 %v4883, %v5331
        %v5396 = vmul.bf16 %v4884, %v5332
        %v5397 = vmul.bf16 %v4885, %v5333
        %v5398 = vmul.bf16 %v4886, %v5334
        %v5399 = vmul.bf16 %v4887, %v5335
        %v5400 = vmul.bf16 %v4888, %v5336
        %v5401 = vmul.bf16 %v4889, %v5337
        %v5402 = vmul.bf16 %v4890, %v5338
        %v5403 = vmul.bf16 %v4891, %v5339
        %v5404 = vmul.bf16 %v4892, %v5340
        %v5405 = vmul.bf16 %v4893, %v5341
        %v5406 = vmul.bf16 %v4894, %v5342
        %v5407 = vmul.bf16 %v4895, %v5343
        %v5408 = vld [vmem:[#allocation9] sm:$0xff]
        %v5409 = vld [vmem:[#allocation9 + $0x8] sm:$0xff]
        %v5410 = vld [vmem:[#allocation9 + $0x10] sm:$0xff]
        %v5411 = vld [vmem:[#allocation9 + $0x18] sm:$0xff]
        %v5412 = vld [vmem:[#allocation9 + $0x20] sm:$0xff]
        %v5413 = vld [vmem:[#allocation9 + $0x28] sm:$0xff]
        %v5414 = vld [vmem:[#allocation9 + $0x30] sm:$0xff]
        %v5415 = vld [vmem:[#allocation9 + $0x38] sm:$0xff]
        %v5416 = vld [vmem:[#allocation9 + $0x40] sm:$0xff]
        %v5417 = vld [vmem:[#allocation9 + $0x48] sm:$0xff]
        %v5418 = vld [vmem:[#allocation9 + $0x50] sm:$0xff]
        %v5419 = vld [vmem:[#allocation9 + $0x58] sm:$0xff]
        %v5420 = vld [vmem:[#allocation9 + $0x60] sm:$0xff]
        %v5421 = vld [vmem:[#allocation9 + $0x68] sm:$0xff]
        %v5422 = vld [vmem:[#allocation9 + $0x70] sm:$0xff]
        %v5423 = vld [vmem:[#allocation9 + $0x78] sm:$0xff]
        %v5424 = vld [vmem:[#allocation9 + $0x80] sm:$0xff]
        %v5425 = vld [vmem:[#allocation9 + $0x88] sm:$0xff]
        %v5426 = vld [vmem:[#allocation9 + $0x90] sm:$0xff]
        %v5427 = vld [vmem:[#allocation9 + $0x98] sm:$0xff]
        %v5428 = vld [vmem:[#allocation9 + $0xa0] sm:$0xff]
        %v5429 = vld [vmem:[#allocation9 + $0xa8] sm:$0xff]
        %v5430 = vld [vmem:[#allocation9 + $0xb0] sm:$0xff]
        %v5431 = vld [vmem:[#allocation9 + $0xb8] sm:$0xff]
        %v5432 = vld [vmem:[#allocation9 + $0xc0] sm:$0xff]
        %v5433 = vld [vmem:[#allocation9 + $0xc8] sm:$0xff]
        %v5434 = vld [vmem:[#allocation9 + $0xd0] sm:$0xff]
        %v5435 = vld [vmem:[#allocation9 + $0xd8] sm:$0xff]
        %v5436 = vld [vmem:[#allocation9 + $0xe0] sm:$0xff]
        %v5437 = vld [vmem:[#allocation9 + $0xe8] sm:$0xff]
        %v5438 = vld [vmem:[#allocation9 + $0xf0] sm:$0xff]
        %v5439 = vld [vmem:[#allocation9 + $0xf8] sm:$0xff]
        %v5440 = vld [vmem:[#allocation9 + $0x100] sm:$0xff]
        %v5441 = vld [vmem:[#allocation9 + $0x108] sm:$0xff]
        %v5442 = vld [vmem:[#allocation9 + $0x110] sm:$0xff]
        %v5443 = vld [vmem:[#allocation9 + $0x118] sm:$0xff]
        %v5444 = vld [vmem:[#allocation9 + $0x120] sm:$0xff]
        %v5445 = vld [vmem:[#allocation9 + $0x128] sm:$0xff]
        %v5446 = vld [vmem:[#allocation9 + $0x130] sm:$0xff]
        %v5447 = vld [vmem:[#allocation9 + $0x138] sm:$0xff]
        %v5448 = vld [vmem:[#allocation9 + $0x140] sm:$0xff]
        %v5449 = vld [vmem:[#allocation9 + $0x148] sm:$0xff]
        %v5450 = vld [vmem:[#allocation9 + $0x150] sm:$0xff]
        %v5451 = vld [vmem:[#allocation9 + $0x158] sm:$0xff]
        %v5452 = vld [vmem:[#allocation9 + $0x160] sm:$0xff]
        %v5453 = vld [vmem:[#allocation9 + $0x168] sm:$0xff]
        %v5454 = vld [vmem:[#allocation9 + $0x170] sm:$0xff]
        %v5455 = vld [vmem:[#allocation9 + $0x178] sm:$0xff]
        %v5456 = vld [vmem:[#allocation9 + $0x180] sm:$0xff]
        %v5457 = vld [vmem:[#allocation9 + $0x188] sm:$0xff]
        %v5458 = vld [vmem:[#allocation9 + $0x190] sm:$0xff]
        %v5459 = vld [vmem:[#allocation9 + $0x198] sm:$0xff]
        %v5460 = vld [vmem:[#allocation9 + $0x1a0] sm:$0xff]
        %v5461 = vld [vmem:[#allocation9 + $0x1a8] sm:$0xff]
        %v5462 = vld [vmem:[#allocation9 + $0x1b0] sm:$0xff]
        %v5463 = vld [vmem:[#allocation9 + $0x1b8] sm:$0xff]
        %v5464 = vld [vmem:[#allocation9 + $0x1c0] sm:$0xff]
        %v5465 = vld [vmem:[#allocation9 + $0x1c8] sm:$0xff]
        %v5466 = vld [vmem:[#allocation9 + $0x1d0] sm:$0xff]
        %v5467 = vld [vmem:[#allocation9 + $0x1d8] sm:$0xff]
        %v5468 = vld [vmem:[#allocation9 + $0x1e0] sm:$0xff]
        %v5469 = vld [vmem:[#allocation9 + $0x1e8] sm:$0xff]
        %v5470 = vld [vmem:[#allocation9 + $0x1f0] sm:$0xff]
        %v5471 = vld [vmem:[#allocation9 + $0x1f8] sm:$0xff]
        %v5472 = vld [vmem:[#allocation9 + $0x200] sm:$0xff]
        %v5473 = vld [vmem:[#allocation9 + $0x208] sm:$0xff]
        %v5474 = vld [vmem:[#allocation9 + $0x210] sm:$0xff]
        %v5475 = vld [vmem:[#allocation9 + $0x218] sm:$0xff]
        %v5476 = vld [vmem:[#allocation9 + $0x220] sm:$0xff]
        %v5477 = vld [vmem:[#allocation9 + $0x228] sm:$0xff]
        %v5478 = vld [vmem:[#allocation9 + $0x230] sm:$0xff]
        %v5479 = vld [vmem:[#allocation9 + $0x238] sm:$0xff]
        %v5480 = vld [vmem:[#allocation9 + $0x240] sm:$0xff]
        %v5481 = vld [vmem:[#allocation9 + $0x248] sm:$0xff]
        %v5482 = vld [vmem:[#allocation9 + $0x250] sm:$0xff]
        %v5483 = vld [vmem:[#allocation9 + $0x258] sm:$0xff]
        %v5484 = vld [vmem:[#allocation9 + $0x260] sm:$0xff]
        %v5485 = vld [vmem:[#allocation9 + $0x268] sm:$0xff]
        %v5486 = vld [vmem:[#allocation9 + $0x270] sm:$0xff]
        %v5487 = vld [vmem:[#allocation9 + $0x278] sm:$0xff]
        %v5488 = vld [vmem:[#allocation9 + $0x280] sm:$0xff]
        %v5489 = vld [vmem:[#allocation9 + $0x288] sm:$0xff]
        %v5490 = vld [vmem:[#allocation9 + $0x290] sm:$0xff]
        %v5491 = vld [vmem:[#allocation9 + $0x298] sm:$0xff]
        %v5492 = vld [vmem:[#allocation9 + $0x2a0] sm:$0xff]
        %v5493 = vld [vmem:[#allocation9 + $0x2a8] sm:$0xff]
        %v5494 = vld [vmem:[#allocation9 + $0x2b0] sm:$0xff]
        %v5495 = vld [vmem:[#allocation9 + $0x2b8] sm:$0xff]
        %v5496 = vld [vmem:[#allocation9 + $0x2c0] sm:$0xff]
        %v5497 = vld [vmem:[#allocation9 + $0x2c8] sm:$0xff]
        %v5498 = vld [vmem:[#allocation9 + $0x2d0] sm:$0xff]
        %v5499 = vld [vmem:[#allocation9 + $0x2d8] sm:$0xff]
        %v5500 = vld [vmem:[#allocation9 + $0x2e0] sm:$0xff]
        %v5501 = vld [vmem:[#allocation9 + $0x2e8] sm:$0xff]
        %v5502 = vld [vmem:[#allocation9 + $0x2f0] sm:$0xff]
        %v5503 = vld [vmem:[#allocation9 + $0x2f8] sm:$0xff]
        %v5504 = vld [vmem:[#allocation9 + $0x300] sm:$0xff]
        %v5505 = vld [vmem:[#allocation9 + $0x308] sm:$0xff]
        %v5506 = vld [vmem:[#allocation9 + $0x310] sm:$0xff]
        %v5507 = vld [vmem:[#allocation9 + $0x318] sm:$0xff]
        %v5508 = vld [vmem:[#allocation9 + $0x320] sm:$0xff]
        %v5509 = vld [vmem:[#allocation9 + $0x328] sm:$0xff]
        %v5510 = vld [vmem:[#allocation9 + $0x330] sm:$0xff]
        %v5511 = vld [vmem:[#allocation9 + $0x338] sm:$0xff]
        %v5512 = vld [vmem:[#allocation9 + $0x340] sm:$0xff]
        %v5513 = vld [vmem:[#allocation9 + $0x348] sm:$0xff]
        %v5514 = vld [vmem:[#allocation9 + $0x350] sm:$0xff]
        %v5515 = vld [vmem:[#allocation9 + $0x358] sm:$0xff]
        %v5516 = vld [vmem:[#allocation9 + $0x360] sm:$0xff]
        %v5517 = vld [vmem:[#allocation9 + $0x368] sm:$0xff]
        %v5518 = vld [vmem:[#allocation9 + $0x370] sm:$0xff]
        %v5519 = vld [vmem:[#allocation9 + $0x378] sm:$0xff]
        %v5520 = vld [vmem:[#allocation9 + $0x380] sm:$0xff]
        %v5521 = vld [vmem:[#allocation9 + $0x388] sm:$0xff]
        %v5522 = vld [vmem:[#allocation9 + $0x390] sm:$0xff]
        %v5523 = vld [vmem:[#allocation9 + $0x398] sm:$0xff]
        %v5524 = vld [vmem:[#allocation9 + $0x3a0] sm:$0xff]
        %v5525 = vld [vmem:[#allocation9 + $0x3a8] sm:$0xff]
        %v5526 = vld [vmem:[#allocation9 + $0x3b0] sm:$0xff]
        %v5527 = vld [vmem:[#allocation9 + $0x3b8] sm:$0xff]
        %v5528 = vld [vmem:[#allocation9 + $0x3c0] sm:$0xff]
        %v5529 = vld [vmem:[#allocation9 + $0x3c8] sm:$0xff]
        %v5530 = vld [vmem:[#allocation9 + $0x3d0] sm:$0xff]
        %v5531 = vld [vmem:[#allocation9 + $0x3d8] sm:$0xff]
        %v5532 = vld [vmem:[#allocation9 + $0x3e0] sm:$0xff]
        %v5533 = vld [vmem:[#allocation9 + $0x3e8] sm:$0xff]
        %v5534 = vld [vmem:[#allocation9 + $0x3f0] sm:$0xff]
        %v5535 = vld [vmem:[#allocation9 + $0x3f8] sm:$0xff]
        %v5536 = vld [vmem:[%s12] sm:$0x3]
        %v5538 = vlaneseq
        %v5539 = vshrl.u32 %v5538, 7
        %v5540 = vsub.s32 0, %v5539
        %v5541 = vrot.slane %v5536, %v5540
        %v5542 = vlaneseq
        %v5543 = vshrl.u32 %v5542, 7
        %v5544 = vsub.s32 1, %v5543
        %v5545 = vrot.slane %v5536, %v5544
        %v5676 = vunpack.c.l.b16 %v5408
        %v5677 = vunpack.c.h.b16 %v5408
        %v5678 = vunpack.c.l.b16 %v5409
        %v5679 = vunpack.c.h.b16 %v5409
        %v5680 = vunpack.c.l.b16 %v5410
        %v5681 = vunpack.c.h.b16 %v5410
        %v5682 = vunpack.c.l.b16 %v5411
        %v5683 = vunpack.c.h.b16 %v5411
        %v5684 = vunpack.c.l.b16 %v5412
        %v5685 = vunpack.c.h.b16 %v5412
        %v5686 = vunpack.c.l.b16 %v5413
        %v5687 = vunpack.c.h.b16 %v5413
        %v5688 = vunpack.c.l.b16 %v5414
        %v5689 = vunpack.c.h.b16 %v5414
        %v5690 = vunpack.c.l.b16 %v5415
        %v5691 = vunpack.c.h.b16 %v5415
        %v5692 = vunpack.c.l.b16 %v5416
        %v5693 = vunpack.c.h.b16 %v5416
        %v5694 = vunpack.c.l.b16 %v5417
        %v5695 = vunpack.c.h.b16 %v5417
        %v5696 = vunpack.c.l.b16 %v5418
        %v5697 = vunpack.c.h.b16 %v5418
        %v5698 = vunpack.c.l.b16 %v5419
        %v5699 = vunpack.c.h.b16 %v5419
        %v5700 = vunpack.c.l.b16 %v5420
        %v5701 = vunpack.c.h.b16 %v5420
        %v5702 = vunpack.c.l.b16 %v5421
        %v5703 = vunpack.c.h.b16 %v5421
        %v5704 = vunpack.c.l.b16 %v5422
        %v5705 = vunpack.c.h.b16 %v5422
        %v5706 = vunpack.c.l.b16 %v5423
        %v5707 = vunpack.c.h.b16 %v5423
        %v5708 = vunpack.c.l.b16 %v5424
        %v5709 = vunpack.c.h.b16 %v5424
        %v5710 = vunpack.c.l.b16 %v5425
        %v5711 = vunpack.c.h.b16 %v5425
        %v5712 = vunpack.c.l.b16 %v5426
        %v5713 = vunpack.c.h.b16 %v5426
        %v5714 = vunpack.c.l.b16 %v5427
        %v5715 = vunpack.c.h.b16 %v5427
        %v5716 = vunpack.c.l.b16 %v5428
        %v5717 = vunpack.c.h.b16 %v5428
        %v5718 = vunpack.c.l.b16 %v5429
        %v5719 = vunpack.c.h.b16 %v5429
        %v5720 = vunpack.c.l.b16 %v5430
        %v5721 = vunpack.c.h.b16 %v5430
        %v5722 = vunpack.c.l.b16 %v5431
        %v5723 = vunpack.c.h.b16 %v5431
        %v5724 = vunpack.c.l.b16 %v5432
        %v5725 = vunpack.c.h.b16 %v5432
        %v5726 = vunpack.c.l.b16 %v5433
        %v5727 = vunpack.c.h.b16 %v5433
        %v5728 = vunpack.c.l.b16 %v5434
        %v5729 = vunpack.c.h.b16 %v5434
        %v5730 = vunpack.c.l.b16 %v5435
        %v5731 = vunpack.c.h.b16 %v5435
        %v5732 = vunpack.c.l.b16 %v5436
        %v5733 = vunpack.c.h.b16 %v5436
        %v5734 = vunpack.c.l.b16 %v5437
        %v5735 = vunpack.c.h.b16 %v5437
        %v5736 = vunpack.c.l.b16 %v5438
        %v5737 = vunpack.c.h.b16 %v5438
        %v5738 = vunpack.c.l.b16 %v5439
        %v5739 = vunpack.c.h.b16 %v5439
        %v5740 = vunpack.c.l.b16 %v5440
        %v5741 = vunpack.c.h.b16 %v5440
        %v5742 = vunpack.c.l.b16 %v5441
        %v5743 = vunpack.c.h.b16 %v5441
        %v5744 = vunpack.c.l.b16 %v5442
        %v5745 = vunpack.c.h.b16 %v5442
        %v5746 = vunpack.c.l.b16 %v5443
        %v5747 = vunpack.c.h.b16 %v5443
        %v5748 = vunpack.c.l.b16 %v5444
        %v5749 = vunpack.c.h.b16 %v5444
        %v5750 = vunpack.c.l.b16 %v5445
        %v5751 = vunpack.c.h.b16 %v5445
        %v5752 = vunpack.c.l.b16 %v5446
        %v5753 = vunpack.c.h.b16 %v5446
        %v5754 = vunpack.c.l.b16 %v5447
        %v5755 = vunpack.c.h.b16 %v5447
        %v5756 = vunpack.c.l.b16 %v5448
        %v5757 = vunpack.c.h.b16 %v5448
        %v5758 = vunpack.c.l.b16 %v5449
        %v5759 = vunpack.c.h.b16 %v5449
        %v5760 = vunpack.c.l.b16 %v5450
        %v5761 = vunpack.c.h.b16 %v5450
        %v5762 = vunpack.c.l.b16 %v5451
        %v5763 = vunpack.c.h.b16 %v5451
        %v5764 = vunpack.c.l.b16 %v5452
        %v5765 = vunpack.c.h.b16 %v5452
        %v5766 = vunpack.c.l.b16 %v5453
        %v5767 = vunpack.c.h.b16 %v5453
        %v5768 = vunpack.c.l.b16 %v5454
        %v5769 = vunpack.c.h.b16 %v5454
        %v5770 = vunpack.c.l.b16 %v5455
        %v5771 = vunpack.c.h.b16 %v5455
        %v5772 = vunpack.c.l.b16 %v5456
        %v5773 = vunpack.c.h.b16 %v5456
        %v5774 = vunpack.c.l.b16 %v5457
        %v5775 = vunpack.c.h.b16 %v5457
        %v5776 = vunpack.c.l.b16 %v5458
        %v5777 = vunpack.c.h.b16 %v5458
        %v5778 = vunpack.c.l.b16 %v5459
        %v5779 = vunpack.c.h.b16 %v5459
        %v5780 = vunpack.c.l.b16 %v5460
        %v5781 = vunpack.c.h.b16 %v5460
        %v5782 = vunpack.c.l.b16 %v5461
        %v5783 = vunpack.c.h.b16 %v5461
        %v5784 = vunpack.c.l.b16 %v5462
        %v5785 = vunpack.c.h.b16 %v5462
        %v5786 = vunpack.c.l.b16 %v5463
        %v5787 = vunpack.c.h.b16 %v5463
        %v5788 = vunpack.c.l.b16 %v5464
        %v5789 = vunpack.c.h.b16 %v5464
        %v5790 = vunpack.c.l.b16 %v5465
        %v5791 = vunpack.c.h.b16 %v5465
        %v5792 = vunpack.c.l.b16 %v5466
        %v5793 = vunpack.c.h.b16 %v5466
        %v5794 = vunpack.c.l.b16 %v5467
        %v5795 = vunpack.c.h.b16 %v5467
        %v5796 = vunpack.c.l.b16 %v5468
        %v5797 = vunpack.c.h.b16 %v5468
        %v5798 = vunpack.c.l.b16 %v5469
        %v5799 = vunpack.c.h.b16 %v5469
        %v5800 = vunpack.c.l.b16 %v5470
        %v5801 = vunpack.c.h.b16 %v5470
        %v5802 = vunpack.c.l.b16 %v5471
        %v5803 = vunpack.c.h.b16 %v5471
        %v5804 = vunpack.c.l.b16 %v5472
        %v5805 = vunpack.c.h.b16 %v5472
        %v5806 = vunpack.c.l.b16 %v5473
        %v5807 = vunpack.c.h.b16 %v5473
        %v5808 = vunpack.c.l.b16 %v5474
        %v5809 = vunpack.c.h.b16 %v5474
        %v5810 = vunpack.c.l.b16 %v5475
        %v5811 = vunpack.c.h.b16 %v5475
        %v5812 = vunpack.c.l.b16 %v5476
        %v5813 = vunpack.c.h.b16 %v5476
        %v5814 = vunpack.c.l.b16 %v5477
        %v5815 = vunpack.c.h.b16 %v5477
        %v5816 = vunpack.c.l.b16 %v5478
        %v5817 = vunpack.c.h.b16 %v5478
        %v5818 = vunpack.c.l.b16 %v5479
        %v5819 = vunpack.c.h.b16 %v5479
        %v5820 = vunpack.c.l.b16 %v5480
        %v5821 = vunpack.c.h.b16 %v5480
        %v5822 = vunpack.c.l.b16 %v5481
        %v5823 = vunpack.c.h.b16 %v5481
        %v5824 = vunpack.c.l.b16 %v5482
        %v5825 = vunpack.c.h.b16 %v5482
        %v5826 = vunpack.c.l.b16 %v5483
        %v5827 = vunpack.c.h.b16 %v5483
        %v5828 = vunpack.c.l.b16 %v5484
        %v5829 = vunpack.c.h.b16 %v5484
        %v5830 = vunpack.c.l.b16 %v5485
        %v5831 = vunpack.c.h.b16 %v5485
        %v5832 = vunpack.c.l.b16 %v5486
        %v5833 = vunpack.c.h.b16 %v5486
        %v5834 = vunpack.c.l.b16 %v5487
        %v5835 = vunpack.c.h.b16 %v5487
        %v5836 = vunpack.c.l.b16 %v5488
        %v5837 = vunpack.c.h.b16 %v5488
        %v5838 = vunpack.c.l.b16 %v5489
        %v5839 = vunpack.c.h.b16 %v5489
        %v5840 = vunpack.c.l.b16 %v5490
        %v5841 = vunpack.c.h.b16 %v5490
        %v5842 = vunpack.c.l.b16 %v5491
        %v5843 = vunpack.c.h.b16 %v5491
        %v5844 = vunpack.c.l.b16 %v5492
        %v5845 = vunpack.c.h.b16 %v5492
        %v5846 = vunpack.c.l.b16 %v5493
        %v5847 = vunpack.c.h.b16 %v5493
        %v5848 = vunpack.c.l.b16 %v5494
        %v5849 = vunpack.c.h.b16 %v5494
        %v5850 = vunpack.c.l.b16 %v5495
        %v5851 = vunpack.c.h.b16 %v5495
        %v5852 = vunpack.c.l.b16 %v5496
        %v5853 = vunpack.c.h.b16 %v5496
        %v5854 = vunpack.c.l.b16 %v5497
        %v5855 = vunpack.c.h.b16 %v5497
        %v5856 = vunpack.c.l.b16 %v5498
        %v5857 = vunpack.c.h.b16 %v5498
        %v5858 = vunpack.c.l.b16 %v5499
        %v5859 = vunpack.c.h.b16 %v5499
        %v5860 = vunpack.c.l.b16 %v5500
        %v5861 = vunpack.c.h.b16 %v5500
        %v5862 = vunpack.c.l.b16 %v5501
        %v5863 = vunpack.c.h.b16 %v5501
        %v5864 = vunpack.c.l.b16 %v5502
        %v5865 = vunpack.c.h.b16 %v5502
        %v5866 = vunpack.c.l.b16 %v5503
        %v5867 = vunpack.c.h.b16 %v5503
        %v5868 = vunpack.c.l.b16 %v5504
        %v5869 = vunpack.c.h.b16 %v5504
        %v5870 = vunpack.c.l.b16 %v5505
        %v5871 = vunpack.c.h.b16 %v5505
        %v5872 = vunpack.c.l.b16 %v5506
        %v5873 = vunpack.c.h.b16 %v5506
        %v5874 = vunpack.c.l.b16 %v5507
        %v5875 = vunpack.c.h.b16 %v5507
        %v5876 = vunpack.c.l.b16 %v5508
        %v5877 = vunpack.c.h.b16 %v5508
        %v5878 = vunpack.c.l.b16 %v5509
        %v5879 = vunpack.c.h.b16 %v5509
        %v5880 = vunpack.c.l.b16 %v5510
        %v5881 = vunpack.c.h.b16 %v5510
        %v5882 = vunpack.c.l.b16 %v5511
        %v5883 = vunpack.c.h.b16 %v5511
        %v5884 = vunpack.c.l.b16 %v5512
        %v5885 = vunpack.c.h.b16 %v5512
        %v5886 = vunpack.c.l.b16 %v5513
        %v5887 = vunpack.c.h.b16 %v5513
        %v5888 = vunpack.c.l.b16 %v5514
        %v5889 = vunpack.c.h.b16 %v5514
        %v5890 = vunpack.c.l.b16 %v5515
        %v5891 = vunpack.c.h.b16 %v5515
        %v5892 = vunpack.c.l.b16 %v5516
        %v5893 = vunpack.c.h.b16 %v5516
        %v5894 = vunpack.c.l.b16 %v5517
        %v5895 = vunpack.c.h.b16 %v5517
        %v5896 = vunpack.c.l.b16 %v5518
        %v5897 = vunpack.c.h.b16 %v5518
        %v5898 = vunpack.c.l.b16 %v5519
        %v5899 = vunpack.c.h.b16 %v5519
        %v5900 = vunpack.c.l.b16 %v5520
        %v5901 = vunpack.c.h.b16 %v5520
        %v5902 = vunpack.c.l.b16 %v5521
        %v5903 = vunpack.c.h.b16 %v5521
        %v5904 = vunpack.c.l.b16 %v5522
        %v5905 = vunpack.c.h.b16 %v5522
        %v5906 = vunpack.c.l.b16 %v5523
        %v5907 = vunpack.c.h.b16 %v5523
        %v5908 = vunpack.c.l.b16 %v5524
        %v5909 = vunpack.c.h.b16 %v5524
        %v5910 = vunpack.c.l.b16 %v5525
        %v5911 = vunpack.c.h.b16 %v5525
        %v5912 = vunpack.c.l.b16 %v5526
        %v5913 = vunpack.c.h.b16 %v5526
        %v5914 = vunpack.c.l.b16 %v5527
        %v5915 = vunpack.c.h.b16 %v5527
        %v5916 = vunpack.c.l.b16 %v5528
        %v5917 = vunpack.c.h.b16 %v5528
        %v5918 = vunpack.c.l.b16 %v5529
        %v5919 = vunpack.c.h.b16 %v5529
        %v5920 = vunpack.c.l.b16 %v5530
        %v5921 = vunpack.c.h.b16 %v5530
        %v5922 = vunpack.c.l.b16 %v5531
        %v5923 = vunpack.c.h.b16 %v5531
        %v5924 = vunpack.c.l.b16 %v5532
        %v5925 = vunpack.c.h.b16 %v5532
        %v5926 = vunpack.c.l.b16 %v5533
        %v5927 = vunpack.c.h.b16 %v5533
        %v5928 = vunpack.c.l.b16 %v5534
        %v5929 = vunpack.c.h.b16 %v5534
        %v5930 = vunpack.c.l.b16 %v5535
        %v5931 = vunpack.c.h.b16 %v5535
        %v5932 = vpack.c.b16 %v5678, %v5676
        %v5933 = vpack.c.b16 %v5679, %v5677
        %v5934 = vpack.c.b16 %v5682, %v5680
        %v5935 = vpack.c.b16 %v5683, %v5681
        %v5936 = vpack.c.b16 %v5686, %v5684
        %v5937 = vpack.c.b16 %v5687, %v5685
        %v5938 = vpack.c.b16 %v5690, %v5688
        %v5939 = vpack.c.b16 %v5691, %v5689
        %v5940 = vpack.c.b16 %v5694, %v5692
        %v5941 = vpack.c.b16 %v5695, %v5693
        %v5942 = vpack.c.b16 %v5698, %v5696
        %v5943 = vpack.c.b16 %v5699, %v5697
        %v5944 = vpack.c.b16 %v5702, %v5700
        %v5945 = vpack.c.b16 %v5703, %v5701
        %v5946 = vpack.c.b16 %v5706, %v5704
        %v5947 = vpack.c.b16 %v5707, %v5705
        %v5948 = vpack.c.b16 %v5710, %v5708
        %v5949 = vpack.c.b16 %v5711, %v5709
        %v5950 = vpack.c.b16 %v5714, %v5712
        %v5951 = vpack.c.b16 %v5715, %v5713
        %v5952 = vpack.c.b16 %v5718, %v5716
        %v5953 = vpack.c.b16 %v5719, %v5717
        %v5954 = vpack.c.b16 %v5722, %v5720
        %v5955 = vpack.c.b16 %v5723, %v5721
        %v5956 = vpack.c.b16 %v5726, %v5724
        %v5957 = vpack.c.b16 %v5727, %v5725
        %v5958 = vpack.c.b16 %v5730, %v5728
        %v5959 = vpack.c.b16 %v5731, %v5729
        %v5960 = vpack.c.b16 %v5734, %v5732
        %v5961 = vpack.c.b16 %v5735, %v5733
        %v5962 = vpack.c.b16 %v5738, %v5736
        %v5963 = vpack.c.b16 %v5739, %v5737
        %v5964 = vpack.c.b16 %v5742, %v5740
        %v5965 = vpack.c.b16 %v5743, %v5741
        %v5966 = vpack.c.b16 %v5746, %v5744
        %v5967 = vpack.c.b16 %v5747, %v5745
        %v5968 = vpack.c.b16 %v5750, %v5748
        %v5969 = vpack.c.b16 %v5751, %v5749
        %v5970 = vpack.c.b16 %v5754, %v5752
        %v5971 = vpack.c.b16 %v5755, %v5753
        %v5972 = vpack.c.b16 %v5758, %v5756
        %v5973 = vpack.c.b16 %v5759, %v5757
        %v5974 = vpack.c.b16 %v5762, %v5760
        %v5975 = vpack.c.b16 %v5763, %v5761
        %v5976 = vpack.c.b16 %v5766, %v5764
        %v5977 = vpack.c.b16 %v5767, %v5765
        %v5978 = vpack.c.b16 %v5770, %v5768
        %v5979 = vpack.c.b16 %v5771, %v5769
        %v5980 = vpack.c.b16 %v5774, %v5772
        %v5981 = vpack.c.b16 %v5775, %v5773
        %v5982 = vpack.c.b16 %v5778, %v5776
        %v5983 = vpack.c.b16 %v5779, %v5777
        %v5984 = vpack.c.b16 %v5782, %v5780
        %v5985 = vpack.c.b16 %v5783, %v5781
        %v5986 = vpack.c.b16 %v5786, %v5784
        %v5987 = vpack.c.b16 %v5787, %v5785
        %v5988 = vpack.c.b16 %v5790, %v5788
        %v5989 = vpack.c.b16 %v5791, %v5789
        %v5990 = vpack.c.b16 %v5794, %v5792
        %v5991 = vpack.c.b16 %v5795, %v5793
        %v5992 = vpack.c.b16 %v5798, %v5796
        %v5993 = vpack.c.b16 %v5799, %v5797
        %v5994 = vpack.c.b16 %v5802, %v5800
        %v5995 = vpack.c.b16 %v5803, %v5801
        %v5996 = vpack.c.b16 %v5806, %v5804
        %v5997 = vpack.c.b16 %v5807, %v5805
        %v5998 = vpack.c.b16 %v5810, %v5808
        %v5999 = vpack.c.b16 %v5811, %v5809
        %v6000 = vpack.c.b16 %v5814, %v5812
        %v6001 = vpack.c.b16 %v5815, %v5813
        %v6002 = vpack.c.b16 %v5818, %v5816
        %v6003 = vpack.c.b16 %v5819, %v5817
        %v6004 = vpack.c.b16 %v5822, %v5820
        %v6005 = vpack.c.b16 %v5823, %v5821
        %v6006 = vpack.c.b16 %v5826, %v5824
        %v6007 = vpack.c.b16 %v5827, %v5825
        %v6008 = vpack.c.b16 %v5830, %v5828
        %v6009 = vpack.c.b16 %v5831, %v5829
        %v6010 = vpack.c.b16 %v5834, %v5832
        %v6011 = vpack.c.b16 %v5835, %v5833
        %v6012 = vpack.c.b16 %v5838, %v5836
        %v6013 = vpack.c.b16 %v5839, %v5837
        %v6014 = vpack.c.b16 %v5842, %v5840
        %v6015 = vpack.c.b16 %v5843, %v5841
        %v6016 = vpack.c.b16 %v5846, %v5844
        %v6017 = vpack.c.b16 %v5847, %v5845
        %v6018 = vpack.c.b16 %v5850, %v5848
        %v6019 = vpack.c.b16 %v5851, %v5849
        %v6020 = vpack.c.b16 %v5854, %v5852
        %v6021 = vpack.c.b16 %v5855, %v5853
        %v6022 = vpack.c.b16 %v5858, %v5856
        %v6023 = vpack.c.b16 %v5859, %v5857
        %v6024 = vpack.c.b16 %v5862, %v5860
        %v6025 = vpack.c.b16 %v5863, %v5861
        %v6026 = vpack.c.b16 %v5866, %v5864
        %v6027 = vpack.c.b16 %v5867, %v5865
        %v6028 = vpack.c.b16 %v5870, %v5868
        %v6029 = vpack.c.b16 %v5871, %v5869
        %v6030 = vpack.c.b16 %v5874, %v5872
        %v6031 = vpack.c.b16 %v5875, %v5873
        %v6032 = vpack.c.b16 %v5878, %v5876
        %v6033 = vpack.c.b16 %v5879, %v5877
        %v6034 = vpack.c.b16 %v5882, %v5880
        %v6035 = vpack.c.b16 %v5883, %v5881
        %v6036 = vpack.c.b16 %v5886, %v5884
        %v6037 = vpack.c.b16 %v5887, %v5885
        %v6038 = vpack.c.b16 %v5890, %v5888
        %v6039 = vpack.c.b16 %v5891, %v5889
        %v6040 = vpack.c.b16 %v5894, %v5892
        %v6041 = vpack.c.b16 %v5895, %v5893
        %v6042 = vpack.c.b16 %v5898, %v5896
        %v6043 = vpack.c.b16 %v5899, %v5897
        %v6044 = vpack.c.b16 %v5902, %v5900
        %v6045 = vpack.c.b16 %v5903, %v5901
        %v6046 = vpack.c.b16 %v5906, %v5904
        %v6047 = vpack.c.b16 %v5907, %v5905
        %v6048 = vpack.c.b16 %v5910, %v5908
        %v6049 = vpack.c.b16 %v5911, %v5909
        %v6050 = vpack.c.b16 %v5914, %v5912
        %v6051 = vpack.c.b16 %v5915, %v5913
        %v6052 = vpack.c.b16 %v5918, %v5916
        %v6053 = vpack.c.b16 %v5919, %v5917
        %v6054 = vpack.c.b16 %v5922, %v5920
        %v6055 = vpack.c.b16 %v5923, %v5921
        %v6056 = vpack.c.b16 %v5926, %v5924
        %v6057 = vpack.c.b16 %v5927, %v5925
        %v6058 = vpack.c.b16 %v5930, %v5928
        %v6059 = vpack.c.b16 %v5931, %v5929
        %6188 = vmatprep.subr.bf16.mxu0 %v5933
        %6189 = vmatpush1.bf16.msra.mxu0 %v5932
        %6190 = vmatprep.subr.bf16.mxu0 %v5935
        %6191 = vmatpush1.bf16.msra.mxu0 %v5934
        %6192 = vmatprep.subr.bf16.mxu0 %v5937
        %6193 = vmatpush1.bf16.msra.mxu0 %v5936
        %6194 = vmatprep.subr.bf16.mxu0 %v5939
        %6195 = vmatpush1.bf16.msra.mxu0 %v5938
        %6196 = vmatprep.subr.bf16.mxu0 %v5941
        %6197 = vmatpush1.bf16.msra.mxu0 %v5940
        %6198 = vmatprep.subr.bf16.mxu0 %v5943
        %6199 = vmatpush1.bf16.msra.mxu0 %v5942
        %6200 = vmatprep.subr.bf16.mxu0 %v5945
        %6201 = vmatpush1.bf16.msra.mxu0 %v5944
        %6202 = vmatprep.subr.bf16.mxu0 %v5947
        %6203 = vmatpush1.bf16.msra.mxu0 %v5946
        %6204 = vmatprep.subr.bf16.mxu0 %v5949
        %6205 = vmatpush1.bf16.msra.mxu0 %v5948
        %6206 = vmatprep.subr.bf16.mxu0 %v5951
        %6207 = vmatpush1.bf16.msra.mxu0 %v5950
        %6208 = vmatprep.subr.bf16.mxu0 %v5953
        %6209 = vmatpush1.bf16.msra.mxu0 %v5952
        %6210 = vmatprep.subr.bf16.mxu0 %v5955
        %6211 = vmatpush1.bf16.msra.mxu0 %v5954
        %6212 = vmatprep.subr.bf16.mxu0 %v5957
        %6213 = vmatpush1.bf16.msra.mxu0 %v5956
        %6214 = vmatprep.subr.bf16.mxu0 %v5959
        %6215 = vmatpush1.bf16.msra.mxu0 %v5958
        %6216 = vmatprep.subr.bf16.mxu0 %v5961
        %6217 = vmatpush1.bf16.msra.mxu0 %v5960
        %6218 = vmatprep.subr.bf16.mxu0 %v5963
        %6219 = vmatpush1.bf16.msra.mxu0 %v5962
        %6220 = vmatprep.mubr.bf16.mxu0 %v5345
        %6221 = vmatmul.mubr.bf16.gmra.mrb[0].mxu0 %v5344
        %v6222 = vpop.f32.mrb[0].mxu0
        %v6223 = vadd.f32 %v5541, %v6222
        %v6224 = vpop.f32.mrb[0].mxu0
        %v6225 = vadd.f32 %v5545, %v6224
        %v6226 = vpop.f32.mrb[0].mxu0
        %v6227 = vadd.f32 %v5541, %v6226
        %v6228 = vpop.f32.mrb[0].mxu0
        %v6229 = vadd.f32 %v5545, %v6228
        %6230 = vmatprep.mubr.bf16.mxu0 %v5353
        %6231 = vmatmul.mubr.bf16.gmra.mrb[0].mxu0 %v5352
        %v6232 = vpop.f32.mrb[0].mxu0
        %v6233 = vadd.f32 %v5541, %v6232
        %v6234 = vpop.f32.mrb[0].mxu0
        %v6235 = vadd.f32 %v5545, %v6234
        %v6236 = vpop.f32.mrb[0].mxu0
        %v6237 = vadd.f32 %v5541, %v6236
        %v6238 = vpop.f32.mrb[0].mxu0
        %v6239 = vadd.f32 %v5545, %v6238
        %6240 = vmatprep.mubr.bf16.mxu0 %v5361
        %6241 = vmatmul.mubr.bf16.gmra.mrb[0].mxu0 %v5360
        %v6242 = vpop.f32.mrb[0].mxu0
        %v6243 = vadd.f32 %v5541, %v6242
        %v6244 = vpop.f32.mrb[0].mxu0
        %v6245 = vadd.f32 %v5545, %v6244
        %v6246 = vpop.f32.mrb[0].mxu0
        %v6247 = vadd.f32 %v5541, %v6246
        %v6248 = vpop.f32.mrb[0].mxu0
        %v6249 = vadd.f32 %v5545, %v6248
        %6250 = vmatprep.mubr.bf16.mxu0 %v5369
        %6251 = vmatmul.mubr.bf16.gmra.mrb[0].mxu0 %v5368
        %v6252 = vpop.f32.mrb[0].mxu0
        %v6253 = vadd.f32 %v5541, %v6252
        %v6254 = vpop.f32.mrb[0].mxu0
        %v6255 = vadd.f32 %v5545, %v6254
        %v6256 = vpop.f32.mrb[0].mxu0
        %v6257 = vadd.f32 %v5541, %v6256
        %v6258 = vpop.f32.mrb[0].mxu0
        %v6259 = vadd.f32 %v5545, %v6258
        %6260 = vmatprep.mubr.bf16.mxu0 %v5377
        %6261 = vmatmul.mubr.bf16.gmra.mrb[0].mxu0 %v5376
        %v6262 = vpop.f32.mrb[0].mxu0
        %v6263 = vadd.f32 %v5541, %v6262
        %v6264 = vpop.f32.mrb[0].mxu0
        %v6265 = vadd.f32 %v5545, %v6264
        %v6266 = vpop.f32.mrb[0].mxu0
        %v6267 = vadd.f32 %v5541, %v6266
        %v6268 = vpop.f32.mrb[0].mxu0
        %v6269 = vadd.f32 %v5545, %v6268
        %6270 = vmatprep.mubr.bf16.mxu0 %v5385
        %6271 = vmatmul.mubr.bf16.gmra.mrb[0].mxu0 %v5384
        %v6272 = vpop.f32.mrb[0].mxu0
        %v6273 = vadd.f32 %v5541, %v6272
        %v6274 = vpop.f32.mrb[0].mxu0
        %v6275 = vadd.f32 %v5545, %v6274
        %v6276 = vpop.f32.mrb[0].mxu0
        %v6277 = vadd.f32 %v5541, %v6276
        %v6278 = vpop.f32.mrb[0].mxu0
        %v6279 = vadd.f32 %v5545, %v6278
        %6280 = vmatprep.mubr.bf16.mxu0 %v5393
        %6281 = vmatmul.mubr.bf16.gmra.mrb[0].mxu0 %v5392
        %v6282 = vpop.f32.mrb[0].mxu0
        %v6283 = vadd.f32 %v5541, %v6282
        %v6284 = vpop.f32.mrb[0].mxu0
        %v6285 = vadd.f32 %v5545, %v6284
        %v6286 = vpop.f32.mrb[0].mxu0
        %v6287 = vadd.f32 %v5541, %v6286
        %v6288 = vpop.f32.mrb[0].mxu0
        %v6289 = vadd.f32 %v5545, %v6288
        %6290 = vmatprep.mubr.bf16.mxu0 %v5401
        %6291 = vmatmul.mubr.bf16.gmra.mrb[0].mxu0 %v5400
        %v6292 = vpop.f32.mrb[0].mxu0
        %v6293 = vadd.f32 %v5541, %v6292
        %v6294 = vpop.f32.mrb[0].mxu0
        %v6295 = vadd.f32 %v5545, %v6294
        %v6296 = vpop.f32.mrb[0].mxu0
        %v6297 = vadd.f32 %v5541, %v6296
        %v6298 = vpop.f32.mrb[0].mxu0
        %v6299 = vadd.f32 %v5545, %v6298
        %6300 = vdwg.mxu0
        %6301 = vmatprep.subr.bf16.mxu0 %v5965
        %6302 = vmatpush1.bf16.msra.mxu0 %v5964
        %6303 = vmatprep.subr.bf16.mxu0 %v5967
        %6304 = vmatpush1.bf16.msra.mxu0 %v5966
        %6305 = vmatprep.subr.bf16.mxu0 %v5969
        %6306 = vmatpush1.bf16.msra.mxu0 %v5968
        %6307 = vmatprep.subr.bf16.mxu0 %v5971
        %6308 = vmatpush1.bf16.msra.mxu0 %v5970
        %6309 = vmatprep.subr.bf16.mxu0 %v5973
        %6310 = vmatpush1.bf16.msra.mxu0 %v5972
        %6311 = vmatprep.subr.bf16.mxu0 %v5975
        %6312 = vmatpush1.bf16.msra.mxu0 %v5974
        %6313 = vmatprep.subr.bf16.mxu0 %v5977
        %6314 = vmatpush1.bf16.msra.mxu0 %v5976
        %6315 = vmatprep.subr.bf16.mxu0 %v5979
        %6316 = vmatpush1.bf16.msra.mxu0 %v5978
        %6317 = vmatprep.subr.bf16.mxu0 %v5981
        %6318 = vmatpush1.bf16.msra.mxu0 %v5980
        %6319 = vmatprep.subr.bf16.mxu0 %v5983
        %6320 = vmatpush1.bf16.msra.mxu0 %v5982
        %6321 = vmatprep.subr.bf16.mxu0 %v5985
        %6322 = vmatpush1.bf16.msra.mxu0 %v5984
        %6323 = vmatprep.subr.bf16.mxu0 %v5987
        %6324 = vmatpush1.bf16.msra.mxu0 %v5986
        %6325 = vmatprep.subr.bf16.mxu0 %v5989
        %6326 = vmatpush1.bf16.msra.mxu0 %v5988
        %6327 = vmatprep.subr.bf16.mxu0 %v5991
        %6328 = vmatpush1.bf16.msra.mxu0 %v5990
        %6329 = vmatprep.subr.bf16.mxu0 %v5993
        %6330 = vmatpush1.bf16.msra.mxu0 %v5992
        %6331 = vmatprep.subr.bf16.mxu0 %v5995
        %6332 = vmatpush1.bf16.msra.mxu0 %v5994
        %6333 = vmatprep.mubr.bf16.mxu0 %v5347
        %6334 = vmatmul.mubr.bf16.gmra.mrb[0].mxu0 %v5346
        %v6335 = vpop.f32.mrb[0].mxu0
        %v6336 = vadd.f32 %v6223, %v6335
        %v6337 = vpop.f32.mrb[0].mxu0
        %v6338 = vadd.f32 %v6225, %v6337
        %v6339 = vpop.f32.mrb[0].mxu0
        %v6340 = vadd.f32 %v6227, %v6339
        %v6341 = vpop.f32.mrb[0].mxu0
        %v6342 = vadd.f32 %v6229, %v6341
        %6343 = vmatprep.mubr.bf16.mxu0 %v5355
        %6344 = vmatmul.mubr.bf16.gmra.mrb[0].mxu0 %v5354
        %v6345 = vpop.f32.mrb[0].mxu0
        %v6346 = vadd.f32 %v6233, %v6345
        %v6347 = vpop.f32.mrb[0].mxu0
        %v6348 = vadd.f32 %v6235, %v6347
        %v6349 = vpop.f32.mrb[0].mxu0
        %v6350 = vadd.f32 %v6237, %v6349
        %v6351 = vpop.f32.mrb[0].mxu0
        %v6352 = vadd.f32 %v6239, %v6351
        %6353 = vmatprep.mubr.bf16.mxu0 %v5363
        %6354 = vmatmul.mubr.bf16.gmra.mrb[0].mxu0 %v5362
        %v6355 = vpop.f32.mrb[0].mxu0
        %v6356 = vadd.f32 %v6243, %v6355
        %v6357 = vpop.f32.mrb[0].mxu0
        %v6358 = vadd.f32 %v6245, %v6357
        %v6359 = vpop.f32.mrb[0].mxu0
        %v6360 = vadd.f32 %v6247, %v6359
        %v6361 = vpop.f32.mrb[0].mxu0
        %v6362 = vadd.f32 %v6249, %v6361
        %6363 = vmatprep.mubr.bf16.mxu0 %v5371
        %6364 = vmatmul.mubr.bf16.gmra.mrb[0].mxu0 %v5370
        %v6365 = vpop.f32.mrb[0].mxu0
        %v6366 = vadd.f32 %v6253, %v6365
        %v6367 = vpop.f32.mrb[0].mxu0
        %v6368 = vadd.f32 %v6255, %v6367
        %v6369 = vpop.f32.mrb[0].mxu0
        %v6370 = vadd.f32 %v6257, %v6369
        %v6371 = vpop.f32.mrb[0].mxu0
        %v6372 = vadd.f32 %v6259, %v6371
        %6373 = vmatprep.mubr.bf16.mxu0 %v5379
        %6374 = vmatmul.mubr.bf16.gmra.mrb[0].mxu0 %v5378
        %v6375 = vpop.f32.mrb[0].mxu0
        %v6376 = vadd.f32 %v6263, %v6375
        %v6377 = vpop.f32.mrb[0].mxu0
        %v6378 = vadd.f32 %v6265, %v6377
        %v6379 = vpop.f32.mrb[0].mxu0
        %v6380 = vadd.f32 %v6267, %v6379
        %v6381 = vpop.f32.mrb[0].mxu0
        %v6382 = vadd.f32 %v6269, %v6381
        %6383 = vmatprep.mubr.bf16.mxu0 %v5387
        %6384 = vmatmul.mubr.bf16.gmra.mrb[0].mxu0 %v5386
        %v6385 = vpop.f32.mrb[0].mxu0
        %v6386 = vadd.f32 %v6273, %v6385
        %v6387 = vpop.f32.mrb[0].mxu0
        %v6388 = vadd.f32 %v6275, %v6387
        %v6389 = vpop.f32.mrb[0].mxu0
        %v6390 = vadd.f32 %v6277, %v6389
        %v6391 = vpop.f32.mrb[0].mxu0
        %v6392 = vadd.f32 %v6279, %v6391
        %6393 = vmatprep.mubr.bf16.mxu0 %v5395
        %6394 = vmatmul.mubr.bf16.gmra.mrb[0].mxu0 %v5394
        %v6395 = vpop.f32.mrb[0].mxu0
        %v6396 = vadd.f32 %v6283, %v6395
        %v6397 = vpop.f32.mrb[0].mxu0
        %v6398 = vadd.f32 %v6285, %v6397
        %v6399 = vpop.f32.mrb[0].mxu0
        %v6400 = vadd.f32 %v6287, %v6399
        %v6401 = vpop.f32.mrb[0].mxu0
        %v6402 = vadd.f32 %v6289, %v6401
        %6403 = vmatprep.mubr.bf16.mxu0 %v5403
        %6404 = vmatmul.mubr.bf16.gmra.mrb[0].mxu0 %v5402
        %v6405 = vpop.f32.mrb[0].mxu0
        %v6406 = vadd.f32 %v6293, %v6405
        %v6407 = vpop.f32.mrb[0].mxu0
        %v6408 = vadd.f32 %v6295, %v6407
        %v6409 = vpop.f32.mrb[0].mxu0
        %v6410 = vadd.f32 %v6297, %v6409
        %v6411 = vpop.f32.mrb[0].mxu0
        %v6412 = vadd.f32 %v6299, %v6411
        %6413 = vdwg.mxu0
        %6414 = vmatprep.subr.bf16.mxu0 %v5997
        %6415 = vmatpush1.bf16.msra.mxu0 %v5996
        %6416 = vmatprep.subr.bf16.mxu0 %v5999
        %6417 = vmatpush1.bf16.msra.mxu0 %v5998
        %6418 = vmatprep.subr.bf16.mxu0 %v6001
        %6419 = vmatpush1.bf16.msra.mxu0 %v6000
        %6420 = vmatprep.subr.bf16.mxu0 %v6003
        %6421 = vmatpush1.bf16.msra.mxu0 %v6002
        %6422 = vmatprep.subr.bf16.mxu0 %v6005
        %6423 = vmatpush1.bf16.msra.mxu0 %v6004
        %6424 = vmatprep.subr.bf16.mxu0 %v6007
        %6425 = vmatpush1.bf16.msra.mxu0 %v6006
        %6426 = vmatprep.subr.bf16.mxu0 %v6009
        %6427 = vmatpush1.bf16.msra.mxu0 %v6008
        %6428 = vmatprep.subr.bf16.mxu0 %v6011
        %6429 = vmatpush1.bf16.msra.mxu0 %v6010
        %6430 = vmatprep.subr.bf16.mxu0 %v6013
        %6431 = vmatpush1.bf16.msra.mxu0 %v6012
        %6432 = vmatprep.subr.bf16.mxu0 %v6015
        %6433 = vmatpush1.bf16.msra.mxu0 %v6014
        %6434 = vmatprep.subr.bf16.mxu0 %v6017
        %6435 = vmatpush1.bf16.msra.mxu0 %v6016
        %6436 = vmatprep.subr.bf16.mxu0 %v6019
        %6437 = vmatpush1.bf16.msra.mxu0 %v6018
        %6438 = vmatprep.subr.bf16.mxu0 %v6021
        %6439 = vmatpush1.bf16.msra.mxu0 %v6020
        %6440 = vmatprep.subr.bf16.mxu0 %v6023
        %6441 = vmatpush1.bf16.msra.mxu0 %v6022
        %6442 = vmatprep.subr.bf16.mxu0 %v6025
        %6443 = vmatpush1.bf16.msra.mxu0 %v6024
        %6444 = vmatprep.subr.bf16.mxu0 %v6027
        %6445 = vmatpush1.bf16.msra.mxu0 %v6026
        %6446 = vmatprep.mubr.bf16.mxu0 %v5349
        %6447 = vmatmul.mubr.bf16.gmra.mrb[0].mxu0 %v5348
        %v6448 = vpop.f32.mrb[0].mxu0
        %v6449 = vadd.f32 %v6336, %v6448
        %v6450 = vpop.f32.mrb[0].mxu0
        %v6451 = vadd.f32 %v6338, %v6450
        %v6452 = vpop.f32.mrb[0].mxu0
        %v6453 = vadd.f32 %v6340, %v6452
        %v6454 = vpop.f32.mrb[0].mxu0
        %v6455 = vadd.f32 %v6342, %v6454
        %6456 = vmatprep.mubr.bf16.mxu0 %v5357
        %6457 = vmatmul.mubr.bf16.gmra.mrb[0].mxu0 %v5356
        %v6458 = vpop.f32.mrb[0].mxu0
        %v6459 = vadd.f32 %v6346, %v6458
        %v6460 = vpop.f32.mrb[0].mxu0
        %v6461 = vadd.f32 %v6348, %v6460
        %v6462 = vpop.f32.mrb[0].mxu0
        %v6463 = vadd.f32 %v6350, %v6462
        %v6464 = vpop.f32.mrb[0].mxu0
        %v6465 = vadd.f32 %v6352, %v6464
        %6466 = vmatprep.mubr.bf16.mxu0 %v5365
        %6467 = vmatmul.mubr.bf16.gmra.mrb[0].mxu0 %v5364
        %v6468 = vpop.f32.mrb[0].mxu0
        %v6469 = vadd.f32 %v6356, %v6468
        %v6470 = vpop.f32.mrb[0].mxu0
        %v6471 = vadd.f32 %v6358, %v6470
        %v6472 = vpop.f32.mrb[0].mxu0
        %v6473 = vadd.f32 %v6360, %v6472
        %v6474 = vpop.f32.mrb[0].mxu0
        %v6475 = vadd.f32 %v6362, %v6474
        %6476 = vmatprep.mubr.bf16.mxu0 %v5373
        %6477 = vmatmul.mubr.bf16.gmra.mrb[0].mxu0 %v5372
        %v6478 = vpop.f32.mrb[0].mxu0
        %v6479 = vadd.f32 %v6366, %v6478
        %v6480 = vpop.f32.mrb[0].mxu0
        %v6481 = vadd.f32 %v6368, %v6480
        %v6482 = vpop.f32.mrb[0].mxu0
        %v6483 = vadd.f32 %v6370, %v6482
        %v6484 = vpop.f32.mrb[0].mxu0
        %v6485 = vadd.f32 %v6372, %v6484
        %6486 = vmatprep.mubr.bf16.mxu0 %v5381
        %6487 = vmatmul.mubr.bf16.gmra.mrb[0].mxu0 %v5380
        %v6488 = vpop.f32.mrb[0].mxu0
        %v6489 = vadd.f32 %v6376, %v6488
        %v6490 = vpop.f32.mrb[0].mxu0
        %v6491 = vadd.f32 %v6378, %v6490
        %v6492 = vpop.f32.mrb[0].mxu0
        %v6493 = vadd.f32 %v6380, %v6492
        %v6494 = vpop.f32.mrb[0].mxu0
        %v6495 = vadd.f32 %v6382, %v6494
        %6496 = vmatprep.mubr.bf16.mxu0 %v5389
        %6497 = vmatmul.mubr.bf16.gmra.mrb[0].mxu0 %v5388
        %v6498 = vpop.f32.mrb[0].mxu0
        %v6499 = vadd.f32 %v6386, %v6498
        %v6500 = vpop.f32.mrb[0].mxu0
        %v6501 = vadd.f32 %v6388, %v6500
        %v6502 = vpop.f32.mrb[0].mxu0
        %v6503 = vadd.f32 %v6390, %v6502
        %v6504 = vpop.f32.mrb[0].mxu0
        %v6505 = vadd.f32 %v6392, %v6504
        %6506 = vmatprep.mubr.bf16.mxu0 %v5397
        %6507 = vmatmul.mubr.bf16.gmra.mrb[0].mxu0 %v5396
        %v6508 = vpop.f32.mrb[0].mxu0
        %v6509 = vadd.f32 %v6396, %v6508
        %v6510 = vpop.f32.mrb[0].mxu0
        %v6511 = vadd.f32 %v6398, %v6510
        %v6512 = vpop.f32.mrb[0].mxu0
        %v6513 = vadd.f32 %v6400, %v6512
        %v6514 = vpop.f32.mrb[0].mxu0
        %v6515 = vadd.f32 %v6402, %v6514
        %6516 = vmatprep.mubr.bf16.mxu0 %v5405
        %6517 = vmatmul.mubr.bf16.gmra.mrb[0].mxu0 %v5404
        %v6518 = vpop.f32.mrb[0].mxu0
        %v6519 = vadd.f32 %v6406, %v6518
        %v6520 = vpop.f32.mrb[0].mxu0
        %v6521 = vadd.f32 %v6408, %v6520
        %v6522 = vpop.f32.mrb[0].mxu0
        %v6523 = vadd.f32 %v6410, %v6522
        %v6524 = vpop.f32.mrb[0].mxu0
        %v6525 = vadd.f32 %v6412, %v6524
        %6526 = vdwg.mxu0
        %6527 = vmatprep.subr.bf16.mxu0 %v6029
        %6528 = vmatpush1.bf16.msra.mxu0 %v6028
        %6529 = vmatprep.subr.bf16.mxu0 %v6031
        %6530 = vmatpush1.bf16.msra.mxu0 %v6030
        %6531 = vmatprep.subr.bf16.mxu0 %v6033
        %6532 = vmatpush1.bf16.msra.mxu0 %v6032
        %6533 = vmatprep.subr.bf16.mxu0 %v6035
        %6534 = vmatpush1.bf16.msra.mxu0 %v6034
        %6535 = vmatprep.subr.bf16.mxu0 %v6037
        %6536 = vmatpush1.bf16.msra.mxu0 %v6036
        %6537 = vmatprep.subr.bf16.mxu0 %v6039
        %6538 = vmatpush1.bf16.msra.mxu0 %v6038
        %6539 = vmatprep.subr.bf16.mxu0 %v6041
        %6540 = vmatpush1.bf16.msra.mxu0 %v6040
        %6541 = vmatprep.subr.bf16.mxu0 %v6043
        %6542 = vmatpush1.bf16.msra.mxu0 %v6042
        %6543 = vmatprep.subr.bf16.mxu0 %v6045
        %6544 = vmatpush1.bf16.msra.mxu0 %v6044
        %6545 = vmatprep.subr.bf16.mxu0 %v6047
        %6546 = vmatpush1.bf16.msra.mxu0 %v6046
        %6547 = vmatprep.subr.bf16.mxu0 %v6049
        %6548 = vmatpush1.bf16.msra.mxu0 %v6048
        %6549 = vmatprep.subr.bf16.mxu0 %v6051
        %6550 = vmatpush1.bf16.msra.mxu0 %v6050
        %6551 = vmatprep.subr.bf16.mxu0 %v6053
        %6552 = vmatpush1.bf16.msra.mxu0 %v6052
        %6553 = vmatprep.subr.bf16.mxu0 %v6055
        %6554 = vmatpush1.bf16.msra.mxu0 %v6054
        %6555 = vmatprep.subr.bf16.mxu0 %v6057
        %6556 = vmatpush1.bf16.msra.mxu0 %v6056
        %6557 = vmatprep.subr.bf16.mxu0 %v6059
        %6558 = vmatpush1.bf16.msra.mxu0 %v6058
        %6559 = vmatprep.mubr.bf16.mxu0 %v5351
        %6560 = vmatmul.mubr.bf16.gmra.mrb[0].mxu0 %v5350
        %v6561 = vpop.f32.mrb[0].mxu0
        %v6562 = vadd.f32 %v6449, %v6561
        %v6563 = vpop.f32.mrb[0].mxu0
        %v6564 = vadd.f32 %v6451, %v6563
        %v6565 = vpop.f32.mrb[0].mxu0
        %v6566 = vadd.f32 %v6453, %v6565
        %v6567 = vpop.f32.mrb[0].mxu0
        %v6568 = vadd.f32 %v6455, %v6567
        %6569 = vmatprep.mubr.bf16.mxu0 %v5359
        %6570 = vmatmul.mubr.bf16.gmra.mrb[0].mxu0 %v5358
        %v6571 = vpop.f32.mrb[0].mxu0
        %v6572 = vadd.f32 %v6459, %v6571
        %v6573 = vpop.f32.mrb[0].mxu0
        %v6574 = vadd.f32 %v6461, %v6573
        %v6575 = vpop.f32.mrb[0].mxu0
        %v6576 = vadd.f32 %v6463, %v6575
        %v6577 = vpop.f32.mrb[0].mxu0
        %v6578 = vadd.f32 %v6465, %v6577
        %6579 = vmatprep.mubr.bf16.mxu0 %v5367
        %6580 = vmatmul.mubr.bf16.gmra.mrb[0].mxu0 %v5366
        %v6581 = vpop.f32.mrb[0].mxu0
        %v6582 = vadd.f32 %v6469, %v6581
        %v6583 = vpop.f32.mrb[0].mxu0
        %v6584 = vadd.f32 %v6471, %v6583
        %v6585 = vpop.f32.mrb[0].mxu0
        %v6586 = vadd.f32 %v6473, %v6585
        %v6587 = vpop.f32.mrb[0].mxu0
        %v6588 = vadd.f32 %v6475, %v6587
        %6589 = vmatprep.mubr.bf16.mxu0 %v5375
        %6590 = vmatmul.mubr.bf16.gmra.mrb[0].mxu0 %v5374
        %v6591 = vpop.f32.mrb[0].mxu0
        %v6592 = vadd.f32 %v6479, %v6591
        %v6593 = vpop.f32.mrb[0].mxu0
        %v6594 = vadd.f32 %v6481, %v6593
        %v6595 = vpop.f32.mrb[0].mxu0
        %v6596 = vadd.f32 %v6483, %v6595
        %v6597 = vpop.f32.mrb[0].mxu0
        %v6598 = vadd.f32 %v6485, %v6597
        %6599 = vmatprep.mubr.bf16.mxu0 %v5383
        %6600 = vmatmul.mubr.bf16.gmra.mrb[0].mxu0 %v5382
        %v6601 = vpop.f32.mrb[0].mxu0
        %v6602 = vadd.f32 %v6489, %v6601
        %v6603 = vpop.f32.mrb[0].mxu0
        %v6604 = vadd.f32 %v6491, %v6603
        %v6605 = vpop.f32.mrb[0].mxu0
        %v6606 = vadd.f32 %v6493, %v6605
        %v6607 = vpop.f32.mrb[0].mxu0
        %v6608 = vadd.f32 %v6495, %v6607
        %6609 = vmatprep.mubr.bf16.mxu0 %v5391
        %6610 = vmatmul.mubr.bf16.gmra.mrb[0].mxu0 %v5390
        %v6611 = vpop.f32.mrb[0].mxu0
        %v6612 = vadd.f32 %v6499, %v6611
        %v6613 = vpop.f32.mrb[0].mxu0
        %v6614 = vadd.f32 %v6501, %v6613
        %v6615 = vpop.f32.mrb[0].mxu0
        %v6616 = vadd.f32 %v6503, %v6615
        %v6617 = vpop.f32.mrb[0].mxu0
        %v6618 = vadd.f32 %v6505, %v6617
        %6619 = vmatprep.mubr.bf16.mxu0 %v5399
        %6620 = vmatmul.mubr.bf16.gmra.mrb[0].mxu0 %v5398
        %v6621 = vpop.f32.mrb[0].mxu0
        %v6622 = vadd.f32 %v6509, %v6621
        %v6623 = vpop.f32.mrb[0].mxu0
        %v6624 = vadd.f32 %v6511, %v6623
        %v6625 = vpop.f32.mrb[0].mxu0
        %v6626 = vadd.f32 %v6513, %v6625
        %v6627 = vpop.f32.mrb[0].mxu0
        %v6628 = vadd.f32 %v6515, %v6627
        %6629 = vmatprep.mubr.bf16.mxu0 %v5407
        %6630 = vmatmul.mubr.bf16.gmra.mrb[0].mxu0 %v5406
        %v6631 = vpop.f32.mrb[0].mxu0
        %v6632 = vadd.f32 %v6519, %v6631
        %v6633 = vpop.f32.mrb[0].mxu0
        %v6634 = vadd.f32 %v6521, %v6633
        %v6635 = vpop.f32.mrb[0].mxu0
        %v6636 = vadd.f32 %v6523, %v6635
        %v6637 = vpop.f32.mrb[0].mxu0
        %v6638 = vadd.f32 %v6525, %v6637
        %6639 = vdwg.mxu0
        %v6640 = vadd.f32 %v2985, %v6562
        %v6641 = vadd.f32 %v2986, %v6564
        %v6642 = vadd.f32 %v2987, %v6566
        %v6643 = vadd.f32 %v2988, %v6568
        %v6644 = vadd.f32 %v2989, %v6572
        %v6645 = vadd.f32 %v2990, %v6574
        %v6646 = vadd.f32 %v2991, %v6576
        %v6647 = vadd.f32 %v2992, %v6578
        %v6648 = vadd.f32 %v2993, %v6582
        %v6649 = vadd.f32 %v2994, %v6584
        %v6650 = vadd.f32 %v2995, %v6586
        %v6651 = vadd.f32 %v2996, %v6588
        %v6652 = vadd.f32 %v2997, %v6592
        %v6653 = vadd.f32 %v2998, %v6594
        %v6654 = vadd.f32 %v2999, %v6596
        %v6655 = vadd.f32 %v3000, %v6598
        %v6656 = vadd.f32 %v3001, %v6602
        %v6657 = vadd.f32 %v3002, %v6604
        %v6658 = vadd.f32 %v3003, %v6606
        %v6659 = vadd.f32 %v3004, %v6608
        %v6660 = vadd.f32 %v3005, %v6612
        %v6661 = vadd.f32 %v3006, %v6614
        %v6662 = vadd.f32 %v3007, %v6616
        %v6663 = vadd.f32 %v3008, %v6618
        %v6664 = vadd.f32 %v3009, %v6622
        %v6665 = vadd.f32 %v3010, %v6624
        %v6666 = vadd.f32 %v3011, %v6626
        %v6667 = vadd.f32 %v3012, %v6628
        %v6668 = vadd.f32 %v3013, %v6632
        %v6669 = vadd.f32 %v3014, %v6634
        %v6670 = vadd.f32 %v3015, %v6636
        %v6671 = vadd.f32 %v3016, %v6638
        %6672 = vst [vmem:[%s502] sm:$0xff] %v6640
        %6673 = vst [vmem:[%s502 + $0x8] sm:$0xff] %v6641
        %6674 = vst [vmem:[%s502 + $0x10] sm:$0xff] %v6642
        %6675 = vst [vmem:[%s502 + $0x18] sm:$0xff] %v6643
        %6676 = vst [vmem:[%s502 + $0x20] sm:$0xff] %v6644
        %6677 = vst [vmem:[%s502 + $0x28] sm:$0xff] %v6645
        %6678 = vst [vmem:[%s502 + $0x30] sm:$0xff] %v6646
        %6679 = vst [vmem:[%s502 + $0x38] sm:$0xff] %v6647
        %6680 = vst [vmem:[%s502 + $0x40] sm:$0xff] %v6648
        %6681 = vst [vmem:[%s502 + $0x48] sm:$0xff] %v6649
        %6682 = vst [vmem:[%s502 + $0x50] sm:$0xff] %v6650
        %6683 = vst [vmem:[%s502 + $0x58] sm:$0xff] %v6651
        %6684 = vst [vmem:[%s502 + $0x60] sm:$0xff] %v6652
        %6685 = vst [vmem:[%s502 + $0x68] sm:$0xff] %v6653
        %6686 = vst [vmem:[%s502 + $0x70] sm:$0xff] %v6654
        %6687 = vst [vmem:[%s502 + $0x78] sm:$0xff] %v6655
        %6688 = vst [vmem:[%s502 + $0x80] sm:$0xff] %v6656
        %6689 = vst [vmem:[%s502 + $0x88] sm:$0xff] %v6657
        %6690 = vst [vmem:[%s502 + $0x90] sm:$0xff] %v6658
        %6691 = vst [vmem:[%s502 + $0x98] sm:$0xff] %v6659
        %6692 = vst [vmem:[%s502 + $0xa0] sm:$0xff] %v6660
        %6693 = vst [vmem:[%s502 + $0xa8] sm:$0xff] %v6661
        %6694 = vst [vmem:[%s502 + $0xb0] sm:$0xff] %v6662
        %6695 = vst [vmem:[%s502 + $0xb8] sm:$0xff] %v6663
        %6696 = vst [vmem:[%s502 + $0xc0] sm:$0xff] %v6664
        %6697 = vst [vmem:[%s502 + $0xc8] sm:$0xff] %v6665
        %6698 = vst [vmem:[%s502 + $0xd0] sm:$0xff] %v6666
        %6699 = vst [vmem:[%s502 + $0xd8] sm:$0xff] %v6667
        %6700 = vst [vmem:[%s502 + $0xe0] sm:$0xff] %v6668
        %6701 = vst [vmem:[%s502 + $0xe8] sm:$0xff] %v6669
        %6702 = vst [vmem:[%s502 + $0xf0] sm:$0xff] %v6670
        %6703 = vst [vmem:[%s502 + $0xf8] sm:$0xff] %v6671
        %s6704 = sand.u32 %s318, 1
        %s6705 = scalar_lea.sflag [#allocation5], %s6704
        %s6706 = sand.u32 %s318, 1
        %s6707 = smul.addr %s6706, 256
        %s6708 = scalar_lea.vmem [#allocation11], %s6707
        // Predicated region
        $region89: #{tpu_custom_call.1} parent=71 // pred_check
          %p6709 = pneg %p328
        $region90: #{tpu_custom_call.1} parent=71 // pred_check_branch
          %6711 = sbr.rel (%p6709) target = $region92
        $region91: #{tpu_custom_call.1} parent=71 // pred_region
          %s6713 = ssub.s32 4096, 4096
          %6714 = vsyncadd %s6705, %s6713
          %s6715 = smul.addr %s32, 32
          %s6716 = smul.addr %s6715, 128
          %s6717 = scalar_lea.hbm %s13, %s6716
          %s6718 = sshll.u32 %s6708, 4
          %s6719 = int_to_ptr.vmem [resolvable:$true] %s6718
          %6724 = dma.vmem_to_hbm [thread:$0]  %s6719, 4096, %s6717, %s6705, 256, 256, 16
        $region92: #{tpu_custom_call.1} parent=71 // pred_fallthru
          _
      $region72: #{tpu_custom_call.1} parent=5 // pred_fallthru
        _
      %p6725 = scmp.le.s32.totalorder 2, %s27
      // Predicated region
      $region93: #{tpu_custom_call.1} parent=5 // pred_check
        %p6726 = pneg %p6725
      $region94: #{tpu_custom_call.1} parent=5 // pred_check_branch
        %6728 = sbr.rel (%p6726) target = $region96
      $region95: #{tpu_custom_call.1} parent=5 // pred_region
        %s6729 = ssub.s32 %s27, 2
        // Predicated region
        $region97: #{tpu_custom_call.1} parent=95 // pred_check
          %p6730 = pneg %p334
        $region98: #{tpu_custom_call.1} parent=95 // pred_check_branch
          %6732 = sbr.rel (%p6730) target = $region100
        $region99: #{tpu_custom_call.1} parent=95 // pred_region
          %s6733 = sand.u32 %s319, 1
          %s6734 = scalar_lea.sflag [#allocation5], %s6733
          %s6735 = sand.u32 %s319, 1
          %s6736 = smul.addr %s6735, 256
          %s6737 = scalar_lea.vmem [#allocation11], %s6736
          %6738 = dma.done %s6734, 4096
        $region100: #{tpu_custom_call.1} parent=95 // pred_fallthru
          _
      $region96: #{tpu_custom_call.1} parent=5 // pred_fallthru
        _
    $region6: #{tpu_custom_call.1} parent=1 // loop_footer
      %s31 = sadd.s32 1, %s27
    $region7: #{tpu_custom_call.1} parent=1 // loop_footer_branch
      %26 = sbr.rel target = $region3
    $region8: #{tpu_custom_call.1} parent=1 // loop_exit
      _
    %6739 = vsyncpa [#allocation4], 1
    %s6740 = scalar_lea.sflag [#allocation4], 1
    %6741 = vsyncpa %s6740, 1
    %6742 = vsyncpa [#allocation7], 1
    %6743 = vsyncpa [#allocation10], 1
    %6744 = vsyncpa [#allocation5], 1
    %s6745 = scalar_lea.sflag [#allocation5], 1
    %6746 = vsyncpa %s6745, 1

</llo_original>
